<compile_context>
chip_gen: v7x
topology: tpu7x:2x2x1
jax: 0.10.0
libtpu: 0.0.40
codegen_flags: <defaults>
</compile_context>

<pallas_src>
import functools

import jax
import jax.numpy as jnp
import numpy as np
from jax.experimental import pallas as pl
from jax.experimental.pallas import tpu as pltpu


def _gru_gates(gi, gh, h, H):
    r = jax.nn.sigmoid(gi[:, 0:H] + gh[:, 0:H])
    zg = jax.nn.sigmoid(gi[:, H:2 * H] + gh[:, H:2 * H])
    n = jnp.tanh(gi[:, 2 * H:3 * H] + r * gh[:, 2 * H:3 * H])
    return (1.0 - zg) * n + zg * h


def vae_kernel(T_his, T_pred, horizon, B, nz, ny, H,
               # inputs
               x2d_ref, y2d_ref, eps_ref,
               xe_wih_ref, xe_whh_ref, xe_bih_ref, xe_bhh_ref,
               ye_wih_ref, ye_whh_ref, ye_bih_ref, ye_bhh_ref,
               e_w1x_ref, e_w1y_ref, e_b1_ref, e_w2_ref, e_b2_ref,
               e_wml_ref, e_bml_ref,
               d_wih_hx_ref, d_wih_z_ref, d_wih_y_ref,
               d_whh_ref, d_bih_ref, d_bhh_ref,
               d_w1_ref, d_b1_ref, d_w2_ref, d_b2_ref,
               d_wo_ref, d_bo_ref,
               # outputs
               y_out_ref, ml_out_ref):
    f32 = jnp.float32

    def run_gru(seq2d, T, wih_ref, whh_ref, bih_ref, bhh_ref):
        # Hoisted input-to-hidden matmul: one matmul for the whole sequence.
        gi_all = (jnp.dot(seq2d, wih_ref[...], preferred_element_type=f32)
                  + bih_ref[...])
        whh = whh_ref[...]
        bhh = jnp.broadcast_to(bhh_ref[...], (B, 3 * H))  # hoisted broadcast
        h = jnp.zeros((B, H), f32)
        for t in range(T):  # static trip count -> fully unrolled, h stays in vregs
            gi = gi_all[t * B:(t + 1) * B, :]
            gh = jnp.dot(h, whh, preferred_element_type=f32) + bhh
            h = _gru_gates(gi, gh, h, H)
        return h

    # ---- encoders ----
    h_x = run_gru(x2d_ref[...], T_his, xe_wih_ref, xe_whh_ref, xe_bih_ref, xe_bhh_ref)
    h_y = run_gru(y2d_ref[...], T_pred, ye_wih_ref, ye_whh_ref, ye_bih_ref, ye_bhh_ref)

    # ---- e_mlp on cat(h_x, h_y) via split weights (no lane concat) ----
    he = jnp.tanh(jnp.dot(h_x, e_w1x_ref[...], preferred_element_type=f32)
                  + jnp.dot(h_y, e_w1y_ref[...], preferred_element_type=f32)
                  + e_b1_ref[...])
    he = jnp.tanh(jnp.dot(he, e_w2_ref[...], preferred_element_type=f32) + e_b2_ref[...])

    # ---- fused mu | logvar head + reparameterize ----
    ml = jnp.dot(he, e_wml_ref[...], preferred_element_type=f32) + e_bml_ref[...]
    ml_out_ref[...] = ml
    mu = ml[:, 0:nz]
    logvar = ml[:, nz:2 * nz]
    z = mu + eps_ref[...] * jnp.exp(0.5 * logvar)

    # ---- decoder roll-out ----
    # cat(h_x, z, y_p) @ W_ih: the h_x and z contributions are loop-invariant.
    gi_const = (jnp.dot(h_x, d_wih_hx_ref[...], preferred_element_type=f32)
                + jnp.dot(z, d_wih_z_ref[...], preferred_element_type=f32)
                + d_bih_ref[...])
    d_wih_y = d_wih_y_ref[...]
    d_whh = d_whh_ref[...]
    d_bhh = jnp.broadcast_to(d_bhh_ref[...], (B, 3 * H))
    d_w1, d_b1 = d_w1_ref[...], d_b1_ref[...]
    d_w2, d_b2 = d_w2_ref[...], d_b2_ref[...]
    d_wo, d_bo = d_wo_ref[...], d_bo_ref[...]

    h = jnp.zeros((B, H), f32)
    y_p = x2d_ref[(T_his - 1) * B:T_his * B, :]  # x[-1]
    y_steps = []
    for _ in range(horizon):  # static -> fully unrolled
        gi = gi_const + jnp.dot(y_p, d_wih_y, preferred_element_type=f32)
        gh = jnp.dot(h, d_whh, preferred_element_type=f32) + d_bhh
        h = _gru_gates(gi, gh, h, H)
        hd = jnp.tanh(jnp.dot(h, d_w1, preferred_element_type=f32) + d_b1)
        hd = jnp.tanh(jnp.dot(hd, d_w2, preferred_element_type=f32) + d_b2)
        y_i = jnp.dot(hd, d_wo, preferred_element_type=f32) + d_bo
        y_steps.append(y_i)
        y_p = y_i
    # Single store of all roll-out steps (avoids `horizon` masked partial stores).
    y_out_ref[...] = jnp.concatenate(y_steps, axis=0)


def vae_forward(x, y, eps, params, *, nz, nh_rnn, horizon):
    T_his, B, nx = x.shape
    T_pred, _, ny = y.shape
    assert nx == ny, "decoder feeds x[-1] back as y_p, so nx must equal ny"
    H = nh_rnn

    (xe_wih, xe_whh, xe_bih, xe_bhh,
     ye_wih, ye_whh, ye_bih, ye_bhh,
     e_w1, e_b1, e_w2, e_b2,
     e_wmu, e_bmu, e_wlv, e_blv,
     d_wih, d_whh, d_bih, d_bhh,
     d_w1, d_b1, d_w2, d_b2,
     d_wo, d_bo) = params

    # Wrapper-side layout plumbing / packing: reshape sequences to 2D, split
    # concat-input weights, fuse the two tiny heads into one matmul.
    x2d = x.reshape(T_his * B, nx)
    y2d = y.reshape(T_pred * B, ny)
    e_w1x, e_w1y = e_w1[:H, :], e_w1[H:, :]             # split cat(h_x, h_y) weight
    e_wml = jnp.concatenate([e_wmu, e_wlv], axis=1)     # fuse mu | logvar heads
    e_bml = jnp.concatenate([e_bmu, e_blv], axis=1)
    d_wih_hx = d_wih[:H, :]                             # split cat(h_x, z, y_p) weight
    d_wih_z = d_wih[H:H + nz, :]
    d_wih_y = d_wih[H + nz:, :]

    kern = functools.partial(vae_kernel, T_his, T_pred, horizon, B, nz, ny, H)
    inputs = (x2d, y2d, eps,
              xe_wih, xe_whh, xe_bih, xe_bhh,
              ye_wih, ye_whh, ye_bih, ye_bhh,
              e_w1x, e_w1y, e_b1, e_w2, e_b2,
              e_wml, e_bml,
              d_wih_hx, d_wih_z, d_wih_y, d_whh, d_bih, d_bhh,
              d_w1, d_b1, d_w2, d_b2,
              d_wo, d_bo)
    out_shape = (jax.ShapeDtypeStruct((horizon * B, ny), jnp.float32),
                 jax.ShapeDtypeStruct((B, 2 * nz), jnp.float32))
    y_flat, ml = pl.pallas_call(
        kern,
        out_shape=out_shape,
        in_specs=[pl.BlockSpec(memory_space=pltpu.MemorySpace.VMEM) for _ in inputs],
        out_specs=(pl.BlockSpec(memory_space=pltpu.MemorySpace.VMEM),
                   pl.BlockSpec(memory_space=pltpu.MemorySpace.VMEM)),
        compiler_params=pltpu.CompilerParams(vmem_limit_bytes=32 * 1024 * 1024),
    )(*inputs)
    y_pred = y_flat.reshape(horizon, B, ny)
    mu = ml[:, :nz]
    logvar = ml[:, nz:]
    return y_pred, mu, logvar


def _reference_forward(x, y, eps, params, *, nz, nh_rnn, horizon):
    """Pure-JAX mirror of the PyTorch VAE.forward (gru, uni-dir, no drnn_mlp)."""
    (xe_wih, xe_whh, xe_bih, xe_bhh,
     ye_wih, ye_whh, ye_bih, ye_bhh,
     e_w1, e_b1, e_w2, e_b2,
     e_wmu, e_bmu, e_wlv, e_blv,
     d_wih, d_whh, d_bih, d_bhh,
     d_w1, d_b1, d_w2, d_b2,
     d_wo, d_bo) = params
    H = nh_rnn

    def gru(seq, wih, whh, bih, bhh):
        B = seq.shape[1]
        h = jnp.zeros((B, H), jnp.float32)
        for t in range(seq.shape[0]):
            gi = seq[t] @ wih + bih
            gh = h @ whh + bhh
            r = jax.nn.sigmoid(gi[:, :H] + gh[:, :H])
            zg = jax.nn.sigmoid(gi[:, H:2 * H] + gh[:, H:2 * H])
            n = jnp.tanh(gi[:, 2 * H:] + r * gh[:, 2 * H:])
            h = (1.0 - zg) * n + zg * h
        return h

    h_x = gru(x, xe_wih, xe_whh, xe_bih, xe_bhh)
    h_y = gru(y, ye_wih, ye_whh, ye_bih, ye_bhh)
    he = jnp.tanh(jnp.concatenate([h_x, h_y], axis=1) @ e_w1 + e_b1)
    he = jnp.tanh(he @ e_w2 + e_b2)
    mu = he @ e_wmu + e_bmu
    logvar = he @ e_wlv + e_blv
    z = mu + eps * jnp.exp(0.5 * logvar)

    B = x.shape[1]
    h = jnp.zeros((B, H), jnp.float32)
    y_p = x[-1]
    ys = []
    for _ in range(horizon):
        rnn_in = jnp.concatenate([h_x, z, y_p], axis=1)
        gi = rnn_in @ d_wih + d_bih
        gh = h @ d_whh + d_bhh
        r = jax.nn.sigmoid(gi[:, :H] + gh[:, :H])
        zg = jax.nn.sigmoid(gi[:, H:2 * H] + gh[:, H:2 * H])
        n = jnp.tanh(gi[:, 2 * H:] + r * gh[:, 2 * H:])
        h = (1.0 - zg) * n + zg * h
        hd = jnp.tanh(h @ d_w1 + d_b1)
        hd = jnp.tanh(hd @ d_w2 + d_b2)
        y_i = hd @ d_wo + d_bo
        ys.append(y_i)
        y_p = y_i
    return jnp.stack(ys), mu, logvar


if __name__ == "__main__":
    # Small shapes consistent with the module: traj_dim=16, nz=8, horizon=8,
    # history/future length 8, batch 2; specs: gru, uni-dir, nh_rnn=128,
    # nh_mlp=[128, 128].
    nx = ny = 16
    nz = 8
    horizon = 8
    T_his, T_pred, B = 8, 8, 2
    nh_rnn = 128
    nh_mlp = [128, 128]
    H, m0, m1 = nh_rnn, nh_mlp[0], nh_mlp[1]

    key = jax.random.PRNGKey(0)
    ks = jax.random.split(key, 32)

    def u(k, shape, scale=0.2):
        return jax.random.uniform(k, shape, jnp.float32, -scale, scale)

    # All weights pre-transposed to (in_dim, out_dim); biases as (1, dim) rows.
    params = (
        # x_rnn (GRU cell)
        u(ks[0], (nx, 3 * H)), u(ks[1], (H, 3 * H)), u(ks[2], (1, 3 * H)), u(ks[3], (1, 3 * H)),
        # e_rnn (GRU cell)
        u(ks[4], (ny, 3 * H)), u(ks[5], (H, 3 * H)), u(ks[6], (1, 3 * H)), u(ks[7], (1, 3 * H)),
        # e_mlp (tanh MLP on cat(h_x, h_y))
        u(ks[8], (2 * H, m0)), u(ks[9], (1, m0)), u(ks[10], (m0, m1)), u(ks[11], (1, m1)),
        # e_mu / e_logvar
        u(ks[12], (m1, nz)), u(ks[13], (1, nz)), u(ks[14], (m1, nz)), u(ks[15], (1, nz)),
        # d_rnn (GRU cell on cat(h_x, z, y_p))
        u(ks[16], (H + nz + ny, 3 * H)), u(ks[17], (H, 3 * H)), u(ks[18], (1, 3 * H)), u(ks[19], (1, 3 * H)),
        # d_mlp
        u(ks[20], (H, m0)), u(ks[21], (1, m0)), u(ks[22], (m0, m1)), u(ks[23], (1, m1)),
        # d_out
        u(ks[24], (m1, ny)), u(ks[25], (1, ny)),
    )

    x = jax.random.normal(ks[26], (T_his, B, nx), jnp.float32)       # history traj
    y_fut = jax.random.normal(ks[27], (T_pred, B, ny), jnp.float32)  # future traj
    eps = jax.random.normal(ks[28], (B, nz), jnp.float32)            # reparameterize noise

    y_pred, mu, logvar = vae_forward(x, y_fut, eps, params,
                                     nz=nz, nh_rnn=nh_rnn, horizon=horizon)
    jax.block_until_ready((y_pred, mu, logvar))

    y_ref, mu_ref, lv_ref = _reference_forward(x, y_fut, eps, params,
                                               nz=nz, nh_rnn=nh_rnn, horizon=horizon)
    np.testing.assert_allclose(np.asarray(mu), np.asarray(mu_ref), rtol=5e-3, atol=5e-3)
    np.testing.assert_allclose(np.asarray(logvar), np.asarray(lv_ref), rtol=5e-3, atol=5e-3)
    np.testing.assert_allclose(np.asarray(y_pred), np.asarray(y_ref), rtol=5e-3, atol=5e-3)

    assert y_pred.shape == (horizon, B, ny)
    assert mu.shape == (B, nz) and logvar.shape == (B, nz)
    print("KERNEL_OK")
</pallas_src>

<mosaic_0001>
module attributes {stable_mosaic.version = 11 : i64} {
  func.func @vae_kernel(%arg0: memref<16x16xf32, #tpu.memory_space<vmem>>, %arg1: memref<16x16xf32, #tpu.memory_space<vmem>>, %arg2: memref<2x8xf32, #tpu.memory_space<vmem>>, %arg3: memref<16x384xf32, #tpu.memory_space<vmem>>, %arg4: memref<128x384xf32, #tpu.memory_space<vmem>>, %arg5: memref<1x384xf32, #tpu.memory_space<vmem>>, %arg6: memref<1x384xf32, #tpu.memory_space<vmem>>, %arg7: memref<16x384xf32, #tpu.memory_space<vmem>>, %arg8: memref<128x384xf32, #tpu.memory_space<vmem>>, %arg9: memref<1x384xf32, #tpu.memory_space<vmem>>, %arg10: memref<1x384xf32, #tpu.memory_space<vmem>>, %arg11: memref<128x128xf32, #tpu.memory_space<vmem>>, %arg12: memref<128x128xf32, #tpu.memory_space<vmem>>, %arg13: memref<1x128xf32, #tpu.memory_space<vmem>>, %arg14: memref<128x128xf32, #tpu.memory_space<vmem>>, %arg15: memref<1x128xf32, #tpu.memory_space<vmem>>, %arg16: memref<128x16xf32, #tpu.memory_space<vmem>>, %arg17: memref<1x16xf32, #tpu.memory_space<vmem>>, %arg18: memref<128x384xf32, #tpu.memory_space<vmem>>, %arg19: memref<8x384xf32, #tpu.memory_space<vmem>>, %arg20: memref<16x384xf32, #tpu.memory_space<vmem>>, %arg21: memref<128x384xf32, #tpu.memory_space<vmem>>, %arg22: memref<1x384xf32, #tpu.memory_space<vmem>>, %arg23: memref<1x384xf32, #tpu.memory_space<vmem>>, %arg24: memref<128x128xf32, #tpu.memory_space<vmem>>, %arg25: memref<1x128xf32, #tpu.memory_space<vmem>>, %arg26: memref<128x128xf32, #tpu.memory_space<vmem>>, %arg27: memref<1x128xf32, #tpu.memory_space<vmem>>, %arg28: memref<128x16xf32, #tpu.memory_space<vmem>>, %arg29: memref<1x16xf32, #tpu.memory_space<vmem>>, %arg30: memref<16x16xf32, #tpu.memory_space<vmem>>, %arg31: memref<2x16xf32, #tpu.memory_space<vmem>>) attributes {dimension_semantics = [], scalar_prefetch = 0 : i64, scratch_operands = 0 : i64, tpu.core_type = #tpu.core_type<tc>} {
    %c0 = arith.constant 0 : index
    %c0_0 = arith.constant 0 : index
    %0 = vector.load %arg0[%c0, %c0_0] : memref<16x16xf32, #tpu.memory_space<vmem>>, vector<16x16xf32>
    %c0_1 = arith.constant 0 : index
    %c0_2 = arith.constant 0 : index
    %1 = vector.load %arg3[%c0_1, %c0_2] : memref<16x384xf32, #tpu.memory_space<vmem>>, vector<16x384xf32>
    %cst = arith.constant dense<0.000000e+00> : vector<16x384xf32>
    %2 = tpu.matmul %0, %1, %cst {dimension_numbers = #tpu.dot_dimension_numbers<[1], [0], [0], [1], [0, 0, 1, 1], [], []>} : vector<16x16xf32>, vector<16x384xf32>, vector<16x384xf32> -> vector<16x384xf32>
    %c0_3 = arith.constant 0 : index
    %c0_4 = arith.constant 0 : index
    %3 = vector.load %arg5[%c0_3, %c0_4] : memref<1x384xf32, #tpu.memory_space<vmem>>, vector<1x384xf32>
    %4 = vector.broadcast %3 : vector<1x384xf32> to vector<16x384xf32>
    %5 = arith.addf %2, %4 : vector<16x384xf32>
    %c0_5 = arith.constant 0 : index
    %c0_6 = arith.constant 0 : index
    %6 = vector.load %arg4[%c0_5, %c0_6] : memref<128x384xf32, #tpu.memory_space<vmem>>, vector<128x384xf32>
    %c0_7 = arith.constant 0 : index
    %c0_8 = arith.constant 0 : index
    %7 = vector.load %arg6[%c0_7, %c0_8] : memref<1x384xf32, #tpu.memory_space<vmem>>, vector<1x384xf32>
    %8 = vector.shape_cast %7 : vector<1x384xf32> to vector<1x384xf32>
    %9 = vector.broadcast %8 : vector<1x384xf32> to vector<2x384xf32>
    %cst_9 = arith.constant 0.000000e+00 : f32
    %10 = vector.broadcast %cst_9 : f32 to vector<2x128xf32>
    %11 = vector.extract_strided_slice %5 {offsets = [0, 0], sizes = [2, 384], strides = [1, 1]} : vector<16x384xf32> to vector<2x384xf32>
    %cst_10 = arith.constant dense<0.000000e+00> : vector<2x384xf32>
    %12 = tpu.matmul %10, %6, %cst_10 {dimension_numbers = #tpu.dot_dimension_numbers<[1], [0], [0], [1], [0, 0, 1, 1], [], []>} : vector<2x128xf32>, vector<128x384xf32>, vector<2x384xf32> -> vector<2x384xf32>
    %13 = arith.addf %12, %9 : vector<2x384xf32>
    %14 = vector.extract_strided_slice %11 {offsets = [0, 0], sizes = [2, 128], strides = [1, 1]} : vector<2x384xf32> to vector<2x128xf32>
    %15 = vector.extract_strided_slice %13 {offsets = [0, 0], sizes = [2, 128], strides = [1, 1]} : vector<2x384xf32> to vector<2x128xf32>
    %16 = arith.addf %14, %15 : vector<2x128xf32>
    %17 = arith.negf %16 : vector<2x128xf32>
    %18 = math.exp %17 : vector<2x128xf32>
    %cst_11 = arith.constant 1.000000e+00 : f32
    %19 = vector.broadcast %cst_11 : f32 to vector<2x128xf32>
    %20 = arith.addf %19, %18 : vector<2x128xf32>
    %21 = arith.divf %19, %20 : vector<2x128xf32>
    %22 = vector.extract_strided_slice %11 {offsets = [0, 128], sizes = [2, 128], strides = [1, 1]} : vector<2x384xf32> to vector<2x128xf32>
    %23 = vector.extract_strided_slice %13 {offsets = [0, 128], sizes = [2, 128], strides = [1, 1]} : vector<2x384xf32> to vector<2x128xf32>
    %24 = arith.addf %22, %23 : vector<2x128xf32>
    %25 = arith.negf %24 : vector<2x128xf32>
    %26 = math.exp %25 : vector<2x128xf32>
    %cst_12 = arith.constant 1.000000e+00 : f32
    %27 = vector.broadcast %cst_12 : f32 to vector<2x128xf32>
    %28 = arith.addf %27, %26 : vector<2x128xf32>
    %29 = arith.divf %27, %28 : vector<2x128xf32>
    %30 = vector.extract_strided_slice %11 {offsets = [0, 256], sizes = [2, 128], strides = [1, 1]} : vector<2x384xf32> to vector<2x128xf32>
    %31 = vector.extract_strided_slice %13 {offsets = [0, 256], sizes = [2, 128], strides = [1, 1]} : vector<2x384xf32> to vector<2x128xf32>
    %32 = arith.mulf %21, %31 : vector<2x128xf32>
    %33 = arith.addf %30, %32 : vector<2x128xf32>
    %34 = math.tanh %33 : vector<2x128xf32>
    %cst_13 = arith.constant 1.000000e+00 : f32
    %35 = vector.broadcast %cst_13 : f32 to vector<2x128xf32>
    %36 = arith.subf %35, %29 : vector<2x128xf32>
    %37 = arith.mulf %36, %34 : vector<2x128xf32>
    %38 = arith.mulf %29, %10 : vector<2x128xf32>
    %39 = arith.addf %37, %38 : vector<2x128xf32>
    %40 = vector.extract_strided_slice %5 {offsets = [2, 0], sizes = [2, 384], strides = [1, 1]} : vector<16x384xf32> to vector<2x384xf32>
    %cst_14 = arith.constant dense<0.000000e+00> : vector<2x384xf32>
    %41 = tpu.matmul %39, %6, %cst_14 {dimension_numbers = #tpu.dot_dimension_numbers<[1], [0], [0], [1], [0, 0, 1, 1], [], []>} : vector<2x128xf32>, vector<128x384xf32>, vector<2x384xf32> -> vector<2x384xf32>
    %42 = arith.addf %41, %9 : vector<2x384xf32>
    %43 = vector.extract_strided_slice %40 {offsets = [0, 0], sizes = [2, 128], strides = [1, 1]} : vector<2x384xf32> to vector<2x128xf32>
    %44 = vector.extract_strided_slice %42 {offsets = [0, 0], sizes = [2, 128], strides = [1, 1]} : vector<2x384xf32> to vector<2x128xf32>
    %45 = arith.addf %43, %44 : vector<2x128xf32>
    %46 = arith.negf %45 : vector<2x128xf32>
    %47 = math.exp %46 : vector<2x128xf32>
    %cst_15 = arith.constant 1.000000e+00 : f32
    %48 = vector.broadcast %cst_15 : f32 to vector<2x128xf32>
    %49 = arith.addf %48, %47 : vector<2x128xf32>
    %50 = arith.divf %48, %49 : vector<2x128xf32>
    %51 = vector.extract_strided_slice %40 {offsets = [0, 128], sizes = [2, 128], strides = [1, 1]} : vector<2x384xf32> to vector<2x128xf32>
    %52 = vector.extract_strided_slice %42 {offsets = [0, 128], sizes = [2, 128], strides = [1, 1]} : vector<2x384xf32> to vector<2x128xf32>
    %53 = arith.addf %51, %52 : vector<2x128xf32>
    %54 = arith.negf %53 : vector<2x128xf32>
    %55 = math.exp %54 : vector<2x128xf32>
    %cst_16 = arith.constant 1.000000e+00 : f32
    %56 = vector.broadcast %cst_16 : f32 to vector<2x128xf32>
    %57 = arith.addf %56, %55 : vector<2x128xf32>
    %58 = arith.divf %56, %57 : vector<2x128xf32>
    %59 = vector.extract_strided_slice %40 {offsets = [0, 256], sizes = [2, 128], strides = [1, 1]} : vector<2x384xf32> to vector<2x128xf32>
    %60 = vector.extract_strided_slice %42 {offsets = [0, 256], sizes = [2, 128], strides = [1, 1]} : vector<2x384xf32> to vector<2x128xf32>
    %61 = arith.mulf %50, %60 : vector<2x128xf32>
    %62 = arith.addf %59, %61 : vector<2x128xf32>
    %63 = math.tanh %62 : vector<2x128xf32>
    %cst_17 = arith.constant 1.000000e+00 : f32
    %64 = vector.broadcast %cst_17 : f32 to vector<2x128xf32>
    %65 = arith.subf %64, %58 : vector<2x128xf32>
    %66 = arith.mulf %65, %63 : vector<2x128xf32>
    %67 = arith.mulf %58, %39 : vector<2x128xf32>
    %68 = arith.addf %66, %67 : vector<2x128xf32>
    %69 = vector.extract_strided_slice %5 {offsets = [4, 0], sizes = [2, 384], strides = [1, 1]} : vector<16x384xf32> to vector<2x384xf32>
    %cst_18 = arith.constant dense<0.000000e+00> : vector<2x384xf32>
    %70 = tpu.matmul %68, %6, %cst_18 {dimension_numbers = #tpu.dot_dimension_numbers<[1], [0], [0], [1], [0, 0, 1, 1], [], []>} : vector<2x128xf32>, vector<128x384xf32>, vector<2x384xf32> -> vector<2x384xf32>
    %71 = arith.addf %70, %9 : vector<2x384xf32>
    %72 = vector.extract_strided_slice %69 {offsets = [0, 0], sizes = [2, 128], strides = [1, 1]} : vector<2x384xf32> to vector<2x128xf32>
    %73 = vector.extract_strided_slice %71 {offsets = [0, 0], sizes = [2, 128], strides = [1, 1]} : vector<2x384xf32> to vector<2x128xf32>
    %74 = arith.addf %72, %73 : vector<2x128xf32>
    %75 = arith.negf %74 : vector<2x128xf32>
    %76 = math.exp %75 : vector<2x128xf32>
    %cst_19 = arith.constant 1.000000e+00 : f32
    %77 = vector.broadcast %cst_19 : f32 to vector<2x128xf32>
    %78 = arith.addf %77, %76 : vector<2x128xf32>
    %79 = arith.divf %77, %78 : vector<2x128xf32>
    %80 = vector.extract_strided_slice %69 {offsets = [0, 128], sizes = [2, 128], strides = [1, 1]} : vector<2x384xf32> to vector<2x128xf32>
    %81 = vector.extract_strided_slice %71 {offsets = [0, 128], sizes = [2, 128], strides = [1, 1]} : vector<2x384xf32> to vector<2x128xf32>
    %82 = arith.addf %80, %81 : vector<2x128xf32>
    %83 = arith.negf %82 : vector<2x128xf32>
    %84 = math.exp %83 : vector<2x128xf32>
    %cst_20 = arith.constant 1.000000e+00 : f32
    %85 = vector.broadcast %cst_20 : f32 to vector<2x128xf32>
    %86 = arith.addf %85, %84 : vector<2x128xf32>
    %87 = arith.divf %85, %86 : vector<2x128xf32>
    %88 = vector.extract_strided_slice %69 {offsets = [0, 256], sizes = [2, 128], strides = [1, 1]} : vector<2x384xf32> to vector<2x128xf32>
    %89 = vector.extract_strided_slice %71 {offsets = [0, 256], sizes = [2, 128], strides = [1, 1]} : vector<2x384xf32> to vector<2x128xf32>
    %90 = arith.mulf %79, %89 : vector<2x128xf32>
    %91 = arith.addf %88, %90 : vector<2x128xf32>
    %92 = math.tanh %91 : vector<2x128xf32>
    %cst_21 = arith.constant 1.000000e+00 : f32
    %93 = vector.broadcast %cst_21 : f32 to vector<2x128xf32>
    %94 = arith.subf %93, %87 : vector<2x128xf32>
    %95 = arith.mulf %94, %92 : vector<2x128xf32>
    %96 = arith.mulf %87, %68 : vector<2x128xf32>
    %97 = arith.addf %95, %96 : vector<2x128xf32>
    %98 = vector.extract_strided_slice %5 {offsets = [6, 0], sizes = [2, 384], strides = [1, 1]} : vector<16x384xf32> to vector<2x384xf32>
    %cst_22 = arith.constant dense<0.000000e+00> : vector<2x384xf32>
    %99 = tpu.matmul %97, %6, %cst_22 {dimension_numbers = #tpu.dot_dimension_numbers<[1], [0], [0], [1], [0, 0, 1, 1], [], []>} : vector<2x128xf32>, vector<128x384xf32>, vector<2x384xf32> -> vector<2x384xf32>
    %100 = arith.addf %99, %9 : vector<2x384xf32>
    %101 = vector.extract_strided_slice %98 {offsets = [0, 0], sizes = [2, 128], strides = [1, 1]} : vector<2x384xf32> to vector<2x128xf32>
    %102 = vector.extract_strided_slice %100 {offsets = [0, 0], sizes = [2, 128], strides = [1, 1]} : vector<2x384xf32> to vector<2x128xf32>
    %103 = arith.addf %101, %102 : vector<2x128xf32>
    %104 = arith.negf %103 : vector<2x128xf32>
    %105 = math.exp %104 : vector<2x128xf32>
    %cst_23 = arith.constant 1.000000e+00 : f32
    %106 = vector.broadcast %cst_23 : f32 to vector<2x128xf32>
    %107 = arith.addf %106, %105 : vector<2x128xf32>
    %108 = arith.divf %106, %107 : vector<2x128xf32>
    %109 = vector.extract_strided_slice %98 {offsets = [0, 128], sizes = [2, 128], strides = [1, 1]} : vector<2x384xf32> to vector<2x128xf32>
    %110 = vector.extract_strided_slice %100 {offsets = [0, 128], sizes = [2, 128], strides = [1, 1]} : vector<2x384xf32> to vector<2x128xf32>
    %111 = arith.addf %109, %110 : vector<2x128xf32>
    %112 = arith.negf %111 : vector<2x128xf32>
    %113 = math.exp %112 : vector<2x128xf32>
    %cst_24 = arith.constant 1.000000e+00 : f32
    %114 = vector.broadcast %cst_24 : f32 to vector<2x128xf32>
    %115 = arith.addf %114, %113 : vector<2x128xf32>
    %116 = arith.divf %114, %115 : vector<2x128xf32>
    %117 = vector.extract_strided_slice %98 {offsets = [0, 256], sizes = [2, 128], strides = [1, 1]} : vector<2x384xf32> to vector<2x128xf32>
    %118 = vector.extract_strided_slice %100 {offsets = [0, 256], sizes = [2, 128], strides = [1, 1]} : vector<2x384xf32> to vector<2x128xf32>
    %119 = arith.mulf %108, %118 : vector<2x128xf32>
    %120 = arith.addf %117, %119 : vector<2x128xf32>
    %121 = math.tanh %120 : vector<2x128xf32>
    %cst_25 = arith.constant 1.000000e+00 : f32
    %122 = vector.broadcast %cst_25 : f32 to vector<2x128xf32>
    %123 = arith.subf %122, %116 : vector<2x128xf32>
    %124 = arith.mulf %123, %121 : vector<2x128xf32>
    %125 = arith.mulf %116, %97 : vector<2x128xf32>
    %126 = arith.addf %124, %125 : vector<2x128xf32>
    %127 = vector.extract_strided_slice %5 {offsets = [8, 0], sizes = [2, 384], strides = [1, 1]} : vector<16x384xf32> to vector<2x384xf32>
    %cst_26 = arith.constant dense<0.000000e+00> : vector<2x384xf32>
    %128 = tpu.matmul %126, %6, %cst_26 {dimension_numbers = #tpu.dot_dimension_numbers<[1], [0], [0], [1], [0, 0, 1, 1], [], []>} : vector<2x128xf32>, vector<128x384xf32>, vector<2x384xf32> -> vector<2x384xf32>
    %129 = arith.addf %128, %9 : vector<2x384xf32>
    %130 = vector.extract_strided_slice %127 {offsets = [0, 0], sizes = [2, 128], strides = [1, 1]} : vector<2x384xf32> to vector<2x128xf32>
    %131 = vector.extract_strided_slice %129 {offsets = [0, 0], sizes = [2, 128], strides = [1, 1]} : vector<2x384xf32> to vector<2x128xf32>
    %132 = arith.addf %130, %131 : vector<2x128xf32>
    %133 = arith.negf %132 : vector<2x128xf32>
    %134 = math.exp %133 : vector<2x128xf32>
    %cst_27 = arith.constant 1.000000e+00 : f32
    %135 = vector.broadcast %cst_27 : f32 to vector<2x128xf32>
    %136 = arith.addf %135, %134 : vector<2x128xf32>
    %137 = arith.divf %135, %136 : vector<2x128xf32>
    %138 = vector.extract_strided_slice %127 {offsets = [0, 128], sizes = [2, 128], strides = [1, 1]} : vector<2x384xf32> to vector<2x128xf32>
    %139 = vector.extract_strided_slice %129 {offsets = [0, 128], sizes = [2, 128], strides = [1, 1]} : vector<2x384xf32> to vector<2x128xf32>
    %140 = arith.addf %138, %139 : vector<2x128xf32>
    %141 = arith.negf %140 : vector<2x128xf32>
    %142 = math.exp %141 : vector<2x128xf32>
    %cst_28 = arith.constant 1.000000e+00 : f32
    %143 = vector.broadcast %cst_28 : f32 to vector<2x128xf32>
    %144 = arith.addf %143, %142 : vector<2x128xf32>
    %145 = arith.divf %143, %144 : vector<2x128xf32>
    %146 = vector.extract_strided_slice %127 {offsets = [0, 256], sizes = [2, 128], strides = [1, 1]} : vector<2x384xf32> to vector<2x128xf32>
    %147 = vector.extract_strided_slice %129 {offsets = [0, 256], sizes = [2, 128], strides = [1, 1]} : vector<2x384xf32> to vector<2x128xf32>
    %148 = arith.mulf %137, %147 : vector<2x128xf32>
    %149 = arith.addf %146, %148 : vector<2x128xf32>
    %150 = math.tanh %149 : vector<2x128xf32>
    %cst_29 = arith.constant 1.000000e+00 : f32
    %151 = vector.broadcast %cst_29 : f32 to vector<2x128xf32>
    %152 = arith.subf %151, %145 : vector<2x128xf32>
    %153 = arith.mulf %152, %150 : vector<2x128xf32>
    %154 = arith.mulf %145, %126 : vector<2x128xf32>
    %155 = arith.addf %153, %154 : vector<2x128xf32>
    %156 = vector.extract_strided_slice %5 {offsets = [10, 0], sizes = [2, 384], strides = [1, 1]} : vector<16x384xf32> to vector<2x384xf32>
    %cst_30 = arith.constant dense<0.000000e+00> : vector<2x384xf32>
    %157 = tpu.matmul %155, %6, %cst_30 {dimension_numbers = #tpu.dot_dimension_numbers<[1], [0], [0], [1], [0, 0, 1, 1], [], []>} : vector<2x128xf32>, vector<128x384xf32>, vector<2x384xf32> -> vector<2x384xf32>
    %158 = arith.addf %157, %9 : vector<2x384xf32>
    %159 = vector.extract_strided_slice %156 {offsets = [0, 0], sizes = [2, 128], strides = [1, 1]} : vector<2x384xf32> to vector<2x128xf32>
    %160 = vector.extract_strided_slice %158 {offsets = [0, 0], sizes = [2, 128], strides = [1, 1]} : vector<2x384xf32> to vector<2x128xf32>
    %161 = arith.addf %159, %160 : vector<2x128xf32>
    %162 = arith.negf %161 : vector<2x128xf32>
    %163 = math.exp %162 : vector<2x128xf32>
    %cst_31 = arith.constant 1.000000e+00 : f32
    %164 = vector.broadcast %cst_31 : f32 to vector<2x128xf32>
    %165 = arith.addf %164, %163 : vector<2x128xf32>
    %166 = arith.divf %164, %165 : vector<2x128xf32>
    %167 = vector.extract_strided_slice %156 {offsets = [0, 128], sizes = [2, 128], strides = [1, 1]} : vector<2x384xf32> to vector<2x128xf32>
    %168 = vector.extract_strided_slice %158 {offsets = [0, 128], sizes = [2, 128], strides = [1, 1]} : vector<2x384xf32> to vector<2x128xf32>
    %169 = arith.addf %167, %168 : vector<2x128xf32>
    %170 = arith.negf %169 : vector<2x128xf32>
    %171 = math.exp %170 : vector<2x128xf32>
    %cst_32 = arith.constant 1.000000e+00 : f32
    %172 = vector.broadcast %cst_32 : f32 to vector<2x128xf32>
    %173 = arith.addf %172, %171 : vector<2x128xf32>
    %174 = arith.divf %172, %173 : vector<2x128xf32>
    %175 = vector.extract_strided_slice %156 {offsets = [0, 256], sizes = [2, 128], strides = [1, 1]} : vector<2x384xf32> to vector<2x128xf32>
    %176 = vector.extract_strided_slice %158 {offsets = [0, 256], sizes = [2, 128], strides = [1, 1]} : vector<2x384xf32> to vector<2x128xf32>
    %177 = arith.mulf %166, %176 : vector<2x128xf32>
    %178 = arith.addf %175, %177 : vector<2x128xf32>
    %179 = math.tanh %178 : vector<2x128xf32>
    %cst_33 = arith.constant 1.000000e+00 : f32
    %180 = vector.broadcast %cst_33 : f32 to vector<2x128xf32>
    %181 = arith.subf %180, %174 : vector<2x128xf32>
    %182 = arith.mulf %181, %179 : vector<2x128xf32>
    %183 = arith.mulf %174, %155 : vector<2x128xf32>
    %184 = arith.addf %182, %183 : vector<2x128xf32>
    %185 = vector.extract_strided_slice %5 {offsets = [12, 0], sizes = [2, 384], strides = [1, 1]} : vector<16x384xf32> to vector<2x384xf32>
    %cst_34 = arith.constant dense<0.000000e+00> : vector<2x384xf32>
    %186 = tpu.matmul %184, %6, %cst_34 {dimension_numbers = #tpu.dot_dimension_numbers<[1], [0], [0], [1], [0, 0, 1, 1], [], []>} : vector<2x128xf32>, vector<128x384xf32>, vector<2x384xf32> -> vector<2x384xf32>
    %187 = arith.addf %186, %9 : vector<2x384xf32>
    %188 = vector.extract_strided_slice %185 {offsets = [0, 0], sizes = [2, 128], strides = [1, 1]} : vector<2x384xf32> to vector<2x128xf32>
    %189 = vector.extract_strided_slice %187 {offsets = [0, 0], sizes = [2, 128], strides = [1, 1]} : vector<2x384xf32> to vector<2x128xf32>
    %190 = arith.addf %188, %189 : vector<2x128xf32>
    %191 = arith.negf %190 : vector<2x128xf32>
    %192 = math.exp %191 : vector<2x128xf32>
    %cst_35 = arith.constant 1.000000e+00 : f32
    %193 = vector.broadcast %cst_35 : f32 to vector<2x128xf32>
    %194 = arith.addf %193, %192 : vector<2x128xf32>
    %195 = arith.divf %193, %194 : vector<2x128xf32>
    %196 = vector.extract_strided_slice %185 {offsets = [0, 128], sizes = [2, 128], strides = [1, 1]} : vector<2x384xf32> to vector<2x128xf32>
    %197 = vector.extract_strided_slice %187 {offsets = [0, 128], sizes = [2, 128], strides = [1, 1]} : vector<2x384xf32> to vector<2x128xf32>
    %198 = arith.addf %196, %197 : vector<2x128xf32>
    %199 = arith.negf %198 : vector<2x128xf32>
    %200 = math.exp %199 : vector<2x128xf32>
    %cst_36 = arith.constant 1.000000e+00 : f32
    %201 = vector.broadcast %cst_36 : f32 to vector<2x128xf32>
    %202 = arith.addf %201, %200 : vector<2x128xf32>
    %203 = arith.divf %201, %202 : vector<2x128xf32>
    %204 = vector.extract_strided_slice %185 {offsets = [0, 256], sizes = [2, 128], strides = [1, 1]} : vector<2x384xf32> to vector<2x128xf32>
    %205 = vector.extract_strided_slice %187 {offsets = [0, 256], sizes = [2, 128], strides = [1, 1]} : vector<2x384xf32> to vector<2x128xf32>
    %206 = arith.mulf %195, %205 : vector<2x128xf32>
    %207 = arith.addf %204, %206 : vector<2x128xf32>
    %208 = math.tanh %207 : vector<2x128xf32>
    %cst_37 = arith.constant 1.000000e+00 : f32
    %209 = vector.broadcast %cst_37 : f32 to vector<2x128xf32>
    %210 = arith.subf %209, %203 : vector<2x128xf32>
    %211 = arith.mulf %210, %208 : vector<2x128xf32>
    %212 = arith.mulf %203, %184 : vector<2x128xf32>
    %213 = arith.addf %211, %212 : vector<2x128xf32>
    %214 = vector.extract_strided_slice %5 {offsets = [14, 0], sizes = [2, 384], strides = [1, 1]} : vector<16x384xf32> to vector<2x384xf32>
    %cst_38 = arith.constant dense<0.000000e+00> : vector<2x384xf32>
    %215 = tpu.matmul %213, %6, %cst_38 {dimension_numbers = #tpu.dot_dimension_numbers<[1], [0], [0], [1], [0, 0, 1, 1], [], []>} : vector<2x128xf32>, vector<128x384xf32>, vector<2x384xf32> -> vector<2x384xf32>
    %216 = arith.addf %215, %9 : vector<2x384xf32>
    %217 = vector.extract_strided_slice %214 {offsets = [0, 0], sizes = [2, 128], strides = [1, 1]} : vector<2x384xf32> to vector<2x128xf32>
    %218 = vector.extract_strided_slice %216 {offsets = [0, 0], sizes = [2, 128], strides = [1, 1]} : vector<2x384xf32> to vector<2x128xf32>
    %219 = arith.addf %217, %218 : vector<2x128xf32>
    %220 = arith.negf %219 : vector<2x128xf32>
    %221 = math.exp %220 : vector<2x128xf32>
    %cst_39 = arith.constant 1.000000e+00 : f32
    %222 = vector.broadcast %cst_39 : f32 to vector<2x128xf32>
    %223 = arith.addf %222, %221 : vector<2x128xf32>
    %224 = arith.divf %222, %223 : vector<2x128xf32>
    %225 = vector.extract_strided_slice %214 {offsets = [0, 128], sizes = [2, 128], strides = [1, 1]} : vector<2x384xf32> to vector<2x128xf32>
    %226 = vector.extract_strided_slice %216 {offsets = [0, 128], sizes = [2, 128], strides = [1, 1]} : vector<2x384xf32> to vector<2x128xf32>
    %227 = arith.addf %225, %226 : vector<2x128xf32>
    %228 = arith.negf %227 : vector<2x128xf32>
    %229 = math.exp %228 : vector<2x128xf32>
    %cst_40 = arith.constant 1.000000e+00 : f32
    %230 = vector.broadcast %cst_40 : f32 to vector<2x128xf32>
    %231 = arith.addf %230, %229 : vector<2x128xf32>
    %232 = arith.divf %230, %231 : vector<2x128xf32>
    %233 = vector.extract_strided_slice %214 {offsets = [0, 256], sizes = [2, 128], strides = [1, 1]} : vector<2x384xf32> to vector<2x128xf32>
    %234 = vector.extract_strided_slice %216 {offsets = [0, 256], sizes = [2, 128], strides = [1, 1]} : vector<2x384xf32> to vector<2x128xf32>
    %235 = arith.mulf %224, %234 : vector<2x128xf32>
    %236 = arith.addf %233, %235 : vector<2x128xf32>
    %237 = math.tanh %236 : vector<2x128xf32>
    %cst_41 = arith.constant 1.000000e+00 : f32
    %238 = vector.broadcast %cst_41 : f32 to vector<2x128xf32>
    %239 = arith.subf %238, %232 : vector<2x128xf32>
    %240 = arith.mulf %239, %237 : vector<2x128xf32>
    %241 = arith.mulf %232, %213 : vector<2x128xf32>
    %242 = arith.addf %240, %241 : vector<2x128xf32>
    %c0_42 = arith.constant 0 : index
    %c0_43 = arith.constant 0 : index
    %243 = vector.load %arg1[%c0_42, %c0_43] : memref<16x16xf32, #tpu.memory_space<vmem>>, vector<16x16xf32>
    %c0_44 = arith.constant 0 : index
    %c0_45 = arith.constant 0 : index
    %244 = vector.load %arg7[%c0_44, %c0_45] : memref<16x384xf32, #tpu.memory_space<vmem>>, vector<16x384xf32>
    %cst_46 = arith.constant dense<0.000000e+00> : vector<16x384xf32>
    %245 = tpu.matmul %243, %244, %cst_46 {dimension_numbers = #tpu.dot_dimension_numbers<[1], [0], [0], [1], [0, 0, 1, 1], [], []>} : vector<16x16xf32>, vector<16x384xf32>, vector<16x384xf32> -> vector<16x384xf32>
    %c0_47 = arith.constant 0 : index
    %c0_48 = arith.constant 0 : index
    %246 = vector.load %arg9[%c0_47, %c0_48] : memref<1x384xf32, #tpu.memory_space<vmem>>, vector<1x384xf32>
    %247 = vector.broadcast %246 : vector<1x384xf32> to vector<16x384xf32>
    %248 = arith.addf %245, %247 : vector<16x384xf32>
    %c0_49 = arith.constant 0 : index
    %c0_50 = arith.constant 0 : index
    %249 = vector.load %arg8[%c0_49, %c0_50] : memref<128x384xf32, #tpu.memory_space<vmem>>, vector<128x384xf32>
    %c0_51 = arith.constant 0 : index
    %c0_52 = arith.constant 0 : index
    %250 = vector.load %arg10[%c0_51, %c0_52] : memref<1x384xf32, #tpu.memory_space<vmem>>, vector<1x384xf32>
    %251 = vector.shape_cast %250 : vector<1x384xf32> to vector<1x384xf32>
    %252 = vector.broadcast %251 : vector<1x384xf32> to vector<2x384xf32>
    %cst_53 = arith.constant 0.000000e+00 : f32
    %253 = vector.broadcast %cst_53 : f32 to vector<2x128xf32>
    %254 = vector.extract_strided_slice %248 {offsets = [0, 0], sizes = [2, 384], strides = [1, 1]} : vector<16x384xf32> to vector<2x384xf32>
    %cst_54 = arith.constant dense<0.000000e+00> : vector<2x384xf32>
    %255 = tpu.matmul %253, %249, %cst_54 {dimension_numbers = #tpu.dot_dimension_numbers<[1], [0], [0], [1], [0, 0, 1, 1], [], []>} : vector<2x128xf32>, vector<128x384xf32>, vector<2x384xf32> -> vector<2x384xf32>
    %256 = arith.addf %255, %252 : vector<2x384xf32>
    %257 = vector.extract_strided_slice %254 {offsets = [0, 0], sizes = [2, 128], strides = [1, 1]} : vector<2x384xf32> to vector<2x128xf32>
    %258 = vector.extract_strided_slice %256 {offsets = [0, 0], sizes = [2, 128], strides = [1, 1]} : vector<2x384xf32> to vector<2x128xf32>
    %259 = arith.addf %257, %258 : vector<2x128xf32>
    %260 = arith.negf %259 : vector<2x128xf32>
    %261 = math.exp %260 : vector<2x128xf32>
    %cst_55 = arith.constant 1.000000e+00 : f32
    %262 = vector.broadcast %cst_55 : f32 to vector<2x128xf32>
    %263 = arith.addf %262, %261 : vector<2x128xf32>
    %264 = arith.divf %262, %263 : vector<2x128xf32>
    %265 = vector.extract_strided_slice %254 {offsets = [0, 128], sizes = [2, 128], strides = [1, 1]} : vector<2x384xf32> to vector<2x128xf32>
    %266 = vector.extract_strided_slice %256 {offsets = [0, 128], sizes = [2, 128], strides = [1, 1]} : vector<2x384xf32> to vector<2x128xf32>
    %267 = arith.addf %265, %266 : vector<2x128xf32>
    %268 = arith.negf %267 : vector<2x128xf32>
    %269 = math.exp %268 : vector<2x128xf32>
    %cst_56 = arith.constant 1.000000e+00 : f32
    %270 = vector.broadcast %cst_56 : f32 to vector<2x128xf32>
    %271 = arith.addf %270, %269 : vector<2x128xf32>
    %272 = arith.divf %270, %271 : vector<2x128xf32>
    %273 = vector.extract_strided_slice %254 {offsets = [0, 256], sizes = [2, 128], strides = [1, 1]} : vector<2x384xf32> to vector<2x128xf32>
    %274 = vector.extract_strided_slice %256 {offsets = [0, 256], sizes = [2, 128], strides = [1, 1]} : vector<2x384xf32> to vector<2x128xf32>
    %275 = arith.mulf %264, %274 : vector<2x128xf32>
    %276 = arith.addf %273, %275 : vector<2x128xf32>
    %277 = math.tanh %276 : vector<2x128xf32>
    %cst_57 = arith.constant 1.000000e+00 : f32
    %278 = vector.broadcast %cst_57 : f32 to vector<2x128xf32>
    %279 = arith.subf %278, %272 : vector<2x128xf32>
    %280 = arith.mulf %279, %277 : vector<2x128xf32>
    %281 = arith.mulf %272, %253 : vector<2x128xf32>
    %282 = arith.addf %280, %281 : vector<2x128xf32>
    %283 = vector.extract_strided_slice %248 {offsets = [2, 0], sizes = [2, 384], strides = [1, 1]} : vector<16x384xf32> to vector<2x384xf32>
    %cst_58 = arith.constant dense<0.000000e+00> : vector<2x384xf32>
    %284 = tpu.matmul %282, %249, %cst_58 {dimension_numbers = #tpu.dot_dimension_numbers<[1], [0], [0], [1], [0, 0, 1, 1], [], []>} : vector<2x128xf32>, vector<128x384xf32>, vector<2x384xf32> -> vector<2x384xf32>
    %285 = arith.addf %284, %252 : vector<2x384xf32>
    %286 = vector.extract_strided_slice %283 {offsets = [0, 0], sizes = [2, 128], strides = [1, 1]} : vector<2x384xf32> to vector<2x128xf32>
    %287 = vector.extract_strided_slice %285 {offsets = [0, 0], sizes = [2, 128], strides = [1, 1]} : vector<2x384xf32> to vector<2x128xf32>
    %288 = arith.addf %286, %287 : vector<2x128xf32>
    %289 = arith.negf %288 : vector<2x128xf32>
    %290 = math.exp %289 : vector<2x128xf32>
    %cst_59 = arith.constant 1.000000e+00 : f32
    %291 = vector.broadcast %cst_59 : f32 to vector<2x128xf32>
    %292 = arith.addf %291, %290 : vector<2x128xf32>
    %293 = arith.divf %291, %292 : vector<2x128xf32>
    %294 = vector.extract_strided_slice %283 {offsets = [0, 128], sizes = [2, 128], strides = [1, 1]} : vector<2x384xf32> to vector<2x128xf32>
    %295 = vector.extract_strided_slice %285 {offsets = [0, 128], sizes = [2, 128], strides = [1, 1]} : vector<2x384xf32> to vector<2x128xf32>
    %296 = arith.addf %294, %295 : vector<2x128xf32>
    %297 = arith.negf %296 : vector<2x128xf32>
    %298 = math.exp %297 : vector<2x128xf32>
    %cst_60 = arith.constant 1.000000e+00 : f32
    %299 = vector.broadcast %cst_60 : f32 to vector<2x128xf32>
    %300 = arith.addf %299, %298 : vector<2x128xf32>
    %301 = arith.divf %299, %300 : vector<2x128xf32>
    %302 = vector.extract_strided_slice %283 {offsets = [0, 256], sizes = [2, 128], strides = [1, 1]} : vector<2x384xf32> to vector<2x128xf32>
    %303 = vector.extract_strided_slice %285 {offsets = [0, 256], sizes = [2, 128], strides = [1, 1]} : vector<2x384xf32> to vector<2x128xf32>
    %304 = arith.mulf %293, %303 : vector<2x128xf32>
    %305 = arith.addf %302, %304 : vector<2x128xf32>
    %306 = math.tanh %305 : vector<2x128xf32>
    %cst_61 = arith.constant 1.000000e+00 : f32
    %307 = vector.broadcast %cst_61 : f32 to vector<2x128xf32>
    %308 = arith.subf %307, %301 : vector<2x128xf32>
    %309 = arith.mulf %308, %306 : vector<2x128xf32>
    %310 = arith.mulf %301, %282 : vector<2x128xf32>
    %311 = arith.addf %309, %310 : vector<2x128xf32>
    %312 = vector.extract_strided_slice %248 {offsets = [4, 0], sizes = [2, 384], strides = [1, 1]} : vector<16x384xf32> to vector<2x384xf32>
    %cst_62 = arith.constant dense<0.000000e+00> : vector<2x384xf32>
    %313 = tpu.matmul %311, %249, %cst_62 {dimension_numbers = #tpu.dot_dimension_numbers<[1], [0], [0], [1], [0, 0, 1, 1], [], []>} : vector<2x128xf32>, vector<128x384xf32>, vector<2x384xf32> -> vector<2x384xf32>
    %314 = arith.addf %313, %252 : vector<2x384xf32>
    %315 = vector.extract_strided_slice %312 {offsets = [0, 0], sizes = [2, 128], strides = [1, 1]} : vector<2x384xf32> to vector<2x128xf32>
    %316 = vector.extract_strided_slice %314 {offsets = [0, 0], sizes = [2, 128], strides = [1, 1]} : vector<2x384xf32> to vector<2x128xf32>
    %317 = arith.addf %315, %316 : vector<2x128xf32>
    %318 = arith.negf %317 : vector<2x128xf32>
    %319 = math.exp %318 : vector<2x128xf32>
    %cst_63 = arith.constant 1.000000e+00 : f32
    %320 = vector.broadcast %cst_63 : f32 to vector<2x128xf32>
    %321 = arith.addf %320, %319 : vector<2x128xf32>
    %322 = arith.divf %320, %321 : vector<2x128xf32>
    %323 = vector.extract_strided_slice %312 {offsets = [0, 128], sizes = [2, 128], strides = [1, 1]} : vector<2x384xf32> to vector<2x128xf32>
    %324 = vector.extract_strided_slice %314 {offsets = [0, 128], sizes = [2, 128], strides = [1, 1]} : vector<2x384xf32> to vector<2x128xf32>
    %325 = arith.addf %323, %324 : vector<2x128xf32>
    %326 = arith.negf %325 : vector<2x128xf32>
    %327 = math.exp %326 : vector<2x128xf32>
    %cst_64 = arith.constant 1.000000e+00 : f32
    %328 = vector.broadcast %cst_64 : f32 to vector<2x128xf32>
    %329 = arith.addf %328, %327 : vector<2x128xf32>
    %330 = arith.divf %328, %329 : vector<2x128xf32>
    %331 = vector.extract_strided_slice %312 {offsets = [0, 256], sizes = [2, 128], strides = [1, 1]} : vector<2x384xf32> to vector<2x128xf32>
    %332 = vector.extract_strided_slice %314 {offsets = [0, 256], sizes = [2, 128], strides = [1, 1]} : vector<2x384xf32> to vector<2x128xf32>
    %333 = arith.mulf %322, %332 : vector<2x128xf32>
    %334 = arith.addf %331, %333 : vector<2x128xf32>
    %335 = math.tanh %334 : vector<2x128xf32>
    %cst_65 = arith.constant 1.000000e+00 : f32
    %336 = vector.broadcast %cst_65 : f32 to vector<2x128xf32>
    %337 = arith.subf %336, %330 : vector<2x128xf32>
    %338 = arith.mulf %337, %335 : vector<2x128xf32>
    %339 = arith.mulf %330, %311 : vector<2x128xf32>
    %340 = arith.addf %338, %339 : vector<2x128xf32>
    %341 = vector.extract_strided_slice %248 {offsets = [6, 0], sizes = [2, 384], strides = [1, 1]} : vector<16x384xf32> to vector<2x384xf32>
    %cst_66 = arith.constant dense<0.000000e+00> : vector<2x384xf32>
    %342 = tpu.matmul %340, %249, %cst_66 {dimension_numbers = #tpu.dot_dimension_numbers<[1], [0], [0], [1], [0, 0, 1, 1], [], []>} : vector<2x128xf32>, vector<128x384xf32>, vector<2x384xf32> -> vector<2x384xf32>
    %343 = arith.addf %342, %252 : vector<2x384xf32>
    %344 = vector.extract_strided_slice %341 {offsets = [0, 0], sizes = [2, 128], strides = [1, 1]} : vector<2x384xf32> to vector<2x128xf32>
    %345 = vector.extract_strided_slice %343 {offsets = [0, 0], sizes = [2, 128], strides = [1, 1]} : vector<2x384xf32> to vector<2x128xf32>
    %346 = arith.addf %344, %345 : vector<2x128xf32>
    %347 = arith.negf %346 : vector<2x128xf32>
    %348 = math.exp %347 : vector<2x128xf32>
    %cst_67 = arith.constant 1.000000e+00 : f32
    %349 = vector.broadcast %cst_67 : f32 to vector<2x128xf32>
    %350 = arith.addf %349, %348 : vector<2x128xf32>
    %351 = arith.divf %349, %350 : vector<2x128xf32>
    %352 = vector.extract_strided_slice %341 {offsets = [0, 128], sizes = [2, 128], strides = [1, 1]} : vector<2x384xf32> to vector<2x128xf32>
    %353 = vector.extract_strided_slice %343 {offsets = [0, 128], sizes = [2, 128], strides = [1, 1]} : vector<2x384xf32> to vector<2x128xf32>
    %354 = arith.addf %352, %353 : vector<2x128xf32>
    %355 = arith.negf %354 : vector<2x128xf32>
    %356 = math.exp %355 : vector<2x128xf32>
    %cst_68 = arith.constant 1.000000e+00 : f32
    %357 = vector.broadcast %cst_68 : f32 to vector<2x128xf32>
    %358 = arith.addf %357, %356 : vector<2x128xf32>
    %359 = arith.divf %357, %358 : vector<2x128xf32>
    %360 = vector.extract_strided_slice %341 {offsets = [0, 256], sizes = [2, 128], strides = [1, 1]} : vector<2x384xf32> to vector<2x128xf32>
    %361 = vector.extract_strided_slice %343 {offsets = [0, 256], sizes = [2, 128], strides = [1, 1]} : vector<2x384xf32> to vector<2x128xf32>
    %362 = arith.mulf %351, %361 : vector<2x128xf32>
    %363 = arith.addf %360, %362 : vector<2x128xf32>
    %364 = math.tanh %363 : vector<2x128xf32>
    %cst_69 = arith.constant 1.000000e+00 : f32
    %365 = vector.broadcast %cst_69 : f32 to vector<2x128xf32>
    %366 = arith.subf %365, %359 : vector<2x128xf32>
    %367 = arith.mulf %366, %364 : vector<2x128xf32>
    %368 = arith.mulf %359, %340 : vector<2x128xf32>
    %369 = arith.addf %367, %368 : vector<2x128xf32>
    %370 = vector.extract_strided_slice %248 {offsets = [8, 0], sizes = [2, 384], strides = [1, 1]} : vector<16x384xf32> to vector<2x384xf32>
    %cst_70 = arith.constant dense<0.000000e+00> : vector<2x384xf32>
    %371 = tpu.matmul %369, %249, %cst_70 {dimension_numbers = #tpu.dot_dimension_numbers<[1], [0], [0], [1], [0, 0, 1, 1], [], []>} : vector<2x128xf32>, vector<128x384xf32>, vector<2x384xf32> -> vector<2x384xf32>
    %372 = arith.addf %371, %252 : vector<2x384xf32>
    %373 = vector.extract_strided_slice %370 {offsets = [0, 0], sizes = [2, 128], strides = [1, 1]} : vector<2x384xf32> to vector<2x128xf32>
    %374 = vector.extract_strided_slice %372 {offsets = [0, 0], sizes = [2, 128], strides = [1, 1]} : vector<2x384xf32> to vector<2x128xf32>
    %375 = arith.addf %373, %374 : vector<2x128xf32>
    %376 = arith.negf %375 : vector<2x128xf32>
    %377 = math.exp %376 : vector<2x128xf32>
    %cst_71 = arith.constant 1.000000e+00 : f32
    %378 = vector.broadcast %cst_71 : f32 to vector<2x128xf32>
    %379 = arith.addf %378, %377 : vector<2x128xf32>
    %380 = arith.divf %378, %379 : vector<2x128xf32>
    %381 = vector.extract_strided_slice %370 {offsets = [0, 128], sizes = [2, 128], strides = [1, 1]} : vector<2x384xf32> to vector<2x128xf32>
    %382 = vector.extract_strided_slice %372 {offsets = [0, 128], sizes = [2, 128], strides = [1, 1]} : vector<2x384xf32> to vector<2x128xf32>
    %383 = arith.addf %381, %382 : vector<2x128xf32>
    %384 = arith.negf %383 : vector<2x128xf32>
    %385 = math.exp %384 : vector<2x128xf32>
    %cst_72 = arith.constant 1.000000e+00 : f32
    %386 = vector.broadcast %cst_72 : f32 to vector<2x128xf32>
    %387 = arith.addf %386, %385 : vector<2x128xf32>
    %388 = arith.divf %386, %387 : vector<2x128xf32>
    %389 = vector.extract_strided_slice %370 {offsets = [0, 256], sizes = [2, 128], strides = [1, 1]} : vector<2x384xf32> to vector<2x128xf32>
    %390 = vector.extract_strided_slice %372 {offsets = [0, 256], sizes = [2, 128], strides = [1, 1]} : vector<2x384xf32> to vector<2x128xf32>
    %391 = arith.mulf %380, %390 : vector<2x128xf32>
    %392 = arith.addf %389, %391 : vector<2x128xf32>
    %393 = math.tanh %392 : vector<2x128xf32>
    %cst_73 = arith.constant 1.000000e+00 : f32
    %394 = vector.broadcast %cst_73 : f32 to vector<2x128xf32>
    %395 = arith.subf %394, %388 : vector<2x128xf32>
    %396 = arith.mulf %395, %393 : vector<2x128xf32>
    %397 = arith.mulf %388, %369 : vector<2x128xf32>
    %398 = arith.addf %396, %397 : vector<2x128xf32>
    %399 = vector.extract_strided_slice %248 {offsets = [10, 0], sizes = [2, 384], strides = [1, 1]} : vector<16x384xf32> to vector<2x384xf32>
    %cst_74 = arith.constant dense<0.000000e+00> : vector<2x384xf32>
    %400 = tpu.matmul %398, %249, %cst_74 {dimension_numbers = #tpu.dot_dimension_numbers<[1], [0], [0], [1], [0, 0, 1, 1], [], []>} : vector<2x128xf32>, vector<128x384xf32>, vector<2x384xf32> -> vector<2x384xf32>
    %401 = arith.addf %400, %252 : vector<2x384xf32>
    %402 = vector.extract_strided_slice %399 {offsets = [0, 0], sizes = [2, 128], strides = [1, 1]} : vector<2x384xf32> to vector<2x128xf32>
    %403 = vector.extract_strided_slice %401 {offsets = [0, 0], sizes = [2, 128], strides = [1, 1]} : vector<2x384xf32> to vector<2x128xf32>
    %404 = arith.addf %402, %403 : vector<2x128xf32>
    %405 = arith.negf %404 : vector<2x128xf32>
    %406 = math.exp %405 : vector<2x128xf32>
    %cst_75 = arith.constant 1.000000e+00 : f32
    %407 = vector.broadcast %cst_75 : f32 to vector<2x128xf32>
    %408 = arith.addf %407, %406 : vector<2x128xf32>
    %409 = arith.divf %407, %408 : vector<2x128xf32>
    %410 = vector.extract_strided_slice %399 {offsets = [0, 128], sizes = [2, 128], strides = [1, 1]} : vector<2x384xf32> to vector<2x128xf32>
    %411 = vector.extract_strided_slice %401 {offsets = [0, 128], sizes = [2, 128], strides = [1, 1]} : vector<2x384xf32> to vector<2x128xf32>
    %412 = arith.addf %410, %411 : vector<2x128xf32>
    %413 = arith.negf %412 : vector<2x128xf32>
    %414 = math.exp %413 : vector<2x128xf32>
    %cst_76 = arith.constant 1.000000e+00 : f32
    %415 = vector.broadcast %cst_76 : f32 to vector<2x128xf32>
    %416 = arith.addf %415, %414 : vector<2x128xf32>
    %417 = arith.divf %415, %416 : vector<2x128xf32>
    %418 = vector.extract_strided_slice %399 {offsets = [0, 256], sizes = [2, 128], strides = [1, 1]} : vector<2x384xf32> to vector<2x128xf32>
    %419 = vector.extract_strided_slice %401 {offsets = [0, 256], sizes = [2, 128], strides = [1, 1]} : vector<2x384xf32> to vector<2x128xf32>
    %420 = arith.mulf %409, %419 : vector<2x128xf32>
    %421 = arith.addf %418, %420 : vector<2x128xf32>
    %422 = math.tanh %421 : vector<2x128xf32>
    %cst_77 = arith.constant 1.000000e+00 : f32
    %423 = vector.broadcast %cst_77 : f32 to vector<2x128xf32>
    %424 = arith.subf %423, %417 : vector<2x128xf32>
    %425 = arith.mulf %424, %422 : vector<2x128xf32>
    %426 = arith.mulf %417, %398 : vector<2x128xf32>
    %427 = arith.addf %425, %426 : vector<2x128xf32>
    %428 = vector.extract_strided_slice %248 {offsets = [12, 0], sizes = [2, 384], strides = [1, 1]} : vector<16x384xf32> to vector<2x384xf32>
    %cst_78 = arith.constant dense<0.000000e+00> : vector<2x384xf32>
    %429 = tpu.matmul %427, %249, %cst_78 {dimension_numbers = #tpu.dot_dimension_numbers<[1], [0], [0], [1], [0, 0, 1, 1], [], []>} : vector<2x128xf32>, vector<128x384xf32>, vector<2x384xf32> -> vector<2x384xf32>
    %430 = arith.addf %429, %252 : vector<2x384xf32>
    %431 = vector.extract_strided_slice %428 {offsets = [0, 0], sizes = [2, 128], strides = [1, 1]} : vector<2x384xf32> to vector<2x128xf32>
    %432 = vector.extract_strided_slice %430 {offsets = [0, 0], sizes = [2, 128], strides = [1, 1]} : vector<2x384xf32> to vector<2x128xf32>
    %433 = arith.addf %431, %432 : vector<2x128xf32>
    %434 = arith.negf %433 : vector<2x128xf32>
    %435 = math.exp %434 : vector<2x128xf32>
    %cst_79 = arith.constant 1.000000e+00 : f32
    %436 = vector.broadcast %cst_79 : f32 to vector<2x128xf32>
    %437 = arith.addf %436, %435 : vector<2x128xf32>
    %438 = arith.divf %436, %437 : vector<2x128xf32>
    %439 = vector.extract_strided_slice %428 {offsets = [0, 128], sizes = [2, 128], strides = [1, 1]} : vector<2x384xf32> to vector<2x128xf32>
    %440 = vector.extract_strided_slice %430 {offsets = [0, 128], sizes = [2, 128], strides = [1, 1]} : vector<2x384xf32> to vector<2x128xf32>
    %441 = arith.addf %439, %440 : vector<2x128xf32>
    %442 = arith.negf %441 : vector<2x128xf32>
    %443 = math.exp %442 : vector<2x128xf32>
    %cst_80 = arith.constant 1.000000e+00 : f32
    %444 = vector.broadcast %cst_80 : f32 to vector<2x128xf32>
    %445 = arith.addf %444, %443 : vector<2x128xf32>
    %446 = arith.divf %444, %445 : vector<2x128xf32>
    %447 = vector.extract_strided_slice %428 {offsets = [0, 256], sizes = [2, 128], strides = [1, 1]} : vector<2x384xf32> to vector<2x128xf32>
    %448 = vector.extract_strided_slice %430 {offsets = [0, 256], sizes = [2, 128], strides = [1, 1]} : vector<2x384xf32> to vector<2x128xf32>
    %449 = arith.mulf %438, %448 : vector<2x128xf32>
    %450 = arith.addf %447, %449 : vector<2x128xf32>
    %451 = math.tanh %450 : vector<2x128xf32>
    %cst_81 = arith.constant 1.000000e+00 : f32
    %452 = vector.broadcast %cst_81 : f32 to vector<2x128xf32>
    %453 = arith.subf %452, %446 : vector<2x128xf32>
    %454 = arith.mulf %453, %451 : vector<2x128xf32>
    %455 = arith.mulf %446, %427 : vector<2x128xf32>
    %456 = arith.addf %454, %455 : vector<2x128xf32>
    %457 = vector.extract_strided_slice %248 {offsets = [14, 0], sizes = [2, 384], strides = [1, 1]} : vector<16x384xf32> to vector<2x384xf32>
    %cst_82 = arith.constant dense<0.000000e+00> : vector<2x384xf32>
    %458 = tpu.matmul %456, %249, %cst_82 {dimension_numbers = #tpu.dot_dimension_numbers<[1], [0], [0], [1], [0, 0, 1, 1], [], []>} : vector<2x128xf32>, vector<128x384xf32>, vector<2x384xf32> -> vector<2x384xf32>
    %459 = arith.addf %458, %252 : vector<2x384xf32>
    %460 = vector.extract_strided_slice %457 {offsets = [0, 0], sizes = [2, 128], strides = [1, 1]} : vector<2x384xf32> to vector<2x128xf32>
    %461 = vector.extract_strided_slice %459 {offsets = [0, 0], sizes = [2, 128], strides = [1, 1]} : vector<2x384xf32> to vector<2x128xf32>
    %462 = arith.addf %460, %461 : vector<2x128xf32>
    %463 = arith.negf %462 : vector<2x128xf32>
    %464 = math.exp %463 : vector<2x128xf32>
    %cst_83 = arith.constant 1.000000e+00 : f32
    %465 = vector.broadcast %cst_83 : f32 to vector<2x128xf32>
    %466 = arith.addf %465, %464 : vector<2x128xf32>
    %467 = arith.divf %465, %466 : vector<2x128xf32>
    %468 = vector.extract_strided_slice %457 {offsets = [0, 128], sizes = [2, 128], strides = [1, 1]} : vector<2x384xf32> to vector<2x128xf32>
    %469 = vector.extract_strided_slice %459 {offsets = [0, 128], sizes = [2, 128], strides = [1, 1]} : vector<2x384xf32> to vector<2x128xf32>
    %470 = arith.addf %468, %469 : vector<2x128xf32>
    %471 = arith.negf %470 : vector<2x128xf32>
    %472 = math.exp %471 : vector<2x128xf32>
    %cst_84 = arith.constant 1.000000e+00 : f32
    %473 = vector.broadcast %cst_84 : f32 to vector<2x128xf32>
    %474 = arith.addf %473, %472 : vector<2x128xf32>
    %475 = arith.divf %473, %474 : vector<2x128xf32>
    %476 = vector.extract_strided_slice %457 {offsets = [0, 256], sizes = [2, 128], strides = [1, 1]} : vector<2x384xf32> to vector<2x128xf32>
    %477 = vector.extract_strided_slice %459 {offsets = [0, 256], sizes = [2, 128], strides = [1, 1]} : vector<2x384xf32> to vector<2x128xf32>
    %478 = arith.mulf %467, %477 : vector<2x128xf32>
    %479 = arith.addf %476, %478 : vector<2x128xf32>
    %480 = math.tanh %479 : vector<2x128xf32>
    %cst_85 = arith.constant 1.000000e+00 : f32
    %481 = vector.broadcast %cst_85 : f32 to vector<2x128xf32>
    %482 = arith.subf %481, %475 : vector<2x128xf32>
    %483 = arith.mulf %482, %480 : vector<2x128xf32>
    %484 = arith.mulf %475, %456 : vector<2x128xf32>
    %485 = arith.addf %483, %484 : vector<2x128xf32>
    %c0_86 = arith.constant 0 : index
    %c0_87 = arith.constant 0 : index
    %486 = vector.load %arg11[%c0_86, %c0_87] : memref<128x128xf32, #tpu.memory_space<vmem>>, vector<128x128xf32>
    %cst_88 = arith.constant dense<0.000000e+00> : vector<2x128xf32>
    %487 = tpu.matmul %242, %486, %cst_88 {dimension_numbers = #tpu.dot_dimension_numbers<[1], [0], [0], [1], [0, 0, 1, 1], [], []>} : vector<2x128xf32>, vector<128x128xf32>, vector<2x128xf32> -> vector<2x128xf32>
    %c0_89 = arith.constant 0 : index
    %c0_90 = arith.constant 0 : index
    %488 = vector.load %arg12[%c0_89, %c0_90] : memref<128x128xf32, #tpu.memory_space<vmem>>, vector<128x128xf32>
    %cst_91 = arith.constant dense<0.000000e+00> : vector<2x128xf32>
    %489 = tpu.matmul %485, %488, %cst_91 {dimension_numbers = #tpu.dot_dimension_numbers<[1], [0], [0], [1], [0, 0, 1, 1], [], []>} : vector<2x128xf32>, vector<128x128xf32>, vector<2x128xf32> -> vector<2x128xf32>
    %490 = arith.addf %487, %489 : vector<2x128xf32>
    %c0_92 = arith.constant 0 : index
    %c0_93 = arith.constant 0 : index
    %491 = vector.load %arg13[%c0_92, %c0_93] : memref<1x128xf32, #tpu.memory_space<vmem>>, vector<1x128xf32>
    %492 = vector.broadcast %491 : vector<1x128xf32> to vector<2x128xf32>
    %493 = arith.addf %490, %492 : vector<2x128xf32>
    %494 = math.tanh %493 : vector<2x128xf32>
    %c0_94 = arith.constant 0 : index
    %c0_95 = arith.constant 0 : index
    %495 = vector.load %arg14[%c0_94, %c0_95] : memref<128x128xf32, #tpu.memory_space<vmem>>, vector<128x128xf32>
    %cst_96 = arith.constant dense<0.000000e+00> : vector<2x128xf32>
    %496 = tpu.matmul %494, %495, %cst_96 {dimension_numbers = #tpu.dot_dimension_numbers<[1], [0], [0], [1], [0, 0, 1, 1], [], []>} : vector<2x128xf32>, vector<128x128xf32>, vector<2x128xf32> -> vector<2x128xf32>
    %c0_97 = arith.constant 0 : index
    %c0_98 = arith.constant 0 : index
    %497 = vector.load %arg15[%c0_97, %c0_98] : memref<1x128xf32, #tpu.memory_space<vmem>>, vector<1x128xf32>
    %498 = vector.broadcast %497 : vector<1x128xf32> to vector<2x128xf32>
    %499 = arith.addf %496, %498 : vector<2x128xf32>
    %500 = math.tanh %499 : vector<2x128xf32>
    %c0_99 = arith.constant 0 : index
    %c0_100 = arith.constant 0 : index
    %501 = vector.load %arg16[%c0_99, %c0_100] : memref<128x16xf32, #tpu.memory_space<vmem>>, vector<128x16xf32>
    %cst_101 = arith.constant dense<0.000000e+00> : vector<2x16xf32>
    %502 = tpu.matmul %500, %501, %cst_101 {dimension_numbers = #tpu.dot_dimension_numbers<[1], [0], [0], [1], [0, 0, 1, 1], [], []>} : vector<2x128xf32>, vector<128x16xf32>, vector<2x16xf32> -> vector<2x16xf32>
    %c0_102 = arith.constant 0 : index
    %c0_103 = arith.constant 0 : index
    %503 = vector.load %arg17[%c0_102, %c0_103] : memref<1x16xf32, #tpu.memory_space<vmem>>, vector<1x16xf32>
    %504 = vector.broadcast %503 : vector<1x16xf32> to vector<2x16xf32>
    %505 = arith.addf %502, %504 : vector<2x16xf32>
    %c0_104 = arith.constant 0 : index
    %c0_105 = arith.constant 0 : index
    %506 = vector.load %arg31[%c0_104, %c0_105] : memref<2x16xf32, #tpu.memory_space<vmem>>, vector<2x16xf32>
    tpu.vector_store %arg31[%c0_104, %c0_105], %505 {strides = array<i32>} : memref<2x16xf32, #tpu.memory_space<vmem>>, vector<2x16xf32>,
    %507 = vector.extract_strided_slice %505 {offsets = [0, 0], sizes = [2, 8], strides = [1, 1]} : vector<2x16xf32> to vector<2x8xf32>
    %508 = vector.extract_strided_slice %505 {offsets = [0, 8], sizes = [2, 8], strides = [1, 1]} : vector<2x16xf32> to vector<2x8xf32>
    %c0_106 = arith.constant 0 : index
    %c0_107 = arith.constant 0 : index
    %509 = vector.load %arg2[%c0_106, %c0_107] : memref<2x8xf32, #tpu.memory_space<vmem>>, vector<2x8xf32>
    %cst_108 = arith.constant 5.000000e-01 : f32
    %510 = vector.broadcast %cst_108 : f32 to vector<2x8xf32>
    %511 = arith.mulf %510, %508 : vector<2x8xf32>
    %512 = math.exp %511 : vector<2x8xf32>
    %513 = arith.mulf %509, %512 : vector<2x8xf32>
    %514 = arith.addf %507, %513 : vector<2x8xf32>
    %c0_109 = arith.constant 0 : index
    %c0_110 = arith.constant 0 : index
    %515 = vector.load %arg18[%c0_109, %c0_110] : memref<128x384xf32, #tpu.memory_space<vmem>>, vector<128x384xf32>
    %cst_111 = arith.constant dense<0.000000e+00> : vector<2x384xf32>
    %516 = tpu.matmul %242, %515, %cst_111 {dimension_numbers = #tpu.dot_dimension_numbers<[1], [0], [0], [1], [0, 0, 1, 1], [], []>} : vector<2x128xf32>, vector<128x384xf32>, vector<2x384xf32> -> vector<2x384xf32>
    %c0_112 = arith.constant 0 : index
    %c0_113 = arith.constant 0 : index
    %517 = vector.load %arg19[%c0_112, %c0_113] : memref<8x384xf32, #tpu.memory_space<vmem>>, vector<8x384xf32>
    %cst_114 = arith.constant dense<0.000000e+00> : vector<2x384xf32>
    %518 = tpu.matmul %514, %517, %cst_114 {dimension_numbers = #tpu.dot_dimension_numbers<[1], [0], [0], [1], [0, 0, 1, 1], [], []>} : vector<2x8xf32>, vector<8x384xf32>, vector<2x384xf32> -> vector<2x384xf32>
    %519 = arith.addf %516, %518 : vector<2x384xf32>
    %c0_115 = arith.constant 0 : index
    %c0_116 = arith.constant 0 : index
    %520 = vector.load %arg22[%c0_115, %c0_116] : memref<1x384xf32, #tpu.memory_space<vmem>>, vector<1x384xf32>
    %521 = vector.broadcast %520 : vector<1x384xf32> to vector<2x384xf32>
    %522 = arith.addf %519, %521 : vector<2x384xf32>
    %c0_117 = arith.constant 0 : index
    %c0_118 = arith.constant 0 : index
    %523 = vector.load %arg20[%c0_117, %c0_118] : memref<16x384xf32, #tpu.memory_space<vmem>>, vector<16x384xf32>
    %c0_119 = arith.constant 0 : index
    %c0_120 = arith.constant 0 : index
    %524 = vector.load %arg21[%c0_119, %c0_120] : memref<128x384xf32, #tpu.memory_space<vmem>>, vector<128x384xf32>
    %c0_121 = arith.constant 0 : index
    %c0_122 = arith.constant 0 : index
    %525 = vector.load %arg23[%c0_121, %c0_122] : memref<1x384xf32, #tpu.memory_space<vmem>>, vector<1x384xf32>
    %526 = vector.shape_cast %525 : vector<1x384xf32> to vector<1x384xf32>
    %527 = vector.broadcast %526 : vector<1x384xf32> to vector<2x384xf32>
    %c0_123 = arith.constant 0 : index
    %c0_124 = arith.constant 0 : index
    %528 = vector.load %arg24[%c0_123, %c0_124] : memref<128x128xf32, #tpu.memory_space<vmem>>, vector<128x128xf32>
    %c0_125 = arith.constant 0 : index
    %c0_126 = arith.constant 0 : index
    %529 = vector.load %arg25[%c0_125, %c0_126] : memref<1x128xf32, #tpu.memory_space<vmem>>, vector<1x128xf32>
    %c0_127 = arith.constant 0 : index
    %c0_128 = arith.constant 0 : index
    %530 = vector.load %arg26[%c0_127, %c0_128] : memref<128x128xf32, #tpu.memory_space<vmem>>, vector<128x128xf32>
    %c0_129 = arith.constant 0 : index
    %c0_130 = arith.constant 0 : index
    %531 = vector.load %arg27[%c0_129, %c0_130] : memref<1x128xf32, #tpu.memory_space<vmem>>, vector<1x128xf32>
    %c0_131 = arith.constant 0 : index
    %c0_132 = arith.constant 0 : index
    %532 = vector.load %arg28[%c0_131, %c0_132] : memref<128x16xf32, #tpu.memory_space<vmem>>, vector<128x16xf32>
    %c0_133 = arith.constant 0 : index
    %c0_134 = arith.constant 0 : index
    %533 = vector.load %arg29[%c0_133, %c0_134] : memref<1x16xf32, #tpu.memory_space<vmem>>, vector<1x16xf32>
    %cst_135 = arith.constant 0.000000e+00 : f32
    %534 = vector.broadcast %cst_135 : f32 to vector<2x128xf32>
    %c14 = arith.constant 14 : index
    %c0_136 = arith.constant 0 : index
    %535 = vector.load %arg0[%c14, %c0_136] : memref<16x16xf32, #tpu.memory_space<vmem>>, vector<2x16xf32>
    %cst_137 = arith.constant dense<0.000000e+00> : vector<2x384xf32>
    %536 = tpu.matmul %535, %523, %cst_137 {dimension_numbers = #tpu.dot_dimension_numbers<[1], [0], [0], [1], [0, 0, 1, 1], [], []>} : vector<2x16xf32>, vector<16x384xf32>, vector<2x384xf32> -> vector<2x384xf32>
    %537 = arith.addf %522, %536 : vector<2x384xf32>
    %cst_138 = arith.constant dense<0.000000e+00> : vector<2x384xf32>
    %538 = tpu.matmul %534, %524, %cst_138 {dimension_numbers = #tpu.dot_dimension_numbers<[1], [0], [0], [1], [0, 0, 1, 1], [], []>} : vector<2x128xf32>, vector<128x384xf32>, vector<2x384xf32> -> vector<2x384xf32>
    %539 = arith.addf %538, %527 : vector<2x384xf32>
    %540 = vector.extract_strided_slice %537 {offsets = [0, 0], sizes = [2, 128], strides = [1, 1]} : vector<2x384xf32> to vector<2x128xf32>
    %541 = vector.extract_strided_slice %539 {offsets = [0, 0], sizes = [2, 128], strides = [1, 1]} : vector<2x384xf32> to vector<2x128xf32>
    %542 = arith.addf %540, %541 : vector<2x128xf32>
    %543 = arith.negf %542 : vector<2x128xf32>
    %544 = math.exp %543 : vector<2x128xf32>
    %cst_139 = arith.constant 1.000000e+00 : f32
    %545 = vector.broadcast %cst_139 : f32 to vector<2x128xf32>
    %546 = arith.addf %545, %544 : vector<2x128xf32>
    %547 = arith.divf %545, %546 : vector<2x128xf32>
    %548 = vector.extract_strided_slice %537 {offsets = [0, 128], sizes = [2, 128], strides = [1, 1]} : vector<2x384xf32> to vector<2x128xf32>
    %549 = vector.extract_strided_slice %539 {offsets = [0, 128], sizes = [2, 128], strides = [1, 1]} : vector<2x384xf32> to vector<2x128xf32>
    %550 = arith.addf %548, %549 : vector<2x128xf32>
    %551 = arith.negf %550 : vector<2x128xf32>
    %552 = math.exp %551 : vector<2x128xf32>
    %cst_140 = arith.constant 1.000000e+00 : f32
    %553 = vector.broadcast %cst_140 : f32 to vector<2x128xf32>
    %554 = arith.addf %553, %552 : vector<2x128xf32>
    %555 = arith.divf %553, %554 : vector<2x128xf32>
    %556 = vector.extract_strided_slice %537 {offsets = [0, 256], sizes = [2, 128], strides = [1, 1]} : vector<2x384xf32> to vector<2x128xf32>
    %557 = vector.extract_strided_slice %539 {offsets = [0, 256], sizes = [2, 128], strides = [1, 1]} : vector<2x384xf32> to vector<2x128xf32>
    %558 = arith.mulf %547, %557 : vector<2x128xf32>
    %559 = arith.addf %556, %558 : vector<2x128xf32>
    %560 = math.tanh %559 : vector<2x128xf32>
    %cst_141 = arith.constant 1.000000e+00 : f32
    %561 = vector.broadcast %cst_141 : f32 to vector<2x128xf32>
    %562 = arith.subf %561, %555 : vector<2x128xf32>
    %563 = arith.mulf %562, %560 : vector<2x128xf32>
    %564 = arith.mulf %555, %534 : vector<2x128xf32>
    %565 = arith.addf %563, %564 : vector<2x128xf32>
    %cst_142 = arith.constant dense<0.000000e+00> : vector<2x128xf32>
    %566 = tpu.matmul %565, %528, %cst_142 {dimension_numbers = #tpu.dot_dimension_numbers<[1], [0], [0], [1], [0, 0, 1, 1], [], []>} : vector<2x128xf32>, vector<128x128xf32>, vector<2x128xf32> -> vector<2x128xf32>
    %567 = vector.broadcast %529 : vector<1x128xf32> to vector<2x128xf32>
    %568 = arith.addf %566, %567 : vector<2x128xf32>
    %569 = math.tanh %568 : vector<2x128xf32>
    %cst_143 = arith.constant dense<0.000000e+00> : vector<2x128xf32>
    %570 = tpu.matmul %569, %530, %cst_143 {dimension_numbers = #tpu.dot_dimension_numbers<[1], [0], [0], [1], [0, 0, 1, 1], [], []>} : vector<2x128xf32>, vector<128x128xf32>, vector<2x128xf32> -> vector<2x128xf32>
    %571 = vector.broadcast %531 : vector<1x128xf32> to vector<2x128xf32>
    %572 = arith.addf %570, %571 : vector<2x128xf32>
    %573 = math.tanh %572 : vector<2x128xf32>
    %cst_144 = arith.constant dense<0.000000e+00> : vector<2x16xf32>
    %574 = tpu.matmul %573, %532, %cst_144 {dimension_numbers = #tpu.dot_dimension_numbers<[1], [0], [0], [1], [0, 0, 1, 1], [], []>} : vector<2x128xf32>, vector<128x16xf32>, vector<2x16xf32> -> vector<2x16xf32>
    %575 = vector.broadcast %533 : vector<1x16xf32> to vector<2x16xf32>
    %576 = arith.addf %574, %575 : vector<2x16xf32>
    %cst_145 = arith.constant dense<0.000000e+00> : vector<2x384xf32>
    %577 = tpu.matmul %576, %523, %cst_145 {dimension_numbers = #tpu.dot_dimension_numbers<[1], [0], [0], [1], [0, 0, 1, 1], [], []>} : vector<2x16xf32>, vector<16x384xf32>, vector<2x384xf32> -> vector<2x384xf32>
    %578 = arith.addf %522, %577 : vector<2x384xf32>
    %cst_146 = arith.constant dense<0.000000e+00> : vector<2x384xf32>
    %579 = tpu.matmul %565, %524, %cst_146 {dimension_numbers = #tpu.dot_dimension_numbers<[1], [0], [0], [1], [0, 0, 1, 1], [], []>} : vector<2x128xf32>, vector<128x384xf32>, vector<2x384xf32> -> vector<2x384xf32>
    %580 = arith.addf %579, %527 : vector<2x384xf32>
    %581 = vector.extract_strided_slice %578 {offsets = [0, 0], sizes = [2, 128], strides = [1, 1]} : vector<2x384xf32> to vector<2x128xf32>
    %582 = vector.extract_strided_slice %580 {offsets = [0, 0], sizes = [2, 128], strides = [1, 1]} : vector<2x384xf32> to vector<2x128xf32>
    %583 = arith.addf %581, %582 : vector<2x128xf32>
    %584 = arith.negf %583 : vector<2x128xf32>
    %585 = math.exp %584 : vector<2x128xf32>
    %cst_147 = arith.constant 1.000000e+00 : f32
    %586 = vector.broadcast %cst_147 : f32 to vector<2x128xf32>
    %587 = arith.addf %586, %585 : vector<2x128xf32>
    %588 = arith.divf %586, %587 : vector<2x128xf32>
    %589 = vector.extract_strided_slice %578 {offsets = [0, 128], sizes = [2, 128], strides = [1, 1]} : vector<2x384xf32> to vector<2x128xf32>
    %590 = vector.extract_strided_slice %580 {offsets = [0, 128], sizes = [2, 128], strides = [1, 1]} : vector<2x384xf32> to vector<2x128xf32>
    %591 = arith.addf %589, %590 : vector<2x128xf32>
    %592 = arith.negf %591 : vector<2x128xf32>
    %593 = math.exp %592 : vector<2x128xf32>
    %cst_148 = arith.constant 1.000000e+00 : f32
    %594 = vector.broadcast %cst_148 : f32 to vector<2x128xf32>
    %595 = arith.addf %594, %593 : vector<2x128xf32>
    %596 = arith.divf %594, %595 : vector<2x128xf32>
    %597 = vector.extract_strided_slice %578 {offsets = [0, 256], sizes = [2, 128], strides = [1, 1]} : vector<2x384xf32> to vector<2x128xf32>
    %598 = vector.extract_strided_slice %580 {offsets = [0, 256], sizes = [2, 128], strides = [1, 1]} : vector<2x384xf32> to vector<2x128xf32>
    %599 = arith.mulf %588, %598 : vector<2x128xf32>
    %600 = arith.addf %597, %599 : vector<2x128xf32>
    %601 = math.tanh %600 : vector<2x128xf32>
    %cst_149 = arith.constant 1.000000e+00 : f32
    %602 = vector.broadcast %cst_149 : f32 to vector<2x128xf32>
    %603 = arith.subf %602, %596 : vector<2x128xf32>
    %604 = arith.mulf %603, %601 : vector<2x128xf32>
    %605 = arith.mulf %596, %565 : vector<2x128xf32>
    %606 = arith.addf %604, %605 : vector<2x128xf32>
    %cst_150 = arith.constant dense<0.000000e+00> : vector<2x128xf32>
    %607 = tpu.matmul %606, %528, %cst_150 {dimension_numbers = #tpu.dot_dimension_numbers<[1], [0], [0], [1], [0, 0, 1, 1], [], []>} : vector<2x128xf32>, vector<128x128xf32>, vector<2x128xf32> -> vector<2x128xf32>
    %608 = vector.broadcast %529 : vector<1x128xf32> to vector<2x128xf32>
    %609 = arith.addf %607, %608 : vector<2x128xf32>
    %610 = math.tanh %609 : vector<2x128xf32>
    %cst_151 = arith.constant dense<0.000000e+00> : vector<2x128xf32>
    %611 = tpu.matmul %610, %530, %cst_151 {dimension_numbers = #tpu.dot_dimension_numbers<[1], [0], [0], [1], [0, 0, 1, 1], [], []>} : vector<2x128xf32>, vector<128x128xf32>, vector<2x128xf32> -> vector<2x128xf32>
    %612 = vector.broadcast %531 : vector<1x128xf32> to vector<2x128xf32>
    %613 = arith.addf %611, %612 : vector<2x128xf32>
    %614 = math.tanh %613 : vector<2x128xf32>
    %cst_152 = arith.constant dense<0.000000e+00> : vector<2x16xf32>
    %615 = tpu.matmul %614, %532, %cst_152 {dimension_numbers = #tpu.dot_dimension_numbers<[1], [0], [0], [1], [0, 0, 1, 1], [], []>} : vector<2x128xf32>, vector<128x16xf32>, vector<2x16xf32> -> vector<2x16xf32>
    %616 = vector.broadcast %533 : vector<1x16xf32> to vector<2x16xf32>
    %617 = arith.addf %615, %616 : vector<2x16xf32>
    %cst_153 = arith.constant dense<0.000000e+00> : vector<2x384xf32>
    %618 = tpu.matmul %617, %523, %cst_153 {dimension_numbers = #tpu.dot_dimension_numbers<[1], [0], [0], [1], [0, 0, 1, 1], [], []>} : vector<2x16xf32>, vector<16x384xf32>, vector<2x384xf32> -> vector<2x384xf32>
    %619 = arith.addf %522, %618 : vector<2x384xf32>
    %cst_154 = arith.constant dense<0.000000e+00> : vector<2x384xf32>
    %620 = tpu.matmul %606, %524, %cst_154 {dimension_numbers = #tpu.dot_dimension_numbers<[1], [0], [0], [1], [0, 0, 1, 1], [], []>} : vector<2x128xf32>, vector<128x384xf32>, vector<2x384xf32> -> vector<2x384xf32>
    %621 = arith.addf %620, %527 : vector<2x384xf32>
    %622 = vector.extract_strided_slice %619 {offsets = [0, 0], sizes = [2, 128], strides = [1, 1]} : vector<2x384xf32> to vector<2x128xf32>
    %623 = vector.extract_strided_slice %621 {offsets = [0, 0], sizes = [2, 128], strides = [1, 1]} : vector<2x384xf32> to vector<2x128xf32>
    %624 = arith.addf %622, %623 : vector<2x128xf32>
    %625 = arith.negf %624 : vector<2x128xf32>
    %626 = math.exp %625 : vector<2x128xf32>
    %cst_155 = arith.constant 1.000000e+00 : f32
    %627 = vector.broadcast %cst_155 : f32 to vector<2x128xf32>
    %628 = arith.addf %627, %626 : vector<2x128xf32>
    %629 = arith.divf %627, %628 : vector<2x128xf32>
    %630 = vector.extract_strided_slice %619 {offsets = [0, 128], sizes = [2, 128], strides = [1, 1]} : vector<2x384xf32> to vector<2x128xf32>
    %631 = vector.extract_strided_slice %621 {offsets = [0, 128], sizes = [2, 128], strides = [1, 1]} : vector<2x384xf32> to vector<2x128xf32>
    %632 = arith.addf %630, %631 : vector<2x128xf32>
    %633 = arith.negf %632 : vector<2x128xf32>
    %634 = math.exp %633 : vector<2x128xf32>
    %cst_156 = arith.constant 1.000000e+00 : f32
    %635 = vector.broadcast %cst_156 : f32 to vector<2x128xf32>
    %636 = arith.addf %635, %634 : vector<2x128xf32>
    %637 = arith.divf %635, %636 : vector<2x128xf32>
    %638 = vector.extract_strided_slice %619 {offsets = [0, 256], sizes = [2, 128], strides = [1, 1]} : vector<2x384xf32> to vector<2x128xf32>
    %639 = vector.extract_strided_slice %621 {offsets = [0, 256], sizes = [2, 128], strides = [1, 1]} : vector<2x384xf32> to vector<2x128xf32>
    %640 = arith.mulf %629, %639 : vector<2x128xf32>
    %641 = arith.addf %638, %640 : vector<2x128xf32>
    %642 = math.tanh %641 : vector<2x128xf32>
    %cst_157 = arith.constant 1.000000e+00 : f32
    %643 = vector.broadcast %cst_157 : f32 to vector<2x128xf32>
    %644 = arith.subf %643, %637 : vector<2x128xf32>
    %645 = arith.mulf %644, %642 : vector<2x128xf32>
    %646 = arith.mulf %637, %606 : vector<2x128xf32>
    %647 = arith.addf %645, %646 : vector<2x128xf32>
    %cst_158 = arith.constant dense<0.000000e+00> : vector<2x128xf32>
    %648 = tpu.matmul %647, %528, %cst_158 {dimension_numbers = #tpu.dot_dimension_numbers<[1], [0], [0], [1], [0, 0, 1, 1], [], []>} : vector<2x128xf32>, vector<128x128xf32>, vector<2x128xf32> -> vector<2x128xf32>
    %649 = vector.broadcast %529 : vector<1x128xf32> to vector<2x128xf32>
    %650 = arith.addf %648, %649 : vector<2x128xf32>
    %651 = math.tanh %650 : vector<2x128xf32>
    %cst_159 = arith.constant dense<0.000000e+00> : vector<2x128xf32>
    %652 = tpu.matmul %651, %530, %cst_159 {dimension_numbers = #tpu.dot_dimension_numbers<[1], [0], [0], [1], [0, 0, 1, 1], [], []>} : vector<2x128xf32>, vector<128x128xf32>, vector<2x128xf32> -> vector<2x128xf32>
    %653 = vector.broadcast %531 : vector<1x128xf32> to vector<2x128xf32>
    %654 = arith.addf %652, %653 : vector<2x128xf32>
    %655 = math.tanh %654 : vector<2x128xf32>
    %cst_160 = arith.constant dense<0.000000e+00> : vector<2x16xf32>
    %656 = tpu.matmul %655, %532, %cst_160 {dimension_numbers = #tpu.dot_dimension_numbers<[1], [0], [0], [1], [0, 0, 1, 1], [], []>} : vector<2x128xf32>, vector<128x16xf32>, vector<2x16xf32> -> vector<2x16xf32>
    %657 = vector.broadcast %533 : vector<1x16xf32> to vector<2x16xf32>
    %658 = arith.addf %656, %657 : vector<2x16xf32>
    %cst_161 = arith.constant dense<0.000000e+00> : vector<2x384xf32>
    %659 = tpu.matmul %658, %523, %cst_161 {dimension_numbers = #tpu.dot_dimension_numbers<[1], [0], [0], [1], [0, 0, 1, 1], [], []>} : vector<2x16xf32>, vector<16x384xf32>, vector<2x384xf32> -> vector<2x384xf32>
    %660 = arith.addf %522, %659 : vector<2x384xf32>
    %cst_162 = arith.constant dense<0.000000e+00> : vector<2x384xf32>
    %661 = tpu.matmul %647, %524, %cst_162 {dimension_numbers = #tpu.dot_dimension_numbers<[1], [0], [0], [1], [0, 0, 1, 1], [], []>} : vector<2x128xf32>, vector<128x384xf32>, vector<2x384xf32> -> vector<2x384xf32>
    %662 = arith.addf %661, %527 : vector<2x384xf32>
    %663 = vector.extract_strided_slice %660 {offsets = [0, 0], sizes = [2, 128], strides = [1, 1]} : vector<2x384xf32> to vector<2x128xf32>
    %664 = vector.extract_strided_slice %662 {offsets = [0, 0], sizes = [2, 128], strides = [1, 1]} : vector<2x384xf32> to vector<2x128xf32>
    %665 = arith.addf %663, %664 : vector<2x128xf32>
    %666 = arith.negf %665 : vector<2x128xf32>
    %667 = math.exp %666 : vector<2x128xf32>
    %cst_163 = arith.constant 1.000000e+00 : f32
    %668 = vector.broadcast %cst_163 : f32 to vector<2x128xf32>
    %669 = arith.addf %668, %667 : vector<2x128xf32>
    %670 = arith.divf %668, %669 : vector<2x128xf32>
    %671 = vector.extract_strided_slice %660 {offsets = [0, 128], sizes = [2, 128], strides = [1, 1]} : vector<2x384xf32> to vector<2x128xf32>
    %672 = vector.extract_strided_slice %662 {offsets = [0, 128], sizes = [2, 128], strides = [1, 1]} : vector<2x384xf32> to vector<2x128xf32>
    %673 = arith.addf %671, %672 : vector<2x128xf32>
    %674 = arith.negf %673 : vector<2x128xf32>
    %675 = math.exp %674 : vector<2x128xf32>
    %cst_164 = arith.constant 1.000000e+00 : f32
    %676 = vector.broadcast %cst_164 : f32 to vector<2x128xf32>
    %677 = arith.addf %676, %675 : vector<2x128xf32>
    %678 = arith.divf %676, %677 : vector<2x128xf32>
    %679 = vector.extract_strided_slice %660 {offsets = [0, 256], sizes = [2, 128], strides = [1, 1]} : vector<2x384xf32> to vector<2x128xf32>
    %680 = vector.extract_strided_slice %662 {offsets = [0, 256], sizes = [2, 128], strides = [1, 1]} : vector<2x384xf32> to vector<2x128xf32>
    %681 = arith.mulf %670, %680 : vector<2x128xf32>
    %682 = arith.addf %679, %681 : vector<2x128xf32>
    %683 = math.tanh %682 : vector<2x128xf32>
    %cst_165 = arith.constant 1.000000e+00 : f32
    %684 = vector.broadcast %cst_165 : f32 to vector<2x128xf32>
    %685 = arith.subf %684, %678 : vector<2x128xf32>
    %686 = arith.mulf %685, %683 : vector<2x128xf32>
    %687 = arith.mulf %678, %647 : vector<2x128xf32>
    %688 = arith.addf %686, %687 : vector<2x128xf32>
    %cst_166 = arith.constant dense<0.000000e+00> : vector<2x128xf32>
    %689 = tpu.matmul %688, %528, %cst_166 {dimension_numbers = #tpu.dot_dimension_numbers<[1], [0], [0], [1], [0, 0, 1, 1], [], []>} : vector<2x128xf32>, vector<128x128xf32>, vector<2x128xf32> -> vector<2x128xf32>
    %690 = vector.broadcast %529 : vector<1x128xf32> to vector<2x128xf32>
    %691 = arith.addf %689, %690 : vector<2x128xf32>
    %692 = math.tanh %691 : vector<2x128xf32>
    %cst_167 = arith.constant dense<0.000000e+00> : vector<2x128xf32>
    %693 = tpu.matmul %692, %530, %cst_167 {dimension_numbers = #tpu.dot_dimension_numbers<[1], [0], [0], [1], [0, 0, 1, 1], [], []>} : vector<2x128xf32>, vector<128x128xf32>, vector<2x128xf32> -> vector<2x128xf32>
    %694 = vector.broadcast %531 : vector<1x128xf32> to vector<2x128xf32>
    %695 = arith.addf %693, %694 : vector<2x128xf32>
    %696 = math.tanh %695 : vector<2x128xf32>
    %cst_168 = arith.constant dense<0.000000e+00> : vector<2x16xf32>
    %697 = tpu.matmul %696, %532, %cst_168 {dimension_numbers = #tpu.dot_dimension_numbers<[1], [0], [0], [1], [0, 0, 1, 1], [], []>} : vector<2x128xf32>, vector<128x16xf32>, vector<2x16xf32> -> vector<2x16xf32>
    %698 = vector.broadcast %533 : vector<1x16xf32> to vector<2x16xf32>
    %699 = arith.addf %697, %698 : vector<2x16xf32>
    %cst_169 = arith.constant dense<0.000000e+00> : vector<2x384xf32>
    %700 = tpu.matmul %699, %523, %cst_169 {dimension_numbers = #tpu.dot_dimension_numbers<[1], [0], [0], [1], [0, 0, 1, 1], [], []>} : vector<2x16xf32>, vector<16x384xf32>, vector<2x384xf32> -> vector<2x384xf32>
    %701 = arith.addf %522, %700 : vector<2x384xf32>
    %cst_170 = arith.constant dense<0.000000e+00> : vector<2x384xf32>
    %702 = tpu.matmul %688, %524, %cst_170 {dimension_numbers = #tpu.dot_dimension_numbers<[1], [0], [0], [1], [0, 0, 1, 1], [], []>} : vector<2x128xf32>, vector<128x384xf32>, vector<2x384xf32> -> vector<2x384xf32>
    %703 = arith.addf %702, %527 : vector<2x384xf32>
    %704 = vector.extract_strided_slice %701 {offsets = [0, 0], sizes = [2, 128], strides = [1, 1]} : vector<2x384xf32> to vector<2x128xf32>
    %705 = vector.extract_strided_slice %703 {offsets = [0, 0], sizes = [2, 128], strides = [1, 1]} : vector<2x384xf32> to vector<2x128xf32>
    %706 = arith.addf %704, %705 : vector<2x128xf32>
    %707 = arith.negf %706 : vector<2x128xf32>
    %708 = math.exp %707 : vector<2x128xf32>
    %cst_171 = arith.constant 1.000000e+00 : f32
    %709 = vector.broadcast %cst_171 : f32 to vector<2x128xf32>
    %710 = arith.addf %709, %708 : vector<2x128xf32>
    %711 = arith.divf %709, %710 : vector<2x128xf32>
    %712 = vector.extract_strided_slice %701 {offsets = [0, 128], sizes = [2, 128], strides = [1, 1]} : vector<2x384xf32> to vector<2x128xf32>
    %713 = vector.extract_strided_slice %703 {offsets = [0, 128], sizes = [2, 128], strides = [1, 1]} : vector<2x384xf32> to vector<2x128xf32>
    %714 = arith.addf %712, %713 : vector<2x128xf32>
    %715 = arith.negf %714 : vector<2x128xf32>
    %716 = math.exp %715 : vector<2x128xf32>
    %cst_172 = arith.constant 1.000000e+00 : f32
    %717 = vector.broadcast %cst_172 : f32 to vector<2x128xf32>
    %718 = arith.addf %717, %716 : vector<2x128xf32>
    %719 = arith.divf %717, %718 : vector<2x128xf32>
    %720 = vector.extract_strided_slice %701 {offsets = [0, 256], sizes = [2, 128], strides = [1, 1]} : vector<2x384xf32> to vector<2x128xf32>
    %721 = vector.extract_strided_slice %703 {offsets = [0, 256], sizes = [2, 128], strides = [1, 1]} : vector<2x384xf32> to vector<2x128xf32>
    %722 = arith.mulf %711, %721 : vector<2x128xf32>
    %723 = arith.addf %720, %722 : vector<2x128xf32>
    %724 = math.tanh %723 : vector<2x128xf32>
    %cst_173 = arith.constant 1.000000e+00 : f32
    %725 = vector.broadcast %cst_173 : f32 to vector<2x128xf32>
    %726 = arith.subf %725, %719 : vector<2x128xf32>
    %727 = arith.mulf %726, %724 : vector<2x128xf32>
    %728 = arith.mulf %719, %688 : vector<2x128xf32>
    %729 = arith.addf %727, %728 : vector<2x128xf32>
    %cst_174 = arith.constant dense<0.000000e+00> : vector<2x128xf32>
    %730 = tpu.matmul %729, %528, %cst_174 {dimension_numbers = #tpu.dot_dimension_numbers<[1], [0], [0], [1], [0, 0, 1, 1], [], []>} : vector<2x128xf32>, vector<128x128xf32>, vector<2x128xf32> -> vector<2x128xf32>
    %731 = vector.broadcast %529 : vector<1x128xf32> to vector<2x128xf32>
    %732 = arith.addf %730, %731 : vector<2x128xf32>
    %733 = math.tanh %732 : vector<2x128xf32>
    %cst_175 = arith.constant dense<0.000000e+00> : vector<2x128xf32>
    %734 = tpu.matmul %733, %530, %cst_175 {dimension_numbers = #tpu.dot_dimension_numbers<[1], [0], [0], [1], [0, 0, 1, 1], [], []>} : vector<2x128xf32>, vector<128x128xf32>, vector<2x128xf32> -> vector<2x128xf32>
    %735 = vector.broadcast %531 : vector<1x128xf32> to vector<2x128xf32>
    %736 = arith.addf %734, %735 : vector<2x128xf32>
    %737 = math.tanh %736 : vector<2x128xf32>
    %cst_176 = arith.constant dense<0.000000e+00> : vector<2x16xf32>
    %738 = tpu.matmul %737, %532, %cst_176 {dimension_numbers = #tpu.dot_dimension_numbers<[1], [0], [0], [1], [0, 0, 1, 1], [], []>} : vector<2x128xf32>, vector<128x16xf32>, vector<2x16xf32> -> vector<2x16xf32>
    %739 = vector.broadcast %533 : vector<1x16xf32> to vector<2x16xf32>
    %740 = arith.addf %738, %739 : vector<2x16xf32>
    %cst_177 = arith.constant dense<0.000000e+00> : vector<2x384xf32>
    %741 = tpu.matmul %740, %523, %cst_177 {dimension_numbers = #tpu.dot_dimension_numbers<[1], [0], [0], [1], [0, 0, 1, 1], [], []>} : vector<2x16xf32>, vector<16x384xf32>, vector<2x384xf32> -> vector<2x384xf32>
    %742 = arith.addf %522, %741 : vector<2x384xf32>
    %cst_178 = arith.constant dense<0.000000e+00> : vector<2x384xf32>
    %743 = tpu.matmul %729, %524, %cst_178 {dimension_numbers = #tpu.dot_dimension_numbers<[1], [0], [0], [1], [0, 0, 1, 1], [], []>} : vector<2x128xf32>, vector<128x384xf32>, vector<2x384xf32> -> vector<2x384xf32>
    %744 = arith.addf %743, %527 : vector<2x384xf32>
    %745 = vector.extract_strided_slice %742 {offsets = [0, 0], sizes = [2, 128], strides = [1, 1]} : vector<2x384xf32> to vector<2x128xf32>
    %746 = vector.extract_strided_slice %744 {offsets = [0, 0], sizes = [2, 128], strides = [1, 1]} : vector<2x384xf32> to vector<2x128xf32>
    %747 = arith.addf %745, %746 : vector<2x128xf32>
    %748 = arith.negf %747 : vector<2x128xf32>
    %749 = math.exp %748 : vector<2x128xf32>
    %cst_179 = arith.constant 1.000000e+00 : f32
    %750 = vector.broadcast %cst_179 : f32 to vector<2x128xf32>
    %751 = arith.addf %750, %749 : vector<2x128xf32>
    %752 = arith.divf %750, %751 : vector<2x128xf32>
    %753 = vector.extract_strided_slice %742 {offsets = [0, 128], sizes = [2, 128], strides = [1, 1]} : vector<2x384xf32> to vector<2x128xf32>
    %754 = vector.extract_strided_slice %744 {offsets = [0, 128], sizes = [2, 128], strides = [1, 1]} : vector<2x384xf32> to vector<2x128xf32>
    %755 = arith.addf %753, %754 : vector<2x128xf32>
    %756 = arith.negf %755 : vector<2x128xf32>
    %757 = math.exp %756 : vector<2x128xf32>
    %cst_180 = arith.constant 1.000000e+00 : f32
    %758 = vector.broadcast %cst_180 : f32 to vector<2x128xf32>
    %759 = arith.addf %758, %757 : vector<2x128xf32>
    %760 = arith.divf %758, %759 : vector<2x128xf32>
    %761 = vector.extract_strided_slice %742 {offsets = [0, 256], sizes = [2, 128], strides = [1, 1]} : vector<2x384xf32> to vector<2x128xf32>
    %762 = vector.extract_strided_slice %744 {offsets = [0, 256], sizes = [2, 128], strides = [1, 1]} : vector<2x384xf32> to vector<2x128xf32>
    %763 = arith.mulf %752, %762 : vector<2x128xf32>
    %764 = arith.addf %761, %763 : vector<2x128xf32>
    %765 = math.tanh %764 : vector<2x128xf32>
    %cst_181 = arith.constant 1.000000e+00 : f32
    %766 = vector.broadcast %cst_181 : f32 to vector<2x128xf32>
    %767 = arith.subf %766, %760 : vector<2x128xf32>
    %768 = arith.mulf %767, %765 : vector<2x128xf32>
    %769 = arith.mulf %760, %729 : vector<2x128xf32>
    %770 = arith.addf %768, %769 : vector<2x128xf32>
    %cst_182 = arith.constant dense<0.000000e+00> : vector<2x128xf32>
    %771 = tpu.matmul %770, %528, %cst_182 {dimension_numbers = #tpu.dot_dimension_numbers<[1], [0], [0], [1], [0, 0, 1, 1], [], []>} : vector<2x128xf32>, vector<128x128xf32>, vector<2x128xf32> -> vector<2x128xf32>
    %772 = vector.broadcast %529 : vector<1x128xf32> to vector<2x128xf32>
    %773 = arith.addf %771, %772 : vector<2x128xf32>
    %774 = math.tanh %773 : vector<2x128xf32>
    %cst_183 = arith.constant dense<0.000000e+00> : vector<2x128xf32>
    %775 = tpu.matmul %774, %530, %cst_183 {dimension_numbers = #tpu.dot_dimension_numbers<[1], [0], [0], [1], [0, 0, 1, 1], [], []>} : vector<2x128xf32>, vector<128x128xf32>, vector<2x128xf32> -> vector<2x128xf32>
    %776 = vector.broadcast %531 : vector<1x128xf32> to vector<2x128xf32>
    %777 = arith.addf %775, %776 : vector<2x128xf32>
    %778 = math.tanh %777 : vector<2x128xf32>
    %cst_184 = arith.constant dense<0.000000e+00> : vector<2x16xf32>
    %779 = tpu.matmul %778, %532, %cst_184 {dimension_numbers = #tpu.dot_dimension_numbers<[1], [0], [0], [1], [0, 0, 1, 1], [], []>} : vector<2x128xf32>, vector<128x16xf32>, vector<2x16xf32> -> vector<2x16xf32>
    %780 = vector.broadcast %533 : vector<1x16xf32> to vector<2x16xf32>
    %781 = arith.addf %779, %780 : vector<2x16xf32>
    %cst_185 = arith.constant dense<0.000000e+00> : vector<2x384xf32>
    %782 = tpu.matmul %781, %523, %cst_185 {dimension_numbers = #tpu.dot_dimension_numbers<[1], [0], [0], [1], [0, 0, 1, 1], [], []>} : vector<2x16xf32>, vector<16x384xf32>, vector<2x384xf32> -> vector<2x384xf32>
    %783 = arith.addf %522, %782 : vector<2x384xf32>
    %cst_186 = arith.constant dense<0.000000e+00> : vector<2x384xf32>
    %784 = tpu.matmul %770, %524, %cst_186 {dimension_numbers = #tpu.dot_dimension_numbers<[1], [0], [0], [1], [0, 0, 1, 1], [], []>} : vector<2x128xf32>, vector<128x384xf32>, vector<2x384xf32> -> vector<2x384xf32>
    %785 = arith.addf %784, %527 : vector<2x384xf32>
    %786 = vector.extract_strided_slice %783 {offsets = [0, 0], sizes = [2, 128], strides = [1, 1]} : vector<2x384xf32> to vector<2x128xf32>
    %787 = vector.extract_strided_slice %785 {offsets = [0, 0], sizes = [2, 128], strides = [1, 1]} : vector<2x384xf32> to vector<2x128xf32>
    %788 = arith.addf %786, %787 : vector<2x128xf32>
    %789 = arith.negf %788 : vector<2x128xf32>
    %790 = math.exp %789 : vector<2x128xf32>
    %cst_187 = arith.constant 1.000000e+00 : f32
    %791 = vector.broadcast %cst_187 : f32 to vector<2x128xf32>
    %792 = arith.addf %791, %790 : vector<2x128xf32>
    %793 = arith.divf %791, %792 : vector<2x128xf32>
    %794 = vector.extract_strided_slice %783 {offsets = [0, 128], sizes = [2, 128], strides = [1, 1]} : vector<2x384xf32> to vector<2x128xf32>
    %795 = vector.extract_strided_slice %785 {offsets = [0, 128], sizes = [2, 128], strides = [1, 1]} : vector<2x384xf32> to vector<2x128xf32>
    %796 = arith.addf %794, %795 : vector<2x128xf32>
    %797 = arith.negf %796 : vector<2x128xf32>
    %798 = math.exp %797 : vector<2x128xf32>
    %cst_188 = arith.constant 1.000000e+00 : f32
    %799 = vector.broadcast %cst_188 : f32 to vector<2x128xf32>
    %800 = arith.addf %799, %798 : vector<2x128xf32>
    %801 = arith.divf %799, %800 : vector<2x128xf32>
    %802 = vector.extract_strided_slice %783 {offsets = [0, 256], sizes = [2, 128], strides = [1, 1]} : vector<2x384xf32> to vector<2x128xf32>
    %803 = vector.extract_strided_slice %785 {offsets = [0, 256], sizes = [2, 128], strides = [1, 1]} : vector<2x384xf32> to vector<2x128xf32>
    %804 = arith.mulf %793, %803 : vector<2x128xf32>
    %805 = arith.addf %802, %804 : vector<2x128xf32>
    %806 = math.tanh %805 : vector<2x128xf32>
    %cst_189 = arith.constant 1.000000e+00 : f32
    %807 = vector.broadcast %cst_189 : f32 to vector<2x128xf32>
    %808 = arith.subf %807, %801 : vector<2x128xf32>
    %809 = arith.mulf %808, %806 : vector<2x128xf32>
    %810 = arith.mulf %801, %770 : vector<2x128xf32>
    %811 = arith.addf %809, %810 : vector<2x128xf32>
    %cst_190 = arith.constant dense<0.000000e+00> : vector<2x128xf32>
    %812 = tpu.matmul %811, %528, %cst_190 {dimension_numbers = #tpu.dot_dimension_numbers<[1], [0], [0], [1], [0, 0, 1, 1], [], []>} : vector<2x128xf32>, vector<128x128xf32>, vector<2x128xf32> -> vector<2x128xf32>
    %813 = vector.broadcast %529 : vector<1x128xf32> to vector<2x128xf32>
    %814 = arith.addf %812, %813 : vector<2x128xf32>
    %815 = math.tanh %814 : vector<2x128xf32>
    %cst_191 = arith.constant dense<0.000000e+00> : vector<2x128xf32>
    %816 = tpu.matmul %815, %530, %cst_191 {dimension_numbers = #tpu.dot_dimension_numbers<[1], [0], [0], [1], [0, 0, 1, 1], [], []>} : vector<2x128xf32>, vector<128x128xf32>, vector<2x128xf32> -> vector<2x128xf32>
    %817 = vector.broadcast %531 : vector<1x128xf32> to vector<2x128xf32>
    %818 = arith.addf %816, %817 : vector<2x128xf32>
    %819 = math.tanh %818 : vector<2x128xf32>
    %cst_192 = arith.constant dense<0.000000e+00> : vector<2x16xf32>
    %820 = tpu.matmul %819, %532, %cst_192 {dimension_numbers = #tpu.dot_dimension_numbers<[1], [0], [0], [1], [0, 0, 1, 1], [], []>} : vector<2x128xf32>, vector<128x16xf32>, vector<2x16xf32> -> vector<2x16xf32>
    %821 = vector.broadcast %533 : vector<1x16xf32> to vector<2x16xf32>
    %822 = arith.addf %820, %821 : vector<2x16xf32>
    %cst_193 = arith.constant dense<0.000000e+00> : vector<2x384xf32>
    %823 = tpu.matmul %822, %523, %cst_193 {dimension_numbers = #tpu.dot_dimension_numbers<[1], [0], [0], [1], [0, 0, 1, 1], [], []>} : vector<2x16xf32>, vector<16x384xf32>, vector<2x384xf32> -> vector<2x384xf32>
    %824 = arith.addf %522, %823 : vector<2x384xf32>
    %cst_194 = arith.constant dense<0.000000e+00> : vector<2x384xf32>
    %825 = tpu.matmul %811, %524, %cst_194 {dimension_numbers = #tpu.dot_dimension_numbers<[1], [0], [0], [1], [0, 0, 1, 1], [], []>} : vector<2x128xf32>, vector<128x384xf32>, vector<2x384xf32> -> vector<2x384xf32>
    %826 = arith.addf %825, %527 : vector<2x384xf32>
    %827 = vector.extract_strided_slice %824 {offsets = [0, 0], sizes = [2, 128], strides = [1, 1]} : vector<2x384xf32> to vector<2x128xf32>
    %828 = vector.extract_strided_slice %826 {offsets = [0, 0], sizes = [2, 128], strides = [1, 1]} : vector<2x384xf32> to vector<2x128xf32>
    %829 = arith.addf %827, %828 : vector<2x128xf32>
    %830 = arith.negf %829 : vector<2x128xf32>
    %831 = math.exp %830 : vector<2x128xf32>
    %cst_195 = arith.constant 1.000000e+00 : f32
    %832 = vector.broadcast %cst_195 : f32 to vector<2x128xf32>
    %833 = arith.addf %832, %831 : vector<2x128xf32>
    %834 = arith.divf %832, %833 : vector<2x128xf32>
    %835 = vector.extract_strided_slice %824 {offsets = [0, 128], sizes = [2, 128], strides = [1, 1]} : vector<2x384xf32> to vector<2x128xf32>
    %836 = vector.extract_strided_slice %826 {offsets = [0, 128], sizes = [2, 128], strides = [1, 1]} : vector<2x384xf32> to vector<2x128xf32>
    %837 = arith.addf %835, %836 : vector<2x128xf32>
    %838 = arith.negf %837 : vector<2x128xf32>
    %839 = math.exp %838 : vector<2x128xf32>
    %cst_196 = arith.constant 1.000000e+00 : f32
    %840 = vector.broadcast %cst_196 : f32 to vector<2x128xf32>
    %841 = arith.addf %840, %839 : vector<2x128xf32>
    %842 = arith.divf %840, %841 : vector<2x128xf32>
    %843 = vector.extract_strided_slice %824 {offsets = [0, 256], sizes = [2, 128], strides = [1, 1]} : vector<2x384xf32> to vector<2x128xf32>
    %844 = vector.extract_strided_slice %826 {offsets = [0, 256], sizes = [2, 128], strides = [1, 1]} : vector<2x384xf32> to vector<2x128xf32>
    %845 = arith.mulf %834, %844 : vector<2x128xf32>
    %846 = arith.addf %843, %845 : vector<2x128xf32>
    %847 = math.tanh %846 : vector<2x128xf32>
    %cst_197 = arith.constant 1.000000e+00 : f32
    %848 = vector.broadcast %cst_197 : f32 to vector<2x128xf32>
    %849 = arith.subf %848, %842 : vector<2x128xf32>
    %850 = arith.mulf %849, %847 : vector<2x128xf32>
    %851 = arith.mulf %842, %811 : vector<2x128xf32>
    %852 = arith.addf %850, %851 : vector<2x128xf32>
    %cst_198 = arith.constant dense<0.000000e+00> : vector<2x128xf32>
    %853 = tpu.matmul %852, %528, %cst_198 {dimension_numbers = #tpu.dot_dimension_numbers<[1], [0], [0], [1], [0, 0, 1, 1], [], []>} : vector<2x128xf32>, vector<128x128xf32>, vector<2x128xf32> -> vector<2x128xf32>
    %854 = vector.broadcast %529 : vector<1x128xf32> to vector<2x128xf32>
    %855 = arith.addf %853, %854 : vector<2x128xf32>
    %856 = math.tanh %855 : vector<2x128xf32>
    %cst_199 = arith.constant dense<0.000000e+00> : vector<2x128xf32>
    %857 = tpu.matmul %856, %530, %cst_199 {dimension_numbers = #tpu.dot_dimension_numbers<[1], [0], [0], [1], [0, 0, 1, 1], [], []>} : vector<2x128xf32>, vector<128x128xf32>, vector<2x128xf32> -> vector<2x128xf32>
    %858 = vector.broadcast %531 : vector<1x128xf32> to vector<2x128xf32>
    %859 = arith.addf %857, %858 : vector<2x128xf32>
    %860 = math.tanh %859 : vector<2x128xf32>
    %cst_200 = arith.constant dense<0.000000e+00> : vector<2x16xf32>
    %861 = tpu.matmul %860, %532, %cst_200 {dimension_numbers = #tpu.dot_dimension_numbers<[1], [0], [0], [1], [0, 0, 1, 1], [], []>} : vector<2x128xf32>, vector<128x16xf32>, vector<2x16xf32> -> vector<2x16xf32>
    %862 = vector.broadcast %533 : vector<1x16xf32> to vector<2x16xf32>
    %863 = arith.addf %861, %862 : vector<2x16xf32>
    %864 = tpu.concatenate %576, %617, %658, %699, %740, %781, %822, %863 in 0 : vector<2x16xf32>, vector<2x16xf32>, vector<2x16xf32>, vector<2x16xf32>, vector<2x16xf32>, vector<2x16xf32>, vector<2x16xf32>, vector<2x16xf32> -> vector<16x16xf32>
    %c0_201 = arith.constant 0 : index
    %c0_202 = arith.constant 0 : index
    %865 = vector.load %arg30[%c0_201, %c0_202] : memref<16x16xf32, #tpu.memory_space<vmem>>, vector<16x16xf32>
    tpu.vector_store %arg30[%c0_201, %c0_202], %864 {strides = array<i32>} : memref<16x16xf32, #tpu.memory_space<vmem>>, vector<16x16xf32>,
    return
  }
}

</mosaic_0001>

<llo_original>
// kernel: tpu_custom_call.1
$region0: #{tpu_custom_call.1}
  #allocation0 [shape = 'u32[]', space=smem, size = 0x4, offset = 0x4, fixed_abs, tag = 'smem constant byte address 0x4 - core index']
  #allocation1 [shape = 'u32[144,128]{1,0:T(1,128)}', space=vmem, size = 0x12000, scoped, tag = 'internal scratch']
  %s0 = inlined_call_operand.smem [shape: u32[32], index: -1, kind: input, shape index: {}]
  %s1 = sld [smem:[%s0]]
  %s2 = scalar_lea.smem %s0, 1
  %s3 = sld [smem:[%s2]]
  %s4 = scalar_lea.smem %s0, 2
  %s5 = sld [smem:[%s4]]
  %s6 = scalar_lea.smem %s0, 3
  %s7 = sld [smem:[%s6]]
  %s8 = scalar_lea.smem %s0, 4
  %s9 = sld [smem:[%s8]]
  %s10 = scalar_lea.smem %s0, 5
  %s11 = sld [smem:[%s10]]
  %s12 = scalar_lea.smem %s0, 6
  %s13 = sld [smem:[%s12]]
  %s14 = scalar_lea.smem %s0, 7
  %s15 = sld [smem:[%s14]]
  %s16 = scalar_lea.smem %s0, 8
  %s17 = sld [smem:[%s16]]
  %s18 = scalar_lea.smem %s0, 9
  %s19 = sld [smem:[%s18]]
  %s20 = scalar_lea.smem %s0, 10
  %s21 = sld [smem:[%s20]]
  %s22 = scalar_lea.smem %s0, 11
  %s23 = sld [smem:[%s22]]
  %s24 = scalar_lea.smem %s0, 12
  %s25 = sld [smem:[%s24]]
  %s26 = scalar_lea.smem %s0, 13
  %s27 = sld [smem:[%s26]]
  %s28 = scalar_lea.smem %s0, 14
  %s29 = sld [smem:[%s28]]
  %s30 = scalar_lea.smem %s0, 15
  %s31 = sld [smem:[%s30]]
  %s32 = scalar_lea.smem %s0, 16
  %s33 = sld [smem:[%s32]]
  %s34 = scalar_lea.smem %s0, 17
  %s35 = sld [smem:[%s34]]
  %s36 = scalar_lea.smem %s0, 18
  %s37 = sld [smem:[%s36]]
  %s38 = scalar_lea.smem %s0, 19
  %s39 = sld [smem:[%s38]]
  %s40 = scalar_lea.smem %s0, 20
  %s41 = sld [smem:[%s40]]
  %s42 = scalar_lea.smem %s0, 21
  %s43 = sld [smem:[%s42]]
  %s44 = scalar_lea.smem %s0, 22
  %s45 = sld [smem:[%s44]]
  %s46 = scalar_lea.smem %s0, 23
  %s47 = sld [smem:[%s46]]
  %s48 = scalar_lea.smem %s0, 24
  %s49 = sld [smem:[%s48]]
  %s50 = scalar_lea.smem %s0, 25
  %s51 = sld [smem:[%s50]]
  %s52 = scalar_lea.smem %s0, 26
  %s53 = sld [smem:[%s52]]
  %s54 = scalar_lea.smem %s0, 27
  %s55 = sld [smem:[%s54]]
  %s56 = scalar_lea.smem %s0, 28
  %s57 = sld [smem:[%s56]]
  %s58 = scalar_lea.smem %s0, 29
  %s59 = sld [smem:[%s58]]
  %s60 = scalar_lea.smem %s0, 30
  %s61 = sld [smem:[%s60]]
  %s62 = scalar_lea.smem %s0, 31
  %s63 = sld [smem:[%s62]]
  %64 = xla_tuple %s61, %s63
  %s65 = sld [smem:[#allocation0]]
  $region214: #{tpu_custom_call.1} parent=0
    _
  %s67 = ssub.s32 1, %s65
  %s68 = scalar_select 0, %s67, %s65
  $region1: #{tpu_custom_call.1} parent=0
    #allocation2 [shape = 'u8[8192]{0}', space=vmem, size = 0x2000, scoped, tag = 'input window, operand 0, single buffered']
    #allocation3 [shape = 's32[1]{0}', space=sflag, size = 0x4, scoped, tag = 'scoped memory for tpu_custom_call.1']
    #allocation4 [shape = 's32[1]{0}', space=sflag, size = 0x4, scoped, tag = 'scoped memory for tpu_custom_call.1']
    #allocation5 [shape = 'u8[8192]{0}', space=vmem, size = 0x2000, scoped, tag = 'input window, operand 1, single buffered']
    #allocation6 [shape = 's32[1]{0}', space=sflag, size = 0x4, scoped, tag = 'scoped memory for tpu_custom_call.1']
    #allocation7 [shape = 'u8[1024]{0}', space=vmem, size = 0x400, scoped, tag = 'input window, operand 2, single buffered']
    #allocation8 [shape = 'u8[24576]{0}', space=vmem, size = 0x6000, scoped, tag = 'input window, operand 3, single buffered']
    #allocation9 [shape = 's32[1]{0}', space=sflag, size = 0x4, scoped, tag = 'scoped memory for tpu_custom_call.1']
    #allocation10 [shape = 'u8[196608]{0}', space=vmem, size = 0x30000, scoped, tag = 'input window, operand 4, single buffered']
    #allocation11 [shape = 'u8[1536]{0}', space=vmem, size = 0x800, scoped, tag = 'input window, operand 5, single buffered']
    #allocation12 [shape = 's32[1]{0}', space=sflag, size = 0x4, scoped, tag = 'scoped memory for tpu_custom_call.1']
    #allocation13 [shape = 'u8[1536]{0}', space=vmem, size = 0x800, scoped, tag = 'input window, operand 6, single buffered']
    #allocation14 [shape = 'u8[196608]{0}', space=vmem, size = 0x30000, scoped, tag = 'input window, operand 8, single buffered']
    #allocation15 [shape = 's32[1]{0}', space=sflag, size = 0x4, scoped, tag = 'scoped memory for tpu_custom_call.1']
    #allocation16 [shape = 'u8[1536]{0}', space=vmem, size = 0x800, scoped, tag = 'input window, operand 9, single buffered']
    #allocation17 [shape = 'u8[1536]{0}', space=vmem, size = 0x800, scoped, tag = 'input window, operand 10, single buffered']
    #allocation18 [shape = 's32[1]{0}', space=sflag, size = 0x4, scoped, tag = 'scoped memory for tpu_custom_call.1']
    #allocation19 [shape = 'u8[512]{0}', space=vmem, size = 0x400, scoped, tag = 'input window, operand 13, single buffered']
    #allocation20 [shape = 'u8[65536]{0}', space=vmem, size = 0x10000, scoped, tag = 'input window, operand 14, single buffered']
    #allocation21 [shape = 's32[1]{0}', space=sflag, size = 0x4, scoped, tag = 'scoped memory for tpu_custom_call.1']
    #allocation22 [shape = 'u8[512]{0}', space=vmem, size = 0x400, scoped, tag = 'input window, operand 15, single buffered']
    #allocation23 [shape = 'u8[512]{0}', space=vmem, size = 0x400, scoped, tag = 'input window, operand 17, single buffered']
    #allocation24 [shape = 's32[1]{0}', space=sflag, size = 0x4, scoped, tag = 'scoped memory for tpu_custom_call.1']
    #allocation25 [shape = 'u8[196608]{0}', space=vmem, size = 0x30000, scoped, tag = 'input window, operand 18, single buffered']
    #allocation26 [shape = 'u8[12288]{0}', space=vmem, size = 0x3000, scoped, tag = 'input window, operand 19, single buffered']
    #allocation27 [shape = 's32[1]{0}', space=sflag, size = 0x4, scoped, tag = 'scoped memory for tpu_custom_call.1']
    #allocation28 [shape = 'u8[196608]{0}', space=vmem, size = 0x30000, scoped, tag = 'input window, operand 21, single buffered']
    #allocation29 [shape = 'u8[65536]{0}', space=vmem, size = 0x10000, scoped, tag = 'input window, operand 24, single buffered']
    #allocation30 [shape = 's32[1]{0}', space=sflag, size = 0x4, scoped, tag = 'scoped memory for tpu_custom_call.1']
    #allocation31 [shape = 'u8[65536]{0}', space=vmem, size = 0x10000, scoped, tag = 'input window, operand 26, single buffered']
    #allocation32 [shape = 'u8[8192]{0}', space=vmem, size = 0x2000, scoped, tag = 'output window, operand 0, single buffered']
    #allocation33 [shape = 'u8[1024]{0}', space=vmem, size = 0x400, scoped, tag = 'output window, operand 1, single buffered']
    #allocation34 [shape = 's32[1]{0}', space=sflag, size = 0x4, scoped, tag = 'scoped memory for tpu_custom_call.1']
    %69 = vsyncpa [#allocation3], 0
    %70 = vsyncpa [#allocation6], 0
    %71 = vsyncpa [#allocation9], 0
    %72 = vsyncpa [#allocation12], 0
    %73 = vsyncpa [#allocation15], 0
    %74 = vsyncpa [#allocation18], 0
    %75 = vsyncpa [#allocation21], 0
    %76 = vsyncpa [#allocation24], 0
    %77 = vsyncpa [#allocation27], 0
    %78 = vsyncpa [#allocation30], 0
    %79 = vsyncpa [#allocation4], 0
    %80 = vsyncpa [#allocation34], 0
    // Predicated region
    $region2: #{tpu_custom_call.1} parent=1 // pred_check
      _
    $region3: #{tpu_custom_call.1} parent=1 // pred_check_branch
      %82 = sbr.rel (0) target = $region5
    $region4: #{tpu_custom_call.1} parent=1 // pred_region
      %s84 = ssub.s32 256, 256
      %85 = vsyncadd [#allocation3], %s84
      %s86 = sshll.u32 [#allocation2], 4
      %s87 = int_to_ptr.vmem [resolvable:$true] %s86
      %92 = dma.hbm_to_vmem [thread:$0]  %s1, 256, %s87, [#allocation3], 128, 128, 8
    $region5: #{tpu_custom_call.1} parent=1 // pred_fallthru
      _
    // Predicated region
    $region6: #{tpu_custom_call.1} parent=1 // pred_check
      _
    $region7: #{tpu_custom_call.1} parent=1 // pred_check_branch
      %94 = sbr.rel (0) target = $region9
    $region8: #{tpu_custom_call.1} parent=1 // pred_region
      %s96 = ssub.s32 256, 256
      %97 = vsyncadd [#allocation6], %s96
      %s98 = sshll.u32 [#allocation5], 4
      %s99 = int_to_ptr.vmem [resolvable:$true] %s98
      %104 = dma.hbm_to_vmem [thread:$0]  %s3, 256, %s99, [#allocation6], 128, 128, 8
    $region9: #{tpu_custom_call.1} parent=1 // pred_fallthru
      _
    // Predicated region
    $region10: #{tpu_custom_call.1} parent=1 // pred_check
      _
    $region11: #{tpu_custom_call.1} parent=1 // pred_check_branch
      %106 = sbr.rel (0) target = $region13
    $region12: #{tpu_custom_call.1} parent=1 // pred_region
      %s108 = ssub.s32 32, 32
      %109 = vsyncadd [#allocation6], %s108
      %s111 = sshll.u32 [#allocation7], 4
      %s112 = int_to_ptr.vmem [resolvable:$true] %s111
      %114 = dma.hbm_to_vmem [thread:$0]  %s5, 32, %s112, [#allocation6]
    $region13: #{tpu_custom_call.1} parent=1 // pred_fallthru
      _
    // Predicated region
    $region14: #{tpu_custom_call.1} parent=1 // pred_check
      _
    $region15: #{tpu_custom_call.1} parent=1 // pred_check_branch
      %116 = sbr.rel (0) target = $region17
    $region16: #{tpu_custom_call.1} parent=1 // pred_region
      %s118 = ssub.s32 768, 768
      %119 = vsyncadd [#allocation9], %s118
      %s120 = sshll.u32 [#allocation8], 4
      %s121 = int_to_ptr.vmem [resolvable:$true] %s120
      %126 = dma.hbm_to_vmem [thread:$0]  %s7, 768, %s121, [#allocation9], 384, 384, 24
    $region17: #{tpu_custom_call.1} parent=1 // pred_fallthru
      _
    // Predicated region
    $region18: #{tpu_custom_call.1} parent=1 // pred_check
      _
    $region19: #{tpu_custom_call.1} parent=1 // pred_check_branch
      %128 = sbr.rel (0) target = $region21
    $region20: #{tpu_custom_call.1} parent=1 // pred_region
      %s130 = ssub.s32 6144, 6144
      %131 = vsyncadd [#allocation9], %s130
      %s132 = sshll.u32 [#allocation10], 4
      %s133 = int_to_ptr.vmem [resolvable:$true] %s132
      %138 = dma.hbm_to_vmem [thread:$0]  %s9, 6144, %s133, [#allocation9], 384, 384, 24
    $region21: #{tpu_custom_call.1} parent=1 // pred_fallthru
      _
    // Predicated region
    $region22: #{tpu_custom_call.1} parent=1 // pred_check
      _
    $region23: #{tpu_custom_call.1} parent=1 // pred_check_branch
      %140 = sbr.rel (0) target = $region25
    $region24: #{tpu_custom_call.1} parent=1 // pred_region
      %s142 = ssub.s32 48, 48
      %143 = vsyncadd [#allocation12], %s142
      %s145 = sshll.u32 [#allocation11], 4
      %s146 = int_to_ptr.vmem [resolvable:$true] %s145
      %148 = dma.hbm_to_vmem [thread:$0]  %s11, 48, %s146, [#allocation12]
    $region25: #{tpu_custom_call.1} parent=1 // pred_fallthru
      _
    // Predicated region
    $region26: #{tpu_custom_call.1} parent=1 // pred_check
      _
    $region27: #{tpu_custom_call.1} parent=1 // pred_check_branch
      %150 = sbr.rel (0) target = $region29
    $region28: #{tpu_custom_call.1} parent=1 // pred_region
      %s152 = ssub.s32 48, 48
      %153 = vsyncadd [#allocation12], %s152
      %s155 = sshll.u32 [#allocation13], 4
      %s156 = int_to_ptr.vmem [resolvable:$true] %s155
      %158 = dma.hbm_to_vmem [thread:$0]  %s13, 48, %s156, [#allocation12]
    $region29: #{tpu_custom_call.1} parent=1 // pred_fallthru
      _
    // Predicated region
    $region30: #{tpu_custom_call.1} parent=1 // pred_check
      _
    $region31: #{tpu_custom_call.1} parent=1 // pred_check_branch
      %160 = sbr.rel (0) target = $region33
    $region32: #{tpu_custom_call.1} parent=1 // pred_region
      _
    $region33: #{tpu_custom_call.1} parent=1 // pred_fallthru
      _
    // Predicated region
    $region34: #{tpu_custom_call.1} parent=1 // pred_check
      _
    $region35: #{tpu_custom_call.1} parent=1 // pred_check_branch
      %162 = sbr.rel (0) target = $region37
    $region36: #{tpu_custom_call.1} parent=1 // pred_region
      %s164 = ssub.s32 6144, 6144
      %165 = vsyncadd [#allocation15], %s164
      %s166 = sshll.u32 [#allocation14], 4
      %s167 = int_to_ptr.vmem [resolvable:$true] %s166
      %172 = dma.hbm_to_vmem [thread:$0]  %s17, 6144, %s167, [#allocation15], 384, 384, 24
    $region37: #{tpu_custom_call.1} parent=1 // pred_fallthru
      _
    // Predicated region
    $region38: #{tpu_custom_call.1} parent=1 // pred_check
      _
    $region39: #{tpu_custom_call.1} parent=1 // pred_check_branch
      %174 = sbr.rel (0) target = $region41
    $region40: #{tpu_custom_call.1} parent=1 // pred_region
      %s176 = ssub.s32 48, 48
      %177 = vsyncadd [#allocation15], %s176
      %s179 = sshll.u32 [#allocation16], 4
      %s180 = int_to_ptr.vmem [resolvable:$true] %s179
      %182 = dma.hbm_to_vmem [thread:$0]  %s19, 48, %s180, [#allocation15]
    $region41: #{tpu_custom_call.1} parent=1 // pred_fallthru
      _
    // Predicated region
    $region42: #{tpu_custom_call.1} parent=1 // pred_check
      _
    $region43: #{tpu_custom_call.1} parent=1 // pred_check_branch
      %184 = sbr.rel (0) target = $region45
    $region44: #{tpu_custom_call.1} parent=1 // pred_region
      %s186 = ssub.s32 48, 48
      %187 = vsyncadd [#allocation18], %s186
      %s189 = sshll.u32 [#allocation17], 4
      %s190 = int_to_ptr.vmem [resolvable:$true] %s189
      %192 = dma.hbm_to_vmem [thread:$0]  %s21, 48, %s190, [#allocation18]
    $region45: #{tpu_custom_call.1} parent=1 // pred_fallthru
      _
    // Predicated region
    $region46: #{tpu_custom_call.1} parent=1 // pred_check
      _
    $region47: #{tpu_custom_call.1} parent=1 // pred_check_branch
      %194 = sbr.rel (0) target = $region49
    $region48: #{tpu_custom_call.1} parent=1 // pred_region
      _
    $region49: #{tpu_custom_call.1} parent=1 // pred_fallthru
      _
    // Predicated region
    $region50: #{tpu_custom_call.1} parent=1 // pred_check
      _
    $region51: #{tpu_custom_call.1} parent=1 // pred_check_branch
      %196 = sbr.rel (0) target = $region53
    $region52: #{tpu_custom_call.1} parent=1 // pred_region
      _
    $region53: #{tpu_custom_call.1} parent=1 // pred_fallthru
      _
    // Predicated region
    $region54: #{tpu_custom_call.1} parent=1 // pred_check
      _
    $region55: #{tpu_custom_call.1} parent=1 // pred_check_branch
      %198 = sbr.rel (0) target = $region57
    $region56: #{tpu_custom_call.1} parent=1 // pred_region
      %s200 = ssub.s32 16, 16
      %201 = vsyncadd [#allocation18], %s200
      %s203 = sshll.u32 [#allocation19], 4
      %s204 = int_to_ptr.vmem [resolvable:$true] %s203
      %206 = dma.hbm_to_vmem [thread:$0]  %s27, 16, %s204, [#allocation18]
    $region57: #{tpu_custom_call.1} parent=1 // pred_fallthru
      _
    // Predicated region
    $region58: #{tpu_custom_call.1} parent=1 // pred_check
      _
    $region59: #{tpu_custom_call.1} parent=1 // pred_check_branch
      %208 = sbr.rel (0) target = $region61
    $region60: #{tpu_custom_call.1} parent=1 // pred_region
      %s210 = ssub.s32 2048, 2048
      %211 = vsyncadd [#allocation21], %s210
      %s212 = sshll.u32 [#allocation20], 4
      %s213 = int_to_ptr.vmem [resolvable:$true] %s212
      %218 = dma.hbm_to_vmem [thread:$0]  %s29, 2048, %s213, [#allocation21], 128, 128, 8
    $region61: #{tpu_custom_call.1} parent=1 // pred_fallthru
      _
    // Predicated region
    $region62: #{tpu_custom_call.1} parent=1 // pred_check
      _
    $region63: #{tpu_custom_call.1} parent=1 // pred_check_branch
      %220 = sbr.rel (0) target = $region65
    $region64: #{tpu_custom_call.1} parent=1 // pred_region
      %s222 = ssub.s32 16, 16
      %223 = vsyncadd [#allocation21], %s222
      %s225 = sshll.u32 [#allocation22], 4
      %s226 = int_to_ptr.vmem [resolvable:$true] %s225
      %228 = dma.hbm_to_vmem [thread:$0]  %s31, 16, %s226, [#allocation21]
    $region65: #{tpu_custom_call.1} parent=1 // pred_fallthru
      _
    // Predicated region
    $region66: #{tpu_custom_call.1} parent=1 // pred_check
      _
    $region67: #{tpu_custom_call.1} parent=1 // pred_check_branch
      %230 = sbr.rel (0) target = $region69
    $region68: #{tpu_custom_call.1} parent=1 // pred_region
      _
    $region69: #{tpu_custom_call.1} parent=1 // pred_fallthru
      _
    // Predicated region
    $region70: #{tpu_custom_call.1} parent=1 // pred_check
      _
    $region71: #{tpu_custom_call.1} parent=1 // pred_check_branch
      %232 = sbr.rel (0) target = $region73
    $region72: #{tpu_custom_call.1} parent=1 // pred_region
      %s234 = ssub.s32 16, 16
      %235 = vsyncadd [#allocation24], %s234
      %s237 = sshll.u32 [#allocation23], 4
      %s238 = int_to_ptr.vmem [resolvable:$true] %s237
      %240 = dma.hbm_to_vmem [thread:$0]  %s35, 16, %s238, [#allocation24]
    $region73: #{tpu_custom_call.1} parent=1 // pred_fallthru
      _
    // Predicated region
    $region74: #{tpu_custom_call.1} parent=1 // pred_check
      _
    $region75: #{tpu_custom_call.1} parent=1 // pred_check_branch
      %242 = sbr.rel (0) target = $region77
    $region76: #{tpu_custom_call.1} parent=1 // pred_region
      %s244 = ssub.s32 6144, 6144
      %245 = vsyncadd [#allocation24], %s244
      %s246 = sshll.u32 [#allocation25], 4
      %s247 = int_to_ptr.vmem [resolvable:$true] %s246
      %252 = dma.hbm_to_vmem [thread:$0]  %s37, 6144, %s247, [#allocation24], 384, 384, 24
    $region77: #{tpu_custom_call.1} parent=1 // pred_fallthru
      _
    // Predicated region
    $region78: #{tpu_custom_call.1} parent=1 // pred_check
      _
    $region79: #{tpu_custom_call.1} parent=1 // pred_check_branch
      %254 = sbr.rel (0) target = $region81
    $region80: #{tpu_custom_call.1} parent=1 // pred_region
      %s256 = ssub.s32 384, 384
      %257 = vsyncadd [#allocation27], %s256
      %s259 = sshll.u32 [#allocation26], 4
      %s260 = int_to_ptr.vmem [resolvable:$true] %s259
      %262 = dma.hbm_to_vmem [thread:$0]  %s39, 384, %s260, [#allocation27]
    $region81: #{tpu_custom_call.1} parent=1 // pred_fallthru
      _
    // Predicated region
    $region82: #{tpu_custom_call.1} parent=1 // pred_check
      _
    $region83: #{tpu_custom_call.1} parent=1 // pred_check_branch
      %264 = sbr.rel (0) target = $region85
    $region84: #{tpu_custom_call.1} parent=1 // pred_region
      _
    $region85: #{tpu_custom_call.1} parent=1 // pred_fallthru
      _
    // Predicated region
    $region86: #{tpu_custom_call.1} parent=1 // pred_check
      _
    $region87: #{tpu_custom_call.1} parent=1 // pred_check_branch
      %266 = sbr.rel (0) target = $region89
    $region88: #{tpu_custom_call.1} parent=1 // pred_region
      %s268 = ssub.s32 6144, 6144
      %269 = vsyncadd [#allocation27], %s268
      %s270 = sshll.u32 [#allocation28], 4
      %s271 = int_to_ptr.vmem [resolvable:$true] %s270
      %276 = dma.hbm_to_vmem [thread:$0]  %s43, 6144, %s271, [#allocation27], 384, 384, 24
    $region89: #{tpu_custom_call.1} parent=1 // pred_fallthru
      _
    // Predicated region
    $region90: #{tpu_custom_call.1} parent=1 // pred_check
      _
    $region91: #{tpu_custom_call.1} parent=1 // pred_check_branch
      %278 = sbr.rel (0) target = $region93
    $region92: #{tpu_custom_call.1} parent=1 // pred_region
      _
    $region93: #{tpu_custom_call.1} parent=1 // pred_fallthru
      _
    // Predicated region
    $region94: #{tpu_custom_call.1} parent=1 // pred_check
      _
    $region95: #{tpu_custom_call.1} parent=1 // pred_check_branch
      %280 = sbr.rel (0) target = $region97
    $region96: #{tpu_custom_call.1} parent=1 // pred_region
      _
    $region97: #{tpu_custom_call.1} parent=1 // pred_fallthru
      _
    // Predicated region
    $region98: #{tpu_custom_call.1} parent=1 // pred_check
      _
    $region99: #{tpu_custom_call.1} parent=1 // pred_check_branch
      %282 = sbr.rel (0) target = $region101
    $region100: #{tpu_custom_call.1} parent=1 // pred_region
      %s284 = ssub.s32 2048, 2048
      %285 = vsyncadd [#allocation30], %s284
      %s286 = sshll.u32 [#allocation29], 4
      %s287 = int_to_ptr.vmem [resolvable:$true] %s286
      %292 = dma.hbm_to_vmem [thread:$0]  %s49, 2048, %s287, [#allocation30], 128, 128, 8
    $region101: #{tpu_custom_call.1} parent=1 // pred_fallthru
      _
    // Predicated region
    $region102: #{tpu_custom_call.1} parent=1 // pred_check
      _
    $region103: #{tpu_custom_call.1} parent=1 // pred_check_branch
      %294 = sbr.rel (0) target = $region105
    $region104: #{tpu_custom_call.1} parent=1 // pred_region
      _
    $region105: #{tpu_custom_call.1} parent=1 // pred_fallthru
      _
    // Predicated region
    $region106: #{tpu_custom_call.1} parent=1 // pred_check
      _
    $region107: #{tpu_custom_call.1} parent=1 // pred_check_branch
      %296 = sbr.rel (0) target = $region109
    $region108: #{tpu_custom_call.1} parent=1 // pred_region
      %s298 = ssub.s32 2048, 2048
      %299 = vsyncadd [#allocation30], %s298
      %s300 = sshll.u32 [#allocation31], 4
      %s301 = int_to_ptr.vmem [resolvable:$true] %s300
      %306 = dma.hbm_to_vmem [thread:$0]  %s53, 2048, %s301, [#allocation30], 128, 128, 8
    $region109: #{tpu_custom_call.1} parent=1 // pred_fallthru
      _
    // Predicated region
    $region110: #{tpu_custom_call.1} parent=1 // pred_check
      _
    $region111: #{tpu_custom_call.1} parent=1 // pred_check_branch
      %308 = sbr.rel (0) target = $region113
    $region112: #{tpu_custom_call.1} parent=1 // pred_region
      _
    $region113: #{tpu_custom_call.1} parent=1 // pred_fallthru
      _
    // Predicated region
    $region114: #{tpu_custom_call.1} parent=1 // pred_check
      _
    $region115: #{tpu_custom_call.1} parent=1 // pred_check_branch
      %310 = sbr.rel (0) target = $region117
    $region116: #{tpu_custom_call.1} parent=1 // pred_region
      _
    $region117: #{tpu_custom_call.1} parent=1 // pred_fallthru
      _
    // Predicated region
    $region118: #{tpu_custom_call.1} parent=1 // pred_check
      _
    $region119: #{tpu_custom_call.1} parent=1 // pred_check_branch
      %312 = sbr.rel (0) target = $region121
    $region120: #{tpu_custom_call.1} parent=1 // pred_region
      _
    $region121: #{tpu_custom_call.1} parent=1 // pred_fallthru
      _
    // Predicated region
    $region122: #{tpu_custom_call.1} parent=1 // pred_check
      _
    $region123: #{tpu_custom_call.1} parent=1 // pred_check_branch
      %314 = sbr.rel (0) target = $region125
    $region124: #{tpu_custom_call.1} parent=1 // pred_region
      %315 = dma.done [#allocation3], 256
    $region125: #{tpu_custom_call.1} parent=1 // pred_fallthru
      _
    // Predicated region
    $region126: #{tpu_custom_call.1} parent=1 // pred_check
      _
    $region127: #{tpu_custom_call.1} parent=1 // pred_check_branch
      %317 = sbr.rel (0) target = $region129
    $region128: #{tpu_custom_call.1} parent=1 // pred_region
      %318 = dma.done [#allocation6], 256
    $region129: #{tpu_custom_call.1} parent=1 // pred_fallthru
      _
    // Predicated region
    $region130: #{tpu_custom_call.1} parent=1 // pred_check
      _
    $region131: #{tpu_custom_call.1} parent=1 // pred_check_branch
      %320 = sbr.rel (0) target = $region133
    $region132: #{tpu_custom_call.1} parent=1 // pred_region
      %321 = dma.done [#allocation6], 32
    $region133: #{tpu_custom_call.1} parent=1 // pred_fallthru
      _
    // Predicated region
    $region134: #{tpu_custom_call.1} parent=1 // pred_check
      _
    $region135: #{tpu_custom_call.1} parent=1 // pred_check_branch
      %323 = sbr.rel (0) target = $region137
    $region136: #{tpu_custom_call.1} parent=1 // pred_region
      %324 = dma.done [#allocation9], 768
    $region137: #{tpu_custom_call.1} parent=1 // pred_fallthru
      _
    // Predicated region
    $region138: #{tpu_custom_call.1} parent=1 // pred_check
      _
    $region139: #{tpu_custom_call.1} parent=1 // pred_check_branch
      %326 = sbr.rel (0) target = $region141
    $region140: #{tpu_custom_call.1} parent=1 // pred_region
      %327 = dma.done [#allocation9], 6144
    $region141: #{tpu_custom_call.1} parent=1 // pred_fallthru
      _
    // Predicated region
    $region142: #{tpu_custom_call.1} parent=1 // pred_check
      _
    $region143: #{tpu_custom_call.1} parent=1 // pred_check_branch
      %329 = sbr.rel (0) target = $region145
    $region144: #{tpu_custom_call.1} parent=1 // pred_region
      %330 = dma.done [#allocation12], 48
    $region145: #{tpu_custom_call.1} parent=1 // pred_fallthru
      _
    // Predicated region
    $region146: #{tpu_custom_call.1} parent=1 // pred_check
      _
    $region147: #{tpu_custom_call.1} parent=1 // pred_check_branch
      %332 = sbr.rel (0) target = $region149
    $region148: #{tpu_custom_call.1} parent=1 // pred_region
      %333 = dma.done [#allocation12], 48
    $region149: #{tpu_custom_call.1} parent=1 // pred_fallthru
      _
    // Predicated region
    $region150: #{tpu_custom_call.1} parent=1 // pred_check
      _
    $region151: #{tpu_custom_call.1} parent=1 // pred_check_branch
      %335 = sbr.rel (0) target = $region153
    $region152: #{tpu_custom_call.1} parent=1 // pred_region
      %336 = dma.done [#allocation15], 6144
    $region153: #{tpu_custom_call.1} parent=1 // pred_fallthru
      _
    // Predicated region
    $region154: #{tpu_custom_call.1} parent=1 // pred_check
      _
    $region155: #{tpu_custom_call.1} parent=1 // pred_check_branch
      %338 = sbr.rel (0) target = $region157
    $region156: #{tpu_custom_call.1} parent=1 // pred_region
      %339 = dma.done [#allocation15], 48
    $region157: #{tpu_custom_call.1} parent=1 // pred_fallthru
      _
    // Predicated region
    $region158: #{tpu_custom_call.1} parent=1 // pred_check
      _
    $region159: #{tpu_custom_call.1} parent=1 // pred_check_branch
      %341 = sbr.rel (0) target = $region161
    $region160: #{tpu_custom_call.1} parent=1 // pred_region
      %342 = dma.done [#allocation18], 48
    $region161: #{tpu_custom_call.1} parent=1 // pred_fallthru
      _
    // Predicated region
    $region162: #{tpu_custom_call.1} parent=1 // pred_check
      _
    $region163: #{tpu_custom_call.1} parent=1 // pred_check_branch
      %344 = sbr.rel (0) target = $region165
    $region164: #{tpu_custom_call.1} parent=1 // pred_region
      %345 = dma.done [#allocation18], 16
    $region165: #{tpu_custom_call.1} parent=1 // pred_fallthru
      _
    // Predicated region
    $region166: #{tpu_custom_call.1} parent=1 // pred_check
      _
    $region167: #{tpu_custom_call.1} parent=1 // pred_check_branch
      %347 = sbr.rel (0) target = $region169
    $region168: #{tpu_custom_call.1} parent=1 // pred_region
      %348 = dma.done [#allocation21], 2048
    $region169: #{tpu_custom_call.1} parent=1 // pred_fallthru
      _
    // Predicated region
    $region170: #{tpu_custom_call.1} parent=1 // pred_check
      _
    $region171: #{tpu_custom_call.1} parent=1 // pred_check_branch
      %350 = sbr.rel (0) target = $region173
    $region172: #{tpu_custom_call.1} parent=1 // pred_region
      %351 = dma.done [#allocation21], 16
    $region173: #{tpu_custom_call.1} parent=1 // pred_fallthru
      _
    // Predicated region
    $region174: #{tpu_custom_call.1} parent=1 // pred_check
      _
    $region175: #{tpu_custom_call.1} parent=1 // pred_check_branch
      %353 = sbr.rel (0) target = $region177
    $region176: #{tpu_custom_call.1} parent=1 // pred_region
      %354 = dma.done [#allocation24], 16
    $region177: #{tpu_custom_call.1} parent=1 // pred_fallthru
      _
    // Predicated region
    $region178: #{tpu_custom_call.1} parent=1 // pred_check
      _
    $region179: #{tpu_custom_call.1} parent=1 // pred_check_branch
      %356 = sbr.rel (0) target = $region181
    $region180: #{tpu_custom_call.1} parent=1 // pred_region
      %357 = dma.done [#allocation24], 6144
    $region181: #{tpu_custom_call.1} parent=1 // pred_fallthru
      _
    // Predicated region
    $region182: #{tpu_custom_call.1} parent=1 // pred_check
      _
    $region183: #{tpu_custom_call.1} parent=1 // pred_check_branch
      %359 = sbr.rel (0) target = $region185
    $region184: #{tpu_custom_call.1} parent=1 // pred_region
      %360 = dma.done [#allocation27], 384
    $region185: #{tpu_custom_call.1} parent=1 // pred_fallthru
      _
    // Predicated region
    $region186: #{tpu_custom_call.1} parent=1 // pred_check
      _
    $region187: #{tpu_custom_call.1} parent=1 // pred_check_branch
      %362 = sbr.rel (0) target = $region189
    $region188: #{tpu_custom_call.1} parent=1 // pred_region
      %363 = dma.done [#allocation27], 6144
    $region189: #{tpu_custom_call.1} parent=1 // pred_fallthru
      _
    // Predicated region
    $region190: #{tpu_custom_call.1} parent=1 // pred_check
      _
    $region191: #{tpu_custom_call.1} parent=1 // pred_check_branch
      %365 = sbr.rel (0) target = $region193
    $region192: #{tpu_custom_call.1} parent=1 // pred_region
      %366 = dma.done [#allocation30], 2048
    $region193: #{tpu_custom_call.1} parent=1 // pred_fallthru
      _
    // Predicated region
    $region194: #{tpu_custom_call.1} parent=1 // pred_check
      _
    $region195: #{tpu_custom_call.1} parent=1 // pred_check_branch
      %368 = sbr.rel (0) target = $region197
    $region196: #{tpu_custom_call.1} parent=1 // pred_region
      %369 = dma.done [#allocation30], 2048
    $region197: #{tpu_custom_call.1} parent=1 // pred_fallthru
      _
    %v370 = vld [vmem:[#allocation2] sm:$0xff]
    %v371 = vld [vmem:[#allocation2 + $0x8] sm:$0xff]
    %v372 = vld [vmem:[#allocation8] sm:$0xff]
    %v373 = vld [vmem:[#allocation8 + $0x8] sm:$0xff]
    %v374 = vld [vmem:[#allocation8 + $0x10] sm:$0xff]
    %v375 = vld [vmem:[#allocation8 + $0x18] sm:$0xff]
    %v376 = vld [vmem:[#allocation8 + $0x20] sm:$0xff]
    %v377 = vld [vmem:[#allocation8 + $0x28] sm:$0xff]
    %v378 = vld [vmem:[#allocation11] sm:$0x7]
    %v380 = vlaneseq
    %v381 = vshrl.u32 %v380, 7
    %v382 = vsub.s32 0, %v381
    %v383 = vrot.slane %v378, %v382
    %v384 = vlaneseq
    %v385 = vshrl.u32 %v384, 7
    %v386 = vsub.s32 1, %v385
    %v387 = vrot.slane %v378, %v386
    %v388 = vlaneseq
    %v389 = vshrl.u32 %v388, 7
    %v390 = vsub.s32 2, %v389
    %v391 = vrot.slane %v378, %v390
    %vm395 = vcmask 130048
    %v397 = vsel %vm395, %v370, 0
    %v400 = vsel %vm395, %v371, 0
    %402 = vmatprep.subr.mxu0 %v373
    %403 = vmatpush1.msra.mxu0 %v372
    %404 = vmatprep.subr.mxu0 %v376
    %405 = vmatpush1.msra.mxu0 %v375
    %406 = vmatprep.subr.mxu0 0.0
    %407 = vmatpush1.msra.mxu0 0.0
    %408 = vmatprep.subr.mxu0 0.0
    %409 = vmatpush1.msra.mxu0 0.0
    %410 = vmatprep.subr.mxu0 0.0
    %411 = vmatpush1.msra.mxu0 0.0
    %412 = vmatprep.subr.mxu0 0.0
    %413 = vmatpush1.msra.mxu0 0.0
    %414 = vmatprep.subr.mxu0 0.0
    %415 = vmatpush1.msra.mxu0 0.0
    %416 = vmatprep.subr.mxu0 0.0
    %417 = vmatpush1.msra.mxu0 0.0
    %418 = vmatprep.subr.mxu0 0.0
    %419 = vmatpush1.msra.mxu0 0.0
    %420 = vmatprep.subr.mxu0 0.0
    %421 = vmatpush1.msra.mxu0 0.0
    %422 = vmatprep.subr.mxu0 0.0
    %423 = vmatpush1.msra.mxu0 0.0
    %424 = vmatprep.subr.mxu0 0.0
    %425 = vmatpush1.msra.mxu0 0.0
    %426 = vmatprep.subr.mxu0 0.0
    %427 = vmatpush1.msra.mxu0 0.0
    %428 = vmatprep.subr.mxu0 0.0
    %429 = vmatpush1.msra.mxu0 0.0
    %430 = vmatprep.subr.mxu0 0.0
    %431 = vmatpush1.msra.mxu0 0.0
    %432 = vmatprep.subr.mxu0 0.0
    %433 = vmatpush1.msra.mxu0 0.0
    %434 = vmatprep.subr.mxu0 0.0
    %435 = vmatpush1.msra.mxu0 0.0
    %436 = vmatprep.subr.mxu0 0.0
    %437 = vmatpush1.msra.mxu0 0.0
    %438 = vmatprep.subr.mxu0 0.0
    %439 = vmatpush1.msra.mxu0 0.0
    %440 = vmatprep.subr.mxu0 0.0
    %441 = vmatpush1.msra.mxu0 0.0
    %442 = vmatprep.subr.mxu0 0.0
    %443 = vmatpush1.msra.mxu0 0.0
    %444 = vmatprep.subr.mxu0 0.0
    %445 = vmatpush1.msra.mxu0 0.0
    %446 = vmatprep.subr.mxu0 0.0
    %447 = vmatpush1.msra.mxu0 0.0
    %448 = vmatprep.subr.mxu0 0.0
    %449 = vmatpush1.msra.mxu0 0.0
    %450 = vmatprep.subr.mxu0 0.0
    %451 = vmatpush1.msra.mxu0 0.0
    %452 = vmatprep.subr.mxu0 0.0
    %453 = vmatpush1.msra.mxu0 0.0
    %454 = vmatprep.subr.mxu0 0.0
    %455 = vmatpush1.msra.mxu0 0.0
    %456 = vmatprep.subr.mxu0 0.0
    %457 = vmatpush1.msra.mxu0 0.0
    %458 = vmatprep.subr.mxu0 0.0
    %459 = vmatpush1.msra.mxu0 0.0
    %460 = vmatprep.subr.mxu0 0.0
    %461 = vmatpush1.msra.mxu0 0.0
    %462 = vmatprep.subr.mxu0 0.0
    %463 = vmatpush1.msra.mxu0 0.0
    %464 = vmatprep.subr.mxu0 0.0
    %465 = vmatpush1.msra.mxu0 0.0
    %466 = vmatprep.mubr.f32.mxu0 0.0
    %467 = vmatmul.mubr.f32.gmra.mrb[0].mxu0 %v397
    %v468 = vpop.f32.mrb[0].mxu0
    %v469 = vadd.f32 %v383, %v468
    %v470 = vpop.f32.mrb[0].mxu0
    %v471 = vadd.f32 %v387, %v470
    %472 = vmatprep.mubr.f32.mxu0 0.0
    %473 = vmatmul.mubr.f32.gmra.mrb[0].mxu0 %v400
    %v474 = vpop.f32.mrb[0].mxu0
    %v475 = vadd.f32 %v383, %v474
    %v476 = vpop.f32.mrb[0].mxu0
    %v477 = vadd.f32 %v387, %v476
    %478 = vdwg.mxu0
    %479 = vmatprep.subr.mxu0 0.0
    %480 = vmatpush1.msra.mxu0 %v374
    %481 = vmatprep.subr.mxu0 0.0
    %482 = vmatpush1.msra.mxu0 %v377
    %483 = vmatprep.subr.mxu0 0.0
    %484 = vmatpush1.msra.mxu0 0.0
    %485 = vmatprep.subr.mxu0 0.0
    %486 = vmatpush1.msra.mxu0 0.0
    %487 = vmatprep.subr.mxu0 0.0
    %488 = vmatpush1.msra.mxu0 0.0
    %489 = vmatprep.subr.mxu0 0.0
    %490 = vmatpush1.msra.mxu0 0.0
    %491 = vmatprep.subr.mxu0 0.0
    %492 = vmatpush1.msra.mxu0 0.0
    %493 = vmatprep.subr.mxu0 0.0
    %494 = vmatpush1.msra.mxu0 0.0
    %495 = vmatprep.subr.mxu0 0.0
    %496 = vmatpush1.msra.mxu0 0.0
    %497 = vmatprep.subr.mxu0 0.0
    %498 = vmatpush1.msra.mxu0 0.0
    %499 = vmatprep.subr.mxu0 0.0
    %500 = vmatpush1.msra.mxu0 0.0
    %501 = vmatprep.subr.mxu0 0.0
    %502 = vmatpush1.msra.mxu0 0.0
    %503 = vmatprep.subr.mxu0 0.0
    %504 = vmatpush1.msra.mxu0 0.0
    %505 = vmatprep.subr.mxu0 0.0
    %506 = vmatpush1.msra.mxu0 0.0
    %507 = vmatprep.subr.mxu0 0.0
    %508 = vmatpush1.msra.mxu0 0.0
    %509 = vmatprep.subr.mxu0 0.0
    %510 = vmatpush1.msra.mxu0 0.0
    %511 = vmatprep.subr.mxu0 0.0
    %512 = vmatpush1.msra.mxu0 0.0
    %513 = vmatprep.subr.mxu0 0.0
    %514 = vmatpush1.msra.mxu0 0.0
    %515 = vmatprep.subr.mxu0 0.0
    %516 = vmatpush1.msra.mxu0 0.0
    %517 = vmatprep.subr.mxu0 0.0
    %518 = vmatpush1.msra.mxu0 0.0
    %519 = vmatprep.subr.mxu0 0.0
    %520 = vmatpush1.msra.mxu0 0.0
    %521 = vmatprep.subr.mxu0 0.0
    %522 = vmatpush1.msra.mxu0 0.0
    %523 = vmatprep.subr.mxu0 0.0
    %524 = vmatpush1.msra.mxu0 0.0
    %525 = vmatprep.subr.mxu0 0.0
    %526 = vmatpush1.msra.mxu0 0.0
    %527 = vmatprep.subr.mxu0 0.0
    %528 = vmatpush1.msra.mxu0 0.0
    %529 = vmatprep.subr.mxu0 0.0
    %530 = vmatpush1.msra.mxu0 0.0
    %531 = vmatprep.subr.mxu0 0.0
    %532 = vmatpush1.msra.mxu0 0.0
    %533 = vmatprep.subr.mxu0 0.0
    %534 = vmatpush1.msra.mxu0 0.0
    %535 = vmatprep.subr.mxu0 0.0
    %536 = vmatpush1.msra.mxu0 0.0
    %537 = vmatprep.subr.mxu0 0.0
    %538 = vmatpush1.msra.mxu0 0.0
    %539 = vmatprep.subr.mxu0 0.0
    %540 = vmatpush1.msra.mxu0 0.0
    %541 = vmatprep.subr.mxu0 0.0
    %542 = vmatpush1.msra.mxu0 0.0
    %543 = vmatprep.mubr.f32.mxu0 0.0
    %544 = vmatmul.mubr.f32.gmra.mrb[0].mxu0 %v397
    %v545 = vpop.f32.mrb[0].mxu0
    %v546 = vadd.f32 %v391, %v545
    %v547 = vpop.f32.mrb[0].mxu0
    %548 = vmatprep.mubr.f32.mxu0 0.0
    %549 = vmatmul.mubr.f32.gmra.mrb[0].mxu0 %v400
    %v550 = vpop.f32.mrb[0].mxu0
    %v551 = vadd.f32 %v391, %v550
    %v552 = vpop.f32.mrb[0].mxu0
    %553 = vdwg.mxu0
    %v554 = vld [vmem:[#allocation10] sm:$0xff]
    %v555 = vld [vmem:[#allocation10 + $0x8] sm:$0xff]
    %v556 = vld [vmem:[#allocation10 + $0x10] sm:$0xff]
    %v557 = vld [vmem:[#allocation10 + $0x18] sm:$0xff]
    %v558 = vld [vmem:[#allocation10 + $0x20] sm:$0xff]
    %v559 = vld [vmem:[#allocation10 + $0x28] sm:$0xff]
    %v560 = vld [vmem:[#allocation10 + $0x30] sm:$0xff]
    %v561 = vld [vmem:[#allocation10 + $0x38] sm:$0xff]
    %v562 = vld [vmem:[#allocation10 + $0x40] sm:$0xff]
    %v563 = vld [vmem:[#allocation10 + $0x48] sm:$0xff]
    %v564 = vld [vmem:[#allocation10 + $0x50] sm:$0xff]
    %v565 = vld [vmem:[#allocation10 + $0x58] sm:$0xff]
    %v566 = vld [vmem:[#allocation10 + $0x60] sm:$0xff]
    %v567 = vld [vmem:[#allocation10 + $0x68] sm:$0xff]
    %v568 = vld [vmem:[#allocation10 + $0x70] sm:$0xff]
    %v569 = vld [vmem:[#allocation10 + $0x78] sm:$0xff]
    %v570 = vld [vmem:[#allocation10 + $0x80] sm:$0xff]
    %v571 = vld [vmem:[#allocation10 + $0x88] sm:$0xff]
    %v572 = vld [vmem:[#allocation10 + $0x90] sm:$0xff]
    %v573 = vld [vmem:[#allocation10 + $0x98] sm:$0xff]
    %v574 = vld [vmem:[#allocation10 + $0xa0] sm:$0xff]
    %v575 = vld [vmem:[#allocation10 + $0xa8] sm:$0xff]
    %v576 = vld [vmem:[#allocation10 + $0xb0] sm:$0xff]
    %v577 = vld [vmem:[#allocation10 + $0xb8] sm:$0xff]
    %v578 = vld [vmem:[#allocation10 + $0xc0] sm:$0xff]
    %v579 = vld [vmem:[#allocation10 + $0xc8] sm:$0xff]
    %v580 = vld [vmem:[#allocation10 + $0xd0] sm:$0xff]
    %v581 = vld [vmem:[#allocation10 + $0xd8] sm:$0xff]
    %v582 = vld [vmem:[#allocation10 + $0xe0] sm:$0xff]
    %v583 = vld [vmem:[#allocation10 + $0xe8] sm:$0xff]
    %v584 = vld [vmem:[#allocation10 + $0xf0] sm:$0xff]
    %v585 = vld [vmem:[#allocation10 + $0xf8] sm:$0xff]
    %v586 = vld [vmem:[#allocation10 + $0x100] sm:$0xff]
    %v587 = vld [vmem:[#allocation10 + $0x108] sm:$0xff]
    %v588 = vld [vmem:[#allocation10 + $0x110] sm:$0xff]
    %v589 = vld [vmem:[#allocation10 + $0x118] sm:$0xff]
    %v590 = vld [vmem:[#allocation10 + $0x120] sm:$0xff]
    %v591 = vld [vmem:[#allocation10 + $0x128] sm:$0xff]
    %v592 = vld [vmem:[#allocation10 + $0x130] sm:$0xff]
    %v593 = vld [vmem:[#allocation10 + $0x138] sm:$0xff]
    %v594 = vld [vmem:[#allocation10 + $0x140] sm:$0xff]
    %v595 = vld [vmem:[#allocation10 + $0x148] sm:$0xff]
    %v596 = vld [vmem:[#allocation10 + $0x150] sm:$0xff]
    %v597 = vld [vmem:[#allocation10 + $0x158] sm:$0xff]
    %v598 = vld [vmem:[#allocation10 + $0x160] sm:$0xff]
    %v599 = vld [vmem:[#allocation10 + $0x168] sm:$0xff]
    %v600 = vld [vmem:[#allocation10 + $0x170] sm:$0xff]
    %v601 = vld [vmem:[#allocation10 + $0x178] sm:$0xff]
    %v602 = vld [vmem:[#allocation13] sm:$0x7]
    %v604 = vlaneseq
    %v605 = vshrl.u32 %v604, 7
    %v606 = vsub.s32 0, %v605
    %v607 = vrot.slane %v602, %v606
    %v608 = vlaneseq
    %v609 = vshrl.u32 %v608, 7
    %v610 = vsub.s32 1, %v609
    %v611 = vrot.slane %v602, %v610
    %v612 = vlaneseq
    %v613 = vshrl.u32 %v612, 7
    %v614 = vsub.s32 2, %v613
    %v615 = vrot.slane %v602, %v614
    %619 = vmatprep.subr.mxu0 %v555
    %620 = vmatpush1.msra.mxu0 %v554
    %621 = vmatprep.subr.mxu0 %v558
    %622 = vmatpush1.msra.mxu0 %v557
    %623 = vmatprep.subr.mxu0 %v561
    %624 = vmatpush1.msra.mxu0 %v560
    %625 = vmatprep.subr.mxu0 %v564
    %626 = vmatpush1.msra.mxu0 %v563
    %627 = vmatprep.subr.mxu0 %v567
    %628 = vmatpush1.msra.mxu0 %v566
    %629 = vmatprep.subr.mxu0 %v570
    %630 = vmatpush1.msra.mxu0 %v569
    %631 = vmatprep.subr.mxu0 %v573
    %632 = vmatpush1.msra.mxu0 %v572
    %633 = vmatprep.subr.mxu0 %v576
    %634 = vmatpush1.msra.mxu0 %v575
    %635 = vmatprep.subr.mxu0 %v579
    %636 = vmatpush1.msra.mxu0 %v578
    %637 = vmatprep.subr.mxu0 %v582
    %638 = vmatpush1.msra.mxu0 %v581
    %639 = vmatprep.subr.mxu0 %v585
    %640 = vmatpush1.msra.mxu0 %v584
    %641 = vmatprep.subr.mxu0 %v588
    %642 = vmatpush1.msra.mxu0 %v587
    %643 = vmatprep.subr.mxu0 %v591
    %644 = vmatpush1.msra.mxu0 %v590
    %645 = vmatprep.subr.mxu0 %v594
    %646 = vmatpush1.msra.mxu0 %v593
    %647 = vmatprep.subr.mxu0 %v597
    %648 = vmatpush1.msra.mxu0 %v596
    %649 = vmatprep.subr.mxu0 %v600
    %650 = vmatpush1.msra.mxu0 %v599
    %651 = vmatprep.subr.mxu0 0.0
    %652 = vmatpush1.msra.mxu0 0.0
    %653 = vmatprep.subr.mxu0 0.0
    %654 = vmatpush1.msra.mxu0 0.0
    %655 = vmatprep.subr.mxu0 0.0
    %656 = vmatpush1.msra.mxu0 0.0
    %657 = vmatprep.subr.mxu0 0.0
    %658 = vmatpush1.msra.mxu0 0.0
    %659 = vmatprep.subr.mxu0 0.0
    %660 = vmatpush1.msra.mxu0 0.0
    %661 = vmatprep.subr.mxu0 0.0
    %662 = vmatpush1.msra.mxu0 0.0
    %663 = vmatprep.subr.mxu0 0.0
    %664 = vmatpush1.msra.mxu0 0.0
    %665 = vmatprep.subr.mxu0 0.0
    %666 = vmatpush1.msra.mxu0 0.0
    %667 = vmatprep.subr.mxu0 0.0
    %668 = vmatpush1.msra.mxu0 0.0
    %669 = vmatprep.subr.mxu0 0.0
    %670 = vmatpush1.msra.mxu0 0.0
    %671 = vmatprep.subr.mxu0 0.0
    %672 = vmatpush1.msra.mxu0 0.0
    %673 = vmatprep.subr.mxu0 0.0
    %674 = vmatpush1.msra.mxu0 0.0
    %675 = vmatprep.subr.mxu0 0.0
    %676 = vmatpush1.msra.mxu0 0.0
    %677 = vmatprep.subr.mxu0 0.0
    %678 = vmatpush1.msra.mxu0 0.0
    %679 = vmatprep.subr.mxu0 0.0
    %680 = vmatpush1.msra.mxu0 0.0
    %681 = vmatprep.subr.mxu0 0.0
    %682 = vmatpush1.msra.mxu0 0.0
    %683 = vmatprep.mubr.f32.mxu0 0.0
    %684 = vmatmul.mubr.f32.gmra.mrb[0].mxu0 0.0
    %v685 = vpop.f32.mrb[0].mxu0
    %v686 = vadd.f32 %v607, %v685
    %v687 = vpop.f32.mrb[0].mxu0
    %v688 = vadd.f32 %v611, %v687
    %689 = vdwg.mxu0
    %690 = vmatprep.subr.mxu0 0.0
    %691 = vmatpush1.msra.mxu0 %v556
    %692 = vmatprep.subr.mxu0 0.0
    %693 = vmatpush1.msra.mxu0 %v559
    %694 = vmatprep.subr.mxu0 0.0
    %695 = vmatpush1.msra.mxu0 %v562
    %696 = vmatprep.subr.mxu0 0.0
    %697 = vmatpush1.msra.mxu0 %v565
    %698 = vmatprep.subr.mxu0 0.0
    %699 = vmatpush1.msra.mxu0 %v568
    %700 = vmatprep.subr.mxu0 0.0
    %701 = vmatpush1.msra.mxu0 %v571
    %702 = vmatprep.subr.mxu0 0.0
    %703 = vmatpush1.msra.mxu0 %v574
    %704 = vmatprep.subr.mxu0 0.0
    %705 = vmatpush1.msra.mxu0 %v577
    %706 = vmatprep.subr.mxu0 0.0
    %707 = vmatpush1.msra.mxu0 %v580
    %708 = vmatprep.subr.mxu0 0.0
    %709 = vmatpush1.msra.mxu0 %v583
    %710 = vmatprep.subr.mxu0 0.0
    %711 = vmatpush1.msra.mxu0 %v586
    %712 = vmatprep.subr.mxu0 0.0
    %713 = vmatpush1.msra.mxu0 %v589
    %714 = vmatprep.subr.mxu0 0.0
    %715 = vmatpush1.msra.mxu0 %v592
    %716 = vmatprep.subr.mxu0 0.0
    %717 = vmatpush1.msra.mxu0 %v595
    %718 = vmatprep.subr.mxu0 0.0
    %719 = vmatpush1.msra.mxu0 %v598
    %720 = vmatprep.subr.mxu0 0.0
    %721 = vmatpush1.msra.mxu0 %v601
    %722 = vmatprep.subr.mxu0 0.0
    %723 = vmatpush1.msra.mxu0 0.0
    %724 = vmatprep.subr.mxu0 0.0
    %725 = vmatpush1.msra.mxu0 0.0
    %726 = vmatprep.subr.mxu0 0.0
    %727 = vmatpush1.msra.mxu0 0.0
    %728 = vmatprep.subr.mxu0 0.0
    %729 = vmatpush1.msra.mxu0 0.0
    %730 = vmatprep.subr.mxu0 0.0
    %731 = vmatpush1.msra.mxu0 0.0
    %732 = vmatprep.subr.mxu0 0.0
    %733 = vmatpush1.msra.mxu0 0.0
    %734 = vmatprep.subr.mxu0 0.0
    %735 = vmatpush1.msra.mxu0 0.0
    %736 = vmatprep.subr.mxu0 0.0
    %737 = vmatpush1.msra.mxu0 0.0
    %738 = vmatprep.subr.mxu0 0.0
    %739 = vmatpush1.msra.mxu0 0.0
    %740 = vmatprep.subr.mxu0 0.0
    %741 = vmatpush1.msra.mxu0 0.0
    %742 = vmatprep.subr.mxu0 0.0
    %743 = vmatpush1.msra.mxu0 0.0
    %744 = vmatprep.subr.mxu0 0.0
    %745 = vmatpush1.msra.mxu0 0.0
    %746 = vmatprep.subr.mxu0 0.0
    %747 = vmatpush1.msra.mxu0 0.0
    %748 = vmatprep.subr.mxu0 0.0
    %749 = vmatpush1.msra.mxu0 0.0
    %750 = vmatprep.subr.mxu0 0.0
    %751 = vmatpush1.msra.mxu0 0.0
    %752 = vmatprep.subr.mxu0 0.0
    %753 = vmatpush1.msra.mxu0 0.0
    %754 = vmatprep.mubr.f32.mxu0 0.0
    %755 = vmatmul.mubr.f32.gmra.mrb[0].mxu0 0.0
    %v756 = vpop.f32.mrb[0].mxu0
    %v757 = vadd.f32 %v615, %v756
    %v758 = vpop.f32.mrb[0].mxu0
    %759 = vdwg.mxu0
    %v760 = vadd.f32 %v469, %v686
    %v761 = vxor.u32 %v760, 2147483648
    %v762 = vmul.f32 %v761, 1.442695
    %v763 = vpow.pop %v762
    %v764 = vadd.f32 %v763, 1.0
    %v765 = vrcp.pop %v764
    %v766 = vmul.f32 1.0, %v765
    %v767 = vadd.f32 %v471, %v688
    %v768 = vxor.u32 %v767, 2147483648
    %v769 = vmul.f32 %v768, 1.442695
    %v770 = vpow.pop %v769
    %v771 = vadd.f32 %v770, 1.0
    %v772 = vrcp.pop %v771
    %v773 = vmul.f32 1.0, %v772
    %v774 = vmul.f32 %v766, %v757
    %v775 = vadd.f32 %v546, %v774
    %v776 = vtanh.pop %v775
    %v777 = vsub.f32 1.0, %v773
    %v778 = vmul.f32 %v777, %v776
    %v779 = vmul.f32 %v773, 0.0
    %v780 = vadd.f32 %v778, %v779
    %781 = vmatprep.subr.mxu0 %v555
    %782 = vmatpush1.msra.mxu0 %v554
    %783 = vmatprep.subr.mxu0 %v558
    %784 = vmatpush1.msra.mxu0 %v557
    %785 = vmatprep.subr.mxu0 %v561
    %786 = vmatpush1.msra.mxu0 %v560
    %787 = vmatprep.subr.mxu0 %v564
    %788 = vmatpush1.msra.mxu0 %v563
    %789 = vmatprep.subr.mxu0 %v567
    %790 = vmatpush1.msra.mxu0 %v566
    %791 = vmatprep.subr.mxu0 %v570
    %792 = vmatpush1.msra.mxu0 %v569
    %793 = vmatprep.subr.mxu0 %v573
    %794 = vmatpush1.msra.mxu0 %v572
    %795 = vmatprep.subr.mxu0 %v576
    %796 = vmatpush1.msra.mxu0 %v575
    %797 = vmatprep.subr.mxu0 %v579
    %798 = vmatpush1.msra.mxu0 %v578
    %799 = vmatprep.subr.mxu0 %v582
    %800 = vmatpush1.msra.mxu0 %v581
    %801 = vmatprep.subr.mxu0 %v585
    %802 = vmatpush1.msra.mxu0 %v584
    %803 = vmatprep.subr.mxu0 %v588
    %804 = vmatpush1.msra.mxu0 %v587
    %805 = vmatprep.subr.mxu0 %v591
    %806 = vmatpush1.msra.mxu0 %v590
    %807 = vmatprep.subr.mxu0 %v594
    %808 = vmatpush1.msra.mxu0 %v593
    %809 = vmatprep.subr.mxu0 %v597
    %810 = vmatpush1.msra.mxu0 %v596
    %811 = vmatprep.subr.mxu0 %v600
    %812 = vmatpush1.msra.mxu0 %v599
    %813 = vmatprep.subr.mxu0 0.0
    %814 = vmatpush1.msra.mxu0 0.0
    %815 = vmatprep.subr.mxu0 0.0
    %816 = vmatpush1.msra.mxu0 0.0
    %817 = vmatprep.subr.mxu0 0.0
    %818 = vmatpush1.msra.mxu0 0.0
    %819 = vmatprep.subr.mxu0 0.0
    %820 = vmatpush1.msra.mxu0 0.0
    %821 = vmatprep.subr.mxu0 0.0
    %822 = vmatpush1.msra.mxu0 0.0
    %823 = vmatprep.subr.mxu0 0.0
    %824 = vmatpush1.msra.mxu0 0.0
    %825 = vmatprep.subr.mxu0 0.0
    %826 = vmatpush1.msra.mxu0 0.0
    %827 = vmatprep.subr.mxu0 0.0
    %828 = vmatpush1.msra.mxu0 0.0
    %829 = vmatprep.subr.mxu0 0.0
    %830 = vmatpush1.msra.mxu0 0.0
    %831 = vmatprep.subr.mxu0 0.0
    %832 = vmatpush1.msra.mxu0 0.0
    %833 = vmatprep.subr.mxu0 0.0
    %834 = vmatpush1.msra.mxu0 0.0
    %835 = vmatprep.subr.mxu0 0.0
    %836 = vmatpush1.msra.mxu0 0.0
    %837 = vmatprep.subr.mxu0 0.0
    %838 = vmatpush1.msra.mxu0 0.0
    %839 = vmatprep.subr.mxu0 0.0
    %840 = vmatpush1.msra.mxu0 0.0
    %841 = vmatprep.subr.mxu0 0.0
    %842 = vmatpush1.msra.mxu0 0.0
    %843 = vmatprep.subr.mxu0 0.0
    %844 = vmatpush1.msra.mxu0 0.0
    %845 = vmatprep.mubr.f32.mxu0 0.0
    %846 = vmatmul.mubr.f32.gmra.mrb[0].mxu0 %v780
    %v847 = vpop.f32.mrb[0].mxu0
    %v848 = vadd.f32 %v607, %v847
    %v849 = vpop.f32.mrb[0].mxu0
    %v850 = vadd.f32 %v611, %v849
    %851 = vdwg.mxu0
    %852 = vmatprep.subr.mxu0 0.0
    %853 = vmatpush1.msra.mxu0 %v556
    %854 = vmatprep.subr.mxu0 0.0
    %855 = vmatpush1.msra.mxu0 %v559
    %856 = vmatprep.subr.mxu0 0.0
    %857 = vmatpush1.msra.mxu0 %v562
    %858 = vmatprep.subr.mxu0 0.0
    %859 = vmatpush1.msra.mxu0 %v565
    %860 = vmatprep.subr.mxu0 0.0
    %861 = vmatpush1.msra.mxu0 %v568
    %862 = vmatprep.subr.mxu0 0.0
    %863 = vmatpush1.msra.mxu0 %v571
    %864 = vmatprep.subr.mxu0 0.0
    %865 = vmatpush1.msra.mxu0 %v574
    %866 = vmatprep.subr.mxu0 0.0
    %867 = vmatpush1.msra.mxu0 %v577
    %868 = vmatprep.subr.mxu0 0.0
    %869 = vmatpush1.msra.mxu0 %v580
    %870 = vmatprep.subr.mxu0 0.0
    %871 = vmatpush1.msra.mxu0 %v583
    %872 = vmatprep.subr.mxu0 0.0
    %873 = vmatpush1.msra.mxu0 %v586
    %874 = vmatprep.subr.mxu0 0.0
    %875 = vmatpush1.msra.mxu0 %v589
    %876 = vmatprep.subr.mxu0 0.0
    %877 = vmatpush1.msra.mxu0 %v592
    %878 = vmatprep.subr.mxu0 0.0
    %879 = vmatpush1.msra.mxu0 %v595
    %880 = vmatprep.subr.mxu0 0.0
    %881 = vmatpush1.msra.mxu0 %v598
    %882 = vmatprep.subr.mxu0 0.0
    %883 = vmatpush1.msra.mxu0 %v601
    %884 = vmatprep.subr.mxu0 0.0
    %885 = vmatpush1.msra.mxu0 0.0
    %886 = vmatprep.subr.mxu0 0.0
    %887 = vmatpush1.msra.mxu0 0.0
    %888 = vmatprep.subr.mxu0 0.0
    %889 = vmatpush1.msra.mxu0 0.0
    %890 = vmatprep.subr.mxu0 0.0
    %891 = vmatpush1.msra.mxu0 0.0
    %892 = vmatprep.subr.mxu0 0.0
    %893 = vmatpush1.msra.mxu0 0.0
    %894 = vmatprep.subr.mxu0 0.0
    %895 = vmatpush1.msra.mxu0 0.0
    %896 = vmatprep.subr.mxu0 0.0
    %897 = vmatpush1.msra.mxu0 0.0
    %898 = vmatprep.subr.mxu0 0.0
    %899 = vmatpush1.msra.mxu0 0.0
    %900 = vmatprep.subr.mxu0 0.0
    %901 = vmatpush1.msra.mxu0 0.0
    %902 = vmatprep.subr.mxu0 0.0
    %903 = vmatpush1.msra.mxu0 0.0
    %904 = vmatprep.subr.mxu0 0.0
    %905 = vmatpush1.msra.mxu0 0.0
    %906 = vmatprep.subr.mxu0 0.0
    %907 = vmatpush1.msra.mxu0 0.0
    %908 = vmatprep.subr.mxu0 0.0
    %909 = vmatpush1.msra.mxu0 0.0
    %910 = vmatprep.subr.mxu0 0.0
    %911 = vmatpush1.msra.mxu0 0.0
    %912 = vmatprep.subr.mxu0 0.0
    %913 = vmatpush1.msra.mxu0 0.0
    %914 = vmatprep.subr.mxu0 0.0
    %915 = vmatpush1.msra.mxu0 0.0
    %916 = vmatprep.mubr.f32.mxu0 0.0
    %917 = vmatmul.mubr.f32.gmra.mrb[0].mxu0 %v780
    %v918 = vpop.f32.mrb[0].mxu0
    %v919 = vadd.f32 %v615, %v918
    %v920 = vpop.f32.mrb[0].mxu0
    %921 = vdwg.mxu0
    %v923 = vrot.slane %v848, 6
    %v925 = vadd.f32 %v469, %v923
    %v926 = vxor.u32 %v925, 2147483648
    %v927 = vmul.f32 %v926, 1.442695
    %v928 = vpow.pop %v927
    %v929 = vadd.f32 %v928, 1.0
    %v930 = vrcp.pop %v929
    %v931 = vmul.f32 1.0, %v930
    %v933 = vrot.slane %v850, 6
    %v935 = vadd.f32 %v471, %v933
    %v936 = vxor.u32 %v935, 2147483648
    %v937 = vmul.f32 %v936, 1.442695
    %v938 = vpow.pop %v937
    %v939 = vadd.f32 %v938, 1.0
    %v940 = vrcp.pop %v939
    %v941 = vmul.f32 1.0, %v940
    %v943 = vrot.slane %v919, 6
    %v945 = vmul.f32 %v931, %v943
    %v946 = vadd.f32 %v546, %v945
    %v947 = vtanh.pop %v946
    %v948 = vsub.f32 1.0, %v941
    %v949 = vmul.f32 %v948, %v947
    %v951 = vrot.slane %v780, 6
    %v953 = vmul.f32 %v941, %v951
    %v954 = vadd.f32 %v949, %v953
    %v956 = vrot.slane %v954, 2
    %958 = vmatprep.subr.mxu0 %v555
    %959 = vmatpush1.msra.mxu0 %v554
    %960 = vmatprep.subr.mxu0 %v558
    %961 = vmatpush1.msra.mxu0 %v557
    %962 = vmatprep.subr.mxu0 %v561
    %963 = vmatpush1.msra.mxu0 %v560
    %964 = vmatprep.subr.mxu0 %v564
    %965 = vmatpush1.msra.mxu0 %v563
    %966 = vmatprep.subr.mxu0 %v567
    %967 = vmatpush1.msra.mxu0 %v566
    %968 = vmatprep.subr.mxu0 %v570
    %969 = vmatpush1.msra.mxu0 %v569
    %970 = vmatprep.subr.mxu0 %v573
    %971 = vmatpush1.msra.mxu0 %v572
    %972 = vmatprep.subr.mxu0 %v576
    %973 = vmatpush1.msra.mxu0 %v575
    %974 = vmatprep.subr.mxu0 %v579
    %975 = vmatpush1.msra.mxu0 %v578
    %976 = vmatprep.subr.mxu0 %v582
    %977 = vmatpush1.msra.mxu0 %v581
    %978 = vmatprep.subr.mxu0 %v585
    %979 = vmatpush1.msra.mxu0 %v584
    %980 = vmatprep.subr.mxu0 %v588
    %981 = vmatpush1.msra.mxu0 %v587
    %982 = vmatprep.subr.mxu0 %v591
    %983 = vmatpush1.msra.mxu0 %v590
    %984 = vmatprep.subr.mxu0 %v594
    %985 = vmatpush1.msra.mxu0 %v593
    %986 = vmatprep.subr.mxu0 %v597
    %987 = vmatpush1.msra.mxu0 %v596
    %988 = vmatprep.subr.mxu0 %v600
    %989 = vmatpush1.msra.mxu0 %v599
    %990 = vmatprep.subr.mxu0 0.0
    %991 = vmatpush1.msra.mxu0 0.0
    %992 = vmatprep.subr.mxu0 0.0
    %993 = vmatpush1.msra.mxu0 0.0
    %994 = vmatprep.subr.mxu0 0.0
    %995 = vmatpush1.msra.mxu0 0.0
    %996 = vmatprep.subr.mxu0 0.0
    %997 = vmatpush1.msra.mxu0 0.0
    %998 = vmatprep.subr.mxu0 0.0
    %999 = vmatpush1.msra.mxu0 0.0
    %1000 = vmatprep.subr.mxu0 0.0
    %1001 = vmatpush1.msra.mxu0 0.0
    %1002 = vmatprep.subr.mxu0 0.0
    %1003 = vmatpush1.msra.mxu0 0.0
    %1004 = vmatprep.subr.mxu0 0.0
    %1005 = vmatpush1.msra.mxu0 0.0
    %1006 = vmatprep.subr.mxu0 0.0
    %1007 = vmatpush1.msra.mxu0 0.0
    %1008 = vmatprep.subr.mxu0 0.0
    %1009 = vmatpush1.msra.mxu0 0.0
    %1010 = vmatprep.subr.mxu0 0.0
    %1011 = vmatpush1.msra.mxu0 0.0
    %1012 = vmatprep.subr.mxu0 0.0
    %1013 = vmatpush1.msra.mxu0 0.0
    %1014 = vmatprep.subr.mxu0 0.0
    %1015 = vmatpush1.msra.mxu0 0.0
    %1016 = vmatprep.subr.mxu0 0.0
    %1017 = vmatpush1.msra.mxu0 0.0
    %1018 = vmatprep.subr.mxu0 0.0
    %1019 = vmatpush1.msra.mxu0 0.0
    %1020 = vmatprep.subr.mxu0 0.0
    %1021 = vmatpush1.msra.mxu0 0.0
    %1022 = vmatprep.mubr.f32.mxu0 0.0
    %1023 = vmatmul.mubr.f32.gmra.mrb[0].mxu0 %v956
    %v1024 = vpop.f32.mrb[0].mxu0
    %v1025 = vadd.f32 %v607, %v1024
    %v1026 = vpop.f32.mrb[0].mxu0
    %v1027 = vadd.f32 %v611, %v1026
    %1028 = vdwg.mxu0
    %1029 = vmatprep.subr.mxu0 0.0
    %1030 = vmatpush1.msra.mxu0 %v556
    %1031 = vmatprep.subr.mxu0 0.0
    %1032 = vmatpush1.msra.mxu0 %v559
    %1033 = vmatprep.subr.mxu0 0.0
    %1034 = vmatpush1.msra.mxu0 %v562
    %1035 = vmatprep.subr.mxu0 0.0
    %1036 = vmatpush1.msra.mxu0 %v565
    %1037 = vmatprep.subr.mxu0 0.0
    %1038 = vmatpush1.msra.mxu0 %v568
    %1039 = vmatprep.subr.mxu0 0.0
    %1040 = vmatpush1.msra.mxu0 %v571
    %1041 = vmatprep.subr.mxu0 0.0
    %1042 = vmatpush1.msra.mxu0 %v574
    %1043 = vmatprep.subr.mxu0 0.0
    %1044 = vmatpush1.msra.mxu0 %v577
    %1045 = vmatprep.subr.mxu0 0.0
    %1046 = vmatpush1.msra.mxu0 %v580
    %1047 = vmatprep.subr.mxu0 0.0
    %1048 = vmatpush1.msra.mxu0 %v583
    %1049 = vmatprep.subr.mxu0 0.0
    %1050 = vmatpush1.msra.mxu0 %v586
    %1051 = vmatprep.subr.mxu0 0.0
    %1052 = vmatpush1.msra.mxu0 %v589
    %1053 = vmatprep.subr.mxu0 0.0
    %1054 = vmatpush1.msra.mxu0 %v592
    %1055 = vmatprep.subr.mxu0 0.0
    %1056 = vmatpush1.msra.mxu0 %v595
    %1057 = vmatprep.subr.mxu0 0.0
    %1058 = vmatpush1.msra.mxu0 %v598
    %1059 = vmatprep.subr.mxu0 0.0
    %1060 = vmatpush1.msra.mxu0 %v601
    %1061 = vmatprep.subr.mxu0 0.0
    %1062 = vmatpush1.msra.mxu0 0.0
    %1063 = vmatprep.subr.mxu0 0.0
    %1064 = vmatpush1.msra.mxu0 0.0
    %1065 = vmatprep.subr.mxu0 0.0
    %1066 = vmatpush1.msra.mxu0 0.0
    %1067 = vmatprep.subr.mxu0 0.0
    %1068 = vmatpush1.msra.mxu0 0.0
    %1069 = vmatprep.subr.mxu0 0.0
    %1070 = vmatpush1.msra.mxu0 0.0
    %1071 = vmatprep.subr.mxu0 0.0
    %1072 = vmatpush1.msra.mxu0 0.0
    %1073 = vmatprep.subr.mxu0 0.0
    %1074 = vmatpush1.msra.mxu0 0.0
    %1075 = vmatprep.subr.mxu0 0.0
    %1076 = vmatpush1.msra.mxu0 0.0
    %1077 = vmatprep.subr.mxu0 0.0
    %1078 = vmatpush1.msra.mxu0 0.0
    %1079 = vmatprep.subr.mxu0 0.0
    %1080 = vmatpush1.msra.mxu0 0.0
    %1081 = vmatprep.subr.mxu0 0.0
    %1082 = vmatpush1.msra.mxu0 0.0
    %1083 = vmatprep.subr.mxu0 0.0
    %1084 = vmatpush1.msra.mxu0 0.0
    %1085 = vmatprep.subr.mxu0 0.0
    %1086 = vmatpush1.msra.mxu0 0.0
    %1087 = vmatprep.subr.mxu0 0.0
    %1088 = vmatpush1.msra.mxu0 0.0
    %1089 = vmatprep.subr.mxu0 0.0
    %1090 = vmatpush1.msra.mxu0 0.0
    %1091 = vmatprep.subr.mxu0 0.0
    %1092 = vmatpush1.msra.mxu0 0.0
    %1093 = vmatprep.mubr.f32.mxu0 0.0
    %1094 = vmatmul.mubr.f32.gmra.mrb[0].mxu0 %v956
    %v1095 = vpop.f32.mrb[0].mxu0
    %v1096 = vadd.f32 %v615, %v1095
    %v1097 = vpop.f32.mrb[0].mxu0
    %1098 = vdwg.mxu0
    %v1100 = vrot.slane %v1025, 4
    %v1102 = vadd.f32 %v469, %v1100
    %v1103 = vxor.u32 %v1102, 2147483648
    %v1104 = vmul.f32 %v1103, 1.442695
    %v1105 = vpow.pop %v1104
    %v1106 = vadd.f32 %v1105, 1.0
    %v1107 = vrcp.pop %v1106
    %v1108 = vmul.f32 1.0, %v1107
    %v1110 = vrot.slane %v1027, 4
    %v1112 = vadd.f32 %v471, %v1110
    %v1113 = vxor.u32 %v1112, 2147483648
    %v1114 = vmul.f32 %v1113, 1.442695
    %v1115 = vpow.pop %v1114
    %v1116 = vadd.f32 %v1115, 1.0
    %v1117 = vrcp.pop %v1116
    %v1118 = vmul.f32 1.0, %v1117
    %v1120 = vrot.slane %v1096, 4
    %v1122 = vmul.f32 %v1108, %v1120
    %v1123 = vadd.f32 %v546, %v1122
    %v1124 = vtanh.pop %v1123
    %v1125 = vsub.f32 1.0, %v1118
    %v1126 = vmul.f32 %v1125, %v1124
    %v1127 = vrot.slane %v954, 6
    %v1129 = vmul.f32 %v1118, %v1127
    %v1130 = vadd.f32 %v1126, %v1129
    %v1132 = vrot.slane %v1130, 4
    %1134 = vmatprep.subr.mxu0 %v555
    %1135 = vmatpush1.msra.mxu0 %v554
    %1136 = vmatprep.subr.mxu0 %v558
    %1137 = vmatpush1.msra.mxu0 %v557
    %1138 = vmatprep.subr.mxu0 %v561
    %1139 = vmatpush1.msra.mxu0 %v560
    %1140 = vmatprep.subr.mxu0 %v564
    %1141 = vmatpush1.msra.mxu0 %v563
    %1142 = vmatprep.subr.mxu0 %v567
    %1143 = vmatpush1.msra.mxu0 %v566
    %1144 = vmatprep.subr.mxu0 %v570
    %1145 = vmatpush1.msra.mxu0 %v569
    %1146 = vmatprep.subr.mxu0 %v573
    %1147 = vmatpush1.msra.mxu0 %v572
    %1148 = vmatprep.subr.mxu0 %v576
    %1149 = vmatpush1.msra.mxu0 %v575
    %1150 = vmatprep.subr.mxu0 %v579
    %1151 = vmatpush1.msra.mxu0 %v578
    %1152 = vmatprep.subr.mxu0 %v582
    %1153 = vmatpush1.msra.mxu0 %v581
    %1154 = vmatprep.subr.mxu0 %v585
    %1155 = vmatpush1.msra.mxu0 %v584
    %1156 = vmatprep.subr.mxu0 %v588
    %1157 = vmatpush1.msra.mxu0 %v587
    %1158 = vmatprep.subr.mxu0 %v591
    %1159 = vmatpush1.msra.mxu0 %v590
    %1160 = vmatprep.subr.mxu0 %v594
    %1161 = vmatpush1.msra.mxu0 %v593
    %1162 = vmatprep.subr.mxu0 %v597
    %1163 = vmatpush1.msra.mxu0 %v596
    %1164 = vmatprep.subr.mxu0 %v600
    %1165 = vmatpush1.msra.mxu0 %v599
    %1166 = vmatprep.subr.mxu0 0.0
    %1167 = vmatpush1.msra.mxu0 0.0
    %1168 = vmatprep.subr.mxu0 0.0
    %1169 = vmatpush1.msra.mxu0 0.0
    %1170 = vmatprep.subr.mxu0 0.0
    %1171 = vmatpush1.msra.mxu0 0.0
    %1172 = vmatprep.subr.mxu0 0.0
    %1173 = vmatpush1.msra.mxu0 0.0
    %1174 = vmatprep.subr.mxu0 0.0
    %1175 = vmatpush1.msra.mxu0 0.0
    %1176 = vmatprep.subr.mxu0 0.0
    %1177 = vmatpush1.msra.mxu0 0.0
    %1178 = vmatprep.subr.mxu0 0.0
    %1179 = vmatpush1.msra.mxu0 0.0
    %1180 = vmatprep.subr.mxu0 0.0
    %1181 = vmatpush1.msra.mxu0 0.0
    %1182 = vmatprep.subr.mxu0 0.0
    %1183 = vmatpush1.msra.mxu0 0.0
    %1184 = vmatprep.subr.mxu0 0.0
    %1185 = vmatpush1.msra.mxu0 0.0
    %1186 = vmatprep.subr.mxu0 0.0
    %1187 = vmatpush1.msra.mxu0 0.0
    %1188 = vmatprep.subr.mxu0 0.0
    %1189 = vmatpush1.msra.mxu0 0.0
    %1190 = vmatprep.subr.mxu0 0.0
    %1191 = vmatpush1.msra.mxu0 0.0
    %1192 = vmatprep.subr.mxu0 0.0
    %1193 = vmatpush1.msra.mxu0 0.0
    %1194 = vmatprep.subr.mxu0 0.0
    %1195 = vmatpush1.msra.mxu0 0.0
    %1196 = vmatprep.subr.mxu0 0.0
    %1197 = vmatpush1.msra.mxu0 0.0
    %1198 = vmatprep.mubr.f32.mxu0 0.0
    %1199 = vmatmul.mubr.f32.gmra.mrb[0].mxu0 %v1132
    %v1200 = vpop.f32.mrb[0].mxu0
    %v1201 = vadd.f32 %v607, %v1200
    %v1202 = vpop.f32.mrb[0].mxu0
    %v1203 = vadd.f32 %v611, %v1202
    %1204 = vdwg.mxu0
    %1205 = vmatprep.subr.mxu0 0.0
    %1206 = vmatpush1.msra.mxu0 %v556
    %1207 = vmatprep.subr.mxu0 0.0
    %1208 = vmatpush1.msra.mxu0 %v559
    %1209 = vmatprep.subr.mxu0 0.0
    %1210 = vmatpush1.msra.mxu0 %v562
    %1211 = vmatprep.subr.mxu0 0.0
    %1212 = vmatpush1.msra.mxu0 %v565
    %1213 = vmatprep.subr.mxu0 0.0
    %1214 = vmatpush1.msra.mxu0 %v568
    %1215 = vmatprep.subr.mxu0 0.0
    %1216 = vmatpush1.msra.mxu0 %v571
    %1217 = vmatprep.subr.mxu0 0.0
    %1218 = vmatpush1.msra.mxu0 %v574
    %1219 = vmatprep.subr.mxu0 0.0
    %1220 = vmatpush1.msra.mxu0 %v577
    %1221 = vmatprep.subr.mxu0 0.0
    %1222 = vmatpush1.msra.mxu0 %v580
    %1223 = vmatprep.subr.mxu0 0.0
    %1224 = vmatpush1.msra.mxu0 %v583
    %1225 = vmatprep.subr.mxu0 0.0
    %1226 = vmatpush1.msra.mxu0 %v586
    %1227 = vmatprep.subr.mxu0 0.0
    %1228 = vmatpush1.msra.mxu0 %v589
    %1229 = vmatprep.subr.mxu0 0.0
    %1230 = vmatpush1.msra.mxu0 %v592
    %1231 = vmatprep.subr.mxu0 0.0
    %1232 = vmatpush1.msra.mxu0 %v595
    %1233 = vmatprep.subr.mxu0 0.0
    %1234 = vmatpush1.msra.mxu0 %v598
    %1235 = vmatprep.subr.mxu0 0.0
    %1236 = vmatpush1.msra.mxu0 %v601
    %1237 = vmatprep.subr.mxu0 0.0
    %1238 = vmatpush1.msra.mxu0 0.0
    %1239 = vmatprep.subr.mxu0 0.0
    %1240 = vmatpush1.msra.mxu0 0.0
    %1241 = vmatprep.subr.mxu0 0.0
    %1242 = vmatpush1.msra.mxu0 0.0
    %1243 = vmatprep.subr.mxu0 0.0
    %1244 = vmatpush1.msra.mxu0 0.0
    %1245 = vmatprep.subr.mxu0 0.0
    %1246 = vmatpush1.msra.mxu0 0.0
    %1247 = vmatprep.subr.mxu0 0.0
    %1248 = vmatpush1.msra.mxu0 0.0
    %1249 = vmatprep.subr.mxu0 0.0
    %1250 = vmatpush1.msra.mxu0 0.0
    %1251 = vmatprep.subr.mxu0 0.0
    %1252 = vmatpush1.msra.mxu0 0.0
    %1253 = vmatprep.subr.mxu0 0.0
    %1254 = vmatpush1.msra.mxu0 0.0
    %1255 = vmatprep.subr.mxu0 0.0
    %1256 = vmatpush1.msra.mxu0 0.0
    %1257 = vmatprep.subr.mxu0 0.0
    %1258 = vmatpush1.msra.mxu0 0.0
    %1259 = vmatprep.subr.mxu0 0.0
    %1260 = vmatpush1.msra.mxu0 0.0
    %1261 = vmatprep.subr.mxu0 0.0
    %1262 = vmatpush1.msra.mxu0 0.0
    %1263 = vmatprep.subr.mxu0 0.0
    %1264 = vmatpush1.msra.mxu0 0.0
    %1265 = vmatprep.subr.mxu0 0.0
    %1266 = vmatpush1.msra.mxu0 0.0
    %1267 = vmatprep.subr.mxu0 0.0
    %1268 = vmatpush1.msra.mxu0 0.0
    %1269 = vmatprep.mubr.f32.mxu0 0.0
    %1270 = vmatmul.mubr.f32.gmra.mrb[0].mxu0 %v1132
    %v1271 = vpop.f32.mrb[0].mxu0
    %v1272 = vadd.f32 %v615, %v1271
    %v1273 = vpop.f32.mrb[0].mxu0
    %1274 = vdwg.mxu0
    %v1276 = vrot.slane %v1201, 2
    %v1278 = vadd.f32 %v469, %v1276
    %v1279 = vxor.u32 %v1278, 2147483648
    %v1280 = vmul.f32 %v1279, 1.442695
    %v1281 = vpow.pop %v1280
    %v1282 = vadd.f32 %v1281, 1.0
    %v1283 = vrcp.pop %v1282
    %v1284 = vmul.f32 1.0, %v1283
    %v1286 = vrot.slane %v1203, 2
    %v1288 = vadd.f32 %v471, %v1286
    %v1289 = vxor.u32 %v1288, 2147483648
    %v1290 = vmul.f32 %v1289, 1.442695
    %v1291 = vpow.pop %v1290
    %v1292 = vadd.f32 %v1291, 1.0
    %v1293 = vrcp.pop %v1292
    %v1294 = vmul.f32 1.0, %v1293
    %v1296 = vrot.slane %v1272, 2
    %v1298 = vmul.f32 %v1284, %v1296
    %v1299 = vadd.f32 %v546, %v1298
    %v1300 = vtanh.pop %v1299
    %v1301 = vsub.f32 1.0, %v1294
    %v1302 = vmul.f32 %v1301, %v1300
    %v1303 = vrot.slane %v1130, 6
    %v1305 = vmul.f32 %v1294, %v1303
    %v1306 = vadd.f32 %v1302, %v1305
    %v1308 = vrot.slane %v1306, 6
    %1310 = vmatprep.subr.mxu0 %v555
    %1311 = vmatpush1.msra.mxu0 %v554
    %1312 = vmatprep.subr.mxu0 %v558
    %1313 = vmatpush1.msra.mxu0 %v557
    %1314 = vmatprep.subr.mxu0 %v561
    %1315 = vmatpush1.msra.mxu0 %v560
    %1316 = vmatprep.subr.mxu0 %v564
    %1317 = vmatpush1.msra.mxu0 %v563
    %1318 = vmatprep.subr.mxu0 %v567
    %1319 = vmatpush1.msra.mxu0 %v566
    %1320 = vmatprep.subr.mxu0 %v570
    %1321 = vmatpush1.msra.mxu0 %v569
    %1322 = vmatprep.subr.mxu0 %v573
    %1323 = vmatpush1.msra.mxu0 %v572
    %1324 = vmatprep.subr.mxu0 %v576
    %1325 = vmatpush1.msra.mxu0 %v575
    %1326 = vmatprep.subr.mxu0 %v579
    %1327 = vmatpush1.msra.mxu0 %v578
    %1328 = vmatprep.subr.mxu0 %v582
    %1329 = vmatpush1.msra.mxu0 %v581
    %1330 = vmatprep.subr.mxu0 %v585
    %1331 = vmatpush1.msra.mxu0 %v584
    %1332 = vmatprep.subr.mxu0 %v588
    %1333 = vmatpush1.msra.mxu0 %v587
    %1334 = vmatprep.subr.mxu0 %v591
    %1335 = vmatpush1.msra.mxu0 %v590
    %1336 = vmatprep.subr.mxu0 %v594
    %1337 = vmatpush1.msra.mxu0 %v593
    %1338 = vmatprep.subr.mxu0 %v597
    %1339 = vmatpush1.msra.mxu0 %v596
    %1340 = vmatprep.subr.mxu0 %v600
    %1341 = vmatpush1.msra.mxu0 %v599
    %1342 = vmatprep.subr.mxu0 0.0
    %1343 = vmatpush1.msra.mxu0 0.0
    %1344 = vmatprep.subr.mxu0 0.0
    %1345 = vmatpush1.msra.mxu0 0.0
    %1346 = vmatprep.subr.mxu0 0.0
    %1347 = vmatpush1.msra.mxu0 0.0
    %1348 = vmatprep.subr.mxu0 0.0
    %1349 = vmatpush1.msra.mxu0 0.0
    %1350 = vmatprep.subr.mxu0 0.0
    %1351 = vmatpush1.msra.mxu0 0.0
    %1352 = vmatprep.subr.mxu0 0.0
    %1353 = vmatpush1.msra.mxu0 0.0
    %1354 = vmatprep.subr.mxu0 0.0
    %1355 = vmatpush1.msra.mxu0 0.0
    %1356 = vmatprep.subr.mxu0 0.0
    %1357 = vmatpush1.msra.mxu0 0.0
    %1358 = vmatprep.subr.mxu0 0.0
    %1359 = vmatpush1.msra.mxu0 0.0
    %1360 = vmatprep.subr.mxu0 0.0
    %1361 = vmatpush1.msra.mxu0 0.0
    %1362 = vmatprep.subr.mxu0 0.0
    %1363 = vmatpush1.msra.mxu0 0.0
    %1364 = vmatprep.subr.mxu0 0.0
    %1365 = vmatpush1.msra.mxu0 0.0
    %1366 = vmatprep.subr.mxu0 0.0
    %1367 = vmatpush1.msra.mxu0 0.0
    %1368 = vmatprep.subr.mxu0 0.0
    %1369 = vmatpush1.msra.mxu0 0.0
    %1370 = vmatprep.subr.mxu0 0.0
    %1371 = vmatpush1.msra.mxu0 0.0
    %1372 = vmatprep.subr.mxu0 0.0
    %1373 = vmatpush1.msra.mxu0 0.0
    %1374 = vmatprep.mubr.f32.mxu0 0.0
    %1375 = vmatmul.mubr.f32.gmra.mrb[0].mxu0 %v1308
    %v1376 = vpop.f32.mrb[0].mxu0
    %v1377 = vadd.f32 %v607, %v1376
    %v1378 = vpop.f32.mrb[0].mxu0
    %v1379 = vadd.f32 %v611, %v1378
    %1380 = vdwg.mxu0
    %1381 = vmatprep.subr.mxu0 0.0
    %1382 = vmatpush1.msra.mxu0 %v556
    %1383 = vmatprep.subr.mxu0 0.0
    %1384 = vmatpush1.msra.mxu0 %v559
    %1385 = vmatprep.subr.mxu0 0.0
    %1386 = vmatpush1.msra.mxu0 %v562
    %1387 = vmatprep.subr.mxu0 0.0
    %1388 = vmatpush1.msra.mxu0 %v565
    %1389 = vmatprep.subr.mxu0 0.0
    %1390 = vmatpush1.msra.mxu0 %v568
    %1391 = vmatprep.subr.mxu0 0.0
    %1392 = vmatpush1.msra.mxu0 %v571
    %1393 = vmatprep.subr.mxu0 0.0
    %1394 = vmatpush1.msra.mxu0 %v574
    %1395 = vmatprep.subr.mxu0 0.0
    %1396 = vmatpush1.msra.mxu0 %v577
    %1397 = vmatprep.subr.mxu0 0.0
    %1398 = vmatpush1.msra.mxu0 %v580
    %1399 = vmatprep.subr.mxu0 0.0
    %1400 = vmatpush1.msra.mxu0 %v583
    %1401 = vmatprep.subr.mxu0 0.0
    %1402 = vmatpush1.msra.mxu0 %v586
    %1403 = vmatprep.subr.mxu0 0.0
    %1404 = vmatpush1.msra.mxu0 %v589
    %1405 = vmatprep.subr.mxu0 0.0
    %1406 = vmatpush1.msra.mxu0 %v592
    %1407 = vmatprep.subr.mxu0 0.0
    %1408 = vmatpush1.msra.mxu0 %v595
    %1409 = vmatprep.subr.mxu0 0.0
    %1410 = vmatpush1.msra.mxu0 %v598
    %1411 = vmatprep.subr.mxu0 0.0
    %1412 = vmatpush1.msra.mxu0 %v601
    %1413 = vmatprep.subr.mxu0 0.0
    %1414 = vmatpush1.msra.mxu0 0.0
    %1415 = vmatprep.subr.mxu0 0.0
    %1416 = vmatpush1.msra.mxu0 0.0
    %1417 = vmatprep.subr.mxu0 0.0
    %1418 = vmatpush1.msra.mxu0 0.0
    %1419 = vmatprep.subr.mxu0 0.0
    %1420 = vmatpush1.msra.mxu0 0.0
    %1421 = vmatprep.subr.mxu0 0.0
    %1422 = vmatpush1.msra.mxu0 0.0
    %1423 = vmatprep.subr.mxu0 0.0
    %1424 = vmatpush1.msra.mxu0 0.0
    %1425 = vmatprep.subr.mxu0 0.0
    %1426 = vmatpush1.msra.mxu0 0.0
    %1427 = vmatprep.subr.mxu0 0.0
    %1428 = vmatpush1.msra.mxu0 0.0
    %1429 = vmatprep.subr.mxu0 0.0
    %1430 = vmatpush1.msra.mxu0 0.0
    %1431 = vmatprep.subr.mxu0 0.0
    %1432 = vmatpush1.msra.mxu0 0.0
    %1433 = vmatprep.subr.mxu0 0.0
    %1434 = vmatpush1.msra.mxu0 0.0
    %1435 = vmatprep.subr.mxu0 0.0
    %1436 = vmatpush1.msra.mxu0 0.0
    %1437 = vmatprep.subr.mxu0 0.0
    %1438 = vmatpush1.msra.mxu0 0.0
    %1439 = vmatprep.subr.mxu0 0.0
    %1440 = vmatpush1.msra.mxu0 0.0
    %1441 = vmatprep.subr.mxu0 0.0
    %1442 = vmatpush1.msra.mxu0 0.0
    %1443 = vmatprep.subr.mxu0 0.0
    %1444 = vmatpush1.msra.mxu0 0.0
    %1445 = vmatprep.mubr.f32.mxu0 0.0
    %1446 = vmatmul.mubr.f32.gmra.mrb[0].mxu0 %v1308
    %v1447 = vpop.f32.mrb[0].mxu0
    %v1448 = vadd.f32 %v615, %v1447
    %v1449 = vpop.f32.mrb[0].mxu0
    %1450 = vdwg.mxu0
    %v1451 = vadd.f32 %v475, %v1377
    %v1452 = vxor.u32 %v1451, 2147483648
    %v1453 = vmul.f32 %v1452, 1.442695
    %v1454 = vpow.pop %v1453
    %v1455 = vadd.f32 %v1454, 1.0
    %v1456 = vrcp.pop %v1455
    %v1457 = vmul.f32 1.0, %v1456
    %v1458 = vadd.f32 %v477, %v1379
    %v1459 = vxor.u32 %v1458, 2147483648
    %v1460 = vmul.f32 %v1459, 1.442695
    %v1461 = vpow.pop %v1460
    %v1462 = vadd.f32 %v1461, 1.0
    %v1463 = vrcp.pop %v1462
    %v1464 = vmul.f32 1.0, %v1463
    %v1465 = vmul.f32 %v1457, %v1448
    %v1466 = vadd.f32 %v551, %v1465
    %v1467 = vtanh.pop %v1466
    %v1468 = vsub.f32 1.0, %v1464
    %v1469 = vmul.f32 %v1468, %v1467
    %v1470 = vmul.f32 %v1464, %v1308
    %v1471 = vadd.f32 %v1469, %v1470
    %1472 = vmatprep.subr.mxu0 %v555
    %1473 = vmatpush1.msra.mxu0 %v554
    %1474 = vmatprep.subr.mxu0 %v558
    %1475 = vmatpush1.msra.mxu0 %v557
    %1476 = vmatprep.subr.mxu0 %v561
    %1477 = vmatpush1.msra.mxu0 %v560
    %1478 = vmatprep.subr.mxu0 %v564
    %1479 = vmatpush1.msra.mxu0 %v563
    %1480 = vmatprep.subr.mxu0 %v567
    %1481 = vmatpush1.msra.mxu0 %v566
    %1482 = vmatprep.subr.mxu0 %v570
    %1483 = vmatpush1.msra.mxu0 %v569
    %1484 = vmatprep.subr.mxu0 %v573
    %1485 = vmatpush1.msra.mxu0 %v572
    %1486 = vmatprep.subr.mxu0 %v576
    %1487 = vmatpush1.msra.mxu0 %v575
    %1488 = vmatprep.subr.mxu0 %v579
    %1489 = vmatpush1.msra.mxu0 %v578
    %1490 = vmatprep.subr.mxu0 %v582
    %1491 = vmatpush1.msra.mxu0 %v581
    %1492 = vmatprep.subr.mxu0 %v585
    %1493 = vmatpush1.msra.mxu0 %v584
    %1494 = vmatprep.subr.mxu0 %v588
    %1495 = vmatpush1.msra.mxu0 %v587
    %1496 = vmatprep.subr.mxu0 %v591
    %1497 = vmatpush1.msra.mxu0 %v590
    %1498 = vmatprep.subr.mxu0 %v594
    %1499 = vmatpush1.msra.mxu0 %v593
    %1500 = vmatprep.subr.mxu0 %v597
    %1501 = vmatpush1.msra.mxu0 %v596
    %1502 = vmatprep.subr.mxu0 %v600
    %1503 = vmatpush1.msra.mxu0 %v599
    %1504 = vmatprep.subr.mxu0 0.0
    %1505 = vmatpush1.msra.mxu0 0.0
    %1506 = vmatprep.subr.mxu0 0.0
    %1507 = vmatpush1.msra.mxu0 0.0
    %1508 = vmatprep.subr.mxu0 0.0
    %1509 = vmatpush1.msra.mxu0 0.0
    %1510 = vmatprep.subr.mxu0 0.0
    %1511 = vmatpush1.msra.mxu0 0.0
    %1512 = vmatprep.subr.mxu0 0.0
    %1513 = vmatpush1.msra.mxu0 0.0
    %1514 = vmatprep.subr.mxu0 0.0
    %1515 = vmatpush1.msra.mxu0 0.0
    %1516 = vmatprep.subr.mxu0 0.0
    %1517 = vmatpush1.msra.mxu0 0.0
    %1518 = vmatprep.subr.mxu0 0.0
    %1519 = vmatpush1.msra.mxu0 0.0
    %1520 = vmatprep.subr.mxu0 0.0
    %1521 = vmatpush1.msra.mxu0 0.0
    %1522 = vmatprep.subr.mxu0 0.0
    %1523 = vmatpush1.msra.mxu0 0.0
    %1524 = vmatprep.subr.mxu0 0.0
    %1525 = vmatpush1.msra.mxu0 0.0
    %1526 = vmatprep.subr.mxu0 0.0
    %1527 = vmatpush1.msra.mxu0 0.0
    %1528 = vmatprep.subr.mxu0 0.0
    %1529 = vmatpush1.msra.mxu0 0.0
    %1530 = vmatprep.subr.mxu0 0.0
    %1531 = vmatpush1.msra.mxu0 0.0
    %1532 = vmatprep.subr.mxu0 0.0
    %1533 = vmatpush1.msra.mxu0 0.0
    %1534 = vmatprep.subr.mxu0 0.0
    %1535 = vmatpush1.msra.mxu0 0.0
    %1536 = vmatprep.mubr.f32.mxu0 0.0
    %1537 = vmatmul.mubr.f32.gmra.mrb[0].mxu0 %v1471
    %v1538 = vpop.f32.mrb[0].mxu0
    %v1539 = vadd.f32 %v607, %v1538
    %v1540 = vpop.f32.mrb[0].mxu0
    %v1541 = vadd.f32 %v611, %v1540
    %1542 = vdwg.mxu0
    %1543 = vmatprep.subr.mxu0 0.0
    %1544 = vmatpush1.msra.mxu0 %v556
    %1545 = vmatprep.subr.mxu0 0.0
    %1546 = vmatpush1.msra.mxu0 %v559
    %1547 = vmatprep.subr.mxu0 0.0
    %1548 = vmatpush1.msra.mxu0 %v562
    %1549 = vmatprep.subr.mxu0 0.0
    %1550 = vmatpush1.msra.mxu0 %v565
    %1551 = vmatprep.subr.mxu0 0.0
    %1552 = vmatpush1.msra.mxu0 %v568
    %1553 = vmatprep.subr.mxu0 0.0
    %1554 = vmatpush1.msra.mxu0 %v571
    %1555 = vmatprep.subr.mxu0 0.0
    %1556 = vmatpush1.msra.mxu0 %v574
    %1557 = vmatprep.subr.mxu0 0.0
    %1558 = vmatpush1.msra.mxu0 %v577
    %1559 = vmatprep.subr.mxu0 0.0
    %1560 = vmatpush1.msra.mxu0 %v580
    %1561 = vmatprep.subr.mxu0 0.0
    %1562 = vmatpush1.msra.mxu0 %v583
    %1563 = vmatprep.subr.mxu0 0.0
    %1564 = vmatpush1.msra.mxu0 %v586
    %1565 = vmatprep.subr.mxu0 0.0
    %1566 = vmatpush1.msra.mxu0 %v589
    %1567 = vmatprep.subr.mxu0 0.0
    %1568 = vmatpush1.msra.mxu0 %v592
    %1569 = vmatprep.subr.mxu0 0.0
    %1570 = vmatpush1.msra.mxu0 %v595
    %1571 = vmatprep.subr.mxu0 0.0
    %1572 = vmatpush1.msra.mxu0 %v598
    %1573 = vmatprep.subr.mxu0 0.0
    %1574 = vmatpush1.msra.mxu0 %v601
    %1575 = vmatprep.subr.mxu0 0.0
    %1576 = vmatpush1.msra.mxu0 0.0
    %1577 = vmatprep.subr.mxu0 0.0
    %1578 = vmatpush1.msra.mxu0 0.0
    %1579 = vmatprep.subr.mxu0 0.0
    %1580 = vmatpush1.msra.mxu0 0.0
    %1581 = vmatprep.subr.mxu0 0.0
    %1582 = vmatpush1.msra.mxu0 0.0
    %1583 = vmatprep.subr.mxu0 0.0
    %1584 = vmatpush1.msra.mxu0 0.0
    %1585 = vmatprep.subr.mxu0 0.0
    %1586 = vmatpush1.msra.mxu0 0.0
    %1587 = vmatprep.subr.mxu0 0.0
    %1588 = vmatpush1.msra.mxu0 0.0
    %1589 = vmatprep.subr.mxu0 0.0
    %1590 = vmatpush1.msra.mxu0 0.0
    %1591 = vmatprep.subr.mxu0 0.0
    %1592 = vmatpush1.msra.mxu0 0.0
    %1593 = vmatprep.subr.mxu0 0.0
    %1594 = vmatpush1.msra.mxu0 0.0
    %1595 = vmatprep.subr.mxu0 0.0
    %1596 = vmatpush1.msra.mxu0 0.0
    %1597 = vmatprep.subr.mxu0 0.0
    %1598 = vmatpush1.msra.mxu0 0.0
    %1599 = vmatprep.subr.mxu0 0.0
    %1600 = vmatpush1.msra.mxu0 0.0
    %1601 = vmatprep.subr.mxu0 0.0
    %1602 = vmatpush1.msra.mxu0 0.0
    %1603 = vmatprep.subr.mxu0 0.0
    %1604 = vmatpush1.msra.mxu0 0.0
    %1605 = vmatprep.subr.mxu0 0.0
    %1606 = vmatpush1.msra.mxu0 0.0
    %1607 = vmatprep.mubr.f32.mxu0 0.0
    %1608 = vmatmul.mubr.f32.gmra.mrb[0].mxu0 %v1471
    %v1609 = vpop.f32.mrb[0].mxu0
    %v1610 = vadd.f32 %v615, %v1609
    %v1611 = vpop.f32.mrb[0].mxu0
    %1612 = vdwg.mxu0
    %v1614 = vrot.slane %v1539, 6
    %v1616 = vadd.f32 %v475, %v1614
    %v1617 = vxor.u32 %v1616, 2147483648
    %v1618 = vmul.f32 %v1617, 1.442695
    %v1619 = vpow.pop %v1618
    %v1620 = vadd.f32 %v1619, 1.0
    %v1621 = vrcp.pop %v1620
    %v1622 = vmul.f32 1.0, %v1621
    %v1624 = vrot.slane %v1541, 6
    %v1626 = vadd.f32 %v477, %v1624
    %v1627 = vxor.u32 %v1626, 2147483648
    %v1628 = vmul.f32 %v1627, 1.442695
    %v1629 = vpow.pop %v1628
    %v1630 = vadd.f32 %v1629, 1.0
    %v1631 = vrcp.pop %v1630
    %v1632 = vmul.f32 1.0, %v1631
    %v1634 = vrot.slane %v1610, 6
    %v1636 = vmul.f32 %v1622, %v1634
    %v1637 = vadd.f32 %v551, %v1636
    %v1638 = vtanh.pop %v1637
    %v1639 = vsub.f32 1.0, %v1632
    %v1640 = vmul.f32 %v1639, %v1638
    %v1642 = vrot.slane %v1471, 6
    %v1644 = vmul.f32 %v1632, %v1642
    %v1645 = vadd.f32 %v1640, %v1644
    %v1647 = vrot.slane %v1645, 2
    %1649 = vmatprep.subr.mxu0 %v555
    %1650 = vmatpush1.msra.mxu0 %v554
    %1651 = vmatprep.subr.mxu0 %v558
    %1652 = vmatpush1.msra.mxu0 %v557
    %1653 = vmatprep.subr.mxu0 %v561
    %1654 = vmatpush1.msra.mxu0 %v560
    %1655 = vmatprep.subr.mxu0 %v564
    %1656 = vmatpush1.msra.mxu0 %v563
    %1657 = vmatprep.subr.mxu0 %v567
    %1658 = vmatpush1.msra.mxu0 %v566
    %1659 = vmatprep.subr.mxu0 %v570
    %1660 = vmatpush1.msra.mxu0 %v569
    %1661 = vmatprep.subr.mxu0 %v573
    %1662 = vmatpush1.msra.mxu0 %v572
    %1663 = vmatprep.subr.mxu0 %v576
    %1664 = vmatpush1.msra.mxu0 %v575
    %1665 = vmatprep.subr.mxu0 %v579
    %1666 = vmatpush1.msra.mxu0 %v578
    %1667 = vmatprep.subr.mxu0 %v582
    %1668 = vmatpush1.msra.mxu0 %v581
    %1669 = vmatprep.subr.mxu0 %v585
    %1670 = vmatpush1.msra.mxu0 %v584
    %1671 = vmatprep.subr.mxu0 %v588
    %1672 = vmatpush1.msra.mxu0 %v587
    %1673 = vmatprep.subr.mxu0 %v591
    %1674 = vmatpush1.msra.mxu0 %v590
    %1675 = vmatprep.subr.mxu0 %v594
    %1676 = vmatpush1.msra.mxu0 %v593
    %1677 = vmatprep.subr.mxu0 %v597
    %1678 = vmatpush1.msra.mxu0 %v596
    %1679 = vmatprep.subr.mxu0 %v600
    %1680 = vmatpush1.msra.mxu0 %v599
    %1681 = vmatprep.subr.mxu0 0.0
    %1682 = vmatpush1.msra.mxu0 0.0
    %1683 = vmatprep.subr.mxu0 0.0
    %1684 = vmatpush1.msra.mxu0 0.0
    %1685 = vmatprep.subr.mxu0 0.0
    %1686 = vmatpush1.msra.mxu0 0.0
    %1687 = vmatprep.subr.mxu0 0.0
    %1688 = vmatpush1.msra.mxu0 0.0
    %1689 = vmatprep.subr.mxu0 0.0
    %1690 = vmatpush1.msra.mxu0 0.0
    %1691 = vmatprep.subr.mxu0 0.0
    %1692 = vmatpush1.msra.mxu0 0.0
    %1693 = vmatprep.subr.mxu0 0.0
    %1694 = vmatpush1.msra.mxu0 0.0
    %1695 = vmatprep.subr.mxu0 0.0
    %1696 = vmatpush1.msra.mxu0 0.0
    %1697 = vmatprep.subr.mxu0 0.0
    %1698 = vmatpush1.msra.mxu0 0.0
    %1699 = vmatprep.subr.mxu0 0.0
    %1700 = vmatpush1.msra.mxu0 0.0
    %1701 = vmatprep.subr.mxu0 0.0
    %1702 = vmatpush1.msra.mxu0 0.0
    %1703 = vmatprep.subr.mxu0 0.0
    %1704 = vmatpush1.msra.mxu0 0.0
    %1705 = vmatprep.subr.mxu0 0.0
    %1706 = vmatpush1.msra.mxu0 0.0
    %1707 = vmatprep.subr.mxu0 0.0
    %1708 = vmatpush1.msra.mxu0 0.0
    %1709 = vmatprep.subr.mxu0 0.0
    %1710 = vmatpush1.msra.mxu0 0.0
    %1711 = vmatprep.subr.mxu0 0.0
    %1712 = vmatpush1.msra.mxu0 0.0
    %1713 = vmatprep.mubr.f32.mxu0 0.0
    %1714 = vmatmul.mubr.f32.gmra.mrb[0].mxu0 %v1647
    %v1715 = vpop.f32.mrb[0].mxu0
    %v1716 = vadd.f32 %v607, %v1715
    %v1717 = vpop.f32.mrb[0].mxu0
    %v1718 = vadd.f32 %v611, %v1717
    %1719 = vdwg.mxu0
    %1720 = vmatprep.subr.mxu0 0.0
    %1721 = vmatpush1.msra.mxu0 %v556
    %1722 = vmatprep.subr.mxu0 0.0
    %1723 = vmatpush1.msra.mxu0 %v559
    %1724 = vmatprep.subr.mxu0 0.0
    %1725 = vmatpush1.msra.mxu0 %v562
    %1726 = vmatprep.subr.mxu0 0.0
    %1727 = vmatpush1.msra.mxu0 %v565
    %1728 = vmatprep.subr.mxu0 0.0
    %1729 = vmatpush1.msra.mxu0 %v568
    %1730 = vmatprep.subr.mxu0 0.0
    %1731 = vmatpush1.msra.mxu0 %v571
    %1732 = vmatprep.subr.mxu0 0.0
    %1733 = vmatpush1.msra.mxu0 %v574
    %1734 = vmatprep.subr.mxu0 0.0
    %1735 = vmatpush1.msra.mxu0 %v577
    %1736 = vmatprep.subr.mxu0 0.0
    %1737 = vmatpush1.msra.mxu0 %v580
    %1738 = vmatprep.subr.mxu0 0.0
    %1739 = vmatpush1.msra.mxu0 %v583
    %1740 = vmatprep.subr.mxu0 0.0
    %1741 = vmatpush1.msra.mxu0 %v586
    %1742 = vmatprep.subr.mxu0 0.0
    %1743 = vmatpush1.msra.mxu0 %v589
    %1744 = vmatprep.subr.mxu0 0.0
    %1745 = vmatpush1.msra.mxu0 %v592
    %1746 = vmatprep.subr.mxu0 0.0
    %1747 = vmatpush1.msra.mxu0 %v595
    %1748 = vmatprep.subr.mxu0 0.0
    %1749 = vmatpush1.msra.mxu0 %v598
    %1750 = vmatprep.subr.mxu0 0.0
    %1751 = vmatpush1.msra.mxu0 %v601
    %1752 = vmatprep.subr.mxu0 0.0
    %1753 = vmatpush1.msra.mxu0 0.0
    %1754 = vmatprep.subr.mxu0 0.0
    %1755 = vmatpush1.msra.mxu0 0.0
    %1756 = vmatprep.subr.mxu0 0.0
    %1757 = vmatpush1.msra.mxu0 0.0
    %1758 = vmatprep.subr.mxu0 0.0
    %1759 = vmatpush1.msra.mxu0 0.0
    %1760 = vmatprep.subr.mxu0 0.0
    %1761 = vmatpush1.msra.mxu0 0.0
    %1762 = vmatprep.subr.mxu0 0.0
    %1763 = vmatpush1.msra.mxu0 0.0
    %1764 = vmatprep.subr.mxu0 0.0
    %1765 = vmatpush1.msra.mxu0 0.0
    %1766 = vmatprep.subr.mxu0 0.0
    %1767 = vmatpush1.msra.mxu0 0.0
    %1768 = vmatprep.subr.mxu0 0.0
    %1769 = vmatpush1.msra.mxu0 0.0
    %1770 = vmatprep.subr.mxu0 0.0
    %1771 = vmatpush1.msra.mxu0 0.0
    %1772 = vmatprep.subr.mxu0 0.0
    %1773 = vmatpush1.msra.mxu0 0.0
    %1774 = vmatprep.subr.mxu0 0.0
    %1775 = vmatpush1.msra.mxu0 0.0
    %1776 = vmatprep.subr.mxu0 0.0
    %1777 = vmatpush1.msra.mxu0 0.0
    %1778 = vmatprep.subr.mxu0 0.0
    %1779 = vmatpush1.msra.mxu0 0.0
    %1780 = vmatprep.subr.mxu0 0.0
    %1781 = vmatpush1.msra.mxu0 0.0
    %1782 = vmatprep.subr.mxu0 0.0
    %1783 = vmatpush1.msra.mxu0 0.0
    %1784 = vmatprep.mubr.f32.mxu0 0.0
    %1785 = vmatmul.mubr.f32.gmra.mrb[0].mxu0 %v1647
    %v1786 = vpop.f32.mrb[0].mxu0
    %v1787 = vadd.f32 %v615, %v1786
    %v1788 = vpop.f32.mrb[0].mxu0
    %1789 = vdwg.mxu0
    %v1791 = vrot.slane %v1716, 4
    %v1793 = vadd.f32 %v475, %v1791
    %v1794 = vxor.u32 %v1793, 2147483648
    %v1795 = vmul.f32 %v1794, 1.442695
    %v1796 = vpow.pop %v1795
    %v1797 = vadd.f32 %v1796, 1.0
    %v1798 = vrcp.pop %v1797
    %v1799 = vmul.f32 1.0, %v1798
    %v1801 = vrot.slane %v1718, 4
    %v1803 = vadd.f32 %v477, %v1801
    %v1804 = vxor.u32 %v1803, 2147483648
    %v1805 = vmul.f32 %v1804, 1.442695
    %v1806 = vpow.pop %v1805
    %v1807 = vadd.f32 %v1806, 1.0
    %v1808 = vrcp.pop %v1807
    %v1809 = vmul.f32 1.0, %v1808
    %v1811 = vrot.slane %v1787, 4
    %v1813 = vmul.f32 %v1799, %v1811
    %v1814 = vadd.f32 %v551, %v1813
    %v1815 = vtanh.pop %v1814
    %v1816 = vsub.f32 1.0, %v1809
    %v1817 = vmul.f32 %v1816, %v1815
    %v1818 = vrot.slane %v1645, 6
    %v1820 = vmul.f32 %v1809, %v1818
    %v1821 = vadd.f32 %v1817, %v1820
    %v1823 = vrot.slane %v1821, 4
    %1825 = vmatprep.subr.mxu0 %v555
    %1826 = vmatpush1.msra.mxu0 %v554
    %1827 = vmatprep.subr.mxu0 %v558
    %1828 = vmatpush1.msra.mxu0 %v557
    %1829 = vmatprep.subr.mxu0 %v561
    %1830 = vmatpush1.msra.mxu0 %v560
    %1831 = vmatprep.subr.mxu0 %v564
    %1832 = vmatpush1.msra.mxu0 %v563
    %1833 = vmatprep.subr.mxu0 %v567
    %1834 = vmatpush1.msra.mxu0 %v566
    %1835 = vmatprep.subr.mxu0 %v570
    %1836 = vmatpush1.msra.mxu0 %v569
    %1837 = vmatprep.subr.mxu0 %v573
    %1838 = vmatpush1.msra.mxu0 %v572
    %1839 = vmatprep.subr.mxu0 %v576
    %1840 = vmatpush1.msra.mxu0 %v575
    %1841 = vmatprep.subr.mxu0 %v579
    %1842 = vmatpush1.msra.mxu0 %v578
    %1843 = vmatprep.subr.mxu0 %v582
    %1844 = vmatpush1.msra.mxu0 %v581
    %1845 = vmatprep.subr.mxu0 %v585
    %1846 = vmatpush1.msra.mxu0 %v584
    %1847 = vmatprep.subr.mxu0 %v588
    %1848 = vmatpush1.msra.mxu0 %v587
    %1849 = vmatprep.subr.mxu0 %v591
    %1850 = vmatpush1.msra.mxu0 %v590
    %1851 = vmatprep.subr.mxu0 %v594
    %1852 = vmatpush1.msra.mxu0 %v593
    %1853 = vmatprep.subr.mxu0 %v597
    %1854 = vmatpush1.msra.mxu0 %v596
    %1855 = vmatprep.subr.mxu0 %v600
    %1856 = vmatpush1.msra.mxu0 %v599
    %1857 = vmatprep.subr.mxu0 0.0
    %1858 = vmatpush1.msra.mxu0 0.0
    %1859 = vmatprep.subr.mxu0 0.0
    %1860 = vmatpush1.msra.mxu0 0.0
    %1861 = vmatprep.subr.mxu0 0.0
    %1862 = vmatpush1.msra.mxu0 0.0
    %1863 = vmatprep.subr.mxu0 0.0
    %1864 = vmatpush1.msra.mxu0 0.0
    %1865 = vmatprep.subr.mxu0 0.0
    %1866 = vmatpush1.msra.mxu0 0.0
    %1867 = vmatprep.subr.mxu0 0.0
    %1868 = vmatpush1.msra.mxu0 0.0
    %1869 = vmatprep.subr.mxu0 0.0
    %1870 = vmatpush1.msra.mxu0 0.0
    %1871 = vmatprep.subr.mxu0 0.0
    %1872 = vmatpush1.msra.mxu0 0.0
    %1873 = vmatprep.subr.mxu0 0.0
    %1874 = vmatpush1.msra.mxu0 0.0
    %1875 = vmatprep.subr.mxu0 0.0
    %1876 = vmatpush1.msra.mxu0 0.0
    %1877 = vmatprep.subr.mxu0 0.0
    %1878 = vmatpush1.msra.mxu0 0.0
    %1879 = vmatprep.subr.mxu0 0.0
    %1880 = vmatpush1.msra.mxu0 0.0
    %1881 = vmatprep.subr.mxu0 0.0
    %1882 = vmatpush1.msra.mxu0 0.0
    %1883 = vmatprep.subr.mxu0 0.0
    %1884 = vmatpush1.msra.mxu0 0.0
    %1885 = vmatprep.subr.mxu0 0.0
    %1886 = vmatpush1.msra.mxu0 0.0
    %1887 = vmatprep.subr.mxu0 0.0
    %1888 = vmatpush1.msra.mxu0 0.0
    %1889 = vmatprep.mubr.f32.mxu0 0.0
    %1890 = vmatmul.mubr.f32.gmra.mrb[0].mxu0 %v1823
    %v1891 = vpop.f32.mrb[0].mxu0
    %v1892 = vadd.f32 %v607, %v1891
    %v1893 = vpop.f32.mrb[0].mxu0
    %v1894 = vadd.f32 %v611, %v1893
    %1895 = vdwg.mxu0
    %1896 = vmatprep.subr.mxu0 0.0
    %1897 = vmatpush1.msra.mxu0 %v556
    %1898 = vmatprep.subr.mxu0 0.0
    %1899 = vmatpush1.msra.mxu0 %v559
    %1900 = vmatprep.subr.mxu0 0.0
    %1901 = vmatpush1.msra.mxu0 %v562
    %1902 = vmatprep.subr.mxu0 0.0
    %1903 = vmatpush1.msra.mxu0 %v565
    %1904 = vmatprep.subr.mxu0 0.0
    %1905 = vmatpush1.msra.mxu0 %v568
    %1906 = vmatprep.subr.mxu0 0.0
    %1907 = vmatpush1.msra.mxu0 %v571
    %1908 = vmatprep.subr.mxu0 0.0
    %1909 = vmatpush1.msra.mxu0 %v574
    %1910 = vmatprep.subr.mxu0 0.0
    %1911 = vmatpush1.msra.mxu0 %v577
    %1912 = vmatprep.subr.mxu0 0.0
    %1913 = vmatpush1.msra.mxu0 %v580
    %1914 = vmatprep.subr.mxu0 0.0
    %1915 = vmatpush1.msra.mxu0 %v583
    %1916 = vmatprep.subr.mxu0 0.0
    %1917 = vmatpush1.msra.mxu0 %v586
    %1918 = vmatprep.subr.mxu0 0.0
    %1919 = vmatpush1.msra.mxu0 %v589
    %1920 = vmatprep.subr.mxu0 0.0
    %1921 = vmatpush1.msra.mxu0 %v592
    %1922 = vmatprep.subr.mxu0 0.0
    %1923 = vmatpush1.msra.mxu0 %v595
    %1924 = vmatprep.subr.mxu0 0.0
    %1925 = vmatpush1.msra.mxu0 %v598
    %1926 = vmatprep.subr.mxu0 0.0
    %1927 = vmatpush1.msra.mxu0 %v601
    %1928 = vmatprep.subr.mxu0 0.0
    %1929 = vmatpush1.msra.mxu0 0.0
    %1930 = vmatprep.subr.mxu0 0.0
    %1931 = vmatpush1.msra.mxu0 0.0
    %1932 = vmatprep.subr.mxu0 0.0
    %1933 = vmatpush1.msra.mxu0 0.0
    %1934 = vmatprep.subr.mxu0 0.0
    %1935 = vmatpush1.msra.mxu0 0.0
    %1936 = vmatprep.subr.mxu0 0.0
    %1937 = vmatpush1.msra.mxu0 0.0
    %1938 = vmatprep.subr.mxu0 0.0
    %1939 = vmatpush1.msra.mxu0 0.0
    %1940 = vmatprep.subr.mxu0 0.0
    %1941 = vmatpush1.msra.mxu0 0.0
    %1942 = vmatprep.subr.mxu0 0.0
    %1943 = vmatpush1.msra.mxu0 0.0
    %1944 = vmatprep.subr.mxu0 0.0
    %1945 = vmatpush1.msra.mxu0 0.0
    %1946 = vmatprep.subr.mxu0 0.0
    %1947 = vmatpush1.msra.mxu0 0.0
    %1948 = vmatprep.subr.mxu0 0.0
    %1949 = vmatpush1.msra.mxu0 0.0
    %1950 = vmatprep.subr.mxu0 0.0
    %1951 = vmatpush1.msra.mxu0 0.0
    %1952 = vmatprep.subr.mxu0 0.0
    %1953 = vmatpush1.msra.mxu0 0.0
    %1954 = vmatprep.subr.mxu0 0.0
    %1955 = vmatpush1.msra.mxu0 0.0
    %1956 = vmatprep.subr.mxu0 0.0
    %1957 = vmatpush1.msra.mxu0 0.0
    %1958 = vmatprep.subr.mxu0 0.0
    %1959 = vmatpush1.msra.mxu0 0.0
    %1960 = vmatprep.mubr.f32.mxu0 0.0
    %1961 = vmatmul.mubr.f32.gmra.mrb[0].mxu0 %v1823
    %v1962 = vpop.f32.mrb[0].mxu0
    %v1963 = vadd.f32 %v615, %v1962
    %v1964 = vpop.f32.mrb[0].mxu0
    %1965 = vdwg.mxu0
    %v1967 = vrot.slane %v1892, 2
    %v1969 = vadd.f32 %v475, %v1967
    %v1970 = vxor.u32 %v1969, 2147483648
    %v1971 = vmul.f32 %v1970, 1.442695
    %v1972 = vpow.pop %v1971
    %v1973 = vadd.f32 %v1972, 1.0
    %v1974 = vrcp.pop %v1973
    %v1975 = vmul.f32 1.0, %v1974
    %v1977 = vrot.slane %v1894, 2
    %v1979 = vadd.f32 %v477, %v1977
    %v1980 = vxor.u32 %v1979, 2147483648
    %v1981 = vmul.f32 %v1980, 1.442695
    %v1982 = vpow.pop %v1981
    %v1983 = vadd.f32 %v1982, 1.0
    %v1984 = vrcp.pop %v1983
    %v1985 = vmul.f32 1.0, %v1984
    %v1987 = vrot.slane %v1963, 2
    %v1989 = vmul.f32 %v1975, %v1987
    %v1990 = vadd.f32 %v551, %v1989
    %v1991 = vtanh.pop %v1990
    %v1992 = vsub.f32 1.0, %v1985
    %v1993 = vmul.f32 %v1992, %v1991
    %v1994 = vrot.slane %v1821, 6
    %v1996 = vmul.f32 %v1985, %v1994
    %v1997 = vadd.f32 %v1993, %v1996
    %v1998 = vld [vmem:[#allocation5] sm:$0xff]
    %v1999 = vld [vmem:[#allocation5 + $0x8] sm:$0xff]
    %v2000 = vld [vmem:[%s15] sm:$0xff]
    %v2001 = vld [vmem:[%s15 + $0x8] sm:$0xff]
    %v2002 = vld [vmem:[%s15 + $0x10] sm:$0xff]
    %v2003 = vld [vmem:[%s15 + $0x18] sm:$0xff]
    %v2004 = vld [vmem:[%s15 + $0x20] sm:$0xff]
    %v2005 = vld [vmem:[%s15 + $0x28] sm:$0xff]
    %v2006 = vld [vmem:[#allocation16] sm:$0x7]
    %v2008 = vlaneseq
    %v2009 = vshrl.u32 %v2008, 7
    %v2010 = vsub.s32 0, %v2009
    %v2011 = vrot.slane %v2006, %v2010
    %v2012 = vlaneseq
    %v2013 = vshrl.u32 %v2012, 7
    %v2014 = vsub.s32 1, %v2013
    %v2015 = vrot.slane %v2006, %v2014
    %v2016 = vlaneseq
    %v2017 = vshrl.u32 %v2016, 7
    %v2018 = vsub.s32 2, %v2017
    %v2019 = vrot.slane %v2006, %v2018
    %v2024 = vsel %vm395, %v1998, 0
    %v2027 = vsel %vm395, %v1999, 0
    %2029 = vmatprep.subr.mxu0 %v2001
    %2030 = vmatpush1.msra.mxu0 %v2000
    %2031 = vmatprep.subr.mxu0 %v2004
    %2032 = vmatpush1.msra.mxu0 %v2003
    %2033 = vmatprep.subr.mxu0 0.0
    %2034 = vmatpush1.msra.mxu0 0.0
    %2035 = vmatprep.subr.mxu0 0.0
    %2036 = vmatpush1.msra.mxu0 0.0
    %2037 = vmatprep.subr.mxu0 0.0
    %2038 = vmatpush1.msra.mxu0 0.0
    %2039 = vmatprep.subr.mxu0 0.0
    %2040 = vmatpush1.msra.mxu0 0.0
    %2041 = vmatprep.subr.mxu0 0.0
    %2042 = vmatpush1.msra.mxu0 0.0
    %2043 = vmatprep.subr.mxu0 0.0
    %2044 = vmatpush1.msra.mxu0 0.0
    %2045 = vmatprep.subr.mxu0 0.0
    %2046 = vmatpush1.msra.mxu0 0.0
    %2047 = vmatprep.subr.mxu0 0.0
    %2048 = vmatpush1.msra.mxu0 0.0
    %2049 = vmatprep.subr.mxu0 0.0
    %2050 = vmatpush1.msra.mxu0 0.0
    %2051 = vmatprep.subr.mxu0 0.0
    %2052 = vmatpush1.msra.mxu0 0.0
    %2053 = vmatprep.subr.mxu0 0.0
    %2054 = vmatpush1.msra.mxu0 0.0
    %2055 = vmatprep.subr.mxu0 0.0
    %2056 = vmatpush1.msra.mxu0 0.0
    %2057 = vmatprep.subr.mxu0 0.0
    %2058 = vmatpush1.msra.mxu0 0.0
    %2059 = vmatprep.subr.mxu0 0.0
    %2060 = vmatpush1.msra.mxu0 0.0
    %2061 = vmatprep.subr.mxu0 0.0
    %2062 = vmatpush1.msra.mxu0 0.0
    %2063 = vmatprep.subr.mxu0 0.0
    %2064 = vmatpush1.msra.mxu0 0.0
    %2065 = vmatprep.subr.mxu0 0.0
    %2066 = vmatpush1.msra.mxu0 0.0
    %2067 = vmatprep.subr.mxu0 0.0
    %2068 = vmatpush1.msra.mxu0 0.0
    %2069 = vmatprep.subr.mxu0 0.0
    %2070 = vmatpush1.msra.mxu0 0.0
    %2071 = vmatprep.subr.mxu0 0.0
    %2072 = vmatpush1.msra.mxu0 0.0
    %2073 = vmatprep.subr.mxu0 0.0
    %2074 = vmatpush1.msra.mxu0 0.0
    %2075 = vmatprep.subr.mxu0 0.0
    %2076 = vmatpush1.msra.mxu0 0.0
    %2077 = vmatprep.subr.mxu0 0.0
    %2078 = vmatpush1.msra.mxu0 0.0
    %2079 = vmatprep.subr.mxu0 0.0
    %2080 = vmatpush1.msra.mxu0 0.0
    %2081 = vmatprep.subr.mxu0 0.0
    %2082 = vmatpush1.msra.mxu0 0.0
    %2083 = vmatprep.subr.mxu0 0.0
    %2084 = vmatpush1.msra.mxu0 0.0
    %2085 = vmatprep.subr.mxu0 0.0
    %2086 = vmatpush1.msra.mxu0 0.0
    %2087 = vmatprep.subr.mxu0 0.0
    %2088 = vmatpush1.msra.mxu0 0.0
    %2089 = vmatprep.subr.mxu0 0.0
    %2090 = vmatpush1.msra.mxu0 0.0
    %2091 = vmatprep.subr.mxu0 0.0
    %2092 = vmatpush1.msra.mxu0 0.0
    %2093 = vmatprep.mubr.f32.mxu0 0.0
    %2094 = vmatmul.mubr.f32.gmra.mrb[0].mxu0 %v2024
    %v2095 = vpop.f32.mrb[0].mxu0
    %v2096 = vadd.f32 %v2011, %v2095
    %v2097 = vpop.f32.mrb[0].mxu0
    %v2098 = vadd.f32 %v2015, %v2097
    %2099 = vmatprep.mubr.f32.mxu0 0.0
    %2100 = vmatmul.mubr.f32.gmra.mrb[0].mxu0 %v2027
    %v2101 = vpop.f32.mrb[0].mxu0
    %v2102 = vadd.f32 %v2011, %v2101
    %v2103 = vpop.f32.mrb[0].mxu0
    %v2104 = vadd.f32 %v2015, %v2103
    %2105 = vdwg.mxu0
    %2106 = vmatprep.subr.mxu0 0.0
    %2107 = vmatpush1.msra.mxu0 %v2002
    %2108 = vmatprep.subr.mxu0 0.0
    %2109 = vmatpush1.msra.mxu0 %v2005
    %2110 = vmatprep.subr.mxu0 0.0
    %2111 = vmatpush1.msra.mxu0 0.0
    %2112 = vmatprep.subr.mxu0 0.0
    %2113 = vmatpush1.msra.mxu0 0.0
    %2114 = vmatprep.subr.mxu0 0.0
    %2115 = vmatpush1.msra.mxu0 0.0
    %2116 = vmatprep.subr.mxu0 0.0
    %2117 = vmatpush1.msra.mxu0 0.0
    %2118 = vmatprep.subr.mxu0 0.0
    %2119 = vmatpush1.msra.mxu0 0.0
    %2120 = vmatprep.subr.mxu0 0.0
    %2121 = vmatpush1.msra.mxu0 0.0
    %2122 = vmatprep.subr.mxu0 0.0
    %2123 = vmatpush1.msra.mxu0 0.0
    %2124 = vmatprep.subr.mxu0 0.0
    %2125 = vmatpush1.msra.mxu0 0.0
    %2126 = vmatprep.subr.mxu0 0.0
    %2127 = vmatpush1.msra.mxu0 0.0
    %2128 = vmatprep.subr.mxu0 0.0
    %2129 = vmatpush1.msra.mxu0 0.0
    %2130 = vmatprep.subr.mxu0 0.0
    %2131 = vmatpush1.msra.mxu0 0.0
    %2132 = vmatprep.subr.mxu0 0.0
    %2133 = vmatpush1.msra.mxu0 0.0
    %2134 = vmatprep.subr.mxu0 0.0
    %2135 = vmatpush1.msra.mxu0 0.0
    %2136 = vmatprep.subr.mxu0 0.0
    %2137 = vmatpush1.msra.mxu0 0.0
    %2138 = vmatprep.subr.mxu0 0.0
    %2139 = vmatpush1.msra.mxu0 0.0
    %2140 = vmatprep.subr.mxu0 0.0
    %2141 = vmatpush1.msra.mxu0 0.0
    %2142 = vmatprep.subr.mxu0 0.0
    %2143 = vmatpush1.msra.mxu0 0.0
    %2144 = vmatprep.subr.mxu0 0.0
    %2145 = vmatpush1.msra.mxu0 0.0
    %2146 = vmatprep.subr.mxu0 0.0
    %2147 = vmatpush1.msra.mxu0 0.0
    %2148 = vmatprep.subr.mxu0 0.0
    %2149 = vmatpush1.msra.mxu0 0.0
    %2150 = vmatprep.subr.mxu0 0.0
    %2151 = vmatpush1.msra.mxu0 0.0
    %2152 = vmatprep.subr.mxu0 0.0
    %2153 = vmatpush1.msra.mxu0 0.0
    %2154 = vmatprep.subr.mxu0 0.0
    %2155 = vmatpush1.msra.mxu0 0.0
    %2156 = vmatprep.subr.mxu0 0.0
    %2157 = vmatpush1.msra.mxu0 0.0
    %2158 = vmatprep.subr.mxu0 0.0
    %2159 = vmatpush1.msra.mxu0 0.0
    %2160 = vmatprep.subr.mxu0 0.0
    %2161 = vmatpush1.msra.mxu0 0.0
    %2162 = vmatprep.subr.mxu0 0.0
    %2163 = vmatpush1.msra.mxu0 0.0
    %2164 = vmatprep.subr.mxu0 0.0
    %2165 = vmatpush1.msra.mxu0 0.0
    %2166 = vmatprep.subr.mxu0 0.0
    %2167 = vmatpush1.msra.mxu0 0.0
    %2168 = vmatprep.subr.mxu0 0.0
    %2169 = vmatpush1.msra.mxu0 0.0
    %2170 = vmatprep.mubr.f32.mxu0 0.0
    %2171 = vmatmul.mubr.f32.gmra.mrb[0].mxu0 %v2024
    %v2172 = vpop.f32.mrb[0].mxu0
    %v2173 = vadd.f32 %v2019, %v2172
    %v2174 = vpop.f32.mrb[0].mxu0
    %2175 = vmatprep.mubr.f32.mxu0 0.0
    %2176 = vmatmul.mubr.f32.gmra.mrb[0].mxu0 %v2027
    %v2177 = vpop.f32.mrb[0].mxu0
    %v2178 = vadd.f32 %v2019, %v2177
    %v2179 = vpop.f32.mrb[0].mxu0
    %2180 = vdwg.mxu0
    %v2181 = vld [vmem:[#allocation14] sm:$0xff]
    %v2182 = vld [vmem:[#allocation14 + $0x8] sm:$0xff]
    %v2183 = vld [vmem:[#allocation14 + $0x10] sm:$0xff]
    %v2184 = vld [vmem:[#allocation14 + $0x18] sm:$0xff]
    %v2185 = vld [vmem:[#allocation14 + $0x20] sm:$0xff]
    %v2186 = vld [vmem:[#allocation14 + $0x28] sm:$0xff]
    %v2187 = vld [vmem:[#allocation14 + $0x30] sm:$0xff]
    %v2188 = vld [vmem:[#allocation14 + $0x38] sm:$0xff]
    %v2189 = vld [vmem:[#allocation14 + $0x40] sm:$0xff]
    %v2190 = vld [vmem:[#allocation14 + $0x48] sm:$0xff]
    %v2191 = vld [vmem:[#allocation14 + $0x50] sm:$0xff]
    %v2192 = vld [vmem:[#allocation14 + $0x58] sm:$0xff]
    %v2193 = vld [vmem:[#allocation14 + $0x60] sm:$0xff]
    %v2194 = vld [vmem:[#allocation14 + $0x68] sm:$0xff]
    %v2195 = vld [vmem:[#allocation14 + $0x70] sm:$0xff]
    %v2196 = vld [vmem:[#allocation14 + $0x78] sm:$0xff]
    %v2197 = vld [vmem:[#allocation14 + $0x80] sm:$0xff]
    %v2198 = vld [vmem:[#allocation14 + $0x88] sm:$0xff]
    %v2199 = vld [vmem:[#allocation14 + $0x90] sm:$0xff]
    %v2200 = vld [vmem:[#allocation14 + $0x98] sm:$0xff]
    %v2201 = vld [vmem:[#allocation14 + $0xa0] sm:$0xff]
    %v2202 = vld [vmem:[#allocation14 + $0xa8] sm:$0xff]
    %v2203 = vld [vmem:[#allocation14 + $0xb0] sm:$0xff]
    %v2204 = vld [vmem:[#allocation14 + $0xb8] sm:$0xff]
    %v2205 = vld [vmem:[#allocation14 + $0xc0] sm:$0xff]
    %v2206 = vld [vmem:[#allocation14 + $0xc8] sm:$0xff]
    %v2207 = vld [vmem:[#allocation14 + $0xd0] sm:$0xff]
    %v2208 = vld [vmem:[#allocation14 + $0xd8] sm:$0xff]
    %v2209 = vld [vmem:[#allocation14 + $0xe0] sm:$0xff]
    %v2210 = vld [vmem:[#allocation14 + $0xe8] sm:$0xff]
    %v2211 = vld [vmem:[#allocation14 + $0xf0] sm:$0xff]
    %v2212 = vld [vmem:[#allocation14 + $0xf8] sm:$0xff]
    %v2213 = vld [vmem:[#allocation14 + $0x100] sm:$0xff]
    %v2214 = vld [vmem:[#allocation14 + $0x108] sm:$0xff]
    %v2215 = vld [vmem:[#allocation14 + $0x110] sm:$0xff]
    %v2216 = vld [vmem:[#allocation14 + $0x118] sm:$0xff]
    %v2217 = vld [vmem:[#allocation14 + $0x120] sm:$0xff]
    %v2218 = vld [vmem:[#allocation14 + $0x128] sm:$0xff]
    %v2219 = vld [vmem:[#allocation14 + $0x130] sm:$0xff]
    %v2220 = vld [vmem:[#allocation14 + $0x138] sm:$0xff]
    %v2221 = vld [vmem:[#allocation14 + $0x140] sm:$0xff]
    %v2222 = vld [vmem:[#allocation14 + $0x148] sm:$0xff]
    %v2223 = vld [vmem:[#allocation14 + $0x150] sm:$0xff]
    %v2224 = vld [vmem:[#allocation14 + $0x158] sm:$0xff]
    %v2225 = vld [vmem:[#allocation14 + $0x160] sm:$0xff]
    %v2226 = vld [vmem:[#allocation14 + $0x168] sm:$0xff]
    %v2227 = vld [vmem:[#allocation14 + $0x170] sm:$0xff]
    %v2228 = vld [vmem:[#allocation14 + $0x178] sm:$0xff]
    %v2229 = vld [vmem:[#allocation17] sm:$0x7]
    %v2231 = vlaneseq
    %v2232 = vshrl.u32 %v2231, 7
    %v2233 = vsub.s32 0, %v2232
    %v2234 = vrot.slane %v2229, %v2233
    %v2235 = vlaneseq
    %v2236 = vshrl.u32 %v2235, 7
    %v2237 = vsub.s32 1, %v2236
    %v2238 = vrot.slane %v2229, %v2237
    %v2239 = vlaneseq
    %v2240 = vshrl.u32 %v2239, 7
    %v2241 = vsub.s32 2, %v2240
    %v2242 = vrot.slane %v2229, %v2241
    %2246 = vmatprep.subr.mxu0 %v2182
    %2247 = vmatpush1.msra.mxu0 %v2181
    %2248 = vmatprep.subr.mxu0 %v2185
    %2249 = vmatpush1.msra.mxu0 %v2184
    %2250 = vmatprep.subr.mxu0 %v2188
    %2251 = vmatpush1.msra.mxu0 %v2187
    %2252 = vmatprep.subr.mxu0 %v2191
    %2253 = vmatpush1.msra.mxu0 %v2190
    %2254 = vmatprep.subr.mxu0 %v2194
    %2255 = vmatpush1.msra.mxu0 %v2193
    %2256 = vmatprep.subr.mxu0 %v2197
    %2257 = vmatpush1.msra.mxu0 %v2196
    %2258 = vmatprep.subr.mxu0 %v2200
    %2259 = vmatpush1.msra.mxu0 %v2199
    %2260 = vmatprep.subr.mxu0 %v2203
    %2261 = vmatpush1.msra.mxu0 %v2202
    %2262 = vmatprep.subr.mxu0 %v2206
    %2263 = vmatpush1.msra.mxu0 %v2205
    %2264 = vmatprep.subr.mxu0 %v2209
    %2265 = vmatpush1.msra.mxu0 %v2208
    %2266 = vmatprep.subr.mxu0 %v2212
    %2267 = vmatpush1.msra.mxu0 %v2211
    %2268 = vmatprep.subr.mxu0 %v2215
    %2269 = vmatpush1.msra.mxu0 %v2214
    %2270 = vmatprep.subr.mxu0 %v2218
    %2271 = vmatpush1.msra.mxu0 %v2217
    %2272 = vmatprep.subr.mxu0 %v2221
    %2273 = vmatpush1.msra.mxu0 %v2220
    %2274 = vmatprep.subr.mxu0 %v2224
    %2275 = vmatpush1.msra.mxu0 %v2223
    %2276 = vmatprep.subr.mxu0 %v2227
    %2277 = vmatpush1.msra.mxu0 %v2226
    %2278 = vmatprep.subr.mxu0 0.0
    %2279 = vmatpush1.msra.mxu0 0.0
    %2280 = vmatprep.subr.mxu0 0.0
    %2281 = vmatpush1.msra.mxu0 0.0
    %2282 = vmatprep.subr.mxu0 0.0
    %2283 = vmatpush1.msra.mxu0 0.0
    %2284 = vmatprep.subr.mxu0 0.0
    %2285 = vmatpush1.msra.mxu0 0.0
    %2286 = vmatprep.subr.mxu0 0.0
    %2287 = vmatpush1.msra.mxu0 0.0
    %2288 = vmatprep.subr.mxu0 0.0
    %2289 = vmatpush1.msra.mxu0 0.0
    %2290 = vmatprep.subr.mxu0 0.0
    %2291 = vmatpush1.msra.mxu0 0.0
    %2292 = vmatprep.subr.mxu0 0.0
    %2293 = vmatpush1.msra.mxu0 0.0
    %2294 = vmatprep.subr.mxu0 0.0
    %2295 = vmatpush1.msra.mxu0 0.0
    %2296 = vmatprep.subr.mxu0 0.0
    %2297 = vmatpush1.msra.mxu0 0.0
    %2298 = vmatprep.subr.mxu0 0.0
    %2299 = vmatpush1.msra.mxu0 0.0
    %2300 = vmatprep.subr.mxu0 0.0
    %2301 = vmatpush1.msra.mxu0 0.0
    %2302 = vmatprep.subr.mxu0 0.0
    %2303 = vmatpush1.msra.mxu0 0.0
    %2304 = vmatprep.subr.mxu0 0.0
    %2305 = vmatpush1.msra.mxu0 0.0
    %2306 = vmatprep.subr.mxu0 0.0
    %2307 = vmatpush1.msra.mxu0 0.0
    %2308 = vmatprep.subr.mxu0 0.0
    %2309 = vmatpush1.msra.mxu0 0.0
    %2310 = vmatprep.mubr.f32.mxu0 0.0
    %2311 = vmatmul.mubr.f32.gmra.mrb[0].mxu0 0.0
    %v2312 = vpop.f32.mrb[0].mxu0
    %v2313 = vadd.f32 %v2234, %v2312
    %v2314 = vpop.f32.mrb[0].mxu0
    %v2315 = vadd.f32 %v2238, %v2314
    %2316 = vdwg.mxu0
    %2317 = vmatprep.subr.mxu0 0.0
    %2318 = vmatpush1.msra.mxu0 %v2183
    %2319 = vmatprep.subr.mxu0 0.0
    %2320 = vmatpush1.msra.mxu0 %v2186
    %2321 = vmatprep.subr.mxu0 0.0
    %2322 = vmatpush1.msra.mxu0 %v2189
    %2323 = vmatprep.subr.mxu0 0.0
    %2324 = vmatpush1.msra.mxu0 %v2192
    %2325 = vmatprep.subr.mxu0 0.0
    %2326 = vmatpush1.msra.mxu0 %v2195
    %2327 = vmatprep.subr.mxu0 0.0
    %2328 = vmatpush1.msra.mxu0 %v2198
    %2329 = vmatprep.subr.mxu0 0.0
    %2330 = vmatpush1.msra.mxu0 %v2201
    %2331 = vmatprep.subr.mxu0 0.0
    %2332 = vmatpush1.msra.mxu0 %v2204
    %2333 = vmatprep.subr.mxu0 0.0
    %2334 = vmatpush1.msra.mxu0 %v2207
    %2335 = vmatprep.subr.mxu0 0.0
    %2336 = vmatpush1.msra.mxu0 %v2210
    %2337 = vmatprep.subr.mxu0 0.0
    %2338 = vmatpush1.msra.mxu0 %v2213
    %2339 = vmatprep.subr.mxu0 0.0
    %2340 = vmatpush1.msra.mxu0 %v2216
    %2341 = vmatprep.subr.mxu0 0.0
    %2342 = vmatpush1.msra.mxu0 %v2219
    %2343 = vmatprep.subr.mxu0 0.0
    %2344 = vmatpush1.msra.mxu0 %v2222
    %2345 = vmatprep.subr.mxu0 0.0
    %2346 = vmatpush1.msra.mxu0 %v2225
    %2347 = vmatprep.subr.mxu0 0.0
    %2348 = vmatpush1.msra.mxu0 %v2228
    %2349 = vmatprep.subr.mxu0 0.0
    %2350 = vmatpush1.msra.mxu0 0.0
    %2351 = vmatprep.subr.mxu0 0.0
    %2352 = vmatpush1.msra.mxu0 0.0
    %2353 = vmatprep.subr.mxu0 0.0
    %2354 = vmatpush1.msra.mxu0 0.0
    %2355 = vmatprep.subr.mxu0 0.0
    %2356 = vmatpush1.msra.mxu0 0.0
    %2357 = vmatprep.subr.mxu0 0.0
    %2358 = vmatpush1.msra.mxu0 0.0
    %2359 = vmatprep.subr.mxu0 0.0
    %2360 = vmatpush1.msra.mxu0 0.0
    %2361 = vmatprep.subr.mxu0 0.0
    %2362 = vmatpush1.msra.mxu0 0.0
    %2363 = vmatprep.subr.mxu0 0.0
    %2364 = vmatpush1.msra.mxu0 0.0
    %2365 = vmatprep.subr.mxu0 0.0
    %2366 = vmatpush1.msra.mxu0 0.0
    %2367 = vmatprep.subr.mxu0 0.0
    %2368 = vmatpush1.msra.mxu0 0.0
    %2369 = vmatprep.subr.mxu0 0.0
    %2370 = vmatpush1.msra.mxu0 0.0
    %2371 = vmatprep.subr.mxu0 0.0
    %2372 = vmatpush1.msra.mxu0 0.0
    %2373 = vmatprep.subr.mxu0 0.0
    %2374 = vmatpush1.msra.mxu0 0.0
    %2375 = vmatprep.subr.mxu0 0.0
    %2376 = vmatpush1.msra.mxu0 0.0
    %2377 = vmatprep.subr.mxu0 0.0
    %2378 = vmatpush1.msra.mxu0 0.0
    %2379 = vmatprep.subr.mxu0 0.0
    %2380 = vmatpush1.msra.mxu0 0.0
    %2381 = vmatprep.mubr.f32.mxu0 0.0
    %2382 = vmatmul.mubr.f32.gmra.mrb[0].mxu0 0.0
    %v2383 = vpop.f32.mrb[0].mxu0
    %v2384 = vadd.f32 %v2242, %v2383
    %v2385 = vpop.f32.mrb[0].mxu0
    %2386 = vdwg.mxu0
    %v2387 = vadd.f32 %v2096, %v2313
    %v2388 = vxor.u32 %v2387, 2147483648
    %v2389 = vmul.f32 %v2388, 1.442695
    %v2390 = vpow.pop %v2389
    %v2391 = vadd.f32 %v2390, 1.0
    %v2392 = vrcp.pop %v2391
    %v2393 = vmul.f32 1.0, %v2392
    %v2394 = vadd.f32 %v2098, %v2315
    %v2395 = vxor.u32 %v2394, 2147483648
    %v2396 = vmul.f32 %v2395, 1.442695
    %v2397 = vpow.pop %v2396
    %v2398 = vadd.f32 %v2397, 1.0
    %v2399 = vrcp.pop %v2398
    %v2400 = vmul.f32 1.0, %v2399
    %v2401 = vmul.f32 %v2393, %v2384
    %v2402 = vadd.f32 %v2173, %v2401
    %v2403 = vtanh.pop %v2402
    %v2404 = vsub.f32 1.0, %v2400
    %v2405 = vmul.f32 %v2404, %v2403
    %v2406 = vmul.f32 %v2400, 0.0
    %v2407 = vadd.f32 %v2405, %v2406
    %2408 = vmatprep.subr.mxu0 %v2182
    %2409 = vmatpush1.msra.mxu0 %v2181
    %2410 = vmatprep.subr.mxu0 %v2185
    %2411 = vmatpush1.msra.mxu0 %v2184
    %2412 = vmatprep.subr.mxu0 %v2188
    %2413 = vmatpush1.msra.mxu0 %v2187
    %2414 = vmatprep.subr.mxu0 %v2191
    %2415 = vmatpush1.msra.mxu0 %v2190
    %2416 = vmatprep.subr.mxu0 %v2194
    %2417 = vmatpush1.msra.mxu0 %v2193
    %2418 = vmatprep.subr.mxu0 %v2197
    %2419 = vmatpush1.msra.mxu0 %v2196
    %2420 = vmatprep.subr.mxu0 %v2200
    %2421 = vmatpush1.msra.mxu0 %v2199
    %2422 = vmatprep.subr.mxu0 %v2203
    %2423 = vmatpush1.msra.mxu0 %v2202
    %2424 = vmatprep.subr.mxu0 %v2206
    %2425 = vmatpush1.msra.mxu0 %v2205
    %2426 = vmatprep.subr.mxu0 %v2209
    %2427 = vmatpush1.msra.mxu0 %v2208
    %2428 = vmatprep.subr.mxu0 %v2212
    %2429 = vmatpush1.msra.mxu0 %v2211
    %2430 = vmatprep.subr.mxu0 %v2215
    %2431 = vmatpush1.msra.mxu0 %v2214
    %2432 = vmatprep.subr.mxu0 %v2218
    %2433 = vmatpush1.msra.mxu0 %v2217
    %2434 = vmatprep.subr.mxu0 %v2221
    %2435 = vmatpush1.msra.mxu0 %v2220
    %2436 = vmatprep.subr.mxu0 %v2224
    %2437 = vmatpush1.msra.mxu0 %v2223
    %2438 = vmatprep.subr.mxu0 %v2227
    %2439 = vmatpush1.msra.mxu0 %v2226
    %2440 = vmatprep.subr.mxu0 0.0
    %2441 = vmatpush1.msra.mxu0 0.0
    %2442 = vmatprep.subr.mxu0 0.0
    %2443 = vmatpush1.msra.mxu0 0.0
    %2444 = vmatprep.subr.mxu0 0.0
    %2445 = vmatpush1.msra.mxu0 0.0
    %2446 = vmatprep.subr.mxu0 0.0
    %2447 = vmatpush1.msra.mxu0 0.0
    %2448 = vmatprep.subr.mxu0 0.0
    %2449 = vmatpush1.msra.mxu0 0.0
    %2450 = vmatprep.subr.mxu0 0.0
    %2451 = vmatpush1.msra.mxu0 0.0
    %2452 = vmatprep.subr.mxu0 0.0
    %2453 = vmatpush1.msra.mxu0 0.0
    %2454 = vmatprep.subr.mxu0 0.0
    %2455 = vmatpush1.msra.mxu0 0.0
    %2456 = vmatprep.subr.mxu0 0.0
    %2457 = vmatpush1.msra.mxu0 0.0
    %2458 = vmatprep.subr.mxu0 0.0
    %2459 = vmatpush1.msra.mxu0 0.0
    %2460 = vmatprep.subr.mxu0 0.0
    %2461 = vmatpush1.msra.mxu0 0.0
    %2462 = vmatprep.subr.mxu0 0.0
    %2463 = vmatpush1.msra.mxu0 0.0
    %2464 = vmatprep.subr.mxu0 0.0
    %2465 = vmatpush1.msra.mxu0 0.0
    %2466 = vmatprep.subr.mxu0 0.0
    %2467 = vmatpush1.msra.mxu0 0.0
    %2468 = vmatprep.subr.mxu0 0.0
    %2469 = vmatpush1.msra.mxu0 0.0
    %2470 = vmatprep.subr.mxu0 0.0
    %2471 = vmatpush1.msra.mxu0 0.0
    %2472 = vmatprep.mubr.f32.mxu0 0.0
    %2473 = vmatmul.mubr.f32.gmra.mrb[0].mxu0 %v2407
    %v2474 = vpop.f32.mrb[0].mxu0
    %v2475 = vadd.f32 %v2234, %v2474
    %v2476 = vpop.f32.mrb[0].mxu0
    %v2477 = vadd.f32 %v2238, %v2476
    %2478 = vdwg.mxu0
    %2479 = vmatprep.subr.mxu0 0.0
    %2480 = vmatpush1.msra.mxu0 %v2183
    %2481 = vmatprep.subr.mxu0 0.0
    %2482 = vmatpush1.msra.mxu0 %v2186
    %2483 = vmatprep.subr.mxu0 0.0
    %2484 = vmatpush1.msra.mxu0 %v2189
    %2485 = vmatprep.subr.mxu0 0.0
    %2486 = vmatpush1.msra.mxu0 %v2192
    %2487 = vmatprep.subr.mxu0 0.0
    %2488 = vmatpush1.msra.mxu0 %v2195
    %2489 = vmatprep.subr.mxu0 0.0
    %2490 = vmatpush1.msra.mxu0 %v2198
    %2491 = vmatprep.subr.mxu0 0.0
    %2492 = vmatpush1.msra.mxu0 %v2201
    %2493 = vmatprep.subr.mxu0 0.0
    %2494 = vmatpush1.msra.mxu0 %v2204
    %2495 = vmatprep.subr.mxu0 0.0
    %2496 = vmatpush1.msra.mxu0 %v2207
    %2497 = vmatprep.subr.mxu0 0.0
    %2498 = vmatpush1.msra.mxu0 %v2210
    %2499 = vmatprep.subr.mxu0 0.0
    %2500 = vmatpush1.msra.mxu0 %v2213
    %2501 = vmatprep.subr.mxu0 0.0
    %2502 = vmatpush1.msra.mxu0 %v2216
    %2503 = vmatprep.subr.mxu0 0.0
    %2504 = vmatpush1.msra.mxu0 %v2219
    %2505 = vmatprep.subr.mxu0 0.0
    %2506 = vmatpush1.msra.mxu0 %v2222
    %2507 = vmatprep.subr.mxu0 0.0
    %2508 = vmatpush1.msra.mxu0 %v2225
    %2509 = vmatprep.subr.mxu0 0.0
    %2510 = vmatpush1.msra.mxu0 %v2228
    %2511 = vmatprep.subr.mxu0 0.0
    %2512 = vmatpush1.msra.mxu0 0.0
    %2513 = vmatprep.subr.mxu0 0.0
    %2514 = vmatpush1.msra.mxu0 0.0
    %2515 = vmatprep.subr.mxu0 0.0
    %2516 = vmatpush1.msra.mxu0 0.0
    %2517 = vmatprep.subr.mxu0 0.0
    %2518 = vmatpush1.msra.mxu0 0.0
    %2519 = vmatprep.subr.mxu0 0.0
    %2520 = vmatpush1.msra.mxu0 0.0
    %2521 = vmatprep.subr.mxu0 0.0
    %2522 = vmatpush1.msra.mxu0 0.0
    %2523 = vmatprep.subr.mxu0 0.0
    %2524 = vmatpush1.msra.mxu0 0.0
    %2525 = vmatprep.subr.mxu0 0.0
    %2526 = vmatpush1.msra.mxu0 0.0
    %2527 = vmatprep.subr.mxu0 0.0
    %2528 = vmatpush1.msra.mxu0 0.0
    %2529 = vmatprep.subr.mxu0 0.0
    %2530 = vmatpush1.msra.mxu0 0.0
    %2531 = vmatprep.subr.mxu0 0.0
    %2532 = vmatpush1.msra.mxu0 0.0
    %2533 = vmatprep.subr.mxu0 0.0
    %2534 = vmatpush1.msra.mxu0 0.0
    %2535 = vmatprep.subr.mxu0 0.0
    %2536 = vmatpush1.msra.mxu0 0.0
    %2537 = vmatprep.subr.mxu0 0.0
    %2538 = vmatpush1.msra.mxu0 0.0
    %2539 = vmatprep.subr.mxu0 0.0
    %2540 = vmatpush1.msra.mxu0 0.0
    %2541 = vmatprep.subr.mxu0 0.0
    %2542 = vmatpush1.msra.mxu0 0.0
    %2543 = vmatprep.mubr.f32.mxu0 0.0
    %2544 = vmatmul.mubr.f32.gmra.mrb[0].mxu0 %v2407
    %v2545 = vpop.f32.mrb[0].mxu0
    %v2546 = vadd.f32 %v2242, %v2545
    %v2547 = vpop.f32.mrb[0].mxu0
    %2548 = vdwg.mxu0
    %v2550 = vrot.slane %v2475, 6
    %v2552 = vadd.f32 %v2096, %v2550
    %v2553 = vxor.u32 %v2552, 2147483648
    %v2554 = vmul.f32 %v2553, 1.442695
    %v2555 = vpow.pop %v2554
    %v2556 = vadd.f32 %v2555, 1.0
    %v2557 = vrcp.pop %v2556
    %v2558 = vmul.f32 1.0, %v2557
    %v2560 = vrot.slane %v2477, 6
    %v2562 = vadd.f32 %v2098, %v2560
    %v2563 = vxor.u32 %v2562, 2147483648
    %v2564 = vmul.f32 %v2563, 1.442695
    %v2565 = vpow.pop %v2564
    %v2566 = vadd.f32 %v2565, 1.0
    %v2567 = vrcp.pop %v2566
    %v2568 = vmul.f32 1.0, %v2567
    %v2570 = vrot.slane %v2546, 6
    %v2572 = vmul.f32 %v2558, %v2570
    %v2573 = vadd.f32 %v2173, %v2572
    %v2574 = vtanh.pop %v2573
    %v2575 = vsub.f32 1.0, %v2568
    %v2576 = vmul.f32 %v2575, %v2574
    %v2578 = vrot.slane %v2407, 6
    %v2580 = vmul.f32 %v2568, %v2578
    %v2581 = vadd.f32 %v2576, %v2580
    %v2583 = vrot.slane %v2581, 2
    %2585 = vmatprep.subr.mxu0 %v2182
    %2586 = vmatpush1.msra.mxu0 %v2181
    %2587 = vmatprep.subr.mxu0 %v2185
    %2588 = vmatpush1.msra.mxu0 %v2184
    %2589 = vmatprep.subr.mxu0 %v2188
    %2590 = vmatpush1.msra.mxu0 %v2187
    %2591 = vmatprep.subr.mxu0 %v2191
    %2592 = vmatpush1.msra.mxu0 %v2190
    %2593 = vmatprep.subr.mxu0 %v2194
    %2594 = vmatpush1.msra.mxu0 %v2193
    %2595 = vmatprep.subr.mxu0 %v2197
    %2596 = vmatpush1.msra.mxu0 %v2196
    %2597 = vmatprep.subr.mxu0 %v2200
    %2598 = vmatpush1.msra.mxu0 %v2199
    %2599 = vmatprep.subr.mxu0 %v2203
    %2600 = vmatpush1.msra.mxu0 %v2202
    %2601 = vmatprep.subr.mxu0 %v2206
    %2602 = vmatpush1.msra.mxu0 %v2205
    %2603 = vmatprep.subr.mxu0 %v2209
    %2604 = vmatpush1.msra.mxu0 %v2208
    %2605 = vmatprep.subr.mxu0 %v2212
    %2606 = vmatpush1.msra.mxu0 %v2211
    %2607 = vmatprep.subr.mxu0 %v2215
    %2608 = vmatpush1.msra.mxu0 %v2214
    %2609 = vmatprep.subr.mxu0 %v2218
    %2610 = vmatpush1.msra.mxu0 %v2217
    %2611 = vmatprep.subr.mxu0 %v2221
    %2612 = vmatpush1.msra.mxu0 %v2220
    %2613 = vmatprep.subr.mxu0 %v2224
    %2614 = vmatpush1.msra.mxu0 %v2223
    %2615 = vmatprep.subr.mxu0 %v2227
    %2616 = vmatpush1.msra.mxu0 %v2226
    %2617 = vmatprep.subr.mxu0 0.0
    %2618 = vmatpush1.msra.mxu0 0.0
    %2619 = vmatprep.subr.mxu0 0.0
    %2620 = vmatpush1.msra.mxu0 0.0
    %2621 = vmatprep.subr.mxu0 0.0
    %2622 = vmatpush1.msra.mxu0 0.0
    %2623 = vmatprep.subr.mxu0 0.0
    %2624 = vmatpush1.msra.mxu0 0.0
    %2625 = vmatprep.subr.mxu0 0.0
    %2626 = vmatpush1.msra.mxu0 0.0
    %2627 = vmatprep.subr.mxu0 0.0
    %2628 = vmatpush1.msra.mxu0 0.0
    %2629 = vmatprep.subr.mxu0 0.0
    %2630 = vmatpush1.msra.mxu0 0.0
    %2631 = vmatprep.subr.mxu0 0.0
    %2632 = vmatpush1.msra.mxu0 0.0
    %2633 = vmatprep.subr.mxu0 0.0
    %2634 = vmatpush1.msra.mxu0 0.0
    %2635 = vmatprep.subr.mxu0 0.0
    %2636 = vmatpush1.msra.mxu0 0.0
    %2637 = vmatprep.subr.mxu0 0.0
    %2638 = vmatpush1.msra.mxu0 0.0
    %2639 = vmatprep.subr.mxu0 0.0
    %2640 = vmatpush1.msra.mxu0 0.0
    %2641 = vmatprep.subr.mxu0 0.0
    %2642 = vmatpush1.msra.mxu0 0.0
    %2643 = vmatprep.subr.mxu0 0.0
    %2644 = vmatpush1.msra.mxu0 0.0
    %2645 = vmatprep.subr.mxu0 0.0
    %2646 = vmatpush1.msra.mxu0 0.0
    %2647 = vmatprep.subr.mxu0 0.0
    %2648 = vmatpush1.msra.mxu0 0.0
    %2649 = vmatprep.mubr.f32.mxu0 0.0
    %2650 = vmatmul.mubr.f32.gmra.mrb[0].mxu0 %v2583
    %v2651 = vpop.f32.mrb[0].mxu0
    %v2652 = vadd.f32 %v2234, %v2651
    %v2653 = vpop.f32.mrb[0].mxu0
    %v2654 = vadd.f32 %v2238, %v2653
    %2655 = vdwg.mxu0
    %2656 = vmatprep.subr.mxu0 0.0
    %2657 = vmatpush1.msra.mxu0 %v2183
    %2658 = vmatprep.subr.mxu0 0.0
    %2659 = vmatpush1.msra.mxu0 %v2186
    %2660 = vmatprep.subr.mxu0 0.0
    %2661 = vmatpush1.msra.mxu0 %v2189
    %2662 = vmatprep.subr.mxu0 0.0
    %2663 = vmatpush1.msra.mxu0 %v2192
    %2664 = vmatprep.subr.mxu0 0.0
    %2665 = vmatpush1.msra.mxu0 %v2195
    %2666 = vmatprep.subr.mxu0 0.0
    %2667 = vmatpush1.msra.mxu0 %v2198
    %2668 = vmatprep.subr.mxu0 0.0
    %2669 = vmatpush1.msra.mxu0 %v2201
    %2670 = vmatprep.subr.mxu0 0.0
    %2671 = vmatpush1.msra.mxu0 %v2204
    %2672 = vmatprep.subr.mxu0 0.0
    %2673 = vmatpush1.msra.mxu0 %v2207
    %2674 = vmatprep.subr.mxu0 0.0
    %2675 = vmatpush1.msra.mxu0 %v2210
    %2676 = vmatprep.subr.mxu0 0.0
    %2677 = vmatpush1.msra.mxu0 %v2213
    %2678 = vmatprep.subr.mxu0 0.0
    %2679 = vmatpush1.msra.mxu0 %v2216
    %2680 = vmatprep.subr.mxu0 0.0
    %2681 = vmatpush1.msra.mxu0 %v2219
    %2682 = vmatprep.subr.mxu0 0.0
    %2683 = vmatpush1.msra.mxu0 %v2222
    %2684 = vmatprep.subr.mxu0 0.0
    %2685 = vmatpush1.msra.mxu0 %v2225
    %2686 = vmatprep.subr.mxu0 0.0
    %2687 = vmatpush1.msra.mxu0 %v2228
    %2688 = vmatprep.subr.mxu0 0.0
    %2689 = vmatpush1.msra.mxu0 0.0
    %2690 = vmatprep.subr.mxu0 0.0
    %2691 = vmatpush1.msra.mxu0 0.0
    %2692 = vmatprep.subr.mxu0 0.0
    %2693 = vmatpush1.msra.mxu0 0.0
    %2694 = vmatprep.subr.mxu0 0.0
    %2695 = vmatpush1.msra.mxu0 0.0
    %2696 = vmatprep.subr.mxu0 0.0
    %2697 = vmatpush1.msra.mxu0 0.0
    %2698 = vmatprep.subr.mxu0 0.0
    %2699 = vmatpush1.msra.mxu0 0.0
    %2700 = vmatprep.subr.mxu0 0.0
    %2701 = vmatpush1.msra.mxu0 0.0
    %2702 = vmatprep.subr.mxu0 0.0
    %2703 = vmatpush1.msra.mxu0 0.0
    %2704 = vmatprep.subr.mxu0 0.0
    %2705 = vmatpush1.msra.mxu0 0.0
    %2706 = vmatprep.subr.mxu0 0.0
    %2707 = vmatpush1.msra.mxu0 0.0
    %2708 = vmatprep.subr.mxu0 0.0
    %2709 = vmatpush1.msra.mxu0 0.0
    %2710 = vmatprep.subr.mxu0 0.0
    %2711 = vmatpush1.msra.mxu0 0.0
    %2712 = vmatprep.subr.mxu0 0.0
    %2713 = vmatpush1.msra.mxu0 0.0
    %2714 = vmatprep.subr.mxu0 0.0
    %2715 = vmatpush1.msra.mxu0 0.0
    %2716 = vmatprep.subr.mxu0 0.0
    %2717 = vmatpush1.msra.mxu0 0.0
    %2718 = vmatprep.subr.mxu0 0.0
    %2719 = vmatpush1.msra.mxu0 0.0
    %2720 = vmatprep.mubr.f32.mxu0 0.0
    %2721 = vmatmul.mubr.f32.gmra.mrb[0].mxu0 %v2583
    %v2722 = vpop.f32.mrb[0].mxu0
    %v2723 = vadd.f32 %v2242, %v2722
    %v2724 = vpop.f32.mrb[0].mxu0
    %2725 = vdwg.mxu0
    %v2727 = vrot.slane %v2652, 4
    %v2729 = vadd.f32 %v2096, %v2727
    %v2730 = vxor.u32 %v2729, 2147483648
    %v2731 = vmul.f32 %v2730, 1.442695
    %v2732 = vpow.pop %v2731
    %v2733 = vadd.f32 %v2732, 1.0
    %v2734 = vrcp.pop %v2733
    %v2735 = vmul.f32 1.0, %v2734
    %v2737 = vrot.slane %v2654, 4
    %v2739 = vadd.f32 %v2098, %v2737
    %v2740 = vxor.u32 %v2739, 2147483648
    %v2741 = vmul.f32 %v2740, 1.442695
    %v2742 = vpow.pop %v2741
    %v2743 = vadd.f32 %v2742, 1.0
    %v2744 = vrcp.pop %v2743
    %v2745 = vmul.f32 1.0, %v2744
    %v2747 = vrot.slane %v2723, 4
    %v2749 = vmul.f32 %v2735, %v2747
    %v2750 = vadd.f32 %v2173, %v2749
    %v2751 = vtanh.pop %v2750
    %v2752 = vsub.f32 1.0, %v2745
    %v2753 = vmul.f32 %v2752, %v2751
    %v2754 = vrot.slane %v2581, 6
    %v2756 = vmul.f32 %v2745, %v2754
    %v2757 = vadd.f32 %v2753, %v2756
    %v2759 = vrot.slane %v2757, 4
    %2761 = vmatprep.subr.mxu0 %v2182
    %2762 = vmatpush1.msra.mxu0 %v2181
    %2763 = vmatprep.subr.mxu0 %v2185
    %2764 = vmatpush1.msra.mxu0 %v2184
    %2765 = vmatprep.subr.mxu0 %v2188
    %2766 = vmatpush1.msra.mxu0 %v2187
    %2767 = vmatprep.subr.mxu0 %v2191
    %2768 = vmatpush1.msra.mxu0 %v2190
    %2769 = vmatprep.subr.mxu0 %v2194
    %2770 = vmatpush1.msra.mxu0 %v2193
    %2771 = vmatprep.subr.mxu0 %v2197
    %2772 = vmatpush1.msra.mxu0 %v2196
    %2773 = vmatprep.subr.mxu0 %v2200
    %2774 = vmatpush1.msra.mxu0 %v2199
    %2775 = vmatprep.subr.mxu0 %v2203
    %2776 = vmatpush1.msra.mxu0 %v2202
    %2777 = vmatprep.subr.mxu0 %v2206
    %2778 = vmatpush1.msra.mxu0 %v2205
    %2779 = vmatprep.subr.mxu0 %v2209
    %2780 = vmatpush1.msra.mxu0 %v2208
    %2781 = vmatprep.subr.mxu0 %v2212
    %2782 = vmatpush1.msra.mxu0 %v2211
    %2783 = vmatprep.subr.mxu0 %v2215
    %2784 = vmatpush1.msra.mxu0 %v2214
    %2785 = vmatprep.subr.mxu0 %v2218
    %2786 = vmatpush1.msra.mxu0 %v2217
    %2787 = vmatprep.subr.mxu0 %v2221
    %2788 = vmatpush1.msra.mxu0 %v2220
    %2789 = vmatprep.subr.mxu0 %v2224
    %2790 = vmatpush1.msra.mxu0 %v2223
    %2791 = vmatprep.subr.mxu0 %v2227
    %2792 = vmatpush1.msra.mxu0 %v2226
    %2793 = vmatprep.subr.mxu0 0.0
    %2794 = vmatpush1.msra.mxu0 0.0
    %2795 = vmatprep.subr.mxu0 0.0
    %2796 = vmatpush1.msra.mxu0 0.0
    %2797 = vmatprep.subr.mxu0 0.0
    %2798 = vmatpush1.msra.mxu0 0.0
    %2799 = vmatprep.subr.mxu0 0.0
    %2800 = vmatpush1.msra.mxu0 0.0
    %2801 = vmatprep.subr.mxu0 0.0
    %2802 = vmatpush1.msra.mxu0 0.0
    %2803 = vmatprep.subr.mxu0 0.0
    %2804 = vmatpush1.msra.mxu0 0.0
    %2805 = vmatprep.subr.mxu0 0.0
    %2806 = vmatpush1.msra.mxu0 0.0
    %2807 = vmatprep.subr.mxu0 0.0
    %2808 = vmatpush1.msra.mxu0 0.0
    %2809 = vmatprep.subr.mxu0 0.0
    %2810 = vmatpush1.msra.mxu0 0.0
    %2811 = vmatprep.subr.mxu0 0.0
    %2812 = vmatpush1.msra.mxu0 0.0
    %2813 = vmatprep.subr.mxu0 0.0
    %2814 = vmatpush1.msra.mxu0 0.0
    %2815 = vmatprep.subr.mxu0 0.0
    %2816 = vmatpush1.msra.mxu0 0.0
    %2817 = vmatprep.subr.mxu0 0.0
    %2818 = vmatpush1.msra.mxu0 0.0
    %2819 = vmatprep.subr.mxu0 0.0
    %2820 = vmatpush1.msra.mxu0 0.0
    %2821 = vmatprep.subr.mxu0 0.0
    %2822 = vmatpush1.msra.mxu0 0.0
    %2823 = vmatprep.subr.mxu0 0.0
    %2824 = vmatpush1.msra.mxu0 0.0
    %2825 = vmatprep.mubr.f32.mxu0 0.0
    %2826 = vmatmul.mubr.f32.gmra.mrb[0].mxu0 %v2759
    %v2827 = vpop.f32.mrb[0].mxu0
    %v2828 = vadd.f32 %v2234, %v2827
    %v2829 = vpop.f32.mrb[0].mxu0
    %v2830 = vadd.f32 %v2238, %v2829
    %2831 = vdwg.mxu0
    %2832 = vmatprep.subr.mxu0 0.0
    %2833 = vmatpush1.msra.mxu0 %v2183
    %2834 = vmatprep.subr.mxu0 0.0
    %2835 = vmatpush1.msra.mxu0 %v2186
    %2836 = vmatprep.subr.mxu0 0.0
    %2837 = vmatpush1.msra.mxu0 %v2189
    %2838 = vmatprep.subr.mxu0 0.0
    %2839 = vmatpush1.msra.mxu0 %v2192
    %2840 = vmatprep.subr.mxu0 0.0
    %2841 = vmatpush1.msra.mxu0 %v2195
    %2842 = vmatprep.subr.mxu0 0.0
    %2843 = vmatpush1.msra.mxu0 %v2198
    %2844 = vmatprep.subr.mxu0 0.0
    %2845 = vmatpush1.msra.mxu0 %v2201
    %2846 = vmatprep.subr.mxu0 0.0
    %2847 = vmatpush1.msra.mxu0 %v2204
    %2848 = vmatprep.subr.mxu0 0.0
    %2849 = vmatpush1.msra.mxu0 %v2207
    %2850 = vmatprep.subr.mxu0 0.0
    %2851 = vmatpush1.msra.mxu0 %v2210
    %2852 = vmatprep.subr.mxu0 0.0
    %2853 = vmatpush1.msra.mxu0 %v2213
    %2854 = vmatprep.subr.mxu0 0.0
    %2855 = vmatpush1.msra.mxu0 %v2216
    %2856 = vmatprep.subr.mxu0 0.0
    %2857 = vmatpush1.msra.mxu0 %v2219
    %2858 = vmatprep.subr.mxu0 0.0
    %2859 = vmatpush1.msra.mxu0 %v2222
    %2860 = vmatprep.subr.mxu0 0.0
    %2861 = vmatpush1.msra.mxu0 %v2225
    %2862 = vmatprep.subr.mxu0 0.0
    %2863 = vmatpush1.msra.mxu0 %v2228
    %2864 = vmatprep.subr.mxu0 0.0
    %2865 = vmatpush1.msra.mxu0 0.0
    %2866 = vmatprep.subr.mxu0 0.0
    %2867 = vmatpush1.msra.mxu0 0.0
    %2868 = vmatprep.subr.mxu0 0.0
    %2869 = vmatpush1.msra.mxu0 0.0
    %2870 = vmatprep.subr.mxu0 0.0
    %2871 = vmatpush1.msra.mxu0 0.0
    %2872 = vmatprep.subr.mxu0 0.0
    %2873 = vmatpush1.msra.mxu0 0.0
    %2874 = vmatprep.subr.mxu0 0.0
    %2875 = vmatpush1.msra.mxu0 0.0
    %2876 = vmatprep.subr.mxu0 0.0
    %2877 = vmatpush1.msra.mxu0 0.0
    %2878 = vmatprep.subr.mxu0 0.0
    %2879 = vmatpush1.msra.mxu0 0.0
    %2880 = vmatprep.subr.mxu0 0.0
    %2881 = vmatpush1.msra.mxu0 0.0
    %2882 = vmatprep.subr.mxu0 0.0
    %2883 = vmatpush1.msra.mxu0 0.0
    %2884 = vmatprep.subr.mxu0 0.0
    %2885 = vmatpush1.msra.mxu0 0.0
    %2886 = vmatprep.subr.mxu0 0.0
    %2887 = vmatpush1.msra.mxu0 0.0
    %2888 = vmatprep.subr.mxu0 0.0
    %2889 = vmatpush1.msra.mxu0 0.0
    %2890 = vmatprep.subr.mxu0 0.0
    %2891 = vmatpush1.msra.mxu0 0.0
    %2892 = vmatprep.subr.mxu0 0.0
    %2893 = vmatpush1.msra.mxu0 0.0
    %2894 = vmatprep.subr.mxu0 0.0
    %2895 = vmatpush1.msra.mxu0 0.0
    %2896 = vmatprep.mubr.f32.mxu0 0.0
    %2897 = vmatmul.mubr.f32.gmra.mrb[0].mxu0 %v2759
    %v2898 = vpop.f32.mrb[0].mxu0
    %v2899 = vadd.f32 %v2242, %v2898
    %v2900 = vpop.f32.mrb[0].mxu0
    %2901 = vdwg.mxu0
    %v2903 = vrot.slane %v2828, 2
    %v2905 = vadd.f32 %v2096, %v2903
    %v2906 = vxor.u32 %v2905, 2147483648
    %v2907 = vmul.f32 %v2906, 1.442695
    %v2908 = vpow.pop %v2907
    %v2909 = vadd.f32 %v2908, 1.0
    %v2910 = vrcp.pop %v2909
    %v2911 = vmul.f32 1.0, %v2910
    %v2913 = vrot.slane %v2830, 2
    %v2915 = vadd.f32 %v2098, %v2913
    %v2916 = vxor.u32 %v2915, 2147483648
    %v2917 = vmul.f32 %v2916, 1.442695
    %v2918 = vpow.pop %v2917
    %v2919 = vadd.f32 %v2918, 1.0
    %v2920 = vrcp.pop %v2919
    %v2921 = vmul.f32 1.0, %v2920
    %v2923 = vrot.slane %v2899, 2
    %v2925 = vmul.f32 %v2911, %v2923
    %v2926 = vadd.f32 %v2173, %v2925
    %v2927 = vtanh.pop %v2926
    %v2928 = vsub.f32 1.0, %v2921
    %v2929 = vmul.f32 %v2928, %v2927
    %v2930 = vrot.slane %v2757, 6
    %v2932 = vmul.f32 %v2921, %v2930
    %v2933 = vadd.f32 %v2929, %v2932
    %v2935 = vrot.slane %v2933, 6
    %2937 = vmatprep.subr.mxu0 %v2182
    %2938 = vmatpush1.msra.mxu0 %v2181
    %2939 = vmatprep.subr.mxu0 %v2185
    %2940 = vmatpush1.msra.mxu0 %v2184
    %2941 = vmatprep.subr.mxu0 %v2188
    %2942 = vmatpush1.msra.mxu0 %v2187
    %2943 = vmatprep.subr.mxu0 %v2191
    %2944 = vmatpush1.msra.mxu0 %v2190
    %2945 = vmatprep.subr.mxu0 %v2194
    %2946 = vmatpush1.msra.mxu0 %v2193
    %2947 = vmatprep.subr.mxu0 %v2197
    %2948 = vmatpush1.msra.mxu0 %v2196
    %2949 = vmatprep.subr.mxu0 %v2200
    %2950 = vmatpush1.msra.mxu0 %v2199
    %2951 = vmatprep.subr.mxu0 %v2203
    %2952 = vmatpush1.msra.mxu0 %v2202
    %2953 = vmatprep.subr.mxu0 %v2206
    %2954 = vmatpush1.msra.mxu0 %v2205
    %2955 = vmatprep.subr.mxu0 %v2209
    %2956 = vmatpush1.msra.mxu0 %v2208
    %2957 = vmatprep.subr.mxu0 %v2212
    %2958 = vmatpush1.msra.mxu0 %v2211
    %2959 = vmatprep.subr.mxu0 %v2215
    %2960 = vmatpush1.msra.mxu0 %v2214
    %2961 = vmatprep.subr.mxu0 %v2218
    %2962 = vmatpush1.msra.mxu0 %v2217
    %2963 = vmatprep.subr.mxu0 %v2221
    %2964 = vmatpush1.msra.mxu0 %v2220
    %2965 = vmatprep.subr.mxu0 %v2224
    %2966 = vmatpush1.msra.mxu0 %v2223
    %2967 = vmatprep.subr.mxu0 %v2227
    %2968 = vmatpush1.msra.mxu0 %v2226
    %2969 = vmatprep.subr.mxu0 0.0
    %2970 = vmatpush1.msra.mxu0 0.0
    %2971 = vmatprep.subr.mxu0 0.0
    %2972 = vmatpush1.msra.mxu0 0.0
    %2973 = vmatprep.subr.mxu0 0.0
    %2974 = vmatpush1.msra.mxu0 0.0
    %2975 = vmatprep.subr.mxu0 0.0
    %2976 = vmatpush1.msra.mxu0 0.0
    %2977 = vmatprep.subr.mxu0 0.0
    %2978 = vmatpush1.msra.mxu0 0.0
    %2979 = vmatprep.subr.mxu0 0.0
    %2980 = vmatpush1.msra.mxu0 0.0
    %2981 = vmatprep.subr.mxu0 0.0
    %2982 = vmatpush1.msra.mxu0 0.0
    %2983 = vmatprep.subr.mxu0 0.0
    %2984 = vmatpush1.msra.mxu0 0.0
    %2985 = vmatprep.subr.mxu0 0.0
    %2986 = vmatpush1.msra.mxu0 0.0
    %2987 = vmatprep.subr.mxu0 0.0
    %2988 = vmatpush1.msra.mxu0 0.0
    %2989 = vmatprep.subr.mxu0 0.0
    %2990 = vmatpush1.msra.mxu0 0.0
    %2991 = vmatprep.subr.mxu0 0.0
    %2992 = vmatpush1.msra.mxu0 0.0
    %2993 = vmatprep.subr.mxu0 0.0
    %2994 = vmatpush1.msra.mxu0 0.0
    %2995 = vmatprep.subr.mxu0 0.0
    %2996 = vmatpush1.msra.mxu0 0.0
    %2997 = vmatprep.subr.mxu0 0.0
    %2998 = vmatpush1.msra.mxu0 0.0
    %2999 = vmatprep.subr.mxu0 0.0
    %3000 = vmatpush1.msra.mxu0 0.0
    %3001 = vmatprep.mubr.f32.mxu0 0.0
    %3002 = vmatmul.mubr.f32.gmra.mrb[0].mxu0 %v2935
    %v3003 = vpop.f32.mrb[0].mxu0
    %v3004 = vadd.f32 %v2234, %v3003
    %v3005 = vpop.f32.mrb[0].mxu0
    %v3006 = vadd.f32 %v2238, %v3005
    %3007 = vdwg.mxu0
    %3008 = vmatprep.subr.mxu0 0.0
    %3009 = vmatpush1.msra.mxu0 %v2183
    %3010 = vmatprep.subr.mxu0 0.0
    %3011 = vmatpush1.msra.mxu0 %v2186
    %3012 = vmatprep.subr.mxu0 0.0
    %3013 = vmatpush1.msra.mxu0 %v2189
    %3014 = vmatprep.subr.mxu0 0.0
    %3015 = vmatpush1.msra.mxu0 %v2192
    %3016 = vmatprep.subr.mxu0 0.0
    %3017 = vmatpush1.msra.mxu0 %v2195
    %3018 = vmatprep.subr.mxu0 0.0
    %3019 = vmatpush1.msra.mxu0 %v2198
    %3020 = vmatprep.subr.mxu0 0.0
    %3021 = vmatpush1.msra.mxu0 %v2201
    %3022 = vmatprep.subr.mxu0 0.0
    %3023 = vmatpush1.msra.mxu0 %v2204
    %3024 = vmatprep.subr.mxu0 0.0
    %3025 = vmatpush1.msra.mxu0 %v2207
    %3026 = vmatprep.subr.mxu0 0.0
    %3027 = vmatpush1.msra.mxu0 %v2210
    %3028 = vmatprep.subr.mxu0 0.0
    %3029 = vmatpush1.msra.mxu0 %v2213
    %3030 = vmatprep.subr.mxu0 0.0
    %3031 = vmatpush1.msra.mxu0 %v2216
    %3032 = vmatprep.subr.mxu0 0.0
    %3033 = vmatpush1.msra.mxu0 %v2219
    %3034 = vmatprep.subr.mxu0 0.0
    %3035 = vmatpush1.msra.mxu0 %v2222
    %3036 = vmatprep.subr.mxu0 0.0
    %3037 = vmatpush1.msra.mxu0 %v2225
    %3038 = vmatprep.subr.mxu0 0.0
    %3039 = vmatpush1.msra.mxu0 %v2228
    %3040 = vmatprep.subr.mxu0 0.0
    %3041 = vmatpush1.msra.mxu0 0.0
    %3042 = vmatprep.subr.mxu0 0.0
    %3043 = vmatpush1.msra.mxu0 0.0
    %3044 = vmatprep.subr.mxu0 0.0
    %3045 = vmatpush1.msra.mxu0 0.0
    %3046 = vmatprep.subr.mxu0 0.0
    %3047 = vmatpush1.msra.mxu0 0.0
    %3048 = vmatprep.subr.mxu0 0.0
    %3049 = vmatpush1.msra.mxu0 0.0
    %3050 = vmatprep.subr.mxu0 0.0
    %3051 = vmatpush1.msra.mxu0 0.0
    %3052 = vmatprep.subr.mxu0 0.0
    %3053 = vmatpush1.msra.mxu0 0.0
    %3054 = vmatprep.subr.mxu0 0.0
    %3055 = vmatpush1.msra.mxu0 0.0
    %3056 = vmatprep.subr.mxu0 0.0
    %3057 = vmatpush1.msra.mxu0 0.0
    %3058 = vmatprep.subr.mxu0 0.0
    %3059 = vmatpush1.msra.mxu0 0.0
    %3060 = vmatprep.subr.mxu0 0.0
    %3061 = vmatpush1.msra.mxu0 0.0
    %3062 = vmatprep.subr.mxu0 0.0
    %3063 = vmatpush1.msra.mxu0 0.0
    %3064 = vmatprep.subr.mxu0 0.0
    %3065 = vmatpush1.msra.mxu0 0.0
    %3066 = vmatprep.subr.mxu0 0.0
    %3067 = vmatpush1.msra.mxu0 0.0
    %3068 = vmatprep.subr.mxu0 0.0
    %3069 = vmatpush1.msra.mxu0 0.0
    %3070 = vmatprep.subr.mxu0 0.0
    %3071 = vmatpush1.msra.mxu0 0.0
    %3072 = vmatprep.mubr.f32.mxu0 0.0
    %3073 = vmatmul.mubr.f32.gmra.mrb[0].mxu0 %v2935
    %v3074 = vpop.f32.mrb[0].mxu0
    %v3075 = vadd.f32 %v2242, %v3074
    %v3076 = vpop.f32.mrb[0].mxu0
    %3077 = vdwg.mxu0
    %v3078 = vadd.f32 %v2102, %v3004
    %v3079 = vxor.u32 %v3078, 2147483648
    %v3080 = vmul.f32 %v3079, 1.442695
    %v3081 = vpow.pop %v3080
    %v3082 = vadd.f32 %v3081, 1.0
    %v3083 = vrcp.pop %v3082
    %v3084 = vmul.f32 1.0, %v3083
    %v3085 = vadd.f32 %v2104, %v3006
    %v3086 = vxor.u32 %v3085, 2147483648
    %v3087 = vmul.f32 %v3086, 1.442695
    %v3088 = vpow.pop %v3087
    %v3089 = vadd.f32 %v3088, 1.0
    %v3090 = vrcp.pop %v3089
    %v3091 = vmul.f32 1.0, %v3090
    %v3092 = vmul.f32 %v3084, %v3075
    %v3093 = vadd.f32 %v2178, %v3092
    %v3094 = vtanh.pop %v3093
    %v3095 = vsub.f32 1.0, %v3091
    %v3096 = vmul.f32 %v3095, %v3094
    %v3097 = vmul.f32 %v3091, %v2935
    %v3098 = vadd.f32 %v3096, %v3097
    %3099 = vmatprep.subr.mxu0 %v2182
    %3100 = vmatpush1.msra.mxu0 %v2181
    %3101 = vmatprep.subr.mxu0 %v2185
    %3102 = vmatpush1.msra.mxu0 %v2184
    %3103 = vmatprep.subr.mxu0 %v2188
    %3104 = vmatpush1.msra.mxu0 %v2187
    %3105 = vmatprep.subr.mxu0 %v2191
    %3106 = vmatpush1.msra.mxu0 %v2190
    %3107 = vmatprep.subr.mxu0 %v2194
    %3108 = vmatpush1.msra.mxu0 %v2193
    %3109 = vmatprep.subr.mxu0 %v2197
    %3110 = vmatpush1.msra.mxu0 %v2196
    %3111 = vmatprep.subr.mxu0 %v2200
    %3112 = vmatpush1.msra.mxu0 %v2199
    %3113 = vmatprep.subr.mxu0 %v2203
    %3114 = vmatpush1.msra.mxu0 %v2202
    %3115 = vmatprep.subr.mxu0 %v2206
    %3116 = vmatpush1.msra.mxu0 %v2205
    %3117 = vmatprep.subr.mxu0 %v2209
    %3118 = vmatpush1.msra.mxu0 %v2208
    %3119 = vmatprep.subr.mxu0 %v2212
    %3120 = vmatpush1.msra.mxu0 %v2211
    %3121 = vmatprep.subr.mxu0 %v2215
    %3122 = vmatpush1.msra.mxu0 %v2214
    %3123 = vmatprep.subr.mxu0 %v2218
    %3124 = vmatpush1.msra.mxu0 %v2217
    %3125 = vmatprep.subr.mxu0 %v2221
    %3126 = vmatpush1.msra.mxu0 %v2220
    %3127 = vmatprep.subr.mxu0 %v2224
    %3128 = vmatpush1.msra.mxu0 %v2223
    %3129 = vmatprep.subr.mxu0 %v2227
    %3130 = vmatpush1.msra.mxu0 %v2226
    %3131 = vmatprep.subr.mxu0 0.0
    %3132 = vmatpush1.msra.mxu0 0.0
    %3133 = vmatprep.subr.mxu0 0.0
    %3134 = vmatpush1.msra.mxu0 0.0
    %3135 = vmatprep.subr.mxu0 0.0
    %3136 = vmatpush1.msra.mxu0 0.0
    %3137 = vmatprep.subr.mxu0 0.0
    %3138 = vmatpush1.msra.mxu0 0.0
    %3139 = vmatprep.subr.mxu0 0.0
    %3140 = vmatpush1.msra.mxu0 0.0
    %3141 = vmatprep.subr.mxu0 0.0
    %3142 = vmatpush1.msra.mxu0 0.0
    %3143 = vmatprep.subr.mxu0 0.0
    %3144 = vmatpush1.msra.mxu0 0.0
    %3145 = vmatprep.subr.mxu0 0.0
    %3146 = vmatpush1.msra.mxu0 0.0
    %3147 = vmatprep.subr.mxu0 0.0
    %3148 = vmatpush1.msra.mxu0 0.0
    %3149 = vmatprep.subr.mxu0 0.0
    %3150 = vmatpush1.msra.mxu0 0.0
    %3151 = vmatprep.subr.mxu0 0.0
    %3152 = vmatpush1.msra.mxu0 0.0
    %3153 = vmatprep.subr.mxu0 0.0
    %3154 = vmatpush1.msra.mxu0 0.0
    %3155 = vmatprep.subr.mxu0 0.0
    %3156 = vmatpush1.msra.mxu0 0.0
    %3157 = vmatprep.subr.mxu0 0.0
    %3158 = vmatpush1.msra.mxu0 0.0
    %3159 = vmatprep.subr.mxu0 0.0
    %3160 = vmatpush1.msra.mxu0 0.0
    %3161 = vmatprep.subr.mxu0 0.0
    %3162 = vmatpush1.msra.mxu0 0.0
    %3163 = vmatprep.mubr.f32.mxu0 0.0
    %3164 = vmatmul.mubr.f32.gmra.mrb[0].mxu0 %v3098
    %v3165 = vpop.f32.mrb[0].mxu0
    %v3166 = vadd.f32 %v2234, %v3165
    %v3167 = vpop.f32.mrb[0].mxu0
    %v3168 = vadd.f32 %v2238, %v3167
    %3169 = vdwg.mxu0
    %3170 = vmatprep.subr.mxu0 0.0
    %3171 = vmatpush1.msra.mxu0 %v2183
    %3172 = vmatprep.subr.mxu0 0.0
    %3173 = vmatpush1.msra.mxu0 %v2186
    %3174 = vmatprep.subr.mxu0 0.0
    %3175 = vmatpush1.msra.mxu0 %v2189
    %3176 = vmatprep.subr.mxu0 0.0
    %3177 = vmatpush1.msra.mxu0 %v2192
    %3178 = vmatprep.subr.mxu0 0.0
    %3179 = vmatpush1.msra.mxu0 %v2195
    %3180 = vmatprep.subr.mxu0 0.0
    %3181 = vmatpush1.msra.mxu0 %v2198
    %3182 = vmatprep.subr.mxu0 0.0
    %3183 = vmatpush1.msra.mxu0 %v2201
    %3184 = vmatprep.subr.mxu0 0.0
    %3185 = vmatpush1.msra.mxu0 %v2204
    %3186 = vmatprep.subr.mxu0 0.0
    %3187 = vmatpush1.msra.mxu0 %v2207
    %3188 = vmatprep.subr.mxu0 0.0
    %3189 = vmatpush1.msra.mxu0 %v2210
    %3190 = vmatprep.subr.mxu0 0.0
    %3191 = vmatpush1.msra.mxu0 %v2213
    %3192 = vmatprep.subr.mxu0 0.0
    %3193 = vmatpush1.msra.mxu0 %v2216
    %3194 = vmatprep.subr.mxu0 0.0
    %3195 = vmatpush1.msra.mxu0 %v2219
    %3196 = vmatprep.subr.mxu0 0.0
    %3197 = vmatpush1.msra.mxu0 %v2222
    %3198 = vmatprep.subr.mxu0 0.0
    %3199 = vmatpush1.msra.mxu0 %v2225
    %3200 = vmatprep.subr.mxu0 0.0
    %3201 = vmatpush1.msra.mxu0 %v2228
    %3202 = vmatprep.subr.mxu0 0.0
    %3203 = vmatpush1.msra.mxu0 0.0
    %3204 = vmatprep.subr.mxu0 0.0
    %3205 = vmatpush1.msra.mxu0 0.0
    %3206 = vmatprep.subr.mxu0 0.0
    %3207 = vmatpush1.msra.mxu0 0.0
    %3208 = vmatprep.subr.mxu0 0.0
    %3209 = vmatpush1.msra.mxu0 0.0
    %3210 = vmatprep.subr.mxu0 0.0
    %3211 = vmatpush1.msra.mxu0 0.0
    %3212 = vmatprep.subr.mxu0 0.0
    %3213 = vmatpush1.msra.mxu0 0.0
    %3214 = vmatprep.subr.mxu0 0.0
    %3215 = vmatpush1.msra.mxu0 0.0
    %3216 = vmatprep.subr.mxu0 0.0
    %3217 = vmatpush1.msra.mxu0 0.0
    %3218 = vmatprep.subr.mxu0 0.0
    %3219 = vmatpush1.msra.mxu0 0.0
    %3220 = vmatprep.subr.mxu0 0.0
    %3221 = vmatpush1.msra.mxu0 0.0
    %3222 = vmatprep.subr.mxu0 0.0
    %3223 = vmatpush1.msra.mxu0 0.0
    %3224 = vmatprep.subr.mxu0 0.0
    %3225 = vmatpush1.msra.mxu0 0.0
    %3226 = vmatprep.subr.mxu0 0.0
    %3227 = vmatpush1.msra.mxu0 0.0
    %3228 = vmatprep.subr.mxu0 0.0
    %3229 = vmatpush1.msra.mxu0 0.0
    %3230 = vmatprep.subr.mxu0 0.0
    %3231 = vmatpush1.msra.mxu0 0.0
    %3232 = vmatprep.subr.mxu0 0.0
    %3233 = vmatpush1.msra.mxu0 0.0
    %3234 = vmatprep.mubr.f32.mxu0 0.0
    %3235 = vmatmul.mubr.f32.gmra.mrb[0].mxu0 %v3098
    %v3236 = vpop.f32.mrb[0].mxu0
    %v3237 = vadd.f32 %v2242, %v3236
    %v3238 = vpop.f32.mrb[0].mxu0
    %3239 = vdwg.mxu0
    %v3241 = vrot.slane %v3166, 6
    %v3243 = vadd.f32 %v2102, %v3241
    %v3244 = vxor.u32 %v3243, 2147483648
    %v3245 = vmul.f32 %v3244, 1.442695
    %v3246 = vpow.pop %v3245
    %v3247 = vadd.f32 %v3246, 1.0
    %v3248 = vrcp.pop %v3247
    %v3249 = vmul.f32 1.0, %v3248
    %v3251 = vrot.slane %v3168, 6
    %v3253 = vadd.f32 %v2104, %v3251
    %v3254 = vxor.u32 %v3253, 2147483648
    %v3255 = vmul.f32 %v3254, 1.442695
    %v3256 = vpow.pop %v3255
    %v3257 = vadd.f32 %v3256, 1.0
    %v3258 = vrcp.pop %v3257
    %v3259 = vmul.f32 1.0, %v3258
    %v3261 = vrot.slane %v3237, 6
    %v3263 = vmul.f32 %v3249, %v3261
    %v3264 = vadd.f32 %v2178, %v3263
    %v3265 = vtanh.pop %v3264
    %v3266 = vsub.f32 1.0, %v3259
    %v3267 = vmul.f32 %v3266, %v3265
    %v3269 = vrot.slane %v3098, 6
    %v3271 = vmul.f32 %v3259, %v3269
    %v3272 = vadd.f32 %v3267, %v3271
    %v3274 = vrot.slane %v3272, 2
    %3276 = vmatprep.subr.mxu0 %v2182
    %3277 = vmatpush1.msra.mxu0 %v2181
    %3278 = vmatprep.subr.mxu0 %v2185
    %3279 = vmatpush1.msra.mxu0 %v2184
    %3280 = vmatprep.subr.mxu0 %v2188
    %3281 = vmatpush1.msra.mxu0 %v2187
    %3282 = vmatprep.subr.mxu0 %v2191
    %3283 = vmatpush1.msra.mxu0 %v2190
    %3284 = vmatprep.subr.mxu0 %v2194
    %3285 = vmatpush1.msra.mxu0 %v2193
    %3286 = vmatprep.subr.mxu0 %v2197
    %3287 = vmatpush1.msra.mxu0 %v2196
    %3288 = vmatprep.subr.mxu0 %v2200
    %3289 = vmatpush1.msra.mxu0 %v2199
    %3290 = vmatprep.subr.mxu0 %v2203
    %3291 = vmatpush1.msra.mxu0 %v2202
    %3292 = vmatprep.subr.mxu0 %v2206
    %3293 = vmatpush1.msra.mxu0 %v2205
    %3294 = vmatprep.subr.mxu0 %v2209
    %3295 = vmatpush1.msra.mxu0 %v2208
    %3296 = vmatprep.subr.mxu0 %v2212
    %3297 = vmatpush1.msra.mxu0 %v2211
    %3298 = vmatprep.subr.mxu0 %v2215
    %3299 = vmatpush1.msra.mxu0 %v2214
    %3300 = vmatprep.subr.mxu0 %v2218
    %3301 = vmatpush1.msra.mxu0 %v2217
    %3302 = vmatprep.subr.mxu0 %v2221
    %3303 = vmatpush1.msra.mxu0 %v2220
    %3304 = vmatprep.subr.mxu0 %v2224
    %3305 = vmatpush1.msra.mxu0 %v2223
    %3306 = vmatprep.subr.mxu0 %v2227
    %3307 = vmatpush1.msra.mxu0 %v2226
    %3308 = vmatprep.subr.mxu0 0.0
    %3309 = vmatpush1.msra.mxu0 0.0
    %3310 = vmatprep.subr.mxu0 0.0
    %3311 = vmatpush1.msra.mxu0 0.0
    %3312 = vmatprep.subr.mxu0 0.0
    %3313 = vmatpush1.msra.mxu0 0.0
    %3314 = vmatprep.subr.mxu0 0.0
    %3315 = vmatpush1.msra.mxu0 0.0
    %3316 = vmatprep.subr.mxu0 0.0
    %3317 = vmatpush1.msra.mxu0 0.0
    %3318 = vmatprep.subr.mxu0 0.0
    %3319 = vmatpush1.msra.mxu0 0.0
    %3320 = vmatprep.subr.mxu0 0.0
    %3321 = vmatpush1.msra.mxu0 0.0
    %3322 = vmatprep.subr.mxu0 0.0
    %3323 = vmatpush1.msra.mxu0 0.0
    %3324 = vmatprep.subr.mxu0 0.0
    %3325 = vmatpush1.msra.mxu0 0.0
    %3326 = vmatprep.subr.mxu0 0.0
    %3327 = vmatpush1.msra.mxu0 0.0
    %3328 = vmatprep.subr.mxu0 0.0
    %3329 = vmatpush1.msra.mxu0 0.0
    %3330 = vmatprep.subr.mxu0 0.0
    %3331 = vmatpush1.msra.mxu0 0.0
    %3332 = vmatprep.subr.mxu0 0.0
    %3333 = vmatpush1.msra.mxu0 0.0
    %3334 = vmatprep.subr.mxu0 0.0
    %3335 = vmatpush1.msra.mxu0 0.0
    %3336 = vmatprep.subr.mxu0 0.0
    %3337 = vmatpush1.msra.mxu0 0.0
    %3338 = vmatprep.subr.mxu0 0.0
    %3339 = vmatpush1.msra.mxu0 0.0
    %3340 = vmatprep.mubr.f32.mxu0 0.0
    %3341 = vmatmul.mubr.f32.gmra.mrb[0].mxu0 %v3274
    %v3342 = vpop.f32.mrb[0].mxu0
    %v3343 = vadd.f32 %v2234, %v3342
    %v3344 = vpop.f32.mrb[0].mxu0
    %v3345 = vadd.f32 %v2238, %v3344
    %3346 = vdwg.mxu0
    %3347 = vmatprep.subr.mxu0 0.0
    %3348 = vmatpush1.msra.mxu0 %v2183
    %3349 = vmatprep.subr.mxu0 0.0
    %3350 = vmatpush1.msra.mxu0 %v2186
    %3351 = vmatprep.subr.mxu0 0.0
    %3352 = vmatpush1.msra.mxu0 %v2189
    %3353 = vmatprep.subr.mxu0 0.0
    %3354 = vmatpush1.msra.mxu0 %v2192
    %3355 = vmatprep.subr.mxu0 0.0
    %3356 = vmatpush1.msra.mxu0 %v2195
    %3357 = vmatprep.subr.mxu0 0.0
    %3358 = vmatpush1.msra.mxu0 %v2198
    %3359 = vmatprep.subr.mxu0 0.0
    %3360 = vmatpush1.msra.mxu0 %v2201
    %3361 = vmatprep.subr.mxu0 0.0
    %3362 = vmatpush1.msra.mxu0 %v2204
    %3363 = vmatprep.subr.mxu0 0.0
    %3364 = vmatpush1.msra.mxu0 %v2207
    %3365 = vmatprep.subr.mxu0 0.0
    %3366 = vmatpush1.msra.mxu0 %v2210
    %3367 = vmatprep.subr.mxu0 0.0
    %3368 = vmatpush1.msra.mxu0 %v2213
    %3369 = vmatprep.subr.mxu0 0.0
    %3370 = vmatpush1.msra.mxu0 %v2216
    %3371 = vmatprep.subr.mxu0 0.0
    %3372 = vmatpush1.msra.mxu0 %v2219
    %3373 = vmatprep.subr.mxu0 0.0
    %3374 = vmatpush1.msra.mxu0 %v2222
    %3375 = vmatprep.subr.mxu0 0.0
    %3376 = vmatpush1.msra.mxu0 %v2225
    %3377 = vmatprep.subr.mxu0 0.0
    %3378 = vmatpush1.msra.mxu0 %v2228
    %3379 = vmatprep.subr.mxu0 0.0
    %3380 = vmatpush1.msra.mxu0 0.0
    %3381 = vmatprep.subr.mxu0 0.0
    %3382 = vmatpush1.msra.mxu0 0.0
    %3383 = vmatprep.subr.mxu0 0.0
    %3384 = vmatpush1.msra.mxu0 0.0
    %3385 = vmatprep.subr.mxu0 0.0
    %3386 = vmatpush1.msra.mxu0 0.0
    %3387 = vmatprep.subr.mxu0 0.0
    %3388 = vmatpush1.msra.mxu0 0.0
    %3389 = vmatprep.subr.mxu0 0.0
    %3390 = vmatpush1.msra.mxu0 0.0
    %3391 = vmatprep.subr.mxu0 0.0
    %3392 = vmatpush1.msra.mxu0 0.0
    %3393 = vmatprep.subr.mxu0 0.0
    %3394 = vmatpush1.msra.mxu0 0.0
    %3395 = vmatprep.subr.mxu0 0.0
    %3396 = vmatpush1.msra.mxu0 0.0
    %3397 = vmatprep.subr.mxu0 0.0
    %3398 = vmatpush1.msra.mxu0 0.0
    %3399 = vmatprep.subr.mxu0 0.0
    %3400 = vmatpush1.msra.mxu0 0.0
    %3401 = vmatprep.subr.mxu0 0.0
    %3402 = vmatpush1.msra.mxu0 0.0
    %3403 = vmatprep.subr.mxu0 0.0
    %3404 = vmatpush1.msra.mxu0 0.0
    %3405 = vmatprep.subr.mxu0 0.0
    %3406 = vmatpush1.msra.mxu0 0.0
    %3407 = vmatprep.subr.mxu0 0.0
    %3408 = vmatpush1.msra.mxu0 0.0
    %3409 = vmatprep.subr.mxu0 0.0
    %3410 = vmatpush1.msra.mxu0 0.0
    %3411 = vmatprep.mubr.f32.mxu0 0.0
    %3412 = vmatmul.mubr.f32.gmra.mrb[0].mxu0 %v3274
    %v3413 = vpop.f32.mrb[0].mxu0
    %v3414 = vadd.f32 %v2242, %v3413
    %v3415 = vpop.f32.mrb[0].mxu0
    %3416 = vdwg.mxu0
    %v3418 = vrot.slane %v3343, 4
    %v3420 = vadd.f32 %v2102, %v3418
    %v3421 = vxor.u32 %v3420, 2147483648
    %v3422 = vmul.f32 %v3421, 1.442695
    %v3423 = vpow.pop %v3422
    %v3424 = vadd.f32 %v3423, 1.0
    %v3425 = vrcp.pop %v3424
    %v3426 = vmul.f32 1.0, %v3425
    %v3428 = vrot.slane %v3345, 4
    %v3430 = vadd.f32 %v2104, %v3428
    %v3431 = vxor.u32 %v3430, 2147483648
    %v3432 = vmul.f32 %v3431, 1.442695
    %v3433 = vpow.pop %v3432
    %v3434 = vadd.f32 %v3433, 1.0
    %v3435 = vrcp.pop %v3434
    %v3436 = vmul.f32 1.0, %v3435
    %v3438 = vrot.slane %v3414, 4
    %v3440 = vmul.f32 %v3426, %v3438
    %v3441 = vadd.f32 %v2178, %v3440
    %v3442 = vtanh.pop %v3441
    %v3443 = vsub.f32 1.0, %v3436
    %v3444 = vmul.f32 %v3443, %v3442
    %v3445 = vrot.slane %v3272, 6
    %v3447 = vmul.f32 %v3436, %v3445
    %v3448 = vadd.f32 %v3444, %v3447
    %v3450 = vrot.slane %v3448, 4
    %3452 = vmatprep.subr.mxu0 %v2182
    %3453 = vmatpush1.msra.mxu0 %v2181
    %3454 = vmatprep.subr.mxu0 %v2185
    %3455 = vmatpush1.msra.mxu0 %v2184
    %3456 = vmatprep.subr.mxu0 %v2188
    %3457 = vmatpush1.msra.mxu0 %v2187
    %3458 = vmatprep.subr.mxu0 %v2191
    %3459 = vmatpush1.msra.mxu0 %v2190
    %3460 = vmatprep.subr.mxu0 %v2194
    %3461 = vmatpush1.msra.mxu0 %v2193
    %3462 = vmatprep.subr.mxu0 %v2197
    %3463 = vmatpush1.msra.mxu0 %v2196
    %3464 = vmatprep.subr.mxu0 %v2200
    %3465 = vmatpush1.msra.mxu0 %v2199
    %3466 = vmatprep.subr.mxu0 %v2203
    %3467 = vmatpush1.msra.mxu0 %v2202
    %3468 = vmatprep.subr.mxu0 %v2206
    %3469 = vmatpush1.msra.mxu0 %v2205
    %3470 = vmatprep.subr.mxu0 %v2209
    %3471 = vmatpush1.msra.mxu0 %v2208
    %3472 = vmatprep.subr.mxu0 %v2212
    %3473 = vmatpush1.msra.mxu0 %v2211
    %3474 = vmatprep.subr.mxu0 %v2215
    %3475 = vmatpush1.msra.mxu0 %v2214
    %3476 = vmatprep.subr.mxu0 %v2218
    %3477 = vmatpush1.msra.mxu0 %v2217
    %3478 = vmatprep.subr.mxu0 %v2221
    %3479 = vmatpush1.msra.mxu0 %v2220
    %3480 = vmatprep.subr.mxu0 %v2224
    %3481 = vmatpush1.msra.mxu0 %v2223
    %3482 = vmatprep.subr.mxu0 %v2227
    %3483 = vmatpush1.msra.mxu0 %v2226
    %3484 = vmatprep.subr.mxu0 0.0
    %3485 = vmatpush1.msra.mxu0 0.0
    %3486 = vmatprep.subr.mxu0 0.0
    %3487 = vmatpush1.msra.mxu0 0.0
    %3488 = vmatprep.subr.mxu0 0.0
    %3489 = vmatpush1.msra.mxu0 0.0
    %3490 = vmatprep.subr.mxu0 0.0
    %3491 = vmatpush1.msra.mxu0 0.0
    %3492 = vmatprep.subr.mxu0 0.0
    %3493 = vmatpush1.msra.mxu0 0.0
    %3494 = vmatprep.subr.mxu0 0.0
    %3495 = vmatpush1.msra.mxu0 0.0
    %3496 = vmatprep.subr.mxu0 0.0
    %3497 = vmatpush1.msra.mxu0 0.0
    %3498 = vmatprep.subr.mxu0 0.0
    %3499 = vmatpush1.msra.mxu0 0.0
    %3500 = vmatprep.subr.mxu0 0.0
    %3501 = vmatpush1.msra.mxu0 0.0
    %3502 = vmatprep.subr.mxu0 0.0
    %3503 = vmatpush1.msra.mxu0 0.0
    %3504 = vmatprep.subr.mxu0 0.0
    %3505 = vmatpush1.msra.mxu0 0.0
    %3506 = vmatprep.subr.mxu0 0.0
    %3507 = vmatpush1.msra.mxu0 0.0
    %3508 = vmatprep.subr.mxu0 0.0
    %3509 = vmatpush1.msra.mxu0 0.0
    %3510 = vmatprep.subr.mxu0 0.0
    %3511 = vmatpush1.msra.mxu0 0.0
    %3512 = vmatprep.subr.mxu0 0.0
    %3513 = vmatpush1.msra.mxu0 0.0
    %3514 = vmatprep.subr.mxu0 0.0
    %3515 = vmatpush1.msra.mxu0 0.0
    %3516 = vmatprep.mubr.f32.mxu0 0.0
    %3517 = vmatmul.mubr.f32.gmra.mrb[0].mxu0 %v3450
    %v3518 = vpop.f32.mrb[0].mxu0
    %v3519 = vadd.f32 %v2234, %v3518
    %v3520 = vpop.f32.mrb[0].mxu0
    %v3521 = vadd.f32 %v2238, %v3520
    %3522 = vdwg.mxu0
    %3523 = vmatprep.subr.mxu0 0.0
    %3524 = vmatpush1.msra.mxu0 %v2183
    %3525 = vmatprep.subr.mxu0 0.0
    %3526 = vmatpush1.msra.mxu0 %v2186
    %3527 = vmatprep.subr.mxu0 0.0
    %3528 = vmatpush1.msra.mxu0 %v2189
    %3529 = vmatprep.subr.mxu0 0.0
    %3530 = vmatpush1.msra.mxu0 %v2192
    %3531 = vmatprep.subr.mxu0 0.0
    %3532 = vmatpush1.msra.mxu0 %v2195
    %3533 = vmatprep.subr.mxu0 0.0
    %3534 = vmatpush1.msra.mxu0 %v2198
    %3535 = vmatprep.subr.mxu0 0.0
    %3536 = vmatpush1.msra.mxu0 %v2201
    %3537 = vmatprep.subr.mxu0 0.0
    %3538 = vmatpush1.msra.mxu0 %v2204
    %3539 = vmatprep.subr.mxu0 0.0
    %3540 = vmatpush1.msra.mxu0 %v2207
    %3541 = vmatprep.subr.mxu0 0.0
    %3542 = vmatpush1.msra.mxu0 %v2210
    %3543 = vmatprep.subr.mxu0 0.0
    %3544 = vmatpush1.msra.mxu0 %v2213
    %3545 = vmatprep.subr.mxu0 0.0
    %3546 = vmatpush1.msra.mxu0 %v2216
    %3547 = vmatprep.subr.mxu0 0.0
    %3548 = vmatpush1.msra.mxu0 %v2219
    %3549 = vmatprep.subr.mxu0 0.0
    %3550 = vmatpush1.msra.mxu0 %v2222
    %3551 = vmatprep.subr.mxu0 0.0
    %3552 = vmatpush1.msra.mxu0 %v2225
    %3553 = vmatprep.subr.mxu0 0.0
    %3554 = vmatpush1.msra.mxu0 %v2228
    %3555 = vmatprep.subr.mxu0 0.0
    %3556 = vmatpush1.msra.mxu0 0.0
    %3557 = vmatprep.subr.mxu0 0.0
    %3558 = vmatpush1.msra.mxu0 0.0
    %3559 = vmatprep.subr.mxu0 0.0
    %3560 = vmatpush1.msra.mxu0 0.0
    %3561 = vmatprep.subr.mxu0 0.0
    %3562 = vmatpush1.msra.mxu0 0.0
    %3563 = vmatprep.subr.mxu0 0.0
    %3564 = vmatpush1.msra.mxu0 0.0
    %3565 = vmatprep.subr.mxu0 0.0
    %3566 = vmatpush1.msra.mxu0 0.0
    %3567 = vmatprep.subr.mxu0 0.0
    %3568 = vmatpush1.msra.mxu0 0.0
    %3569 = vmatprep.subr.mxu0 0.0
    %3570 = vmatpush1.msra.mxu0 0.0
    %3571 = vmatprep.subr.mxu0 0.0
    %3572 = vmatpush1.msra.mxu0 0.0
    %3573 = vmatprep.subr.mxu0 0.0
    %3574 = vmatpush1.msra.mxu0 0.0
    %3575 = vmatprep.subr.mxu0 0.0
    %3576 = vmatpush1.msra.mxu0 0.0
    %3577 = vmatprep.subr.mxu0 0.0
    %3578 = vmatpush1.msra.mxu0 0.0
    %3579 = vmatprep.subr.mxu0 0.0
    %3580 = vmatpush1.msra.mxu0 0.0
    %3581 = vmatprep.subr.mxu0 0.0
    %3582 = vmatpush1.msra.mxu0 0.0
    %3583 = vmatprep.subr.mxu0 0.0
    %3584 = vmatpush1.msra.mxu0 0.0
    %3585 = vmatprep.subr.mxu0 0.0
    %3586 = vmatpush1.msra.mxu0 0.0
    %3587 = vmatprep.mubr.f32.mxu0 0.0
    %3588 = vmatmul.mubr.f32.gmra.mrb[0].mxu0 %v3450
    %v3589 = vpop.f32.mrb[0].mxu0
    %v3590 = vadd.f32 %v2242, %v3589
    %v3591 = vpop.f32.mrb[0].mxu0
    %3592 = vdwg.mxu0
    %v3594 = vrot.slane %v3519, 2
    %v3596 = vadd.f32 %v2102, %v3594
    %v3597 = vxor.u32 %v3596, 2147483648
    %v3598 = vmul.f32 %v3597, 1.442695
    %v3599 = vpow.pop %v3598
    %v3600 = vadd.f32 %v3599, 1.0
    %v3601 = vrcp.pop %v3600
    %v3602 = vmul.f32 1.0, %v3601
    %v3604 = vrot.slane %v3521, 2
    %v3606 = vadd.f32 %v2104, %v3604
    %v3607 = vxor.u32 %v3606, 2147483648
    %v3608 = vmul.f32 %v3607, 1.442695
    %v3609 = vpow.pop %v3608
    %v3610 = vadd.f32 %v3609, 1.0
    %v3611 = vrcp.pop %v3610
    %v3612 = vmul.f32 1.0, %v3611
    %v3614 = vrot.slane %v3590, 2
    %v3616 = vmul.f32 %v3602, %v3614
    %v3617 = vadd.f32 %v2178, %v3616
    %v3618 = vtanh.pop %v3617
    %v3619 = vsub.f32 1.0, %v3612
    %v3620 = vmul.f32 %v3619, %v3618
    %v3621 = vrot.slane %v3448, 6
    %v3623 = vmul.f32 %v3612, %v3621
    %v3624 = vadd.f32 %v3620, %v3623
    %v3625 = vld [vmem:[%s23] sm:$0xff]
    %v3626 = vld [vmem:[%s23 + $0x8] sm:$0xff]
    %v3627 = vld [vmem:[%s23 + $0x10] sm:$0xff]
    %v3628 = vld [vmem:[%s23 + $0x18] sm:$0xff]
    %v3629 = vld [vmem:[%s23 + $0x20] sm:$0xff]
    %v3630 = vld [vmem:[%s23 + $0x28] sm:$0xff]
    %v3631 = vld [vmem:[%s23 + $0x30] sm:$0xff]
    %v3632 = vld [vmem:[%s23 + $0x38] sm:$0xff]
    %v3633 = vld [vmem:[%s23 + $0x40] sm:$0xff]
    %v3634 = vld [vmem:[%s23 + $0x48] sm:$0xff]
    %v3635 = vld [vmem:[%s23 + $0x50] sm:$0xff]
    %v3636 = vld [vmem:[%s23 + $0x58] sm:$0xff]
    %v3637 = vld [vmem:[%s23 + $0x60] sm:$0xff]
    %v3638 = vld [vmem:[%s23 + $0x68] sm:$0xff]
    %v3639 = vld [vmem:[%s23 + $0x70] sm:$0xff]
    %v3640 = vld [vmem:[%s23 + $0x78] sm:$0xff]
    %v3641 = vld [vmem:[%s25] sm:$0xff]
    %v3642 = vld [vmem:[%s25 + $0x8] sm:$0xff]
    %v3643 = vld [vmem:[%s25 + $0x10] sm:$0xff]
    %v3644 = vld [vmem:[%s25 + $0x18] sm:$0xff]
    %v3645 = vld [vmem:[%s25 + $0x20] sm:$0xff]
    %v3646 = vld [vmem:[%s25 + $0x28] sm:$0xff]
    %v3647 = vld [vmem:[%s25 + $0x30] sm:$0xff]
    %v3648 = vld [vmem:[%s25 + $0x38] sm:$0xff]
    %v3649 = vld [vmem:[%s25 + $0x40] sm:$0xff]
    %v3650 = vld [vmem:[%s25 + $0x48] sm:$0xff]
    %v3651 = vld [vmem:[%s25 + $0x50] sm:$0xff]
    %v3652 = vld [vmem:[%s25 + $0x58] sm:$0xff]
    %v3653 = vld [vmem:[%s25 + $0x60] sm:$0xff]
    %v3654 = vld [vmem:[%s25 + $0x68] sm:$0xff]
    %v3655 = vld [vmem:[%s25 + $0x70] sm:$0xff]
    %v3656 = vld [vmem:[%s25 + $0x78] sm:$0xff]
    %v3658 = vrot.slane %v3624, 6
    %3660 = vmatprep.subr.mxu0 0.0
    %3661 = vmatpush1.msra.mxu0 %v3641
    %3662 = vmatprep.subr.mxu0 0.0
    %3663 = vmatpush1.msra.mxu0 %v3642
    %3664 = vmatprep.subr.mxu0 0.0
    %3665 = vmatpush1.msra.mxu0 %v3643
    %3666 = vmatprep.subr.mxu0 0.0
    %3667 = vmatpush1.msra.mxu0 %v3644
    %3668 = vmatprep.subr.mxu0 0.0
    %3669 = vmatpush1.msra.mxu0 %v3645
    %3670 = vmatprep.subr.mxu0 0.0
    %3671 = vmatpush1.msra.mxu0 %v3646
    %3672 = vmatprep.subr.mxu0 0.0
    %3673 = vmatpush1.msra.mxu0 %v3647
    %3674 = vmatprep.subr.mxu0 0.0
    %3675 = vmatpush1.msra.mxu0 %v3648
    %3676 = vmatprep.subr.mxu0 0.0
    %3677 = vmatpush1.msra.mxu0 %v3649
    %3678 = vmatprep.subr.mxu0 0.0
    %3679 = vmatpush1.msra.mxu0 %v3650
    %3680 = vmatprep.subr.mxu0 0.0
    %3681 = vmatpush1.msra.mxu0 %v3651
    %3682 = vmatprep.subr.mxu0 0.0
    %3683 = vmatpush1.msra.mxu0 %v3652
    %3684 = vmatprep.subr.mxu0 0.0
    %3685 = vmatpush1.msra.mxu0 %v3653
    %3686 = vmatprep.subr.mxu0 0.0
    %3687 = vmatpush1.msra.mxu0 %v3654
    %3688 = vmatprep.subr.mxu0 0.0
    %3689 = vmatpush1.msra.mxu0 %v3655
    %3690 = vmatprep.subr.mxu0 0.0
    %3691 = vmatpush1.msra.mxu0 %v3656
    %3692 = vmatprep.subr.mxu0 0.0
    %3693 = vmatpush1.msra.mxu0 0.0
    %3694 = vmatprep.subr.mxu0 0.0
    %3695 = vmatpush1.msra.mxu0 0.0
    %3696 = vmatprep.subr.mxu0 0.0
    %3697 = vmatpush1.msra.mxu0 0.0
    %3698 = vmatprep.subr.mxu0 0.0
    %3699 = vmatpush1.msra.mxu0 0.0
    %3700 = vmatprep.subr.mxu0 0.0
    %3701 = vmatpush1.msra.mxu0 0.0
    %3702 = vmatprep.subr.mxu0 0.0
    %3703 = vmatpush1.msra.mxu0 0.0
    %3704 = vmatprep.subr.mxu0 0.0
    %3705 = vmatpush1.msra.mxu0 0.0
    %3706 = vmatprep.subr.mxu0 0.0
    %3707 = vmatpush1.msra.mxu0 0.0
    %3708 = vmatprep.subr.mxu0 0.0
    %3709 = vmatpush1.msra.mxu0 0.0
    %3710 = vmatprep.subr.mxu0 0.0
    %3711 = vmatpush1.msra.mxu0 0.0
    %3712 = vmatprep.subr.mxu0 0.0
    %3713 = vmatpush1.msra.mxu0 0.0
    %3714 = vmatprep.subr.mxu0 0.0
    %3715 = vmatpush1.msra.mxu0 0.0
    %3716 = vmatprep.subr.mxu0 0.0
    %3717 = vmatpush1.msra.mxu0 0.0
    %3718 = vmatprep.subr.mxu0 0.0
    %3719 = vmatpush1.msra.mxu0 0.0
    %3720 = vmatprep.subr.mxu0 0.0
    %3721 = vmatpush1.msra.mxu0 0.0
    %3722 = vmatprep.subr.mxu0 0.0
    %3723 = vmatpush1.msra.mxu0 0.0
    %3724 = vmatprep.mubr.f32.mxu0 0.0
    %3725 = vmatmul.mubr.f32.gmra.mrb[0].mxu0 %v3658
    %v3726 = vpop.f32.mrb[0].mxu0
    %v3727 = vadd.f32 0.0, %v3726
    %v3728 = vpop.f32.mrb[0].mxu0
    %3729 = vdwg.mxu0
    %v3731 = vrot.slane %v1997, 6
    %3733 = vmatprep.subr.mxu0 0.0
    %3734 = vmatpush1.msra.mxu0 %v3625
    %3735 = vmatprep.subr.mxu0 0.0
    %3736 = vmatpush1.msra.mxu0 %v3626
    %3737 = vmatprep.subr.mxu0 0.0
    %3738 = vmatpush1.msra.mxu0 %v3627
    %3739 = vmatprep.subr.mxu0 0.0
    %3740 = vmatpush1.msra.mxu0 %v3628
    %3741 = vmatprep.subr.mxu0 0.0
    %3742 = vmatpush1.msra.mxu0 %v3629
    %3743 = vmatprep.subr.mxu0 0.0
    %3744 = vmatpush1.msra.mxu0 %v3630
    %3745 = vmatprep.subr.mxu0 0.0
    %3746 = vmatpush1.msra.mxu0 %v3631
    %3747 = vmatprep.subr.mxu0 0.0
    %3748 = vmatpush1.msra.mxu0 %v3632
    %3749 = vmatprep.subr.mxu0 0.0
    %3750 = vmatpush1.msra.mxu0 %v3633
    %3751 = vmatprep.subr.mxu0 0.0
    %3752 = vmatpush1.msra.mxu0 %v3634
    %3753 = vmatprep.subr.mxu0 0.0
    %3754 = vmatpush1.msra.mxu0 %v3635
    %3755 = vmatprep.subr.mxu0 0.0
    %3756 = vmatpush1.msra.mxu0 %v3636
    %3757 = vmatprep.subr.mxu0 0.0
    %3758 = vmatpush1.msra.mxu0 %v3637
    %3759 = vmatprep.subr.mxu0 0.0
    %3760 = vmatpush1.msra.mxu0 %v3638
    %3761 = vmatprep.subr.mxu0 0.0
    %3762 = vmatpush1.msra.mxu0 %v3639
    %3763 = vmatprep.subr.mxu0 0.0
    %3764 = vmatpush1.msra.mxu0 %v3640
    %3765 = vmatprep.subr.mxu0 0.0
    %3766 = vmatpush1.msra.mxu0 0.0
    %3767 = vmatprep.subr.mxu0 0.0
    %3768 = vmatpush1.msra.mxu0 0.0
    %3769 = vmatprep.subr.mxu0 0.0
    %3770 = vmatpush1.msra.mxu0 0.0
    %3771 = vmatprep.subr.mxu0 0.0
    %3772 = vmatpush1.msra.mxu0 0.0
    %3773 = vmatprep.subr.mxu0 0.0
    %3774 = vmatpush1.msra.mxu0 0.0
    %3775 = vmatprep.subr.mxu0 0.0
    %3776 = vmatpush1.msra.mxu0 0.0
    %3777 = vmatprep.subr.mxu0 0.0
    %3778 = vmatpush1.msra.mxu0 0.0
    %3779 = vmatprep.subr.mxu0 0.0
    %3780 = vmatpush1.msra.mxu0 0.0
    %3781 = vmatprep.subr.mxu0 0.0
    %3782 = vmatpush1.msra.mxu0 0.0
    %3783 = vmatprep.subr.mxu0 0.0
    %3784 = vmatpush1.msra.mxu0 0.0
    %3785 = vmatprep.subr.mxu0 0.0
    %3786 = vmatpush1.msra.mxu0 0.0
    %3787 = vmatprep.subr.mxu0 0.0
    %3788 = vmatpush1.msra.mxu0 0.0
    %3789 = vmatprep.subr.mxu0 0.0
    %3790 = vmatpush1.msra.mxu0 0.0
    %3791 = vmatprep.subr.mxu0 0.0
    %3792 = vmatpush1.msra.mxu0 0.0
    %3793 = vmatprep.subr.mxu0 0.0
    %3794 = vmatpush1.msra.mxu0 0.0
    %3795 = vmatprep.subr.mxu0 0.0
    %3796 = vmatpush1.msra.mxu0 0.0
    %3797 = vmatprep.mubr.f32.mxu0 0.0
    %3798 = vmatmul.mubr.f32.gmra.mrb[0].mxu0 %v3731
    %v3799 = vpop.f32.mrb[0].mxu0
    %v3800 = vadd.f32 %v3727, %v3799
    %v3801 = vpop.f32.mrb[0].mxu0
    %3802 = vdwg.mxu0
    %v3803 = vld [vmem:[#allocation19] sm:$0x1]
    %v3805 = vlaneseq
    %v3806 = vshrl.u32 %v3805, 7
    %v3807 = vsub.s32 0, %v3806
    %v3808 = vrot.slane %v3803, %v3807
    %v3810 = vadd.f32 %v3800, %v3808
    %v3811 = vtanh.pop %v3810
    %v3812 = vld [vmem:[#allocation20] sm:$0xff]
    %v3813 = vld [vmem:[#allocation20 + $0x8] sm:$0xff]
    %v3814 = vld [vmem:[#allocation20 + $0x10] sm:$0xff]
    %v3815 = vld [vmem:[#allocation20 + $0x18] sm:$0xff]
    %v3816 = vld [vmem:[#allocation20 + $0x20] sm:$0xff]
    %v3817 = vld [vmem:[#allocation20 + $0x28] sm:$0xff]
    %v3818 = vld [vmem:[#allocation20 + $0x30] sm:$0xff]
    %v3819 = vld [vmem:[#allocation20 + $0x38] sm:$0xff]
    %v3820 = vld [vmem:[#allocation20 + $0x40] sm:$0xff]
    %v3821 = vld [vmem:[#allocation20 + $0x48] sm:$0xff]
    %v3822 = vld [vmem:[#allocation20 + $0x50] sm:$0xff]
    %v3823 = vld [vmem:[#allocation20 + $0x58] sm:$0xff]
    %v3824 = vld [vmem:[#allocation20 + $0x60] sm:$0xff]
    %v3825 = vld [vmem:[#allocation20 + $0x68] sm:$0xff]
    %v3826 = vld [vmem:[#allocation20 + $0x70] sm:$0xff]
    %v3827 = vld [vmem:[#allocation20 + $0x78] sm:$0xff]
    %v3828 = vld [vmem:[#allocation22] sm:$0x1]
    %v3830 = vlaneseq
    %v3831 = vshrl.u32 %v3830, 7
    %v3832 = vsub.s32 0, %v3831
    %v3833 = vrot.slane %v3828, %v3832
    %3835 = vmatprep.subr.mxu0 0.0
    %3836 = vmatpush1.msra.mxu0 %v3812
    %3837 = vmatprep.subr.mxu0 0.0
    %3838 = vmatpush1.msra.mxu0 %v3813
    %3839 = vmatprep.subr.mxu0 0.0
    %3840 = vmatpush1.msra.mxu0 %v3814
    %3841 = vmatprep.subr.mxu0 0.0
    %3842 = vmatpush1.msra.mxu0 %v3815
    %3843 = vmatprep.subr.mxu0 0.0
    %3844 = vmatpush1.msra.mxu0 %v3816
    %3845 = vmatprep.subr.mxu0 0.0
    %3846 = vmatpush1.msra.mxu0 %v3817
    %3847 = vmatprep.subr.mxu0 0.0
    %3848 = vmatpush1.msra.mxu0 %v3818
    %3849 = vmatprep.subr.mxu0 0.0
    %3850 = vmatpush1.msra.mxu0 %v3819
    %3851 = vmatprep.subr.mxu0 0.0
    %3852 = vmatpush1.msra.mxu0 %v3820
    %3853 = vmatprep.subr.mxu0 0.0
    %3854 = vmatpush1.msra.mxu0 %v3821
    %3855 = vmatprep.subr.mxu0 0.0
    %3856 = vmatpush1.msra.mxu0 %v3822
    %3857 = vmatprep.subr.mxu0 0.0
    %3858 = vmatpush1.msra.mxu0 %v3823
    %3859 = vmatprep.subr.mxu0 0.0
    %3860 = vmatpush1.msra.mxu0 %v3824
    %3861 = vmatprep.subr.mxu0 0.0
    %3862 = vmatpush1.msra.mxu0 %v3825
    %3863 = vmatprep.subr.mxu0 0.0
    %3864 = vmatpush1.msra.mxu0 %v3826
    %3865 = vmatprep.subr.mxu0 0.0
    %3866 = vmatpush1.msra.mxu0 %v3827
    %3867 = vmatprep.subr.mxu0 0.0
    %3868 = vmatpush1.msra.mxu0 0.0
    %3869 = vmatprep.subr.mxu0 0.0
    %3870 = vmatpush1.msra.mxu0 0.0
    %3871 = vmatprep.subr.mxu0 0.0
    %3872 = vmatpush1.msra.mxu0 0.0
    %3873 = vmatprep.subr.mxu0 0.0
    %3874 = vmatpush1.msra.mxu0 0.0
    %3875 = vmatprep.subr.mxu0 0.0
    %3876 = vmatpush1.msra.mxu0 0.0
    %3877 = vmatprep.subr.mxu0 0.0
    %3878 = vmatpush1.msra.mxu0 0.0
    %3879 = vmatprep.subr.mxu0 0.0
    %3880 = vmatpush1.msra.mxu0 0.0
    %3881 = vmatprep.subr.mxu0 0.0
    %3882 = vmatpush1.msra.mxu0 0.0
    %3883 = vmatprep.subr.mxu0 0.0
    %3884 = vmatpush1.msra.mxu0 0.0
    %3885 = vmatprep.subr.mxu0 0.0
    %3886 = vmatpush1.msra.mxu0 0.0
    %3887 = vmatprep.subr.mxu0 0.0
    %3888 = vmatpush1.msra.mxu0 0.0
    %3889 = vmatprep.subr.mxu0 0.0
    %3890 = vmatpush1.msra.mxu0 0.0
    %3891 = vmatprep.subr.mxu0 0.0
    %3892 = vmatpush1.msra.mxu0 0.0
    %3893 = vmatprep.subr.mxu0 0.0
    %3894 = vmatpush1.msra.mxu0 0.0
    %3895 = vmatprep.subr.mxu0 0.0
    %3896 = vmatpush1.msra.mxu0 0.0
    %3897 = vmatprep.subr.mxu0 0.0
    %3898 = vmatpush1.msra.mxu0 0.0
    %3899 = vmatprep.mubr.f32.mxu0 0.0
    %3900 = vmatmul.mubr.f32.gmra.mrb[0].mxu0 %v3811
    %v3901 = vpop.f32.mrb[0].mxu0
    %v3902 = vadd.f32 %v3833, %v3901
    %v3903 = vpop.f32.mrb[0].mxu0
    %3904 = vdwg.mxu0
    %v3905 = vtanh.pop %v3902
    %v3906 = vld [vmem:[%s33] sm:$0xff]
    %v3907 = vld [vmem:[%s33 + $0x8] sm:$0xff]
    %v3908 = vld [vmem:[%s33 + $0x10] sm:$0xff]
    %v3909 = vld [vmem:[%s33 + $0x18] sm:$0xff]
    %v3910 = vld [vmem:[%s33 + $0x20] sm:$0xff]
    %v3911 = vld [vmem:[%s33 + $0x28] sm:$0xff]
    %v3912 = vld [vmem:[%s33 + $0x30] sm:$0xff]
    %v3913 = vld [vmem:[%s33 + $0x38] sm:$0xff]
    %v3914 = vld [vmem:[%s33 + $0x40] sm:$0xff]
    %v3915 = vld [vmem:[%s33 + $0x48] sm:$0xff]
    %v3916 = vld [vmem:[%s33 + $0x50] sm:$0xff]
    %v3917 = vld [vmem:[%s33 + $0x58] sm:$0xff]
    %v3918 = vld [vmem:[%s33 + $0x60] sm:$0xff]
    %v3919 = vld [vmem:[%s33 + $0x68] sm:$0xff]
    %v3920 = vld [vmem:[%s33 + $0x70] sm:$0xff]
    %v3921 = vld [vmem:[%s33 + $0x78] sm:$0xff]
    %v3922 = vld [vmem:[#allocation23] sm:$0x1]
    %v3924 = vlaneseq
    %v3925 = vshrl.u32 %v3924, 7
    %v3926 = vsub.s32 0, %v3925
    %v3927 = vrot.slane %v3922, %v3926
    %3929 = vmatprep.subr.mxu0 0.0
    %3930 = vmatpush1.msra.mxu0 %v3906
    %3931 = vmatprep.subr.mxu0 0.0
    %3932 = vmatpush1.msra.mxu0 %v3907
    %3933 = vmatprep.subr.mxu0 0.0
    %3934 = vmatpush1.msra.mxu0 %v3908
    %3935 = vmatprep.subr.mxu0 0.0
    %3936 = vmatpush1.msra.mxu0 %v3909
    %3937 = vmatprep.subr.mxu0 0.0
    %3938 = vmatpush1.msra.mxu0 %v3910
    %3939 = vmatprep.subr.mxu0 0.0
    %3940 = vmatpush1.msra.mxu0 %v3911
    %3941 = vmatprep.subr.mxu0 0.0
    %3942 = vmatpush1.msra.mxu0 %v3912
    %3943 = vmatprep.subr.mxu0 0.0
    %3944 = vmatpush1.msra.mxu0 %v3913
    %3945 = vmatprep.subr.mxu0 0.0
    %3946 = vmatpush1.msra.mxu0 %v3914
    %3947 = vmatprep.subr.mxu0 0.0
    %3948 = vmatpush1.msra.mxu0 %v3915
    %3949 = vmatprep.subr.mxu0 0.0
    %3950 = vmatpush1.msra.mxu0 %v3916
    %3951 = vmatprep.subr.mxu0 0.0
    %3952 = vmatpush1.msra.mxu0 %v3917
    %3953 = vmatprep.subr.mxu0 0.0
    %3954 = vmatpush1.msra.mxu0 %v3918
    %3955 = vmatprep.subr.mxu0 0.0
    %3956 = vmatpush1.msra.mxu0 %v3919
    %3957 = vmatprep.subr.mxu0 0.0
    %3958 = vmatpush1.msra.mxu0 %v3920
    %3959 = vmatprep.subr.mxu0 0.0
    %3960 = vmatpush1.msra.mxu0 %v3921
    %3961 = vmatprep.subr.mxu0 0.0
    %3962 = vmatpush1.msra.mxu0 0.0
    %3963 = vmatprep.subr.mxu0 0.0
    %3964 = vmatpush1.msra.mxu0 0.0
    %3965 = vmatprep.subr.mxu0 0.0
    %3966 = vmatpush1.msra.mxu0 0.0
    %3967 = vmatprep.subr.mxu0 0.0
    %3968 = vmatpush1.msra.mxu0 0.0
    %3969 = vmatprep.subr.mxu0 0.0
    %3970 = vmatpush1.msra.mxu0 0.0
    %3971 = vmatprep.subr.mxu0 0.0
    %3972 = vmatpush1.msra.mxu0 0.0
    %3973 = vmatprep.subr.mxu0 0.0
    %3974 = vmatpush1.msra.mxu0 0.0
    %3975 = vmatprep.subr.mxu0 0.0
    %3976 = vmatpush1.msra.mxu0 0.0
    %3977 = vmatprep.subr.mxu0 0.0
    %3978 = vmatpush1.msra.mxu0 0.0
    %3979 = vmatprep.subr.mxu0 0.0
    %3980 = vmatpush1.msra.mxu0 0.0
    %3981 = vmatprep.subr.mxu0 0.0
    %3982 = vmatpush1.msra.mxu0 0.0
    %3983 = vmatprep.subr.mxu0 0.0
    %3984 = vmatpush1.msra.mxu0 0.0
    %3985 = vmatprep.subr.mxu0 0.0
    %3986 = vmatpush1.msra.mxu0 0.0
    %3987 = vmatprep.subr.mxu0 0.0
    %3988 = vmatpush1.msra.mxu0 0.0
    %3989 = vmatprep.subr.mxu0 0.0
    %3990 = vmatpush1.msra.mxu0 0.0
    %3991 = vmatprep.subr.mxu0 0.0
    %3992 = vmatpush1.msra.mxu0 0.0
    %3993 = vmatprep.mubr.f32.mxu0 0.0
    %3994 = vmatmul.mubr.f32.gmra.mrb[0].mxu0 %v3905
    %v3995 = vpop.f32.mrb[0].mxu0
    %v3996 = vadd.f32 %v3927, %v3995
    %v3997 = vpop.f32.mrb[0].mxu0
    %3998 = vdwg.mxu0
    %vm3999 = vcmask 123904
    %4000 = vst.msk [vmem:[#allocation33] sm:$0x3] %vm3999, %v3996
    %v4001 = vld [vmem:[#allocation7] sm:$0x3]
    %v4002 = vmul.f32 %v3996, 0.5
    %v4003 = vmul.f32 %v4002, 1.442695
    %v4004 = vpow.pop %v4003
    %4006 = vrot.lane.b32.xlu0 %v4004, 120
    %v4007 = vpop.permute.xlu0 %4006
    %v4009 = vmul.f32 %v4001, %v4007
    %v4010 = vadd.f32 %v3996, %v4009
    %v4011 = vld [vmem:[#allocation25] sm:$0xff]
    %v4012 = vld [vmem:[#allocation25 + $0x8] sm:$0xff]
    %v4013 = vld [vmem:[#allocation25 + $0x10] sm:$0xff]
    %v4014 = vld [vmem:[#allocation25 + $0x18] sm:$0xff]
    %v4015 = vld [vmem:[#allocation25 + $0x20] sm:$0xff]
    %v4016 = vld [vmem:[#allocation25 + $0x28] sm:$0xff]
    %v4017 = vld [vmem:[#allocation25 + $0x30] sm:$0xff]
    %v4018 = vld [vmem:[#allocation25 + $0x38] sm:$0xff]
    %v4019 = vld [vmem:[#allocation25 + $0x40] sm:$0xff]
    %v4020 = vld [vmem:[#allocation25 + $0x48] sm:$0xff]
    %v4021 = vld [vmem:[#allocation25 + $0x50] sm:$0xff]
    %v4022 = vld [vmem:[#allocation25 + $0x58] sm:$0xff]
    %v4023 = vld [vmem:[#allocation25 + $0x60] sm:$0xff]
    %v4024 = vld [vmem:[#allocation25 + $0x68] sm:$0xff]
    %v4025 = vld [vmem:[#allocation25 + $0x70] sm:$0xff]
    %v4026 = vld [vmem:[#allocation25 + $0x78] sm:$0xff]
    %v4027 = vld [vmem:[#allocation25 + $0x80] sm:$0xff]
    %v4028 = vld [vmem:[#allocation25 + $0x88] sm:$0xff]
    %v4029 = vld [vmem:[#allocation25 + $0x90] sm:$0xff]
    %v4030 = vld [vmem:[#allocation25 + $0x98] sm:$0xff]
    %v4031 = vld [vmem:[#allocation25 + $0xa0] sm:$0xff]
    %v4032 = vld [vmem:[#allocation25 + $0xa8] sm:$0xff]
    %v4033 = vld [vmem:[#allocation25 + $0xb0] sm:$0xff]
    %v4034 = vld [vmem:[#allocation25 + $0xb8] sm:$0xff]
    %v4035 = vld [vmem:[#allocation25 + $0xc0] sm:$0xff]
    %v4036 = vld [vmem:[#allocation25 + $0xc8] sm:$0xff]
    %v4037 = vld [vmem:[#allocation25 + $0xd0] sm:$0xff]
    %v4038 = vld [vmem:[#allocation25 + $0xd8] sm:$0xff]
    %v4039 = vld [vmem:[#allocation25 + $0xe0] sm:$0xff]
    %v4040 = vld [vmem:[#allocation25 + $0xe8] sm:$0xff]
    %v4041 = vld [vmem:[#allocation25 + $0xf0] sm:$0xff]
    %v4042 = vld [vmem:[#allocation25 + $0xf8] sm:$0xff]
    %v4043 = vld [vmem:[#allocation25 + $0x100] sm:$0xff]
    %v4044 = vld [vmem:[#allocation25 + $0x108] sm:$0xff]
    %v4045 = vld [vmem:[#allocation25 + $0x110] sm:$0xff]
    %v4046 = vld [vmem:[#allocation25 + $0x118] sm:$0xff]
    %v4047 = vld [vmem:[#allocation25 + $0x120] sm:$0xff]
    %v4048 = vld [vmem:[#allocation25 + $0x128] sm:$0xff]
    %v4049 = vld [vmem:[#allocation25 + $0x130] sm:$0xff]
    %v4050 = vld [vmem:[#allocation25 + $0x138] sm:$0xff]
    %v4051 = vld [vmem:[#allocation25 + $0x140] sm:$0xff]
    %v4052 = vld [vmem:[#allocation25 + $0x148] sm:$0xff]
    %v4053 = vld [vmem:[#allocation25 + $0x150] sm:$0xff]
    %v4054 = vld [vmem:[#allocation25 + $0x158] sm:$0xff]
    %v4055 = vld [vmem:[#allocation25 + $0x160] sm:$0xff]
    %v4056 = vld [vmem:[#allocation25 + $0x168] sm:$0xff]
    %v4057 = vld [vmem:[#allocation25 + $0x170] sm:$0xff]
    %v4058 = vld [vmem:[#allocation25 + $0x178] sm:$0xff]
    %v4059 = vld [vmem:[#allocation26] sm:$0xff]
    %v4060 = vld [vmem:[#allocation26 + $0x8] sm:$0xff]
    %v4061 = vld [vmem:[#allocation26 + $0x10] sm:$0xff]
    %vm4062 = vcmask 64512
    %v4064 = vsel %vm4062, %v4010, 0
    %4066 = vmatprep.subr.mxu0 %v4060
    %4067 = vmatpush1.msra.mxu0 %v4059
    %4068 = vmatprep.subr.mxu0 0.0
    %4069 = vmatpush1.msra.mxu0 0.0
    %4070 = vmatprep.subr.mxu0 0.0
    %4071 = vmatpush1.msra.mxu0 0.0
    %4072 = vmatprep.subr.mxu0 0.0
    %4073 = vmatpush1.msra.mxu0 0.0
    %4074 = vmatprep.subr.mxu0 0.0
    %4075 = vmatpush1.msra.mxu0 0.0
    %4076 = vmatprep.subr.mxu0 0.0
    %4077 = vmatpush1.msra.mxu0 0.0
    %4078 = vmatprep.subr.mxu0 0.0
    %4079 = vmatpush1.msra.mxu0 0.0
    %4080 = vmatprep.subr.mxu0 0.0
    %4081 = vmatpush1.msra.mxu0 0.0
    %4082 = vmatprep.subr.mxu0 0.0
    %4083 = vmatpush1.msra.mxu0 0.0
    %4084 = vmatprep.subr.mxu0 0.0
    %4085 = vmatpush1.msra.mxu0 0.0
    %4086 = vmatprep.subr.mxu0 0.0
    %4087 = vmatpush1.msra.mxu0 0.0
    %4088 = vmatprep.subr.mxu0 0.0
    %4089 = vmatpush1.msra.mxu0 0.0
    %4090 = vmatprep.subr.mxu0 0.0
    %4091 = vmatpush1.msra.mxu0 0.0
    %4092 = vmatprep.subr.mxu0 0.0
    %4093 = vmatpush1.msra.mxu0 0.0
    %4094 = vmatprep.subr.mxu0 0.0
    %4095 = vmatpush1.msra.mxu0 0.0
    %4096 = vmatprep.subr.mxu0 0.0
    %4097 = vmatpush1.msra.mxu0 0.0
    %4098 = vmatprep.subr.mxu0 0.0
    %4099 = vmatpush1.msra.mxu0 0.0
    %4100 = vmatprep.subr.mxu0 0.0
    %4101 = vmatpush1.msra.mxu0 0.0
    %4102 = vmatprep.subr.mxu0 0.0
    %4103 = vmatpush1.msra.mxu0 0.0
    %4104 = vmatprep.subr.mxu0 0.0
    %4105 = vmatpush1.msra.mxu0 0.0
    %4106 = vmatprep.subr.mxu0 0.0
    %4107 = vmatpush1.msra.mxu0 0.0
    %4108 = vmatprep.subr.mxu0 0.0
    %4109 = vmatpush1.msra.mxu0 0.0
    %4110 = vmatprep.subr.mxu0 0.0
    %4111 = vmatpush1.msra.mxu0 0.0
    %4112 = vmatprep.subr.mxu0 0.0
    %4113 = vmatpush1.msra.mxu0 0.0
    %4114 = vmatprep.subr.mxu0 0.0
    %4115 = vmatpush1.msra.mxu0 0.0
    %4116 = vmatprep.subr.mxu0 0.0
    %4117 = vmatpush1.msra.mxu0 0.0
    %4118 = vmatprep.subr.mxu0 0.0
    %4119 = vmatpush1.msra.mxu0 0.0
    %4120 = vmatprep.subr.mxu0 0.0
    %4121 = vmatpush1.msra.mxu0 0.0
    %4122 = vmatprep.subr.mxu0 0.0
    %4123 = vmatpush1.msra.mxu0 0.0
    %4124 = vmatprep.subr.mxu0 0.0
    %4125 = vmatpush1.msra.mxu0 0.0
    %4126 = vmatprep.subr.mxu0 0.0
    %4127 = vmatpush1.msra.mxu0 0.0
    %4128 = vmatprep.subr.mxu0 0.0
    %4129 = vmatpush1.msra.mxu0 0.0
    %4130 = vmatprep.mubr.f32.mxu0 0.0
    %4131 = vmatmul.mubr.f32.gmra.mrb[0].mxu0 %v4064
    %v4132 = vpop.f32.mrb[0].mxu0
    %v4133 = vadd.f32 0.0, %v4132
    %v4134 = vpop.f32.mrb[0].mxu0
    %v4135 = vadd.f32 0.0, %v4134
    %4136 = vdwg.mxu0
    %4137 = vmatprep.subr.mxu0 0.0
    %4138 = vmatpush1.msra.mxu0 %v4061
    %4139 = vmatprep.subr.mxu0 0.0
    %4140 = vmatpush1.msra.mxu0 0.0
    %4141 = vmatprep.subr.mxu0 0.0
    %4142 = vmatpush1.msra.mxu0 0.0
    %4143 = vmatprep.subr.mxu0 0.0
    %4144 = vmatpush1.msra.mxu0 0.0
    %4145 = vmatprep.subr.mxu0 0.0
    %4146 = vmatpush1.msra.mxu0 0.0
    %4147 = vmatprep.subr.mxu0 0.0
    %4148 = vmatpush1.msra.mxu0 0.0
    %4149 = vmatprep.subr.mxu0 0.0
    %4150 = vmatpush1.msra.mxu0 0.0
    %4151 = vmatprep.subr.mxu0 0.0
    %4152 = vmatpush1.msra.mxu0 0.0
    %4153 = vmatprep.subr.mxu0 0.0
    %4154 = vmatpush1.msra.mxu0 0.0
    %4155 = vmatprep.subr.mxu0 0.0
    %4156 = vmatpush1.msra.mxu0 0.0
    %4157 = vmatprep.subr.mxu0 0.0
    %4158 = vmatpush1.msra.mxu0 0.0
    %4159 = vmatprep.subr.mxu0 0.0
    %4160 = vmatpush1.msra.mxu0 0.0
    %4161 = vmatprep.subr.mxu0 0.0
    %4162 = vmatpush1.msra.mxu0 0.0
    %4163 = vmatprep.subr.mxu0 0.0
    %4164 = vmatpush1.msra.mxu0 0.0
    %4165 = vmatprep.subr.mxu0 0.0
    %4166 = vmatpush1.msra.mxu0 0.0
    %4167 = vmatprep.subr.mxu0 0.0
    %4168 = vmatpush1.msra.mxu0 0.0
    %4169 = vmatprep.subr.mxu0 0.0
    %4170 = vmatpush1.msra.mxu0 0.0
    %4171 = vmatprep.subr.mxu0 0.0
    %4172 = vmatpush1.msra.mxu0 0.0
    %4173 = vmatprep.subr.mxu0 0.0
    %4174 = vmatpush1.msra.mxu0 0.0
    %4175 = vmatprep.subr.mxu0 0.0
    %4176 = vmatpush1.msra.mxu0 0.0
    %4177 = vmatprep.subr.mxu0 0.0
    %4178 = vmatpush1.msra.mxu0 0.0
    %4179 = vmatprep.subr.mxu0 0.0
    %4180 = vmatpush1.msra.mxu0 0.0
    %4181 = vmatprep.subr.mxu0 0.0
    %4182 = vmatpush1.msra.mxu0 0.0
    %4183 = vmatprep.subr.mxu0 0.0
    %4184 = vmatpush1.msra.mxu0 0.0
    %4185 = vmatprep.subr.mxu0 0.0
    %4186 = vmatpush1.msra.mxu0 0.0
    %4187 = vmatprep.subr.mxu0 0.0
    %4188 = vmatpush1.msra.mxu0 0.0
    %4189 = vmatprep.subr.mxu0 0.0
    %4190 = vmatpush1.msra.mxu0 0.0
    %4191 = vmatprep.subr.mxu0 0.0
    %4192 = vmatpush1.msra.mxu0 0.0
    %4193 = vmatprep.subr.mxu0 0.0
    %4194 = vmatpush1.msra.mxu0 0.0
    %4195 = vmatprep.subr.mxu0 0.0
    %4196 = vmatpush1.msra.mxu0 0.0
    %4197 = vmatprep.subr.mxu0 0.0
    %4198 = vmatpush1.msra.mxu0 0.0
    %4199 = vmatprep.subr.mxu0 0.0
    %4200 = vmatpush1.msra.mxu0 0.0
    %4201 = vmatprep.mubr.f32.mxu0 0.0
    %4202 = vmatmul.mubr.f32.gmra.mrb[0].mxu0 %v4064
    %v4203 = vpop.f32.mrb[0].mxu0
    %v4204 = vadd.f32 0.0, %v4203
    %v4205 = vpop.f32.mrb[0].mxu0
    %4206 = vdwg.mxu0
    %4207 = vmatprep.subr.mxu0 %v4012
    %4208 = vmatpush1.msra.mxu0 %v4011
    %4209 = vmatprep.subr.mxu0 %v4015
    %4210 = vmatpush1.msra.mxu0 %v4014
    %4211 = vmatprep.subr.mxu0 %v4018
    %4212 = vmatpush1.msra.mxu0 %v4017
    %4213 = vmatprep.subr.mxu0 %v4021
    %4214 = vmatpush1.msra.mxu0 %v4020
    %4215 = vmatprep.subr.mxu0 %v4024
    %4216 = vmatpush1.msra.mxu0 %v4023
    %4217 = vmatprep.subr.mxu0 %v4027
    %4218 = vmatpush1.msra.mxu0 %v4026
    %4219 = vmatprep.subr.mxu0 %v4030
    %4220 = vmatpush1.msra.mxu0 %v4029
    %4221 = vmatprep.subr.mxu0 %v4033
    %4222 = vmatpush1.msra.mxu0 %v4032
    %4223 = vmatprep.subr.mxu0 %v4036
    %4224 = vmatpush1.msra.mxu0 %v4035
    %4225 = vmatprep.subr.mxu0 %v4039
    %4226 = vmatpush1.msra.mxu0 %v4038
    %4227 = vmatprep.subr.mxu0 %v4042
    %4228 = vmatpush1.msra.mxu0 %v4041
    %4229 = vmatprep.subr.mxu0 %v4045
    %4230 = vmatpush1.msra.mxu0 %v4044
    %4231 = vmatprep.subr.mxu0 %v4048
    %4232 = vmatpush1.msra.mxu0 %v4047
    %4233 = vmatprep.subr.mxu0 %v4051
    %4234 = vmatpush1.msra.mxu0 %v4050
    %4235 = vmatprep.subr.mxu0 %v4054
    %4236 = vmatpush1.msra.mxu0 %v4053
    %4237 = vmatprep.subr.mxu0 %v4057
    %4238 = vmatpush1.msra.mxu0 %v4056
    %4239 = vmatprep.subr.mxu0 0.0
    %4240 = vmatpush1.msra.mxu0 0.0
    %4241 = vmatprep.subr.mxu0 0.0
    %4242 = vmatpush1.msra.mxu0 0.0
    %4243 = vmatprep.subr.mxu0 0.0
    %4244 = vmatpush1.msra.mxu0 0.0
    %4245 = vmatprep.subr.mxu0 0.0
    %4246 = vmatpush1.msra.mxu0 0.0
    %4247 = vmatprep.subr.mxu0 0.0
    %4248 = vmatpush1.msra.mxu0 0.0
    %4249 = vmatprep.subr.mxu0 0.0
    %4250 = vmatpush1.msra.mxu0 0.0
    %4251 = vmatprep.subr.mxu0 0.0
    %4252 = vmatpush1.msra.mxu0 0.0
    %4253 = vmatprep.subr.mxu0 0.0
    %4254 = vmatpush1.msra.mxu0 0.0
    %4255 = vmatprep.subr.mxu0 0.0
    %4256 = vmatpush1.msra.mxu0 0.0
    %4257 = vmatprep.subr.mxu0 0.0
    %4258 = vmatpush1.msra.mxu0 0.0
    %4259 = vmatprep.subr.mxu0 0.0
    %4260 = vmatpush1.msra.mxu0 0.0
    %4261 = vmatprep.subr.mxu0 0.0
    %4262 = vmatpush1.msra.mxu0 0.0
    %4263 = vmatprep.subr.mxu0 0.0
    %4264 = vmatpush1.msra.mxu0 0.0
    %4265 = vmatprep.subr.mxu0 0.0
    %4266 = vmatpush1.msra.mxu0 0.0
    %4267 = vmatprep.subr.mxu0 0.0
    %4268 = vmatpush1.msra.mxu0 0.0
    %4269 = vmatprep.subr.mxu0 0.0
    %4270 = vmatpush1.msra.mxu0 0.0
    %4271 = vmatprep.mubr.f32.mxu0 0.0
    %4272 = vmatmul.mubr.f32.gmra.mrb[0].mxu0 %v3731
    %v4273 = vpop.f32.mrb[0].mxu0
    %v4274 = vadd.f32 %v4133, %v4273
    %v4275 = vpop.f32.mrb[0].mxu0
    %v4276 = vadd.f32 %v4135, %v4275
    %4277 = vdwg.mxu0
    %4278 = vmatprep.subr.mxu0 0.0
    %4279 = vmatpush1.msra.mxu0 %v4013
    %4280 = vmatprep.subr.mxu0 0.0
    %4281 = vmatpush1.msra.mxu0 %v4016
    %4282 = vmatprep.subr.mxu0 0.0
    %4283 = vmatpush1.msra.mxu0 %v4019
    %4284 = vmatprep.subr.mxu0 0.0
    %4285 = vmatpush1.msra.mxu0 %v4022
    %4286 = vmatprep.subr.mxu0 0.0
    %4287 = vmatpush1.msra.mxu0 %v4025
    %4288 = vmatprep.subr.mxu0 0.0
    %4289 = vmatpush1.msra.mxu0 %v4028
    %4290 = vmatprep.subr.mxu0 0.0
    %4291 = vmatpush1.msra.mxu0 %v4031
    %4292 = vmatprep.subr.mxu0 0.0
    %4293 = vmatpush1.msra.mxu0 %v4034
    %4294 = vmatprep.subr.mxu0 0.0
    %4295 = vmatpush1.msra.mxu0 %v4037
    %4296 = vmatprep.subr.mxu0 0.0
    %4297 = vmatpush1.msra.mxu0 %v4040
    %4298 = vmatprep.subr.mxu0 0.0
    %4299 = vmatpush1.msra.mxu0 %v4043
    %4300 = vmatprep.subr.mxu0 0.0
    %4301 = vmatpush1.msra.mxu0 %v4046
    %4302 = vmatprep.subr.mxu0 0.0
    %4303 = vmatpush1.msra.mxu0 %v4049
    %4304 = vmatprep.subr.mxu0 0.0
    %4305 = vmatpush1.msra.mxu0 %v4052
    %4306 = vmatprep.subr.mxu0 0.0
    %4307 = vmatpush1.msra.mxu0 %v4055
    %4308 = vmatprep.subr.mxu0 0.0
    %4309 = vmatpush1.msra.mxu0 %v4058
    %4310 = vmatprep.subr.mxu0 0.0
    %4311 = vmatpush1.msra.mxu0 0.0
    %4312 = vmatprep.subr.mxu0 0.0
    %4313 = vmatpush1.msra.mxu0 0.0
    %4314 = vmatprep.subr.mxu0 0.0
    %4315 = vmatpush1.msra.mxu0 0.0
    %4316 = vmatprep.subr.mxu0 0.0
    %4317 = vmatpush1.msra.mxu0 0.0
    %4318 = vmatprep.subr.mxu0 0.0
    %4319 = vmatpush1.msra.mxu0 0.0
    %4320 = vmatprep.subr.mxu0 0.0
    %4321 = vmatpush1.msra.mxu0 0.0
    %4322 = vmatprep.subr.mxu0 0.0
    %4323 = vmatpush1.msra.mxu0 0.0
    %4324 = vmatprep.subr.mxu0 0.0
    %4325 = vmatpush1.msra.mxu0 0.0
    %4326 = vmatprep.subr.mxu0 0.0
    %4327 = vmatpush1.msra.mxu0 0.0
    %4328 = vmatprep.subr.mxu0 0.0
    %4329 = vmatpush1.msra.mxu0 0.0
    %4330 = vmatprep.subr.mxu0 0.0
    %4331 = vmatpush1.msra.mxu0 0.0
    %4332 = vmatprep.subr.mxu0 0.0
    %4333 = vmatpush1.msra.mxu0 0.0
    %4334 = vmatprep.subr.mxu0 0.0
    %4335 = vmatpush1.msra.mxu0 0.0
    %4336 = vmatprep.subr.mxu0 0.0
    %4337 = vmatpush1.msra.mxu0 0.0
    %4338 = vmatprep.subr.mxu0 0.0
    %4339 = vmatpush1.msra.mxu0 0.0
    %4340 = vmatprep.subr.mxu0 0.0
    %4341 = vmatpush1.msra.mxu0 0.0
    %4342 = vmatprep.mubr.f32.mxu0 0.0
    %4343 = vmatmul.mubr.f32.gmra.mrb[0].mxu0 %v3731
    %v4344 = vpop.f32.mrb[0].mxu0
    %v4345 = vadd.f32 %v4204, %v4344
    %v4346 = vpop.f32.mrb[0].mxu0
    %4347 = vdwg.mxu0
    %v4348 = vld [vmem:[%s45] sm:$0x7]
    %v4350 = vlaneseq
    %v4351 = vshrl.u32 %v4350, 7
    %v4352 = vsub.s32 0, %v4351
    %v4353 = vrot.slane %v4348, %v4352
    %v4354 = vlaneseq
    %v4355 = vshrl.u32 %v4354, 7
    %v4356 = vsub.s32 1, %v4355
    %v4357 = vrot.slane %v4348, %v4356
    %v4358 = vlaneseq
    %v4359 = vshrl.u32 %v4358, 7
    %v4360 = vsub.s32 2, %v4359
    %v4361 = vrot.slane %v4348, %v4360
    %v4365 = vadd.f32 %v4274, %v4353
    %v4366 = vadd.f32 %v4276, %v4357
    %v4367 = vadd.f32 %v4345, %v4361
    %v4368 = vld [vmem:[%s41] sm:$0xff]
    %v4369 = vld [vmem:[%s41 + $0x8] sm:$0xff]
    %v4370 = vld [vmem:[%s41 + $0x10] sm:$0xff]
    %v4371 = vld [vmem:[%s41 + $0x18] sm:$0xff]
    %v4372 = vld [vmem:[%s41 + $0x20] sm:$0xff]
    %v4373 = vld [vmem:[%s41 + $0x28] sm:$0xff]
    %v4374 = vld [vmem:[#allocation28] sm:$0xff]
    %v4375 = vld [vmem:[#allocation28 + $0x8] sm:$0xff]
    %v4376 = vld [vmem:[#allocation28 + $0x10] sm:$0xff]
    %v4377 = vld [vmem:[#allocation28 + $0x18] sm:$0xff]
    %v4378 = vld [vmem:[#allocation28 + $0x20] sm:$0xff]
    %v4379 = vld [vmem:[#allocation28 + $0x28] sm:$0xff]
    %v4380 = vld [vmem:[#allocation28 + $0x30] sm:$0xff]
    %v4381 = vld [vmem:[#allocation28 + $0x38] sm:$0xff]
    %v4382 = vld [vmem:[#allocation28 + $0x40] sm:$0xff]
    %v4383 = vld [vmem:[#allocation28 + $0x48] sm:$0xff]
    %v4384 = vld [vmem:[#allocation28 + $0x50] sm:$0xff]
    %v4385 = vld [vmem:[#allocation28 + $0x58] sm:$0xff]
    %v4386 = vld [vmem:[#allocation28 + $0x60] sm:$0xff]
    %v4387 = vld [vmem:[#allocation28 + $0x68] sm:$0xff]
    %v4388 = vld [vmem:[#allocation28 + $0x70] sm:$0xff]
    %v4389 = vld [vmem:[#allocation28 + $0x78] sm:$0xff]
    %v4390 = vld [vmem:[#allocation28 + $0x80] sm:$0xff]
    %v4391 = vld [vmem:[#allocation28 + $0x88] sm:$0xff]
    %v4392 = vld [vmem:[#allocation28 + $0x90] sm:$0xff]
    %v4393 = vld [vmem:[#allocation28 + $0x98] sm:$0xff]
    %v4394 = vld [vmem:[#allocation28 + $0xa0] sm:$0xff]
    %v4395 = vld [vmem:[#allocation28 + $0xa8] sm:$0xff]
    %v4396 = vld [vmem:[#allocation28 + $0xb0] sm:$0xff]
    %v4397 = vld [vmem:[#allocation28 + $0xb8] sm:$0xff]
    %v4398 = vld [vmem:[#allocation28 + $0xc0] sm:$0xff]
    %v4399 = vld [vmem:[#allocation28 + $0xc8] sm:$0xff]
    %v4400 = vld [vmem:[#allocation28 + $0xd0] sm:$0xff]
    %v4401 = vld [vmem:[#allocation28 + $0xd8] sm:$0xff]
    %v4402 = vld [vmem:[#allocation28 + $0xe0] sm:$0xff]
    %v4403 = vld [vmem:[#allocation28 + $0xe8] sm:$0xff]
    %v4404 = vld [vmem:[#allocation28 + $0xf0] sm:$0xff]
    %v4405 = vld [vmem:[#allocation28 + $0xf8] sm:$0xff]
    %v4406 = vld [vmem:[#allocation28 + $0x100] sm:$0xff]
    %v4407 = vld [vmem:[#allocation28 + $0x108] sm:$0xff]
    %v4408 = vld [vmem:[#allocation28 + $0x110] sm:$0xff]
    %v4409 = vld [vmem:[#allocation28 + $0x118] sm:$0xff]
    %v4410 = vld [vmem:[#allocation28 + $0x120] sm:$0xff]
    %v4411 = vld [vmem:[#allocation28 + $0x128] sm:$0xff]
    %v4412 = vld [vmem:[#allocation28 + $0x130] sm:$0xff]
    %v4413 = vld [vmem:[#allocation28 + $0x138] sm:$0xff]
    %v4414 = vld [vmem:[#allocation28 + $0x140] sm:$0xff]
    %v4415 = vld [vmem:[#allocation28 + $0x148] sm:$0xff]
    %v4416 = vld [vmem:[#allocation28 + $0x150] sm:$0xff]
    %v4417 = vld [vmem:[#allocation28 + $0x158] sm:$0xff]
    %v4418 = vld [vmem:[#allocation28 + $0x160] sm:$0xff]
    %v4419 = vld [vmem:[#allocation28 + $0x168] sm:$0xff]
    %v4420 = vld [vmem:[#allocation28 + $0x170] sm:$0xff]
    %v4421 = vld [vmem:[#allocation28 + $0x178] sm:$0xff]
    %v4422 = vld [vmem:[%s47] sm:$0x7]
    %v4424 = vlaneseq
    %v4425 = vshrl.u32 %v4424, 7
    %v4426 = vsub.s32 0, %v4425
    %v4427 = vrot.slane %v4422, %v4426
    %v4428 = vlaneseq
    %v4429 = vshrl.u32 %v4428, 7
    %v4430 = vsub.s32 1, %v4429
    %v4431 = vrot.slane %v4422, %v4430
    %v4432 = vlaneseq
    %v4433 = vshrl.u32 %v4432, 7
    %v4434 = vsub.s32 2, %v4433
    %v4435 = vrot.slane %v4422, %v4434
    %v4439 = vld [vmem:[#allocation29] sm:$0xff]
    %v4440 = vld [vmem:[#allocation29 + $0x8] sm:$0xff]
    %v4441 = vld [vmem:[#allocation29 + $0x10] sm:$0xff]
    %v4442 = vld [vmem:[#allocation29 + $0x18] sm:$0xff]
    %v4443 = vld [vmem:[#allocation29 + $0x20] sm:$0xff]
    %v4444 = vld [vmem:[#allocation29 + $0x28] sm:$0xff]
    %v4445 = vld [vmem:[#allocation29 + $0x30] sm:$0xff]
    %v4446 = vld [vmem:[#allocation29 + $0x38] sm:$0xff]
    %v4447 = vld [vmem:[#allocation29 + $0x40] sm:$0xff]
    %v4448 = vld [vmem:[#allocation29 + $0x48] sm:$0xff]
    %v4449 = vld [vmem:[#allocation29 + $0x50] sm:$0xff]
    %v4450 = vld [vmem:[#allocation29 + $0x58] sm:$0xff]
    %v4451 = vld [vmem:[#allocation29 + $0x60] sm:$0xff]
    %v4452 = vld [vmem:[#allocation29 + $0x68] sm:$0xff]
    %v4453 = vld [vmem:[#allocation29 + $0x70] sm:$0xff]
    %v4454 = vld [vmem:[#allocation29 + $0x78] sm:$0xff]
    %v4455 = vld [vmem:[%s51] sm:$0x1]
    %v4456 = vld [vmem:[#allocation31] sm:$0xff]
    %v4457 = vld [vmem:[#allocation31 + $0x8] sm:$0xff]
    %v4458 = vld [vmem:[#allocation31 + $0x10] sm:$0xff]
    %v4459 = vld [vmem:[#allocation31 + $0x18] sm:$0xff]
    %v4460 = vld [vmem:[#allocation31 + $0x20] sm:$0xff]
    %v4461 = vld [vmem:[#allocation31 + $0x28] sm:$0xff]
    %v4462 = vld [vmem:[#allocation31 + $0x30] sm:$0xff]
    %v4463 = vld [vmem:[#allocation31 + $0x38] sm:$0xff]
    %v4464 = vld [vmem:[#allocation31 + $0x40] sm:$0xff]
    %v4465 = vld [vmem:[#allocation31 + $0x48] sm:$0xff]
    %v4466 = vld [vmem:[#allocation31 + $0x50] sm:$0xff]
    %v4467 = vld [vmem:[#allocation31 + $0x58] sm:$0xff]
    %v4468 = vld [vmem:[#allocation31 + $0x60] sm:$0xff]
    %v4469 = vld [vmem:[#allocation31 + $0x68] sm:$0xff]
    %v4470 = vld [vmem:[#allocation31 + $0x70] sm:$0xff]
    %v4471 = vld [vmem:[#allocation31 + $0x78] sm:$0xff]
    %v4472 = vld [vmem:[%s55] sm:$0x1]
    %v4473 = vld [vmem:[%s57] sm:$0xff]
    %v4474 = vld [vmem:[%s57 + $0x8] sm:$0xff]
    %v4475 = vld [vmem:[%s57 + $0x10] sm:$0xff]
    %v4476 = vld [vmem:[%s57 + $0x18] sm:$0xff]
    %v4477 = vld [vmem:[%s57 + $0x20] sm:$0xff]
    %v4478 = vld [vmem:[%s57 + $0x28] sm:$0xff]
    %v4479 = vld [vmem:[%s57 + $0x30] sm:$0xff]
    %v4480 = vld [vmem:[%s57 + $0x38] sm:$0xff]
    %v4481 = vld [vmem:[%s57 + $0x40] sm:$0xff]
    %v4482 = vld [vmem:[%s57 + $0x48] sm:$0xff]
    %v4483 = vld [vmem:[%s57 + $0x50] sm:$0xff]
    %v4484 = vld [vmem:[%s57 + $0x58] sm:$0xff]
    %v4485 = vld [vmem:[%s57 + $0x60] sm:$0xff]
    %v4486 = vld [vmem:[%s57 + $0x68] sm:$0xff]
    %v4487 = vld [vmem:[%s57 + $0x70] sm:$0xff]
    %v4488 = vld [vmem:[%s57 + $0x78] sm:$0xff]
    %v4489 = vld [vmem:[%s59] sm:$0x1]
    %v4490 = vld [vmem:[#allocation2 + $0xe] sm:$0x3]
    %v4492 = vsel %vm395, %v4490, 0
    %4494 = vmatprep.subr.mxu0 %v4369
    %4495 = vmatpush1.msra.mxu0 %v4368
    %4496 = vmatprep.subr.mxu0 %v4372
    %4497 = vmatpush1.msra.mxu0 %v4371
    %4498 = vmatprep.subr.mxu0 0.0
    %4499 = vmatpush1.msra.mxu0 0.0
    %4500 = vmatprep.subr.mxu0 0.0
    %4501 = vmatpush1.msra.mxu0 0.0
    %4502 = vmatprep.subr.mxu0 0.0
    %4503 = vmatpush1.msra.mxu0 0.0
    %4504 = vmatprep.subr.mxu0 0.0
    %4505 = vmatpush1.msra.mxu0 0.0
    %4506 = vmatprep.subr.mxu0 0.0
    %4507 = vmatpush1.msra.mxu0 0.0
    %4508 = vmatprep.subr.mxu0 0.0
    %4509 = vmatpush1.msra.mxu0 0.0
    %4510 = vmatprep.subr.mxu0 0.0
    %4511 = vmatpush1.msra.mxu0 0.0
    %4512 = vmatprep.subr.mxu0 0.0
    %4513 = vmatpush1.msra.mxu0 0.0
    %4514 = vmatprep.subr.mxu0 0.0
    %4515 = vmatpush1.msra.mxu0 0.0
    %4516 = vmatprep.subr.mxu0 0.0
    %4517 = vmatpush1.msra.mxu0 0.0
    %4518 = vmatprep.subr.mxu0 0.0
    %4519 = vmatpush1.msra.mxu0 0.0
    %4520 = vmatprep.subr.mxu0 0.0
    %4521 = vmatpush1.msra.mxu0 0.0
    %4522 = vmatprep.subr.mxu0 0.0
    %4523 = vmatpush1.msra.mxu0 0.0
    %4524 = vmatprep.subr.mxu0 0.0
    %4525 = vmatpush1.msra.mxu0 0.0
    %4526 = vmatprep.subr.mxu0 0.0
    %4527 = vmatpush1.msra.mxu0 0.0
    %4528 = vmatprep.subr.mxu0 0.0
    %4529 = vmatpush1.msra.mxu0 0.0
    %4530 = vmatprep.subr.mxu0 0.0
    %4531 = vmatpush1.msra.mxu0 0.0
    %4532 = vmatprep.subr.mxu0 0.0
    %4533 = vmatpush1.msra.mxu0 0.0
    %4534 = vmatprep.subr.mxu0 0.0
    %4535 = vmatpush1.msra.mxu0 0.0
    %4536 = vmatprep.subr.mxu0 0.0
    %4537 = vmatpush1.msra.mxu0 0.0
    %4538 = vmatprep.subr.mxu0 0.0
    %4539 = vmatpush1.msra.mxu0 0.0
    %4540 = vmatprep.subr.mxu0 0.0
    %4541 = vmatpush1.msra.mxu0 0.0
    %4542 = vmatprep.subr.mxu0 0.0
    %4543 = vmatpush1.msra.mxu0 0.0
    %4544 = vmatprep.subr.mxu0 0.0
    %4545 = vmatpush1.msra.mxu0 0.0
    %4546 = vmatprep.subr.mxu0 0.0
    %4547 = vmatpush1.msra.mxu0 0.0
    %4548 = vmatprep.subr.mxu0 0.0
    %4549 = vmatpush1.msra.mxu0 0.0
    %4550 = vmatprep.subr.mxu0 0.0
    %4551 = vmatpush1.msra.mxu0 0.0
    %4552 = vmatprep.subr.mxu0 0.0
    %4553 = vmatpush1.msra.mxu0 0.0
    %4554 = vmatprep.subr.mxu0 0.0
    %4555 = vmatpush1.msra.mxu0 0.0
    %4556 = vmatprep.subr.mxu0 0.0
    %4557 = vmatpush1.msra.mxu0 0.0
    %4558 = vmatprep.mubr.f32.mxu0 0.0
    %4559 = vmatmul.mubr.f32.gmra.mrb[0].mxu0 %v4492
    %v4560 = vpop.f32.mrb[0].mxu0
    %v4561 = vadd.f32 0.0, %v4560
    %v4562 = vpop.f32.mrb[0].mxu0
    %v4563 = vadd.f32 0.0, %v4562
    %4564 = vdwg.mxu0
    %4565 = vmatprep.subr.mxu0 0.0
    %4566 = vmatpush1.msra.mxu0 %v4370
    %4567 = vmatprep.subr.mxu0 0.0
    %4568 = vmatpush1.msra.mxu0 %v4373
    %4569 = vmatprep.subr.mxu0 0.0
    %4570 = vmatpush1.msra.mxu0 0.0
    %4571 = vmatprep.subr.mxu0 0.0
    %4572 = vmatpush1.msra.mxu0 0.0
    %4573 = vmatprep.subr.mxu0 0.0
    %4574 = vmatpush1.msra.mxu0 0.0
    %4575 = vmatprep.subr.mxu0 0.0
    %4576 = vmatpush1.msra.mxu0 0.0
    %4577 = vmatprep.subr.mxu0 0.0
    %4578 = vmatpush1.msra.mxu0 0.0
    %4579 = vmatprep.subr.mxu0 0.0
    %4580 = vmatpush1.msra.mxu0 0.0
    %4581 = vmatprep.subr.mxu0 0.0
    %4582 = vmatpush1.msra.mxu0 0.0
    %4583 = vmatprep.subr.mxu0 0.0
    %4584 = vmatpush1.msra.mxu0 0.0
    %4585 = vmatprep.subr.mxu0 0.0
    %4586 = vmatpush1.msra.mxu0 0.0
    %4587 = vmatprep.subr.mxu0 0.0
    %4588 = vmatpush1.msra.mxu0 0.0
    %4589 = vmatprep.subr.mxu0 0.0
    %4590 = vmatpush1.msra.mxu0 0.0
    %4591 = vmatprep.subr.mxu0 0.0
    %4592 = vmatpush1.msra.mxu0 0.0
    %4593 = vmatprep.subr.mxu0 0.0
    %4594 = vmatpush1.msra.mxu0 0.0
    %4595 = vmatprep.subr.mxu0 0.0
    %4596 = vmatpush1.msra.mxu0 0.0
    %4597 = vmatprep.subr.mxu0 0.0
    %4598 = vmatpush1.msra.mxu0 0.0
    %4599 = vmatprep.subr.mxu0 0.0
    %4600 = vmatpush1.msra.mxu0 0.0
    %4601 = vmatprep.subr.mxu0 0.0
    %4602 = vmatpush1.msra.mxu0 0.0
    %4603 = vmatprep.subr.mxu0 0.0
    %4604 = vmatpush1.msra.mxu0 0.0
    %4605 = vmatprep.subr.mxu0 0.0
    %4606 = vmatpush1.msra.mxu0 0.0
    %4607 = vmatprep.subr.mxu0 0.0
    %4608 = vmatpush1.msra.mxu0 0.0
    %4609 = vmatprep.subr.mxu0 0.0
    %4610 = vmatpush1.msra.mxu0 0.0
    %4611 = vmatprep.subr.mxu0 0.0
    %4612 = vmatpush1.msra.mxu0 0.0
    %4613 = vmatprep.subr.mxu0 0.0
    %4614 = vmatpush1.msra.mxu0 0.0
    %4615 = vmatprep.subr.mxu0 0.0
    %4616 = vmatpush1.msra.mxu0 0.0
    %4617 = vmatprep.subr.mxu0 0.0
    %4618 = vmatpush1.msra.mxu0 0.0
    %4619 = vmatprep.subr.mxu0 0.0
    %4620 = vmatpush1.msra.mxu0 0.0
    %4621 = vmatprep.subr.mxu0 0.0
    %4622 = vmatpush1.msra.mxu0 0.0
    %4623 = vmatprep.subr.mxu0 0.0
    %4624 = vmatpush1.msra.mxu0 0.0
    %4625 = vmatprep.subr.mxu0 0.0
    %4626 = vmatpush1.msra.mxu0 0.0
    %4627 = vmatprep.subr.mxu0 0.0
    %4628 = vmatpush1.msra.mxu0 0.0
    %4629 = vmatprep.mubr.f32.mxu0 0.0
    %4630 = vmatmul.mubr.f32.gmra.mrb[0].mxu0 %v4492
    %v4631 = vpop.f32.mrb[0].mxu0
    %v4632 = vadd.f32 0.0, %v4631
    %v4633 = vpop.f32.mrb[0].mxu0
    %4634 = vdwg.mxu0
    %v4635 = vadd.f32 %v4365, %v4561
    %v4636 = vadd.f32 %v4366, %v4563
    %v4637 = vadd.f32 %v4367, %v4632
    %4638 = vmatprep.subr.mxu0 %v4375
    %4639 = vmatpush1.msra.mxu0 %v4374
    %4640 = vmatprep.subr.mxu0 %v4378
    %4641 = vmatpush1.msra.mxu0 %v4377
    %4642 = vmatprep.subr.mxu0 %v4381
    %4643 = vmatpush1.msra.mxu0 %v4380
    %4644 = vmatprep.subr.mxu0 %v4384
    %4645 = vmatpush1.msra.mxu0 %v4383
    %4646 = vmatprep.subr.mxu0 %v4387
    %4647 = vmatpush1.msra.mxu0 %v4386
    %4648 = vmatprep.subr.mxu0 %v4390
    %4649 = vmatpush1.msra.mxu0 %v4389
    %4650 = vmatprep.subr.mxu0 %v4393
    %4651 = vmatpush1.msra.mxu0 %v4392
    %4652 = vmatprep.subr.mxu0 %v4396
    %4653 = vmatpush1.msra.mxu0 %v4395
    %4654 = vmatprep.subr.mxu0 %v4399
    %4655 = vmatpush1.msra.mxu0 %v4398
    %4656 = vmatprep.subr.mxu0 %v4402
    %4657 = vmatpush1.msra.mxu0 %v4401
    %4658 = vmatprep.subr.mxu0 %v4405
    %4659 = vmatpush1.msra.mxu0 %v4404
    %4660 = vmatprep.subr.mxu0 %v4408
    %4661 = vmatpush1.msra.mxu0 %v4407
    %4662 = vmatprep.subr.mxu0 %v4411
    %4663 = vmatpush1.msra.mxu0 %v4410
    %4664 = vmatprep.subr.mxu0 %v4414
    %4665 = vmatpush1.msra.mxu0 %v4413
    %4666 = vmatprep.subr.mxu0 %v4417
    %4667 = vmatpush1.msra.mxu0 %v4416
    %4668 = vmatprep.subr.mxu0 %v4420
    %4669 = vmatpush1.msra.mxu0 %v4419
    %4670 = vmatprep.subr.mxu0 0.0
    %4671 = vmatpush1.msra.mxu0 0.0
    %4672 = vmatprep.subr.mxu0 0.0
    %4673 = vmatpush1.msra.mxu0 0.0
    %4674 = vmatprep.subr.mxu0 0.0
    %4675 = vmatpush1.msra.mxu0 0.0
    %4676 = vmatprep.subr.mxu0 0.0
    %4677 = vmatpush1.msra.mxu0 0.0
    %4678 = vmatprep.subr.mxu0 0.0
    %4679 = vmatpush1.msra.mxu0 0.0
    %4680 = vmatprep.subr.mxu0 0.0
    %4681 = vmatpush1.msra.mxu0 0.0
    %4682 = vmatprep.subr.mxu0 0.0
    %4683 = vmatpush1.msra.mxu0 0.0
    %4684 = vmatprep.subr.mxu0 0.0
    %4685 = vmatpush1.msra.mxu0 0.0
    %4686 = vmatprep.subr.mxu0 0.0
    %4687 = vmatpush1.msra.mxu0 0.0
    %4688 = vmatprep.subr.mxu0 0.0
    %4689 = vmatpush1.msra.mxu0 0.0
    %4690 = vmatprep.subr.mxu0 0.0
    %4691 = vmatpush1.msra.mxu0 0.0
    %4692 = vmatprep.subr.mxu0 0.0
    %4693 = vmatpush1.msra.mxu0 0.0
    %4694 = vmatprep.subr.mxu0 0.0
    %4695 = vmatpush1.msra.mxu0 0.0
    %4696 = vmatprep.subr.mxu0 0.0
    %4697 = vmatpush1.msra.mxu0 0.0
    %4698 = vmatprep.subr.mxu0 0.0
    %4699 = vmatpush1.msra.mxu0 0.0
    %4700 = vmatprep.subr.mxu0 0.0
    %4701 = vmatpush1.msra.mxu0 0.0
    %4702 = vmatprep.mubr.f32.mxu0 0.0
    %4703 = vmatmul.mubr.f32.gmra.mrb[0].mxu0 0.0
    %v4704 = vpop.f32.mrb[0].mxu0
    %v4705 = vadd.f32 %v4427, %v4704
    %v4706 = vpop.f32.mrb[0].mxu0
    %v4707 = vadd.f32 %v4431, %v4706
    %4708 = vdwg.mxu0
    %4709 = vmatprep.subr.mxu0 0.0
    %4710 = vmatpush1.msra.mxu0 %v4376
    %4711 = vmatprep.subr.mxu0 0.0
    %4712 = vmatpush1.msra.mxu0 %v4379
    %4713 = vmatprep.subr.mxu0 0.0
    %4714 = vmatpush1.msra.mxu0 %v4382
    %4715 = vmatprep.subr.mxu0 0.0
    %4716 = vmatpush1.msra.mxu0 %v4385
    %4717 = vmatprep.subr.mxu0 0.0
    %4718 = vmatpush1.msra.mxu0 %v4388
    %4719 = vmatprep.subr.mxu0 0.0
    %4720 = vmatpush1.msra.mxu0 %v4391
    %4721 = vmatprep.subr.mxu0 0.0
    %4722 = vmatpush1.msra.mxu0 %v4394
    %4723 = vmatprep.subr.mxu0 0.0
    %4724 = vmatpush1.msra.mxu0 %v4397
    %4725 = vmatprep.subr.mxu0 0.0
    %4726 = vmatpush1.msra.mxu0 %v4400
    %4727 = vmatprep.subr.mxu0 0.0
    %4728 = vmatpush1.msra.mxu0 %v4403
    %4729 = vmatprep.subr.mxu0 0.0
    %4730 = vmatpush1.msra.mxu0 %v4406
    %4731 = vmatprep.subr.mxu0 0.0
    %4732 = vmatpush1.msra.mxu0 %v4409
    %4733 = vmatprep.subr.mxu0 0.0
    %4734 = vmatpush1.msra.mxu0 %v4412
    %4735 = vmatprep.subr.mxu0 0.0
    %4736 = vmatpush1.msra.mxu0 %v4415
    %4737 = vmatprep.subr.mxu0 0.0
    %4738 = vmatpush1.msra.mxu0 %v4418
    %4739 = vmatprep.subr.mxu0 0.0
    %4740 = vmatpush1.msra.mxu0 %v4421
    %4741 = vmatprep.subr.mxu0 0.0
    %4742 = vmatpush1.msra.mxu0 0.0
    %4743 = vmatprep.subr.mxu0 0.0
    %4744 = vmatpush1.msra.mxu0 0.0
    %4745 = vmatprep.subr.mxu0 0.0
    %4746 = vmatpush1.msra.mxu0 0.0
    %4747 = vmatprep.subr.mxu0 0.0
    %4748 = vmatpush1.msra.mxu0 0.0
    %4749 = vmatprep.subr.mxu0 0.0
    %4750 = vmatpush1.msra.mxu0 0.0
    %4751 = vmatprep.subr.mxu0 0.0
    %4752 = vmatpush1.msra.mxu0 0.0
    %4753 = vmatprep.subr.mxu0 0.0
    %4754 = vmatpush1.msra.mxu0 0.0
    %4755 = vmatprep.subr.mxu0 0.0
    %4756 = vmatpush1.msra.mxu0 0.0
    %4757 = vmatprep.subr.mxu0 0.0
    %4758 = vmatpush1.msra.mxu0 0.0
    %4759 = vmatprep.subr.mxu0 0.0
    %4760 = vmatpush1.msra.mxu0 0.0
    %4761 = vmatprep.subr.mxu0 0.0
    %4762 = vmatpush1.msra.mxu0 0.0
    %4763 = vmatprep.subr.mxu0 0.0
    %4764 = vmatpush1.msra.mxu0 0.0
    %4765 = vmatprep.subr.mxu0 0.0
    %4766 = vmatpush1.msra.mxu0 0.0
    %4767 = vmatprep.subr.mxu0 0.0
    %4768 = vmatpush1.msra.mxu0 0.0
    %4769 = vmatprep.subr.mxu0 0.0
    %4770 = vmatpush1.msra.mxu0 0.0
    %4771 = vmatprep.subr.mxu0 0.0
    %4772 = vmatpush1.msra.mxu0 0.0
    %4773 = vmatprep.mubr.f32.mxu0 0.0
    %4774 = vmatmul.mubr.f32.gmra.mrb[0].mxu0 0.0
    %v4775 = vpop.f32.mrb[0].mxu0
    %v4776 = vadd.f32 %v4435, %v4775
    %v4777 = vpop.f32.mrb[0].mxu0
    %4778 = vdwg.mxu0
    %v4779 = vadd.f32 %v4635, %v4705
    %v4780 = vxor.u32 %v4779, 2147483648
    %v4781 = vmul.f32 %v4780, 1.442695
    %v4782 = vpow.pop %v4781
    %v4783 = vadd.f32 %v4782, 1.0
    %v4784 = vrcp.pop %v4783
    %v4785 = vmul.f32 1.0, %v4784
    %v4786 = vadd.f32 %v4636, %v4707
    %v4787 = vxor.u32 %v4786, 2147483648
    %v4788 = vmul.f32 %v4787, 1.442695
    %v4789 = vpow.pop %v4788
    %v4790 = vadd.f32 %v4789, 1.0
    %v4791 = vrcp.pop %v4790
    %v4792 = vmul.f32 1.0, %v4791
    %v4793 = vmul.f32 %v4785, %v4776
    %v4794 = vadd.f32 %v4637, %v4793
    %v4795 = vtanh.pop %v4794
    %v4796 = vsub.f32 1.0, %v4792
    %v4797 = vmul.f32 %v4796, %v4795
    %v4798 = vmul.f32 %v4792, 0.0
    %v4799 = vadd.f32 %v4797, %v4798
    %v4801 = vlaneseq
    %v4802 = vshrl.u32 %v4801, 7
    %v4803 = vsub.s32 0, %v4802
    %v4804 = vrot.slane %v4455, %v4803
    %4806 = vmatprep.subr.mxu0 0.0
    %4807 = vmatpush1.msra.mxu0 %v4439
    %4808 = vmatprep.subr.mxu0 0.0
    %4809 = vmatpush1.msra.mxu0 %v4440
    %4810 = vmatprep.subr.mxu0 0.0
    %4811 = vmatpush1.msra.mxu0 %v4441
    %4812 = vmatprep.subr.mxu0 0.0
    %4813 = vmatpush1.msra.mxu0 %v4442
    %4814 = vmatprep.subr.mxu0 0.0
    %4815 = vmatpush1.msra.mxu0 %v4443
    %4816 = vmatprep.subr.mxu0 0.0
    %4817 = vmatpush1.msra.mxu0 %v4444
    %4818 = vmatprep.subr.mxu0 0.0
    %4819 = vmatpush1.msra.mxu0 %v4445
    %4820 = vmatprep.subr.mxu0 0.0
    %4821 = vmatpush1.msra.mxu0 %v4446
    %4822 = vmatprep.subr.mxu0 0.0
    %4823 = vmatpush1.msra.mxu0 %v4447
    %4824 = vmatprep.subr.mxu0 0.0
    %4825 = vmatpush1.msra.mxu0 %v4448
    %4826 = vmatprep.subr.mxu0 0.0
    %4827 = vmatpush1.msra.mxu0 %v4449
    %4828 = vmatprep.subr.mxu0 0.0
    %4829 = vmatpush1.msra.mxu0 %v4450
    %4830 = vmatprep.subr.mxu0 0.0
    %4831 = vmatpush1.msra.mxu0 %v4451
    %4832 = vmatprep.subr.mxu0 0.0
    %4833 = vmatpush1.msra.mxu0 %v4452
    %4834 = vmatprep.subr.mxu0 0.0
    %4835 = vmatpush1.msra.mxu0 %v4453
    %4836 = vmatprep.subr.mxu0 0.0
    %4837 = vmatpush1.msra.mxu0 %v4454
    %4838 = vmatprep.subr.mxu0 0.0
    %4839 = vmatpush1.msra.mxu0 0.0
    %4840 = vmatprep.subr.mxu0 0.0
    %4841 = vmatpush1.msra.mxu0 0.0
    %4842 = vmatprep.subr.mxu0 0.0
    %4843 = vmatpush1.msra.mxu0 0.0
    %4844 = vmatprep.subr.mxu0 0.0
    %4845 = vmatpush1.msra.mxu0 0.0
    %4846 = vmatprep.subr.mxu0 0.0
    %4847 = vmatpush1.msra.mxu0 0.0
    %4848 = vmatprep.subr.mxu0 0.0
    %4849 = vmatpush1.msra.mxu0 0.0
    %4850 = vmatprep.subr.mxu0 0.0
    %4851 = vmatpush1.msra.mxu0 0.0
    %4852 = vmatprep.subr.mxu0 0.0
    %4853 = vmatpush1.msra.mxu0 0.0
    %4854 = vmatprep.subr.mxu0 0.0
    %4855 = vmatpush1.msra.mxu0 0.0
    %4856 = vmatprep.subr.mxu0 0.0
    %4857 = vmatpush1.msra.mxu0 0.0
    %4858 = vmatprep.subr.mxu0 0.0
    %4859 = vmatpush1.msra.mxu0 0.0
    %4860 = vmatprep.subr.mxu0 0.0
    %4861 = vmatpush1.msra.mxu0 0.0
    %4862 = vmatprep.subr.mxu0 0.0
    %4863 = vmatpush1.msra.mxu0 0.0
    %4864 = vmatprep.subr.mxu0 0.0
    %4865 = vmatpush1.msra.mxu0 0.0
    %4866 = vmatprep.subr.mxu0 0.0
    %4867 = vmatpush1.msra.mxu0 0.0
    %4868 = vmatprep.subr.mxu0 0.0
    %4869 = vmatpush1.msra.mxu0 0.0
    %4870 = vmatprep.mubr.f32.mxu0 0.0
    %4871 = vmatmul.mubr.f32.gmra.mrb[0].mxu0 %v4799
    %v4872 = vpop.f32.mrb[0].mxu0
    %v4873 = vadd.f32 %v4804, %v4872
    %v4874 = vpop.f32.mrb[0].mxu0
    %4875 = vdwg.mxu0
    %v4876 = vtanh.pop %v4873
    %v4878 = vlaneseq
    %v4879 = vshrl.u32 %v4878, 7
    %v4880 = vsub.s32 0, %v4879
    %v4881 = vrot.slane %v4472, %v4880
    %4883 = vmatprep.subr.mxu0 0.0
    %4884 = vmatpush1.msra.mxu0 %v4456
    %4885 = vmatprep.subr.mxu0 0.0
    %4886 = vmatpush1.msra.mxu0 %v4457
    %4887 = vmatprep.subr.mxu0 0.0
    %4888 = vmatpush1.msra.mxu0 %v4458
    %4889 = vmatprep.subr.mxu0 0.0
    %4890 = vmatpush1.msra.mxu0 %v4459
    %4891 = vmatprep.subr.mxu0 0.0
    %4892 = vmatpush1.msra.mxu0 %v4460
    %4893 = vmatprep.subr.mxu0 0.0
    %4894 = vmatpush1.msra.mxu0 %v4461
    %4895 = vmatprep.subr.mxu0 0.0
    %4896 = vmatpush1.msra.mxu0 %v4462
    %4897 = vmatprep.subr.mxu0 0.0
    %4898 = vmatpush1.msra.mxu0 %v4463
    %4899 = vmatprep.subr.mxu0 0.0
    %4900 = vmatpush1.msra.mxu0 %v4464
    %4901 = vmatprep.subr.mxu0 0.0
    %4902 = vmatpush1.msra.mxu0 %v4465
    %4903 = vmatprep.subr.mxu0 0.0
    %4904 = vmatpush1.msra.mxu0 %v4466
    %4905 = vmatprep.subr.mxu0 0.0
    %4906 = vmatpush1.msra.mxu0 %v4467
    %4907 = vmatprep.subr.mxu0 0.0
    %4908 = vmatpush1.msra.mxu0 %v4468
    %4909 = vmatprep.subr.mxu0 0.0
    %4910 = vmatpush1.msra.mxu0 %v4469
    %4911 = vmatprep.subr.mxu0 0.0
    %4912 = vmatpush1.msra.mxu0 %v4470
    %4913 = vmatprep.subr.mxu0 0.0
    %4914 = vmatpush1.msra.mxu0 %v4471
    %4915 = vmatprep.subr.mxu0 0.0
    %4916 = vmatpush1.msra.mxu0 0.0
    %4917 = vmatprep.subr.mxu0 0.0
    %4918 = vmatpush1.msra.mxu0 0.0
    %4919 = vmatprep.subr.mxu0 0.0
    %4920 = vmatpush1.msra.mxu0 0.0
    %4921 = vmatprep.subr.mxu0 0.0
    %4922 = vmatpush1.msra.mxu0 0.0
    %4923 = vmatprep.subr.mxu0 0.0
    %4924 = vmatpush1.msra.mxu0 0.0
    %4925 = vmatprep.subr.mxu0 0.0
    %4926 = vmatpush1.msra.mxu0 0.0
    %4927 = vmatprep.subr.mxu0 0.0
    %4928 = vmatpush1.msra.mxu0 0.0
    %4929 = vmatprep.subr.mxu0 0.0
    %4930 = vmatpush1.msra.mxu0 0.0
    %4931 = vmatprep.subr.mxu0 0.0
    %4932 = vmatpush1.msra.mxu0 0.0
    %4933 = vmatprep.subr.mxu0 0.0
    %4934 = vmatpush1.msra.mxu0 0.0
    %4935 = vmatprep.subr.mxu0 0.0
    %4936 = vmatpush1.msra.mxu0 0.0
    %4937 = vmatprep.subr.mxu0 0.0
    %4938 = vmatpush1.msra.mxu0 0.0
    %4939 = vmatprep.subr.mxu0 0.0
    %4940 = vmatpush1.msra.mxu0 0.0
    %4941 = vmatprep.subr.mxu0 0.0
    %4942 = vmatpush1.msra.mxu0 0.0
    %4943 = vmatprep.subr.mxu0 0.0
    %4944 = vmatpush1.msra.mxu0 0.0
    %4945 = vmatprep.subr.mxu0 0.0
    %4946 = vmatpush1.msra.mxu0 0.0
    %4947 = vmatprep.mubr.f32.mxu0 0.0
    %4948 = vmatmul.mubr.f32.gmra.mrb[0].mxu0 %v4876
    %v4949 = vpop.f32.mrb[0].mxu0
    %v4950 = vadd.f32 %v4881, %v4949
    %v4951 = vpop.f32.mrb[0].mxu0
    %4952 = vdwg.mxu0
    %v4953 = vtanh.pop %v4950
    %v4955 = vlaneseq
    %v4956 = vshrl.u32 %v4955, 7
    %v4957 = vsub.s32 0, %v4956
    %v4958 = vrot.slane %v4489, %v4957
    %4960 = vmatprep.subr.mxu0 0.0
    %4961 = vmatpush1.msra.mxu0 %v4473
    %4962 = vmatprep.subr.mxu0 0.0
    %4963 = vmatpush1.msra.mxu0 %v4474
    %4964 = vmatprep.subr.mxu0 0.0
    %4965 = vmatpush1.msra.mxu0 %v4475
    %4966 = vmatprep.subr.mxu0 0.0
    %4967 = vmatpush1.msra.mxu0 %v4476
    %4968 = vmatprep.subr.mxu0 0.0
    %4969 = vmatpush1.msra.mxu0 %v4477
    %4970 = vmatprep.subr.mxu0 0.0
    %4971 = vmatpush1.msra.mxu0 %v4478
    %4972 = vmatprep.subr.mxu0 0.0
    %4973 = vmatpush1.msra.mxu0 %v4479
    %4974 = vmatprep.subr.mxu0 0.0
    %4975 = vmatpush1.msra.mxu0 %v4480
    %4976 = vmatprep.subr.mxu0 0.0
    %4977 = vmatpush1.msra.mxu0 %v4481
    %4978 = vmatprep.subr.mxu0 0.0
    %4979 = vmatpush1.msra.mxu0 %v4482
    %4980 = vmatprep.subr.mxu0 0.0
    %4981 = vmatpush1.msra.mxu0 %v4483
    %4982 = vmatprep.subr.mxu0 0.0
    %4983 = vmatpush1.msra.mxu0 %v4484
    %4984 = vmatprep.subr.mxu0 0.0
    %4985 = vmatpush1.msra.mxu0 %v4485
    %4986 = vmatprep.subr.mxu0 0.0
    %4987 = vmatpush1.msra.mxu0 %v4486
    %4988 = vmatprep.subr.mxu0 0.0
    %4989 = vmatpush1.msra.mxu0 %v4487
    %4990 = vmatprep.subr.mxu0 0.0
    %4991 = vmatpush1.msra.mxu0 %v4488
    %4992 = vmatprep.subr.mxu0 0.0
    %4993 = vmatpush1.msra.mxu0 0.0
    %4994 = vmatprep.subr.mxu0 0.0
    %4995 = vmatpush1.msra.mxu0 0.0
    %4996 = vmatprep.subr.mxu0 0.0
    %4997 = vmatpush1.msra.mxu0 0.0
    %4998 = vmatprep.subr.mxu0 0.0
    %4999 = vmatpush1.msra.mxu0 0.0
    %5000 = vmatprep.subr.mxu0 0.0
    %5001 = vmatpush1.msra.mxu0 0.0
    %5002 = vmatprep.subr.mxu0 0.0
    %5003 = vmatpush1.msra.mxu0 0.0
    %5004 = vmatprep.subr.mxu0 0.0
    %5005 = vmatpush1.msra.mxu0 0.0
    %5006 = vmatprep.subr.mxu0 0.0
    %5007 = vmatpush1.msra.mxu0 0.0
    %5008 = vmatprep.subr.mxu0 0.0
    %5009 = vmatpush1.msra.mxu0 0.0
    %5010 = vmatprep.subr.mxu0 0.0
    %5011 = vmatpush1.msra.mxu0 0.0
    %5012 = vmatprep.subr.mxu0 0.0
    %5013 = vmatpush1.msra.mxu0 0.0
    %5014 = vmatprep.subr.mxu0 0.0
    %5015 = vmatpush1.msra.mxu0 0.0
    %5016 = vmatprep.subr.mxu0 0.0
    %5017 = vmatpush1.msra.mxu0 0.0
    %5018 = vmatprep.subr.mxu0 0.0
    %5019 = vmatpush1.msra.mxu0 0.0
    %5020 = vmatprep.subr.mxu0 0.0
    %5021 = vmatpush1.msra.mxu0 0.0
    %5022 = vmatprep.subr.mxu0 0.0
    %5023 = vmatpush1.msra.mxu0 0.0
    %5024 = vmatprep.mubr.f32.mxu0 0.0
    %5025 = vmatmul.mubr.f32.gmra.mrb[0].mxu0 %v4953
    %v5026 = vpop.f32.mrb[0].mxu0
    %v5027 = vadd.f32 %v4958, %v5026
    %v5028 = vpop.f32.mrb[0].mxu0
    %5029 = vdwg.mxu0
    %v5031 = vsel %vm395, %v5027, 0
    %5033 = vmatprep.subr.mxu0 %v4369
    %5034 = vmatpush1.msra.mxu0 %v4368
    %5035 = vmatprep.subr.mxu0 %v4372
    %5036 = vmatpush1.msra.mxu0 %v4371
    %5037 = vmatprep.subr.mxu0 0.0
    %5038 = vmatpush1.msra.mxu0 0.0
    %5039 = vmatprep.subr.mxu0 0.0
    %5040 = vmatpush1.msra.mxu0 0.0
    %5041 = vmatprep.subr.mxu0 0.0
    %5042 = vmatpush1.msra.mxu0 0.0
    %5043 = vmatprep.subr.mxu0 0.0
    %5044 = vmatpush1.msra.mxu0 0.0
    %5045 = vmatprep.subr.mxu0 0.0
    %5046 = vmatpush1.msra.mxu0 0.0
    %5047 = vmatprep.subr.mxu0 0.0
    %5048 = vmatpush1.msra.mxu0 0.0
    %5049 = vmatprep.subr.mxu0 0.0
    %5050 = vmatpush1.msra.mxu0 0.0
    %5051 = vmatprep.subr.mxu0 0.0
    %5052 = vmatpush1.msra.mxu0 0.0
    %5053 = vmatprep.subr.mxu0 0.0
    %5054 = vmatpush1.msra.mxu0 0.0
    %5055 = vmatprep.subr.mxu0 0.0
    %5056 = vmatpush1.msra.mxu0 0.0
    %5057 = vmatprep.subr.mxu0 0.0
    %5058 = vmatpush1.msra.mxu0 0.0
    %5059 = vmatprep.subr.mxu0 0.0
    %5060 = vmatpush1.msra.mxu0 0.0
    %5061 = vmatprep.subr.mxu0 0.0
    %5062 = vmatpush1.msra.mxu0 0.0
    %5063 = vmatprep.subr.mxu0 0.0
    %5064 = vmatpush1.msra.mxu0 0.0
    %5065 = vmatprep.subr.mxu0 0.0
    %5066 = vmatpush1.msra.mxu0 0.0
    %5067 = vmatprep.subr.mxu0 0.0
    %5068 = vmatpush1.msra.mxu0 0.0
    %5069 = vmatprep.subr.mxu0 0.0
    %5070 = vmatpush1.msra.mxu0 0.0
    %5071 = vmatprep.subr.mxu0 0.0
    %5072 = vmatpush1.msra.mxu0 0.0
    %5073 = vmatprep.subr.mxu0 0.0
    %5074 = vmatpush1.msra.mxu0 0.0
    %5075 = vmatprep.subr.mxu0 0.0
    %5076 = vmatpush1.msra.mxu0 0.0
    %5077 = vmatprep.subr.mxu0 0.0
    %5078 = vmatpush1.msra.mxu0 0.0
    %5079 = vmatprep.subr.mxu0 0.0
    %5080 = vmatpush1.msra.mxu0 0.0
    %5081 = vmatprep.subr.mxu0 0.0
    %5082 = vmatpush1.msra.mxu0 0.0
    %5083 = vmatprep.subr.mxu0 0.0
    %5084 = vmatpush1.msra.mxu0 0.0
    %5085 = vmatprep.subr.mxu0 0.0
    %5086 = vmatpush1.msra.mxu0 0.0
    %5087 = vmatprep.subr.mxu0 0.0
    %5088 = vmatpush1.msra.mxu0 0.0
    %5089 = vmatprep.subr.mxu0 0.0
    %5090 = vmatpush1.msra.mxu0 0.0
    %5091 = vmatprep.subr.mxu0 0.0
    %5092 = vmatpush1.msra.mxu0 0.0
    %5093 = vmatprep.subr.mxu0 0.0
    %5094 = vmatpush1.msra.mxu0 0.0
    %5095 = vmatprep.subr.mxu0 0.0
    %5096 = vmatpush1.msra.mxu0 0.0
    %5097 = vmatprep.mubr.f32.mxu0 0.0
    %5098 = vmatmul.mubr.f32.gmra.mrb[0].mxu0 %v5031
    %v5099 = vpop.f32.mrb[0].mxu0
    %v5100 = vadd.f32 0.0, %v5099
    %v5101 = vpop.f32.mrb[0].mxu0
    %v5102 = vadd.f32 0.0, %v5101
    %5103 = vdwg.mxu0
    %5104 = vmatprep.subr.mxu0 0.0
    %5105 = vmatpush1.msra.mxu0 %v4370
    %5106 = vmatprep.subr.mxu0 0.0
    %5107 = vmatpush1.msra.mxu0 %v4373
    %5108 = vmatprep.subr.mxu0 0.0
    %5109 = vmatpush1.msra.mxu0 0.0
    %5110 = vmatprep.subr.mxu0 0.0
    %5111 = vmatpush1.msra.mxu0 0.0
    %5112 = vmatprep.subr.mxu0 0.0
    %5113 = vmatpush1.msra.mxu0 0.0
    %5114 = vmatprep.subr.mxu0 0.0
    %5115 = vmatpush1.msra.mxu0 0.0
    %5116 = vmatprep.subr.mxu0 0.0
    %5117 = vmatpush1.msra.mxu0 0.0
    %5118 = vmatprep.subr.mxu0 0.0
    %5119 = vmatpush1.msra.mxu0 0.0
    %5120 = vmatprep.subr.mxu0 0.0
    %5121 = vmatpush1.msra.mxu0 0.0
    %5122 = vmatprep.subr.mxu0 0.0
    %5123 = vmatpush1.msra.mxu0 0.0
    %5124 = vmatprep.subr.mxu0 0.0
    %5125 = vmatpush1.msra.mxu0 0.0
    %5126 = vmatprep.subr.mxu0 0.0
    %5127 = vmatpush1.msra.mxu0 0.0
    %5128 = vmatprep.subr.mxu0 0.0
    %5129 = vmatpush1.msra.mxu0 0.0
    %5130 = vmatprep.subr.mxu0 0.0
    %5131 = vmatpush1.msra.mxu0 0.0
    %5132 = vmatprep.subr.mxu0 0.0
    %5133 = vmatpush1.msra.mxu0 0.0
    %5134 = vmatprep.subr.mxu0 0.0
    %5135 = vmatpush1.msra.mxu0 0.0
    %5136 = vmatprep.subr.mxu0 0.0
    %5137 = vmatpush1.msra.mxu0 0.0
    %5138 = vmatprep.subr.mxu0 0.0
    %5139 = vmatpush1.msra.mxu0 0.0
    %5140 = vmatprep.subr.mxu0 0.0
    %5141 = vmatpush1.msra.mxu0 0.0
    %5142 = vmatprep.subr.mxu0 0.0
    %5143 = vmatpush1.msra.mxu0 0.0
    %5144 = vmatprep.subr.mxu0 0.0
    %5145 = vmatpush1.msra.mxu0 0.0
    %5146 = vmatprep.subr.mxu0 0.0
    %5147 = vmatpush1.msra.mxu0 0.0
    %5148 = vmatprep.subr.mxu0 0.0
    %5149 = vmatpush1.msra.mxu0 0.0
    %5150 = vmatprep.subr.mxu0 0.0
    %5151 = vmatpush1.msra.mxu0 0.0
    %5152 = vmatprep.subr.mxu0 0.0
    %5153 = vmatpush1.msra.mxu0 0.0
    %5154 = vmatprep.subr.mxu0 0.0
    %5155 = vmatpush1.msra.mxu0 0.0
    %5156 = vmatprep.subr.mxu0 0.0
    %5157 = vmatpush1.msra.mxu0 0.0
    %5158 = vmatprep.subr.mxu0 0.0
    %5159 = vmatpush1.msra.mxu0 0.0
    %5160 = vmatprep.subr.mxu0 0.0
    %5161 = vmatpush1.msra.mxu0 0.0
    %5162 = vmatprep.subr.mxu0 0.0
    %5163 = vmatpush1.msra.mxu0 0.0
    %5164 = vmatprep.subr.mxu0 0.0
    %5165 = vmatpush1.msra.mxu0 0.0
    %5166 = vmatprep.subr.mxu0 0.0
    %5167 = vmatpush1.msra.mxu0 0.0
    %5168 = vmatprep.mubr.f32.mxu0 0.0
    %5169 = vmatmul.mubr.f32.gmra.mrb[0].mxu0 %v5031
    %v5170 = vpop.f32.mrb[0].mxu0
    %v5171 = vadd.f32 0.0, %v5170
    %v5172 = vpop.f32.mrb[0].mxu0
    %5173 = vdwg.mxu0
    %v5174 = vadd.f32 %v4365, %v5100
    %v5175 = vadd.f32 %v4366, %v5102
    %v5176 = vadd.f32 %v4367, %v5171
    %5177 = vmatprep.subr.mxu0 %v4375
    %5178 = vmatpush1.msra.mxu0 %v4374
    %5179 = vmatprep.subr.mxu0 %v4378
    %5180 = vmatpush1.msra.mxu0 %v4377
    %5181 = vmatprep.subr.mxu0 %v4381
    %5182 = vmatpush1.msra.mxu0 %v4380
    %5183 = vmatprep.subr.mxu0 %v4384
    %5184 = vmatpush1.msra.mxu0 %v4383
    %5185 = vmatprep.subr.mxu0 %v4387
    %5186 = vmatpush1.msra.mxu0 %v4386
    %5187 = vmatprep.subr.mxu0 %v4390
    %5188 = vmatpush1.msra.mxu0 %v4389
    %5189 = vmatprep.subr.mxu0 %v4393
    %5190 = vmatpush1.msra.mxu0 %v4392
    %5191 = vmatprep.subr.mxu0 %v4396
    %5192 = vmatpush1.msra.mxu0 %v4395
    %5193 = vmatprep.subr.mxu0 %v4399
    %5194 = vmatpush1.msra.mxu0 %v4398
    %5195 = vmatprep.subr.mxu0 %v4402
    %5196 = vmatpush1.msra.mxu0 %v4401
    %5197 = vmatprep.subr.mxu0 %v4405
    %5198 = vmatpush1.msra.mxu0 %v4404
    %5199 = vmatprep.subr.mxu0 %v4408
    %5200 = vmatpush1.msra.mxu0 %v4407
    %5201 = vmatprep.subr.mxu0 %v4411
    %5202 = vmatpush1.msra.mxu0 %v4410
    %5203 = vmatprep.subr.mxu0 %v4414
    %5204 = vmatpush1.msra.mxu0 %v4413
    %5205 = vmatprep.subr.mxu0 %v4417
    %5206 = vmatpush1.msra.mxu0 %v4416
    %5207 = vmatprep.subr.mxu0 %v4420
    %5208 = vmatpush1.msra.mxu0 %v4419
    %5209 = vmatprep.subr.mxu0 0.0
    %5210 = vmatpush1.msra.mxu0 0.0
    %5211 = vmatprep.subr.mxu0 0.0
    %5212 = vmatpush1.msra.mxu0 0.0
    %5213 = vmatprep.subr.mxu0 0.0
    %5214 = vmatpush1.msra.mxu0 0.0
    %5215 = vmatprep.subr.mxu0 0.0
    %5216 = vmatpush1.msra.mxu0 0.0
    %5217 = vmatprep.subr.mxu0 0.0
    %5218 = vmatpush1.msra.mxu0 0.0
    %5219 = vmatprep.subr.mxu0 0.0
    %5220 = vmatpush1.msra.mxu0 0.0
    %5221 = vmatprep.subr.mxu0 0.0
    %5222 = vmatpush1.msra.mxu0 0.0
    %5223 = vmatprep.subr.mxu0 0.0
    %5224 = vmatpush1.msra.mxu0 0.0
    %5225 = vmatprep.subr.mxu0 0.0
    %5226 = vmatpush1.msra.mxu0 0.0
    %5227 = vmatprep.subr.mxu0 0.0
    %5228 = vmatpush1.msra.mxu0 0.0
    %5229 = vmatprep.subr.mxu0 0.0
    %5230 = vmatpush1.msra.mxu0 0.0
    %5231 = vmatprep.subr.mxu0 0.0
    %5232 = vmatpush1.msra.mxu0 0.0
    %5233 = vmatprep.subr.mxu0 0.0
    %5234 = vmatpush1.msra.mxu0 0.0
    %5235 = vmatprep.subr.mxu0 0.0
    %5236 = vmatpush1.msra.mxu0 0.0
    %5237 = vmatprep.subr.mxu0 0.0
    %5238 = vmatpush1.msra.mxu0 0.0
    %5239 = vmatprep.subr.mxu0 0.0
    %5240 = vmatpush1.msra.mxu0 0.0
    %5241 = vmatprep.mubr.f32.mxu0 0.0
    %5242 = vmatmul.mubr.f32.gmra.mrb[0].mxu0 %v4799
    %v5243 = vpop.f32.mrb[0].mxu0
    %v5244 = vadd.f32 %v4427, %v5243
    %v5245 = vpop.f32.mrb[0].mxu0
    %v5246 = vadd.f32 %v4431, %v5245
    %5247 = vdwg.mxu0
    %5248 = vmatprep.subr.mxu0 0.0
    %5249 = vmatpush1.msra.mxu0 %v4376
    %5250 = vmatprep.subr.mxu0 0.0
    %5251 = vmatpush1.msra.mxu0 %v4379
    %5252 = vmatprep.subr.mxu0 0.0
    %5253 = vmatpush1.msra.mxu0 %v4382
    %5254 = vmatprep.subr.mxu0 0.0
    %5255 = vmatpush1.msra.mxu0 %v4385
    %5256 = vmatprep.subr.mxu0 0.0
    %5257 = vmatpush1.msra.mxu0 %v4388
    %5258 = vmatprep.subr.mxu0 0.0
    %5259 = vmatpush1.msra.mxu0 %v4391
    %5260 = vmatprep.subr.mxu0 0.0
    %5261 = vmatpush1.msra.mxu0 %v4394
    %5262 = vmatprep.subr.mxu0 0.0
    %5263 = vmatpush1.msra.mxu0 %v4397
    %5264 = vmatprep.subr.mxu0 0.0
    %5265 = vmatpush1.msra.mxu0 %v4400
    %5266 = vmatprep.subr.mxu0 0.0
    %5267 = vmatpush1.msra.mxu0 %v4403
    %5268 = vmatprep.subr.mxu0 0.0
    %5269 = vmatpush1.msra.mxu0 %v4406
    %5270 = vmatprep.subr.mxu0 0.0
    %5271 = vmatpush1.msra.mxu0 %v4409
    %5272 = vmatprep.subr.mxu0 0.0
    %5273 = vmatpush1.msra.mxu0 %v4412
    %5274 = vmatprep.subr.mxu0 0.0
    %5275 = vmatpush1.msra.mxu0 %v4415
    %5276 = vmatprep.subr.mxu0 0.0
    %5277 = vmatpush1.msra.mxu0 %v4418
    %5278 = vmatprep.subr.mxu0 0.0
    %5279 = vmatpush1.msra.mxu0 %v4421
    %5280 = vmatprep.subr.mxu0 0.0
    %5281 = vmatpush1.msra.mxu0 0.0
    %5282 = vmatprep.subr.mxu0 0.0
    %5283 = vmatpush1.msra.mxu0 0.0
    %5284 = vmatprep.subr.mxu0 0.0
    %5285 = vmatpush1.msra.mxu0 0.0
    %5286 = vmatprep.subr.mxu0 0.0
    %5287 = vmatpush1.msra.mxu0 0.0
    %5288 = vmatprep.subr.mxu0 0.0
    %5289 = vmatpush1.msra.mxu0 0.0
    %5290 = vmatprep.subr.mxu0 0.0
    %5291 = vmatpush1.msra.mxu0 0.0
    %5292 = vmatprep.subr.mxu0 0.0
    %5293 = vmatpush1.msra.mxu0 0.0
    %5294 = vmatprep.subr.mxu0 0.0
    %5295 = vmatpush1.msra.mxu0 0.0
    %5296 = vmatprep.subr.mxu0 0.0
    %5297 = vmatpush1.msra.mxu0 0.0
    %5298 = vmatprep.subr.mxu0 0.0
    %5299 = vmatpush1.msra.mxu0 0.0
    %5300 = vmatprep.subr.mxu0 0.0
    %5301 = vmatpush1.msra.mxu0 0.0
    %5302 = vmatprep.subr.mxu0 0.0
    %5303 = vmatpush1.msra.mxu0 0.0
    %5304 = vmatprep.subr.mxu0 0.0
    %5305 = vmatpush1.msra.mxu0 0.0
    %5306 = vmatprep.subr.mxu0 0.0
    %5307 = vmatpush1.msra.mxu0 0.0
    %5308 = vmatprep.subr.mxu0 0.0
    %5309 = vmatpush1.msra.mxu0 0.0
    %5310 = vmatprep.subr.mxu0 0.0
    %5311 = vmatpush1.msra.mxu0 0.0
    %5312 = vmatprep.mubr.f32.mxu0 0.0
    %5313 = vmatmul.mubr.f32.gmra.mrb[0].mxu0 %v4799
    %v5314 = vpop.f32.mrb[0].mxu0
    %v5315 = vadd.f32 %v4435, %v5314
    %v5316 = vpop.f32.mrb[0].mxu0
    %5317 = vdwg.mxu0
    %v5318 = vadd.f32 %v5174, %v5244
    %v5319 = vxor.u32 %v5318, 2147483648
    %v5320 = vmul.f32 %v5319, 1.442695
    %v5321 = vpow.pop %v5320
    %v5322 = vadd.f32 %v5321, 1.0
    %v5323 = vrcp.pop %v5322
    %v5324 = vmul.f32 1.0, %v5323
    %v5325 = vadd.f32 %v5175, %v5246
    %v5326 = vxor.u32 %v5325, 2147483648
    %v5327 = vmul.f32 %v5326, 1.442695
    %v5328 = vpow.pop %v5327
    %v5329 = vadd.f32 %v5328, 1.0
    %v5330 = vrcp.pop %v5329
    %v5331 = vmul.f32 1.0, %v5330
    %v5332 = vmul.f32 %v5324, %v5315
    %v5333 = vadd.f32 %v5176, %v5332
    %v5334 = vtanh.pop %v5333
    %v5335 = vsub.f32 1.0, %v5331
    %v5336 = vmul.f32 %v5335, %v5334
    %v5337 = vmul.f32 %v5331, %v4799
    %v5338 = vadd.f32 %v5336, %v5337
    %5339 = vmatprep.subr.mxu0 0.0
    %5340 = vmatpush1.msra.mxu0 %v4439
    %5341 = vmatprep.subr.mxu0 0.0
    %5342 = vmatpush1.msra.mxu0 %v4440
    %5343 = vmatprep.subr.mxu0 0.0
    %5344 = vmatpush1.msra.mxu0 %v4441
    %5345 = vmatprep.subr.mxu0 0.0
    %5346 = vmatpush1.msra.mxu0 %v4442
    %5347 = vmatprep.subr.mxu0 0.0
    %5348 = vmatpush1.msra.mxu0 %v4443
    %5349 = vmatprep.subr.mxu0 0.0
    %5350 = vmatpush1.msra.mxu0 %v4444
    %5351 = vmatprep.subr.mxu0 0.0
    %5352 = vmatpush1.msra.mxu0 %v4445
    %5353 = vmatprep.subr.mxu0 0.0
    %5354 = vmatpush1.msra.mxu0 %v4446
    %5355 = vmatprep.subr.mxu0 0.0
    %5356 = vmatpush1.msra.mxu0 %v4447
    %5357 = vmatprep.subr.mxu0 0.0
    %5358 = vmatpush1.msra.mxu0 %v4448
    %5359 = vmatprep.subr.mxu0 0.0
    %5360 = vmatpush1.msra.mxu0 %v4449
    %5361 = vmatprep.subr.mxu0 0.0
    %5362 = vmatpush1.msra.mxu0 %v4450
    %5363 = vmatprep.subr.mxu0 0.0
    %5364 = vmatpush1.msra.mxu0 %v4451
    %5365 = vmatprep.subr.mxu0 0.0
    %5366 = vmatpush1.msra.mxu0 %v4452
    %5367 = vmatprep.subr.mxu0 0.0
    %5368 = vmatpush1.msra.mxu0 %v4453
    %5369 = vmatprep.subr.mxu0 0.0
    %5370 = vmatpush1.msra.mxu0 %v4454
    %5371 = vmatprep.subr.mxu0 0.0
    %5372 = vmatpush1.msra.mxu0 0.0
    %5373 = vmatprep.subr.mxu0 0.0
    %5374 = vmatpush1.msra.mxu0 0.0
    %5375 = vmatprep.subr.mxu0 0.0
    %5376 = vmatpush1.msra.mxu0 0.0
    %5377 = vmatprep.subr.mxu0 0.0
    %5378 = vmatpush1.msra.mxu0 0.0
    %5379 = vmatprep.subr.mxu0 0.0
    %5380 = vmatpush1.msra.mxu0 0.0
    %5381 = vmatprep.subr.mxu0 0.0
    %5382 = vmatpush1.msra.mxu0 0.0
    %5383 = vmatprep.subr.mxu0 0.0
    %5384 = vmatpush1.msra.mxu0 0.0
    %5385 = vmatprep.subr.mxu0 0.0
    %5386 = vmatpush1.msra.mxu0 0.0
    %5387 = vmatprep.subr.mxu0 0.0
    %5388 = vmatpush1.msra.mxu0 0.0
    %5389 = vmatprep.subr.mxu0 0.0
    %5390 = vmatpush1.msra.mxu0 0.0
    %5391 = vmatprep.subr.mxu0 0.0
    %5392 = vmatpush1.msra.mxu0 0.0
    %5393 = vmatprep.subr.mxu0 0.0
    %5394 = vmatpush1.msra.mxu0 0.0
    %5395 = vmatprep.subr.mxu0 0.0
    %5396 = vmatpush1.msra.mxu0 0.0
    %5397 = vmatprep.subr.mxu0 0.0
    %5398 = vmatpush1.msra.mxu0 0.0
    %5399 = vmatprep.subr.mxu0 0.0
    %5400 = vmatpush1.msra.mxu0 0.0
    %5401 = vmatprep.subr.mxu0 0.0
    %5402 = vmatpush1.msra.mxu0 0.0
    %5403 = vmatprep.mubr.f32.mxu0 0.0
    %5404 = vmatmul.mubr.f32.gmra.mrb[0].mxu0 %v5338
    %v5405 = vpop.f32.mrb[0].mxu0
    %v5406 = vadd.f32 %v4804, %v5405
    %v5407 = vpop.f32.mrb[0].mxu0
    %5408 = vdwg.mxu0
    %v5409 = vtanh.pop %v5406
    %5410 = vmatprep.subr.mxu0 0.0
    %5411 = vmatpush1.msra.mxu0 %v4456
    %5412 = vmatprep.subr.mxu0 0.0
    %5413 = vmatpush1.msra.mxu0 %v4457
    %5414 = vmatprep.subr.mxu0 0.0
    %5415 = vmatpush1.msra.mxu0 %v4458
    %5416 = vmatprep.subr.mxu0 0.0
    %5417 = vmatpush1.msra.mxu0 %v4459
    %5418 = vmatprep.subr.mxu0 0.0
    %5419 = vmatpush1.msra.mxu0 %v4460
    %5420 = vmatprep.subr.mxu0 0.0
    %5421 = vmatpush1.msra.mxu0 %v4461
    %5422 = vmatprep.subr.mxu0 0.0
    %5423 = vmatpush1.msra.mxu0 %v4462
    %5424 = vmatprep.subr.mxu0 0.0
    %5425 = vmatpush1.msra.mxu0 %v4463
    %5426 = vmatprep.subr.mxu0 0.0
    %5427 = vmatpush1.msra.mxu0 %v4464
    %5428 = vmatprep.subr.mxu0 0.0
    %5429 = vmatpush1.msra.mxu0 %v4465
    %5430 = vmatprep.subr.mxu0 0.0
    %5431 = vmatpush1.msra.mxu0 %v4466
    %5432 = vmatprep.subr.mxu0 0.0
    %5433 = vmatpush1.msra.mxu0 %v4467
    %5434 = vmatprep.subr.mxu0 0.0
    %5435 = vmatpush1.msra.mxu0 %v4468
    %5436 = vmatprep.subr.mxu0 0.0
    %5437 = vmatpush1.msra.mxu0 %v4469
    %5438 = vmatprep.subr.mxu0 0.0
    %5439 = vmatpush1.msra.mxu0 %v4470
    %5440 = vmatprep.subr.mxu0 0.0
    %5441 = vmatpush1.msra.mxu0 %v4471
    %5442 = vmatprep.subr.mxu0 0.0
    %5443 = vmatpush1.msra.mxu0 0.0
    %5444 = vmatprep.subr.mxu0 0.0
    %5445 = vmatpush1.msra.mxu0 0.0
    %5446 = vmatprep.subr.mxu0 0.0
    %5447 = vmatpush1.msra.mxu0 0.0
    %5448 = vmatprep.subr.mxu0 0.0
    %5449 = vmatpush1.msra.mxu0 0.0
    %5450 = vmatprep.subr.mxu0 0.0
    %5451 = vmatpush1.msra.mxu0 0.0
    %5452 = vmatprep.subr.mxu0 0.0
    %5453 = vmatpush1.msra.mxu0 0.0
    %5454 = vmatprep.subr.mxu0 0.0
    %5455 = vmatpush1.msra.mxu0 0.0
    %5456 = vmatprep.subr.mxu0 0.0
    %5457 = vmatpush1.msra.mxu0 0.0
    %5458 = vmatprep.subr.mxu0 0.0
    %5459 = vmatpush1.msra.mxu0 0.0
    %5460 = vmatprep.subr.mxu0 0.0
    %5461 = vmatpush1.msra.mxu0 0.0
    %5462 = vmatprep.subr.mxu0 0.0
    %5463 = vmatpush1.msra.mxu0 0.0
    %5464 = vmatprep.subr.mxu0 0.0
    %5465 = vmatpush1.msra.mxu0 0.0
    %5466 = vmatprep.subr.mxu0 0.0
    %5467 = vmatpush1.msra.mxu0 0.0
    %5468 = vmatprep.subr.mxu0 0.0
    %5469 = vmatpush1.msra.mxu0 0.0
    %5470 = vmatprep.subr.mxu0 0.0
    %5471 = vmatpush1.msra.mxu0 0.0
    %5472 = vmatprep.subr.mxu0 0.0
    %5473 = vmatpush1.msra.mxu0 0.0
    %5474 = vmatprep.mubr.f32.mxu0 0.0
    %5475 = vmatmul.mubr.f32.gmra.mrb[0].mxu0 %v5409
    %v5476 = vpop.f32.mrb[0].mxu0
    %v5477 = vadd.f32 %v4881, %v5476
    %v5478 = vpop.f32.mrb[0].mxu0
    %5479 = vdwg.mxu0
    %v5480 = vtanh.pop %v5477
    %5481 = vmatprep.subr.mxu0 0.0
    %5482 = vmatpush1.msra.mxu0 %v4473
    %5483 = vmatprep.subr.mxu0 0.0
    %5484 = vmatpush1.msra.mxu0 %v4474
    %5485 = vmatprep.subr.mxu0 0.0
    %5486 = vmatpush1.msra.mxu0 %v4475
    %5487 = vmatprep.subr.mxu0 0.0
    %5488 = vmatpush1.msra.mxu0 %v4476
    %5489 = vmatprep.subr.mxu0 0.0
    %5490 = vmatpush1.msra.mxu0 %v4477
    %5491 = vmatprep.subr.mxu0 0.0
    %5492 = vmatpush1.msra.mxu0 %v4478
    %5493 = vmatprep.subr.mxu0 0.0
    %5494 = vmatpush1.msra.mxu0 %v4479
    %5495 = vmatprep.subr.mxu0 0.0
    %5496 = vmatpush1.msra.mxu0 %v4480
    %5497 = vmatprep.subr.mxu0 0.0
    %5498 = vmatpush1.msra.mxu0 %v4481
    %5499 = vmatprep.subr.mxu0 0.0
    %5500 = vmatpush1.msra.mxu0 %v4482
    %5501 = vmatprep.subr.mxu0 0.0
    %5502 = vmatpush1.msra.mxu0 %v4483
    %5503 = vmatprep.subr.mxu0 0.0
    %5504 = vmatpush1.msra.mxu0 %v4484
    %5505 = vmatprep.subr.mxu0 0.0
    %5506 = vmatpush1.msra.mxu0 %v4485
    %5507 = vmatprep.subr.mxu0 0.0
    %5508 = vmatpush1.msra.mxu0 %v4486
    %5509 = vmatprep.subr.mxu0 0.0
    %5510 = vmatpush1.msra.mxu0 %v4487
    %5511 = vmatprep.subr.mxu0 0.0
    %5512 = vmatpush1.msra.mxu0 %v4488
    %5513 = vmatprep.subr.mxu0 0.0
    %5514 = vmatpush1.msra.mxu0 0.0
    %5515 = vmatprep.subr.mxu0 0.0
    %5516 = vmatpush1.msra.mxu0 0.0
    %5517 = vmatprep.subr.mxu0 0.0
    %5518 = vmatpush1.msra.mxu0 0.0
    %5519 = vmatprep.subr.mxu0 0.0
    %5520 = vmatpush1.msra.mxu0 0.0
    %5521 = vmatprep.subr.mxu0 0.0
    %5522 = vmatpush1.msra.mxu0 0.0
    %5523 = vmatprep.subr.mxu0 0.0
    %5524 = vmatpush1.msra.mxu0 0.0
    %5525 = vmatprep.subr.mxu0 0.0
    %5526 = vmatpush1.msra.mxu0 0.0
    %5527 = vmatprep.subr.mxu0 0.0
    %5528 = vmatpush1.msra.mxu0 0.0
    %5529 = vmatprep.subr.mxu0 0.0
    %5530 = vmatpush1.msra.mxu0 0.0
    %5531 = vmatprep.subr.mxu0 0.0
    %5532 = vmatpush1.msra.mxu0 0.0
    %5533 = vmatprep.subr.mxu0 0.0
    %5534 = vmatpush1.msra.mxu0 0.0
    %5535 = vmatprep.subr.mxu0 0.0
    %5536 = vmatpush1.msra.mxu0 0.0
    %5537 = vmatprep.subr.mxu0 0.0
    %5538 = vmatpush1.msra.mxu0 0.0
    %5539 = vmatprep.subr.mxu0 0.0
    %5540 = vmatpush1.msra.mxu0 0.0
    %5541 = vmatprep.subr.mxu0 0.0
    %5542 = vmatpush1.msra.mxu0 0.0
    %5543 = vmatprep.subr.mxu0 0.0
    %5544 = vmatpush1.msra.mxu0 0.0
    %5545 = vmatprep.mubr.f32.mxu0 0.0
    %5546 = vmatmul.mubr.f32.gmra.mrb[0].mxu0 %v5480
    %v5547 = vpop.f32.mrb[0].mxu0
    %v5548 = vadd.f32 %v4958, %v5547
    %v5549 = vpop.f32.mrb[0].mxu0
    %5550 = vdwg.mxu0
    %v5552 = vsel %vm395, %v5548, 0
    %5554 = vmatprep.subr.mxu0 %v4369
    %5555 = vmatpush1.msra.mxu0 %v4368
    %5556 = vmatprep.subr.mxu0 %v4372
    %5557 = vmatpush1.msra.mxu0 %v4371
    %5558 = vmatprep.subr.mxu0 0.0
    %5559 = vmatpush1.msra.mxu0 0.0
    %5560 = vmatprep.subr.mxu0 0.0
    %5561 = vmatpush1.msra.mxu0 0.0
    %5562 = vmatprep.subr.mxu0 0.0
    %5563 = vmatpush1.msra.mxu0 0.0
    %5564 = vmatprep.subr.mxu0 0.0
    %5565 = vmatpush1.msra.mxu0 0.0
    %5566 = vmatprep.subr.mxu0 0.0
    %5567 = vmatpush1.msra.mxu0 0.0
    %5568 = vmatprep.subr.mxu0 0.0
    %5569 = vmatpush1.msra.mxu0 0.0
    %5570 = vmatprep.subr.mxu0 0.0
    %5571 = vmatpush1.msra.mxu0 0.0
    %5572 = vmatprep.subr.mxu0 0.0
    %5573 = vmatpush1.msra.mxu0 0.0
    %5574 = vmatprep.subr.mxu0 0.0
    %5575 = vmatpush1.msra.mxu0 0.0
    %5576 = vmatprep.subr.mxu0 0.0
    %5577 = vmatpush1.msra.mxu0 0.0
    %5578 = vmatprep.subr.mxu0 0.0
    %5579 = vmatpush1.msra.mxu0 0.0
    %5580 = vmatprep.subr.mxu0 0.0
    %5581 = vmatpush1.msra.mxu0 0.0
    %5582 = vmatprep.subr.mxu0 0.0
    %5583 = vmatpush1.msra.mxu0 0.0
    %5584 = vmatprep.subr.mxu0 0.0
    %5585 = vmatpush1.msra.mxu0 0.0
    %5586 = vmatprep.subr.mxu0 0.0
    %5587 = vmatpush1.msra.mxu0 0.0
    %5588 = vmatprep.subr.mxu0 0.0
    %5589 = vmatpush1.msra.mxu0 0.0
    %5590 = vmatprep.subr.mxu0 0.0
    %5591 = vmatpush1.msra.mxu0 0.0
    %5592 = vmatprep.subr.mxu0 0.0
    %5593 = vmatpush1.msra.mxu0 0.0
    %5594 = vmatprep.subr.mxu0 0.0
    %5595 = vmatpush1.msra.mxu0 0.0
    %5596 = vmatprep.subr.mxu0 0.0
    %5597 = vmatpush1.msra.mxu0 0.0
    %5598 = vmatprep.subr.mxu0 0.0
    %5599 = vmatpush1.msra.mxu0 0.0
    %5600 = vmatprep.subr.mxu0 0.0
    %5601 = vmatpush1.msra.mxu0 0.0
    %5602 = vmatprep.subr.mxu0 0.0
    %5603 = vmatpush1.msra.mxu0 0.0
    %5604 = vmatprep.subr.mxu0 0.0
    %5605 = vmatpush1.msra.mxu0 0.0
    %5606 = vmatprep.subr.mxu0 0.0
    %5607 = vmatpush1.msra.mxu0 0.0
    %5608 = vmatprep.subr.mxu0 0.0
    %5609 = vmatpush1.msra.mxu0 0.0
    %5610 = vmatprep.subr.mxu0 0.0
    %5611 = vmatpush1.msra.mxu0 0.0
    %5612 = vmatprep.subr.mxu0 0.0
    %5613 = vmatpush1.msra.mxu0 0.0
    %5614 = vmatprep.subr.mxu0 0.0
    %5615 = vmatpush1.msra.mxu0 0.0
    %5616 = vmatprep.subr.mxu0 0.0
    %5617 = vmatpush1.msra.mxu0 0.0
    %5618 = vmatprep.mubr.f32.mxu0 0.0
    %5619 = vmatmul.mubr.f32.gmra.mrb[0].mxu0 %v5552
    %v5620 = vpop.f32.mrb[0].mxu0
    %v5621 = vadd.f32 0.0, %v5620
    %v5622 = vpop.f32.mrb[0].mxu0
    %v5623 = vadd.f32 0.0, %v5622
    %5624 = vdwg.mxu0
    %5625 = vmatprep.subr.mxu0 0.0
    %5626 = vmatpush1.msra.mxu0 %v4370
    %5627 = vmatprep.subr.mxu0 0.0
    %5628 = vmatpush1.msra.mxu0 %v4373
    %5629 = vmatprep.subr.mxu0 0.0
    %5630 = vmatpush1.msra.mxu0 0.0
    %5631 = vmatprep.subr.mxu0 0.0
    %5632 = vmatpush1.msra.mxu0 0.0
    %5633 = vmatprep.subr.mxu0 0.0
    %5634 = vmatpush1.msra.mxu0 0.0
    %5635 = vmatprep.subr.mxu0 0.0
    %5636 = vmatpush1.msra.mxu0 0.0
    %5637 = vmatprep.subr.mxu0 0.0
    %5638 = vmatpush1.msra.mxu0 0.0
    %5639 = vmatprep.subr.mxu0 0.0
    %5640 = vmatpush1.msra.mxu0 0.0
    %5641 = vmatprep.subr.mxu0 0.0
    %5642 = vmatpush1.msra.mxu0 0.0
    %5643 = vmatprep.subr.mxu0 0.0
    %5644 = vmatpush1.msra.mxu0 0.0
    %5645 = vmatprep.subr.mxu0 0.0
    %5646 = vmatpush1.msra.mxu0 0.0
    %5647 = vmatprep.subr.mxu0 0.0
    %5648 = vmatpush1.msra.mxu0 0.0
    %5649 = vmatprep.subr.mxu0 0.0
    %5650 = vmatpush1.msra.mxu0 0.0
    %5651 = vmatprep.subr.mxu0 0.0
    %5652 = vmatpush1.msra.mxu0 0.0
    %5653 = vmatprep.subr.mxu0 0.0
    %5654 = vmatpush1.msra.mxu0 0.0
    %5655 = vmatprep.subr.mxu0 0.0
    %5656 = vmatpush1.msra.mxu0 0.0
    %5657 = vmatprep.subr.mxu0 0.0
    %5658 = vmatpush1.msra.mxu0 0.0
    %5659 = vmatprep.subr.mxu0 0.0
    %5660 = vmatpush1.msra.mxu0 0.0
    %5661 = vmatprep.subr.mxu0 0.0
    %5662 = vmatpush1.msra.mxu0 0.0
    %5663 = vmatprep.subr.mxu0 0.0
    %5664 = vmatpush1.msra.mxu0 0.0
    %5665 = vmatprep.subr.mxu0 0.0
    %5666 = vmatpush1.msra.mxu0 0.0
    %5667 = vmatprep.subr.mxu0 0.0
    %5668 = vmatpush1.msra.mxu0 0.0
    %5669 = vmatprep.subr.mxu0 0.0
    %5670 = vmatpush1.msra.mxu0 0.0
    %5671 = vmatprep.subr.mxu0 0.0
    %5672 = vmatpush1.msra.mxu0 0.0
    %5673 = vmatprep.subr.mxu0 0.0
    %5674 = vmatpush1.msra.mxu0 0.0
    %5675 = vmatprep.subr.mxu0 0.0
    %5676 = vmatpush1.msra.mxu0 0.0
    %5677 = vmatprep.subr.mxu0 0.0
    %5678 = vmatpush1.msra.mxu0 0.0
    %5679 = vmatprep.subr.mxu0 0.0
    %5680 = vmatpush1.msra.mxu0 0.0
    %5681 = vmatprep.subr.mxu0 0.0
    %5682 = vmatpush1.msra.mxu0 0.0
    %5683 = vmatprep.subr.mxu0 0.0
    %5684 = vmatpush1.msra.mxu0 0.0
    %5685 = vmatprep.subr.mxu0 0.0
    %5686 = vmatpush1.msra.mxu0 0.0
    %5687 = vmatprep.subr.mxu0 0.0
    %5688 = vmatpush1.msra.mxu0 0.0
    %5689 = vmatprep.mubr.f32.mxu0 0.0
    %5690 = vmatmul.mubr.f32.gmra.mrb[0].mxu0 %v5552
    %v5691 = vpop.f32.mrb[0].mxu0
    %v5692 = vadd.f32 0.0, %v5691
    %v5693 = vpop.f32.mrb[0].mxu0
    %5694 = vdwg.mxu0
    %v5695 = vadd.f32 %v4365, %v5621
    %v5696 = vadd.f32 %v4366, %v5623
    %v5697 = vadd.f32 %v4367, %v5692
    %5698 = vmatprep.subr.mxu0 %v4375
    %5699 = vmatpush1.msra.mxu0 %v4374
    %5700 = vmatprep.subr.mxu0 %v4378
    %5701 = vmatpush1.msra.mxu0 %v4377
    %5702 = vmatprep.subr.mxu0 %v4381
    %5703 = vmatpush1.msra.mxu0 %v4380
    %5704 = vmatprep.subr.mxu0 %v4384
    %5705 = vmatpush1.msra.mxu0 %v4383
    %5706 = vmatprep.subr.mxu0 %v4387
    %5707 = vmatpush1.msra.mxu0 %v4386
    %5708 = vmatprep.subr.mxu0 %v4390
    %5709 = vmatpush1.msra.mxu0 %v4389
    %5710 = vmatprep.subr.mxu0 %v4393
    %5711 = vmatpush1.msra.mxu0 %v4392
    %5712 = vmatprep.subr.mxu0 %v4396
    %5713 = vmatpush1.msra.mxu0 %v4395
    %5714 = vmatprep.subr.mxu0 %v4399
    %5715 = vmatpush1.msra.mxu0 %v4398
    %5716 = vmatprep.subr.mxu0 %v4402
    %5717 = vmatpush1.msra.mxu0 %v4401
    %5718 = vmatprep.subr.mxu0 %v4405
    %5719 = vmatpush1.msra.mxu0 %v4404
    %5720 = vmatprep.subr.mxu0 %v4408
    %5721 = vmatpush1.msra.mxu0 %v4407
    %5722 = vmatprep.subr.mxu0 %v4411
    %5723 = vmatpush1.msra.mxu0 %v4410
    %5724 = vmatprep.subr.mxu0 %v4414
    %5725 = vmatpush1.msra.mxu0 %v4413
    %5726 = vmatprep.subr.mxu0 %v4417
    %5727 = vmatpush1.msra.mxu0 %v4416
    %5728 = vmatprep.subr.mxu0 %v4420
    %5729 = vmatpush1.msra.mxu0 %v4419
    %5730 = vmatprep.subr.mxu0 0.0
    %5731 = vmatpush1.msra.mxu0 0.0
    %5732 = vmatprep.subr.mxu0 0.0
    %5733 = vmatpush1.msra.mxu0 0.0
    %5734 = vmatprep.subr.mxu0 0.0
    %5735 = vmatpush1.msra.mxu0 0.0
    %5736 = vmatprep.subr.mxu0 0.0
    %5737 = vmatpush1.msra.mxu0 0.0
    %5738 = vmatprep.subr.mxu0 0.0
    %5739 = vmatpush1.msra.mxu0 0.0
    %5740 = vmatprep.subr.mxu0 0.0
    %5741 = vmatpush1.msra.mxu0 0.0
    %5742 = vmatprep.subr.mxu0 0.0
    %5743 = vmatpush1.msra.mxu0 0.0
    %5744 = vmatprep.subr.mxu0 0.0
    %5745 = vmatpush1.msra.mxu0 0.0
    %5746 = vmatprep.subr.mxu0 0.0
    %5747 = vmatpush1.msra.mxu0 0.0
    %5748 = vmatprep.subr.mxu0 0.0
    %5749 = vmatpush1.msra.mxu0 0.0
    %5750 = vmatprep.subr.mxu0 0.0
    %5751 = vmatpush1.msra.mxu0 0.0
    %5752 = vmatprep.subr.mxu0 0.0
    %5753 = vmatpush1.msra.mxu0 0.0
    %5754 = vmatprep.subr.mxu0 0.0
    %5755 = vmatpush1.msra.mxu0 0.0
    %5756 = vmatprep.subr.mxu0 0.0
    %5757 = vmatpush1.msra.mxu0 0.0
    %5758 = vmatprep.subr.mxu0 0.0
    %5759 = vmatpush1.msra.mxu0 0.0
    %5760 = vmatprep.subr.mxu0 0.0
    %5761 = vmatpush1.msra.mxu0 0.0
    %5762 = vmatprep.mubr.f32.mxu0 0.0
    %5763 = vmatmul.mubr.f32.gmra.mrb[0].mxu0 %v5338
    %v5764 = vpop.f32.mrb[0].mxu0
    %v5765 = vadd.f32 %v4427, %v5764
    %v5766 = vpop.f32.mrb[0].mxu0
    %v5767 = vadd.f32 %v4431, %v5766
    %5768 = vdwg.mxu0
    %5769 = vmatprep.subr.mxu0 0.0
    %5770 = vmatpush1.msra.mxu0 %v4376
    %5771 = vmatprep.subr.mxu0 0.0
    %5772 = vmatpush1.msra.mxu0 %v4379
    %5773 = vmatprep.subr.mxu0 0.0
    %5774 = vmatpush1.msra.mxu0 %v4382
    %5775 = vmatprep.subr.mxu0 0.0
    %5776 = vmatpush1.msra.mxu0 %v4385
    %5777 = vmatprep.subr.mxu0 0.0
    %5778 = vmatpush1.msra.mxu0 %v4388
    %5779 = vmatprep.subr.mxu0 0.0
    %5780 = vmatpush1.msra.mxu0 %v4391
    %5781 = vmatprep.subr.mxu0 0.0
    %5782 = vmatpush1.msra.mxu0 %v4394
    %5783 = vmatprep.subr.mxu0 0.0
    %5784 = vmatpush1.msra.mxu0 %v4397
    %5785 = vmatprep.subr.mxu0 0.0
    %5786 = vmatpush1.msra.mxu0 %v4400
    %5787 = vmatprep.subr.mxu0 0.0
    %5788 = vmatpush1.msra.mxu0 %v4403
    %5789 = vmatprep.subr.mxu0 0.0
    %5790 = vmatpush1.msra.mxu0 %v4406
    %5791 = vmatprep.subr.mxu0 0.0
    %5792 = vmatpush1.msra.mxu0 %v4409
    %5793 = vmatprep.subr.mxu0 0.0
    %5794 = vmatpush1.msra.mxu0 %v4412
    %5795 = vmatprep.subr.mxu0 0.0
    %5796 = vmatpush1.msra.mxu0 %v4415
    %5797 = vmatprep.subr.mxu0 0.0
    %5798 = vmatpush1.msra.mxu0 %v4418
    %5799 = vmatprep.subr.mxu0 0.0
    %5800 = vmatpush1.msra.mxu0 %v4421
    %5801 = vmatprep.subr.mxu0 0.0
    %5802 = vmatpush1.msra.mxu0 0.0
    %5803 = vmatprep.subr.mxu0 0.0
    %5804 = vmatpush1.msra.mxu0 0.0
    %5805 = vmatprep.subr.mxu0 0.0
    %5806 = vmatpush1.msra.mxu0 0.0
    %5807 = vmatprep.subr.mxu0 0.0
    %5808 = vmatpush1.msra.mxu0 0.0
    %5809 = vmatprep.subr.mxu0 0.0
    %5810 = vmatpush1.msra.mxu0 0.0
    %5811 = vmatprep.subr.mxu0 0.0
    %5812 = vmatpush1.msra.mxu0 0.0
    %5813 = vmatprep.subr.mxu0 0.0
    %5814 = vmatpush1.msra.mxu0 0.0
    %5815 = vmatprep.subr.mxu0 0.0
    %5816 = vmatpush1.msra.mxu0 0.0
    %5817 = vmatprep.subr.mxu0 0.0
    %5818 = vmatpush1.msra.mxu0 0.0
    %5819 = vmatprep.subr.mxu0 0.0
    %5820 = vmatpush1.msra.mxu0 0.0
    %5821 = vmatprep.subr.mxu0 0.0
    %5822 = vmatpush1.msra.mxu0 0.0
    %5823 = vmatprep.subr.mxu0 0.0
    %5824 = vmatpush1.msra.mxu0 0.0
    %5825 = vmatprep.subr.mxu0 0.0
    %5826 = vmatpush1.msra.mxu0 0.0
    %5827 = vmatprep.subr.mxu0 0.0
    %5828 = vmatpush1.msra.mxu0 0.0
    %5829 = vmatprep.subr.mxu0 0.0
    %5830 = vmatpush1.msra.mxu0 0.0
    %5831 = vmatprep.subr.mxu0 0.0
    %5832 = vmatpush1.msra.mxu0 0.0
    %5833 = vmatprep.mubr.f32.mxu0 0.0
    %5834 = vmatmul.mubr.f32.gmra.mrb[0].mxu0 %v5338
    %v5835 = vpop.f32.mrb[0].mxu0
    %v5836 = vadd.f32 %v4435, %v5835
    %v5837 = vpop.f32.mrb[0].mxu0
    %5838 = vdwg.mxu0
    %v5839 = vadd.f32 %v5695, %v5765
    %v5840 = vxor.u32 %v5839, 2147483648
    %v5841 = vmul.f32 %v5840, 1.442695
    %v5842 = vpow.pop %v5841
    %v5843 = vadd.f32 %v5842, 1.0
    %v5844 = vrcp.pop %v5843
    %v5845 = vmul.f32 1.0, %v5844
    %v5846 = vadd.f32 %v5696, %v5767
    %v5847 = vxor.u32 %v5846, 2147483648
    %v5848 = vmul.f32 %v5847, 1.442695
    %v5849 = vpow.pop %v5848
    %v5850 = vadd.f32 %v5849, 1.0
    %v5851 = vrcp.pop %v5850
    %v5852 = vmul.f32 1.0, %v5851
    %v5853 = vmul.f32 %v5845, %v5836
    %v5854 = vadd.f32 %v5697, %v5853
    %v5855 = vtanh.pop %v5854
    %v5856 = vsub.f32 1.0, %v5852
    %v5857 = vmul.f32 %v5856, %v5855
    %v5858 = vmul.f32 %v5852, %v5338
    %v5859 = vadd.f32 %v5857, %v5858
    %5860 = vmatprep.subr.mxu0 0.0
    %5861 = vmatpush1.msra.mxu0 %v4439
    %5862 = vmatprep.subr.mxu0 0.0
    %5863 = vmatpush1.msra.mxu0 %v4440
    %5864 = vmatprep.subr.mxu0 0.0
    %5865 = vmatpush1.msra.mxu0 %v4441
    %5866 = vmatprep.subr.mxu0 0.0
    %5867 = vmatpush1.msra.mxu0 %v4442
    %5868 = vmatprep.subr.mxu0 0.0
    %5869 = vmatpush1.msra.mxu0 %v4443
    %5870 = vmatprep.subr.mxu0 0.0
    %5871 = vmatpush1.msra.mxu0 %v4444
    %5872 = vmatprep.subr.mxu0 0.0
    %5873 = vmatpush1.msra.mxu0 %v4445
    %5874 = vmatprep.subr.mxu0 0.0
    %5875 = vmatpush1.msra.mxu0 %v4446
    %5876 = vmatprep.subr.mxu0 0.0
    %5877 = vmatpush1.msra.mxu0 %v4447
    %5878 = vmatprep.subr.mxu0 0.0
    %5879 = vmatpush1.msra.mxu0 %v4448
    %5880 = vmatprep.subr.mxu0 0.0
    %5881 = vmatpush1.msra.mxu0 %v4449
    %5882 = vmatprep.subr.mxu0 0.0
    %5883 = vmatpush1.msra.mxu0 %v4450
    %5884 = vmatprep.subr.mxu0 0.0
    %5885 = vmatpush1.msra.mxu0 %v4451
    %5886 = vmatprep.subr.mxu0 0.0
    %5887 = vmatpush1.msra.mxu0 %v4452
    %5888 = vmatprep.subr.mxu0 0.0
    %5889 = vmatpush1.msra.mxu0 %v4453
    %5890 = vmatprep.subr.mxu0 0.0
    %5891 = vmatpush1.msra.mxu0 %v4454
    %5892 = vmatprep.subr.mxu0 0.0
    %5893 = vmatpush1.msra.mxu0 0.0
    %5894 = vmatprep.subr.mxu0 0.0
    %5895 = vmatpush1.msra.mxu0 0.0
    %5896 = vmatprep.subr.mxu0 0.0
    %5897 = vmatpush1.msra.mxu0 0.0
    %5898 = vmatprep.subr.mxu0 0.0
    %5899 = vmatpush1.msra.mxu0 0.0
    %5900 = vmatprep.subr.mxu0 0.0
    %5901 = vmatpush1.msra.mxu0 0.0
    %5902 = vmatprep.subr.mxu0 0.0
    %5903 = vmatpush1.msra.mxu0 0.0
    %5904 = vmatprep.subr.mxu0 0.0
    %5905 = vmatpush1.msra.mxu0 0.0
    %5906 = vmatprep.subr.mxu0 0.0
    %5907 = vmatpush1.msra.mxu0 0.0
    %5908 = vmatprep.subr.mxu0 0.0
    %5909 = vmatpush1.msra.mxu0 0.0
    %5910 = vmatprep.subr.mxu0 0.0
    %5911 = vmatpush1.msra.mxu0 0.0
    %5912 = vmatprep.subr.mxu0 0.0
    %5913 = vmatpush1.msra.mxu0 0.0
    %5914 = vmatprep.subr.mxu0 0.0
    %5915 = vmatpush1.msra.mxu0 0.0
    %5916 = vmatprep.subr.mxu0 0.0
    %5917 = vmatpush1.msra.mxu0 0.0
    %5918 = vmatprep.subr.mxu0 0.0
    %5919 = vmatpush1.msra.mxu0 0.0
    %5920 = vmatprep.subr.mxu0 0.0
    %5921 = vmatpush1.msra.mxu0 0.0
    %5922 = vmatprep.subr.mxu0 0.0
    %5923 = vmatpush1.msra.mxu0 0.0
    %5924 = vmatprep.mubr.f32.mxu0 0.0
    %5925 = vmatmul.mubr.f32.gmra.mrb[0].mxu0 %v5859
    %v5926 = vpop.f32.mrb[0].mxu0
    %v5927 = vadd.f32 %v4804, %v5926
    %v5928 = vpop.f32.mrb[0].mxu0
    %5929 = vdwg.mxu0
    %v5930 = vtanh.pop %v5927
    %5931 = vmatprep.subr.mxu0 0.0
    %5932 = vmatpush1.msra.mxu0 %v4456
    %5933 = vmatprep.subr.mxu0 0.0
    %5934 = vmatpush1.msra.mxu0 %v4457
    %5935 = vmatprep.subr.mxu0 0.0
    %5936 = vmatpush1.msra.mxu0 %v4458
    %5937 = vmatprep.subr.mxu0 0.0
    %5938 = vmatpush1.msra.mxu0 %v4459
    %5939 = vmatprep.subr.mxu0 0.0
    %5940 = vmatpush1.msra.mxu0 %v4460
    %5941 = vmatprep.subr.mxu0 0.0
    %5942 = vmatpush1.msra.mxu0 %v4461
    %5943 = vmatprep.subr.mxu0 0.0
    %5944 = vmatpush1.msra.mxu0 %v4462
    %5945 = vmatprep.subr.mxu0 0.0
    %5946 = vmatpush1.msra.mxu0 %v4463
    %5947 = vmatprep.subr.mxu0 0.0
    %5948 = vmatpush1.msra.mxu0 %v4464
    %5949 = vmatprep.subr.mxu0 0.0
    %5950 = vmatpush1.msra.mxu0 %v4465
    %5951 = vmatprep.subr.mxu0 0.0
    %5952 = vmatpush1.msra.mxu0 %v4466
    %5953 = vmatprep.subr.mxu0 0.0
    %5954 = vmatpush1.msra.mxu0 %v4467
    %5955 = vmatprep.subr.mxu0 0.0
    %5956 = vmatpush1.msra.mxu0 %v4468
    %5957 = vmatprep.subr.mxu0 0.0
    %5958 = vmatpush1.msra.mxu0 %v4469
    %5959 = vmatprep.subr.mxu0 0.0
    %5960 = vmatpush1.msra.mxu0 %v4470
    %5961 = vmatprep.subr.mxu0 0.0
    %5962 = vmatpush1.msra.mxu0 %v4471
    %5963 = vmatprep.subr.mxu0 0.0
    %5964 = vmatpush1.msra.mxu0 0.0
    %5965 = vmatprep.subr.mxu0 0.0
    %5966 = vmatpush1.msra.mxu0 0.0
    %5967 = vmatprep.subr.mxu0 0.0
    %5968 = vmatpush1.msra.mxu0 0.0
    %5969 = vmatprep.subr.mxu0 0.0
    %5970 = vmatpush1.msra.mxu0 0.0
    %5971 = vmatprep.subr.mxu0 0.0
    %5972 = vmatpush1.msra.mxu0 0.0
    %5973 = vmatprep.subr.mxu0 0.0
    %5974 = vmatpush1.msra.mxu0 0.0
    %5975 = vmatprep.subr.mxu0 0.0
    %5976 = vmatpush1.msra.mxu0 0.0
    %5977 = vmatprep.subr.mxu0 0.0
    %5978 = vmatpush1.msra.mxu0 0.0
    %5979 = vmatprep.subr.mxu0 0.0
    %5980 = vmatpush1.msra.mxu0 0.0
    %5981 = vmatprep.subr.mxu0 0.0
    %5982 = vmatpush1.msra.mxu0 0.0
    %5983 = vmatprep.subr.mxu0 0.0
    %5984 = vmatpush1.msra.mxu0 0.0
    %5985 = vmatprep.subr.mxu0 0.0
    %5986 = vmatpush1.msra.mxu0 0.0
    %5987 = vmatprep.subr.mxu0 0.0
    %5988 = vmatpush1.msra.mxu0 0.0
    %5989 = vmatprep.subr.mxu0 0.0
    %5990 = vmatpush1.msra.mxu0 0.0
    %5991 = vmatprep.subr.mxu0 0.0
    %5992 = vmatpush1.msra.mxu0 0.0
    %5993 = vmatprep.subr.mxu0 0.0
    %5994 = vmatpush1.msra.mxu0 0.0
    %5995 = vmatprep.mubr.f32.mxu0 0.0
    %5996 = vmatmul.mubr.f32.gmra.mrb[0].mxu0 %v5930
    %v5997 = vpop.f32.mrb[0].mxu0
    %v5998 = vadd.f32 %v4881, %v5997
    %v5999 = vpop.f32.mrb[0].mxu0
    %6000 = vdwg.mxu0
    %v6001 = vtanh.pop %v5998
    %6002 = vmatprep.subr.mxu0 0.0
    %6003 = vmatpush1.msra.mxu0 %v4473
    %6004 = vmatprep.subr.mxu0 0.0
    %6005 = vmatpush1.msra.mxu0 %v4474
    %6006 = vmatprep.subr.mxu0 0.0
    %6007 = vmatpush1.msra.mxu0 %v4475
    %6008 = vmatprep.subr.mxu0 0.0
    %6009 = vmatpush1.msra.mxu0 %v4476
    %6010 = vmatprep.subr.mxu0 0.0
    %6011 = vmatpush1.msra.mxu0 %v4477
    %6012 = vmatprep.subr.mxu0 0.0
    %6013 = vmatpush1.msra.mxu0 %v4478
    %6014 = vmatprep.subr.mxu0 0.0
    %6015 = vmatpush1.msra.mxu0 %v4479
    %6016 = vmatprep.subr.mxu0 0.0
    %6017 = vmatpush1.msra.mxu0 %v4480
    %6018 = vmatprep.subr.mxu0 0.0
    %6019 = vmatpush1.msra.mxu0 %v4481
    %6020 = vmatprep.subr.mxu0 0.0
    %6021 = vmatpush1.msra.mxu0 %v4482
    %6022 = vmatprep.subr.mxu0 0.0
    %6023 = vmatpush1.msra.mxu0 %v4483
    %6024 = vmatprep.subr.mxu0 0.0
    %6025 = vmatpush1.msra.mxu0 %v4484
    %6026 = vmatprep.subr.mxu0 0.0
    %6027 = vmatpush1.msra.mxu0 %v4485
    %6028 = vmatprep.subr.mxu0 0.0
    %6029 = vmatpush1.msra.mxu0 %v4486
    %6030 = vmatprep.subr.mxu0 0.0
    %6031 = vmatpush1.msra.mxu0 %v4487
    %6032 = vmatprep.subr.mxu0 0.0
    %6033 = vmatpush1.msra.mxu0 %v4488
    %6034 = vmatprep.subr.mxu0 0.0
    %6035 = vmatpush1.msra.mxu0 0.0
    %6036 = vmatprep.subr.mxu0 0.0
    %6037 = vmatpush1.msra.mxu0 0.0
    %6038 = vmatprep.subr.mxu0 0.0
    %6039 = vmatpush1.msra.mxu0 0.0
    %6040 = vmatprep.subr.mxu0 0.0
    %6041 = vmatpush1.msra.mxu0 0.0
    %6042 = vmatprep.subr.mxu0 0.0
    %6043 = vmatpush1.msra.mxu0 0.0
    %6044 = vmatprep.subr.mxu0 0.0
    %6045 = vmatpush1.msra.mxu0 0.0
    %6046 = vmatprep.subr.mxu0 0.0
    %6047 = vmatpush1.msra.mxu0 0.0
    %6048 = vmatprep.subr.mxu0 0.0
    %6049 = vmatpush1.msra.mxu0 0.0
    %6050 = vmatprep.subr.mxu0 0.0
    %6051 = vmatpush1.msra.mxu0 0.0
    %6052 = vmatprep.subr.mxu0 0.0
    %6053 = vmatpush1.msra.mxu0 0.0
    %6054 = vmatprep.subr.mxu0 0.0
    %6055 = vmatpush1.msra.mxu0 0.0
    %6056 = vmatprep.subr.mxu0 0.0
    %6057 = vmatpush1.msra.mxu0 0.0
    %6058 = vmatprep.subr.mxu0 0.0
    %6059 = vmatpush1.msra.mxu0 0.0
    %6060 = vmatprep.subr.mxu0 0.0
    %6061 = vmatpush1.msra.mxu0 0.0
    %6062 = vmatprep.subr.mxu0 0.0
    %6063 = vmatpush1.msra.mxu0 0.0
    %6064 = vmatprep.subr.mxu0 0.0
    %6065 = vmatpush1.msra.mxu0 0.0
    %6066 = vmatprep.mubr.f32.mxu0 0.0
    %6067 = vmatmul.mubr.f32.gmra.mrb[0].mxu0 %v6001
    %v6068 = vpop.f32.mrb[0].mxu0
    %v6069 = vadd.f32 %v4958, %v6068
    %v6070 = vpop.f32.mrb[0].mxu0
    %6071 = vdwg.mxu0
    %v6073 = vsel %vm395, %v6069, 0
    %6075 = vmatprep.subr.mxu0 %v4369
    %6076 = vmatpush1.msra.mxu0 %v4368
    %6077 = vmatprep.subr.mxu0 %v4372
    %6078 = vmatpush1.msra.mxu0 %v4371
    %6079 = vmatprep.subr.mxu0 0.0
    %6080 = vmatpush1.msra.mxu0 0.0
    %6081 = vmatprep.subr.mxu0 0.0
    %6082 = vmatpush1.msra.mxu0 0.0
    %6083 = vmatprep.subr.mxu0 0.0
    %6084 = vmatpush1.msra.mxu0 0.0
    %6085 = vmatprep.subr.mxu0 0.0
    %6086 = vmatpush1.msra.mxu0 0.0
    %6087 = vmatprep.subr.mxu0 0.0
    %6088 = vmatpush1.msra.mxu0 0.0
    %6089 = vmatprep.subr.mxu0 0.0
    %6090 = vmatpush1.msra.mxu0 0.0
    %6091 = vmatprep.subr.mxu0 0.0
    %6092 = vmatpush1.msra.mxu0 0.0
    %6093 = vmatprep.subr.mxu0 0.0
    %6094 = vmatpush1.msra.mxu0 0.0
    %6095 = vmatprep.subr.mxu0 0.0
    %6096 = vmatpush1.msra.mxu0 0.0
    %6097 = vmatprep.subr.mxu0 0.0
    %6098 = vmatpush1.msra.mxu0 0.0
    %6099 = vmatprep.subr.mxu0 0.0
    %6100 = vmatpush1.msra.mxu0 0.0
    %6101 = vmatprep.subr.mxu0 0.0
    %6102 = vmatpush1.msra.mxu0 0.0
    %6103 = vmatprep.subr.mxu0 0.0
    %6104 = vmatpush1.msra.mxu0 0.0
    %6105 = vmatprep.subr.mxu0 0.0
    %6106 = vmatpush1.msra.mxu0 0.0
    %6107 = vmatprep.subr.mxu0 0.0
    %6108 = vmatpush1.msra.mxu0 0.0
    %6109 = vmatprep.subr.mxu0 0.0
    %6110 = vmatpush1.msra.mxu0 0.0
    %6111 = vmatprep.subr.mxu0 0.0
    %6112 = vmatpush1.msra.mxu0 0.0
    %6113 = vmatprep.subr.mxu0 0.0
    %6114 = vmatpush1.msra.mxu0 0.0
    %6115 = vmatprep.subr.mxu0 0.0
    %6116 = vmatpush1.msra.mxu0 0.0
    %6117 = vmatprep.subr.mxu0 0.0
    %6118 = vmatpush1.msra.mxu0 0.0
    %6119 = vmatprep.subr.mxu0 0.0
    %6120 = vmatpush1.msra.mxu0 0.0
    %6121 = vmatprep.subr.mxu0 0.0
    %6122 = vmatpush1.msra.mxu0 0.0
    %6123 = vmatprep.subr.mxu0 0.0
    %6124 = vmatpush1.msra.mxu0 0.0
    %6125 = vmatprep.subr.mxu0 0.0
    %6126 = vmatpush1.msra.mxu0 0.0
    %6127 = vmatprep.subr.mxu0 0.0
    %6128 = vmatpush1.msra.mxu0 0.0
    %6129 = vmatprep.subr.mxu0 0.0
    %6130 = vmatpush1.msra.mxu0 0.0
    %6131 = vmatprep.subr.mxu0 0.0
    %6132 = vmatpush1.msra.mxu0 0.0
    %6133 = vmatprep.subr.mxu0 0.0
    %6134 = vmatpush1.msra.mxu0 0.0
    %6135 = vmatprep.subr.mxu0 0.0
    %6136 = vmatpush1.msra.mxu0 0.0
    %6137 = vmatprep.subr.mxu0 0.0
    %6138 = vmatpush1.msra.mxu0 0.0
    %6139 = vmatprep.mubr.f32.mxu0 0.0
    %6140 = vmatmul.mubr.f32.gmra.mrb[0].mxu0 %v6073
    %v6141 = vpop.f32.mrb[0].mxu0
    %v6142 = vadd.f32 0.0, %v6141
    %v6143 = vpop.f32.mrb[0].mxu0
    %v6144 = vadd.f32 0.0, %v6143
    %6145 = vdwg.mxu0
    %6146 = vmatprep.subr.mxu0 0.0
    %6147 = vmatpush1.msra.mxu0 %v4370
    %6148 = vmatprep.subr.mxu0 0.0
    %6149 = vmatpush1.msra.mxu0 %v4373
    %6150 = vmatprep.subr.mxu0 0.0
    %6151 = vmatpush1.msra.mxu0 0.0
    %6152 = vmatprep.subr.mxu0 0.0
    %6153 = vmatpush1.msra.mxu0 0.0
    %6154 = vmatprep.subr.mxu0 0.0
    %6155 = vmatpush1.msra.mxu0 0.0
    %6156 = vmatprep.subr.mxu0 0.0
    %6157 = vmatpush1.msra.mxu0 0.0
    %6158 = vmatprep.subr.mxu0 0.0
    %6159 = vmatpush1.msra.mxu0 0.0
    %6160 = vmatprep.subr.mxu0 0.0
    %6161 = vmatpush1.msra.mxu0 0.0
    %6162 = vmatprep.subr.mxu0 0.0
    %6163 = vmatpush1.msra.mxu0 0.0
    %6164 = vmatprep.subr.mxu0 0.0
    %6165 = vmatpush1.msra.mxu0 0.0
    %6166 = vmatprep.subr.mxu0 0.0
    %6167 = vmatpush1.msra.mxu0 0.0
    %6168 = vmatprep.subr.mxu0 0.0
    %6169 = vmatpush1.msra.mxu0 0.0
    %6170 = vmatprep.subr.mxu0 0.0
    %6171 = vmatpush1.msra.mxu0 0.0
    %6172 = vmatprep.subr.mxu0 0.0
    %6173 = vmatpush1.msra.mxu0 0.0
    %6174 = vmatprep.subr.mxu0 0.0
    %6175 = vmatpush1.msra.mxu0 0.0
    %6176 = vmatprep.subr.mxu0 0.0
    %6177 = vmatpush1.msra.mxu0 0.0
    %6178 = vmatprep.subr.mxu0 0.0
    %6179 = vmatpush1.msra.mxu0 0.0
    %6180 = vmatprep.subr.mxu0 0.0
    %6181 = vmatpush1.msra.mxu0 0.0
    %6182 = vmatprep.subr.mxu0 0.0
    %6183 = vmatpush1.msra.mxu0 0.0
    %6184 = vmatprep.subr.mxu0 0.0
    %6185 = vmatpush1.msra.mxu0 0.0
    %6186 = vmatprep.subr.mxu0 0.0
    %6187 = vmatpush1.msra.mxu0 0.0
    %6188 = vmatprep.subr.mxu0 0.0
    %6189 = vmatpush1.msra.mxu0 0.0
    %6190 = vmatprep.subr.mxu0 0.0
    %6191 = vmatpush1.msra.mxu0 0.0
    %6192 = vmatprep.subr.mxu0 0.0
    %6193 = vmatpush1.msra.mxu0 0.0
    %6194 = vmatprep.subr.mxu0 0.0
    %6195 = vmatpush1.msra.mxu0 0.0
    %6196 = vmatprep.subr.mxu0 0.0
    %6197 = vmatpush1.msra.mxu0 0.0
    %6198 = vmatprep.subr.mxu0 0.0
    %6199 = vmatpush1.msra.mxu0 0.0
    %6200 = vmatprep.subr.mxu0 0.0
    %6201 = vmatpush1.msra.mxu0 0.0
    %6202 = vmatprep.subr.mxu0 0.0
    %6203 = vmatpush1.msra.mxu0 0.0
    %6204 = vmatprep.subr.mxu0 0.0
    %6205 = vmatpush1.msra.mxu0 0.0
    %6206 = vmatprep.subr.mxu0 0.0
    %6207 = vmatpush1.msra.mxu0 0.0
    %6208 = vmatprep.subr.mxu0 0.0
    %6209 = vmatpush1.msra.mxu0 0.0
    %6210 = vmatprep.mubr.f32.mxu0 0.0
    %6211 = vmatmul.mubr.f32.gmra.mrb[0].mxu0 %v6073
    %v6212 = vpop.f32.mrb[0].mxu0
    %v6213 = vadd.f32 0.0, %v6212
    %v6214 = vpop.f32.mrb[0].mxu0
    %6215 = vdwg.mxu0
    %v6216 = vadd.f32 %v4365, %v6142
    %v6217 = vadd.f32 %v4366, %v6144
    %v6218 = vadd.f32 %v4367, %v6213
    %6219 = vmatprep.subr.mxu0 %v4375
    %6220 = vmatpush1.msra.mxu0 %v4374
    %6221 = vmatprep.subr.mxu0 %v4378
    %6222 = vmatpush1.msra.mxu0 %v4377
    %6223 = vmatprep.subr.mxu0 %v4381
    %6224 = vmatpush1.msra.mxu0 %v4380
    %6225 = vmatprep.subr.mxu0 %v4384
    %6226 = vmatpush1.msra.mxu0 %v4383
    %6227 = vmatprep.subr.mxu0 %v4387
    %6228 = vmatpush1.msra.mxu0 %v4386
    %6229 = vmatprep.subr.mxu0 %v4390
    %6230 = vmatpush1.msra.mxu0 %v4389
    %6231 = vmatprep.subr.mxu0 %v4393
    %6232 = vmatpush1.msra.mxu0 %v4392
    %6233 = vmatprep.subr.mxu0 %v4396
    %6234 = vmatpush1.msra.mxu0 %v4395
    %6235 = vmatprep.subr.mxu0 %v4399
    %6236 = vmatpush1.msra.mxu0 %v4398
    %6237 = vmatprep.subr.mxu0 %v4402
    %6238 = vmatpush1.msra.mxu0 %v4401
    %6239 = vmatprep.subr.mxu0 %v4405
    %6240 = vmatpush1.msra.mxu0 %v4404
    %6241 = vmatprep.subr.mxu0 %v4408
    %6242 = vmatpush1.msra.mxu0 %v4407
    %6243 = vmatprep.subr.mxu0 %v4411
    %6244 = vmatpush1.msra.mxu0 %v4410
    %6245 = vmatprep.subr.mxu0 %v4414
    %6246 = vmatpush1.msra.mxu0 %v4413
    %6247 = vmatprep.subr.mxu0 %v4417
    %6248 = vmatpush1.msra.mxu0 %v4416
    %6249 = vmatprep.subr.mxu0 %v4420
    %6250 = vmatpush1.msra.mxu0 %v4419
    %6251 = vmatprep.subr.mxu0 0.0
    %6252 = vmatpush1.msra.mxu0 0.0
    %6253 = vmatprep.subr.mxu0 0.0
    %6254 = vmatpush1.msra.mxu0 0.0
    %6255 = vmatprep.subr.mxu0 0.0
    %6256 = vmatpush1.msra.mxu0 0.0
    %6257 = vmatprep.subr.mxu0 0.0
    %6258 = vmatpush1.msra.mxu0 0.0
    %6259 = vmatprep.subr.mxu0 0.0
    %6260 = vmatpush1.msra.mxu0 0.0
    %6261 = vmatprep.subr.mxu0 0.0
    %6262 = vmatpush1.msra.mxu0 0.0
    %6263 = vmatprep.subr.mxu0 0.0
    %6264 = vmatpush1.msra.mxu0 0.0
    %6265 = vmatprep.subr.mxu0 0.0
    %6266 = vmatpush1.msra.mxu0 0.0
    %6267 = vmatprep.subr.mxu0 0.0
    %6268 = vmatpush1.msra.mxu0 0.0
    %6269 = vmatprep.subr.mxu0 0.0
    %6270 = vmatpush1.msra.mxu0 0.0
    %6271 = vmatprep.subr.mxu0 0.0
    %6272 = vmatpush1.msra.mxu0 0.0
    %6273 = vmatprep.subr.mxu0 0.0
    %6274 = vmatpush1.msra.mxu0 0.0
    %6275 = vmatprep.subr.mxu0 0.0
    %6276 = vmatpush1.msra.mxu0 0.0
    %6277 = vmatprep.subr.mxu0 0.0
    %6278 = vmatpush1.msra.mxu0 0.0
    %6279 = vmatprep.subr.mxu0 0.0
    %6280 = vmatpush1.msra.mxu0 0.0
    %6281 = vmatprep.subr.mxu0 0.0
    %6282 = vmatpush1.msra.mxu0 0.0
    %6283 = vmatprep.mubr.f32.mxu0 0.0
    %6284 = vmatmul.mubr.f32.gmra.mrb[0].mxu0 %v5859
    %v6285 = vpop.f32.mrb[0].mxu0
    %v6286 = vadd.f32 %v4427, %v6285
    %v6287 = vpop.f32.mrb[0].mxu0
    %v6288 = vadd.f32 %v4431, %v6287
    %6289 = vdwg.mxu0
    %6290 = vmatprep.subr.mxu0 0.0
    %6291 = vmatpush1.msra.mxu0 %v4376
    %6292 = vmatprep.subr.mxu0 0.0
    %6293 = vmatpush1.msra.mxu0 %v4379
    %6294 = vmatprep.subr.mxu0 0.0
    %6295 = vmatpush1.msra.mxu0 %v4382
    %6296 = vmatprep.subr.mxu0 0.0
    %6297 = vmatpush1.msra.mxu0 %v4385
    %6298 = vmatprep.subr.mxu0 0.0
    %6299 = vmatpush1.msra.mxu0 %v4388
    %6300 = vmatprep.subr.mxu0 0.0
    %6301 = vmatpush1.msra.mxu0 %v4391
    %6302 = vmatprep.subr.mxu0 0.0
    %6303 = vmatpush1.msra.mxu0 %v4394
    %6304 = vmatprep.subr.mxu0 0.0
    %6305 = vmatpush1.msra.mxu0 %v4397
    %6306 = vmatprep.subr.mxu0 0.0
    %6307 = vmatpush1.msra.mxu0 %v4400
    %6308 = vmatprep.subr.mxu0 0.0
    %6309 = vmatpush1.msra.mxu0 %v4403
    %6310 = vmatprep.subr.mxu0 0.0
    %6311 = vmatpush1.msra.mxu0 %v4406
    %6312 = vmatprep.subr.mxu0 0.0
    %6313 = vmatpush1.msra.mxu0 %v4409
    %6314 = vmatprep.subr.mxu0 0.0
    %6315 = vmatpush1.msra.mxu0 %v4412
    %6316 = vmatprep.subr.mxu0 0.0
    %6317 = vmatpush1.msra.mxu0 %v4415
    %6318 = vmatprep.subr.mxu0 0.0
    %6319 = vmatpush1.msra.mxu0 %v4418
    %6320 = vmatprep.subr.mxu0 0.0
    %6321 = vmatpush1.msra.mxu0 %v4421
    %6322 = vmatprep.subr.mxu0 0.0
    %6323 = vmatpush1.msra.mxu0 0.0
    %6324 = vmatprep.subr.mxu0 0.0
    %6325 = vmatpush1.msra.mxu0 0.0
    %6326 = vmatprep.subr.mxu0 0.0
    %6327 = vmatpush1.msra.mxu0 0.0
    %6328 = vmatprep.subr.mxu0 0.0
    %6329 = vmatpush1.msra.mxu0 0.0
    %6330 = vmatprep.subr.mxu0 0.0
    %6331 = vmatpush1.msra.mxu0 0.0
    %6332 = vmatprep.subr.mxu0 0.0
    %6333 = vmatpush1.msra.mxu0 0.0
    %6334 = vmatprep.subr.mxu0 0.0
    %6335 = vmatpush1.msra.mxu0 0.0
    %6336 = vmatprep.subr.mxu0 0.0
    %6337 = vmatpush1.msra.mxu0 0.0
    %6338 = vmatprep.subr.mxu0 0.0
    %6339 = vmatpush1.msra.mxu0 0.0
    %6340 = vmatprep.subr.mxu0 0.0
    %6341 = vmatpush1.msra.mxu0 0.0
    %6342 = vmatprep.subr.mxu0 0.0
    %6343 = vmatpush1.msra.mxu0 0.0
    %6344 = vmatprep.subr.mxu0 0.0
    %6345 = vmatpush1.msra.mxu0 0.0
    %6346 = vmatprep.subr.mxu0 0.0
    %6347 = vmatpush1.msra.mxu0 0.0
    %6348 = vmatprep.subr.mxu0 0.0
    %6349 = vmatpush1.msra.mxu0 0.0
    %6350 = vmatprep.subr.mxu0 0.0
    %6351 = vmatpush1.msra.mxu0 0.0
    %6352 = vmatprep.subr.mxu0 0.0
    %6353 = vmatpush1.msra.mxu0 0.0
    %6354 = vmatprep.mubr.f32.mxu0 0.0
    %6355 = vmatmul.mubr.f32.gmra.mrb[0].mxu0 %v5859
    %v6356 = vpop.f32.mrb[0].mxu0
    %v6357 = vadd.f32 %v4435, %v6356
    %v6358 = vpop.f32.mrb[0].mxu0
    %6359 = vdwg.mxu0
    %v6360 = vadd.f32 %v6216, %v6286
    %v6361 = vxor.u32 %v6360, 2147483648
    %v6362 = vmul.f32 %v6361, 1.442695
    %v6363 = vpow.pop %v6362
    %v6364 = vadd.f32 %v6363, 1.0
    %v6365 = vrcp.pop %v6364
    %v6366 = vmul.f32 1.0, %v6365
    %v6367 = vadd.f32 %v6217, %v6288
    %v6368 = vxor.u32 %v6367, 2147483648
    %v6369 = vmul.f32 %v6368, 1.442695
    %v6370 = vpow.pop %v6369
    %v6371 = vadd.f32 %v6370, 1.0
    %v6372 = vrcp.pop %v6371
    %v6373 = vmul.f32 1.0, %v6372
    %v6374 = vmul.f32 %v6366, %v6357
    %v6375 = vadd.f32 %v6218, %v6374
    %v6376 = vtanh.pop %v6375
    %v6377 = vsub.f32 1.0, %v6373
    %v6378 = vmul.f32 %v6377, %v6376
    %v6379 = vmul.f32 %v6373, %v5859
    %v6380 = vadd.f32 %v6378, %v6379
    %6381 = vmatprep.subr.mxu0 0.0
    %6382 = vmatpush1.msra.mxu0 %v4439
    %6383 = vmatprep.subr.mxu0 0.0
    %6384 = vmatpush1.msra.mxu0 %v4440
    %6385 = vmatprep.subr.mxu0 0.0
    %6386 = vmatpush1.msra.mxu0 %v4441
    %6387 = vmatprep.subr.mxu0 0.0
    %6388 = vmatpush1.msra.mxu0 %v4442
    %6389 = vmatprep.subr.mxu0 0.0
    %6390 = vmatpush1.msra.mxu0 %v4443
    %6391 = vmatprep.subr.mxu0 0.0
    %6392 = vmatpush1.msra.mxu0 %v4444
    %6393 = vmatprep.subr.mxu0 0.0
    %6394 = vmatpush1.msra.mxu0 %v4445
    %6395 = vmatprep.subr.mxu0 0.0
    %6396 = vmatpush1.msra.mxu0 %v4446
    %6397 = vmatprep.subr.mxu0 0.0
    %6398 = vmatpush1.msra.mxu0 %v4447
    %6399 = vmatprep.subr.mxu0 0.0
    %6400 = vmatpush1.msra.mxu0 %v4448
    %6401 = vmatprep.subr.mxu0 0.0
    %6402 = vmatpush1.msra.mxu0 %v4449
    %6403 = vmatprep.subr.mxu0 0.0
    %6404 = vmatpush1.msra.mxu0 %v4450
    %6405 = vmatprep.subr.mxu0 0.0
    %6406 = vmatpush1.msra.mxu0 %v4451
    %6407 = vmatprep.subr.mxu0 0.0
    %6408 = vmatpush1.msra.mxu0 %v4452
    %6409 = vmatprep.subr.mxu0 0.0
    %6410 = vmatpush1.msra.mxu0 %v4453
    %6411 = vmatprep.subr.mxu0 0.0
    %6412 = vmatpush1.msra.mxu0 %v4454
    %6413 = vmatprep.subr.mxu0 0.0
    %6414 = vmatpush1.msra.mxu0 0.0
    %6415 = vmatprep.subr.mxu0 0.0
    %6416 = vmatpush1.msra.mxu0 0.0
    %6417 = vmatprep.subr.mxu0 0.0
    %6418 = vmatpush1.msra.mxu0 0.0
    %6419 = vmatprep.subr.mxu0 0.0
    %6420 = vmatpush1.msra.mxu0 0.0
    %6421 = vmatprep.subr.mxu0 0.0
    %6422 = vmatpush1.msra.mxu0 0.0
    %6423 = vmatprep.subr.mxu0 0.0
    %6424 = vmatpush1.msra.mxu0 0.0
    %6425 = vmatprep.subr.mxu0 0.0
    %6426 = vmatpush1.msra.mxu0 0.0
    %6427 = vmatprep.subr.mxu0 0.0
    %6428 = vmatpush1.msra.mxu0 0.0
    %6429 = vmatprep.subr.mxu0 0.0
    %6430 = vmatpush1.msra.mxu0 0.0
    %6431 = vmatprep.subr.mxu0 0.0
    %6432 = vmatpush1.msra.mxu0 0.0
    %6433 = vmatprep.subr.mxu0 0.0
    %6434 = vmatpush1.msra.mxu0 0.0
    %6435 = vmatprep.subr.mxu0 0.0
    %6436 = vmatpush1.msra.mxu0 0.0
    %6437 = vmatprep.subr.mxu0 0.0
    %6438 = vmatpush1.msra.mxu0 0.0
    %6439 = vmatprep.subr.mxu0 0.0
    %6440 = vmatpush1.msra.mxu0 0.0
    %6441 = vmatprep.subr.mxu0 0.0
    %6442 = vmatpush1.msra.mxu0 0.0
    %6443 = vmatprep.subr.mxu0 0.0
    %6444 = vmatpush1.msra.mxu0 0.0
    %6445 = vmatprep.mubr.f32.mxu0 0.0
    %6446 = vmatmul.mubr.f32.gmra.mrb[0].mxu0 %v6380
    %v6447 = vpop.f32.mrb[0].mxu0
    %v6448 = vadd.f32 %v4804, %v6447
    %v6449 = vpop.f32.mrb[0].mxu0
    %6450 = vdwg.mxu0
    %v6451 = vtanh.pop %v6448
    %6452 = vmatprep.subr.mxu0 0.0
    %6453 = vmatpush1.msra.mxu0 %v4456
    %6454 = vmatprep.subr.mxu0 0.0
    %6455 = vmatpush1.msra.mxu0 %v4457
    %6456 = vmatprep.subr.mxu0 0.0
    %6457 = vmatpush1.msra.mxu0 %v4458
    %6458 = vmatprep.subr.mxu0 0.0
    %6459 = vmatpush1.msra.mxu0 %v4459
    %6460 = vmatprep.subr.mxu0 0.0
    %6461 = vmatpush1.msra.mxu0 %v4460
    %6462 = vmatprep.subr.mxu0 0.0
    %6463 = vmatpush1.msra.mxu0 %v4461
    %6464 = vmatprep.subr.mxu0 0.0
    %6465 = vmatpush1.msra.mxu0 %v4462
    %6466 = vmatprep.subr.mxu0 0.0
    %6467 = vmatpush1.msra.mxu0 %v4463
    %6468 = vmatprep.subr.mxu0 0.0
    %6469 = vmatpush1.msra.mxu0 %v4464
    %6470 = vmatprep.subr.mxu0 0.0
    %6471 = vmatpush1.msra.mxu0 %v4465
    %6472 = vmatprep.subr.mxu0 0.0
    %6473 = vmatpush1.msra.mxu0 %v4466
    %6474 = vmatprep.subr.mxu0 0.0
    %6475 = vmatpush1.msra.mxu0 %v4467
    %6476 = vmatprep.subr.mxu0 0.0
    %6477 = vmatpush1.msra.mxu0 %v4468
    %6478 = vmatprep.subr.mxu0 0.0
    %6479 = vmatpush1.msra.mxu0 %v4469
    %6480 = vmatprep.subr.mxu0 0.0
    %6481 = vmatpush1.msra.mxu0 %v4470
    %6482 = vmatprep.subr.mxu0 0.0
    %6483 = vmatpush1.msra.mxu0 %v4471
    %6484 = vmatprep.subr.mxu0 0.0
    %6485 = vmatpush1.msra.mxu0 0.0
    %6486 = vmatprep.subr.mxu0 0.0
    %6487 = vmatpush1.msra.mxu0 0.0
    %6488 = vmatprep.subr.mxu0 0.0
    %6489 = vmatpush1.msra.mxu0 0.0
    %6490 = vmatprep.subr.mxu0 0.0
    %6491 = vmatpush1.msra.mxu0 0.0
    %6492 = vmatprep.subr.mxu0 0.0
    %6493 = vmatpush1.msra.mxu0 0.0
    %6494 = vmatprep.subr.mxu0 0.0
    %6495 = vmatpush1.msra.mxu0 0.0
    %6496 = vmatprep.subr.mxu0 0.0
    %6497 = vmatpush1.msra.mxu0 0.0
    %6498 = vmatprep.subr.mxu0 0.0
    %6499 = vmatpush1.msra.mxu0 0.0
    %6500 = vmatprep.subr.mxu0 0.0
    %6501 = vmatpush1.msra.mxu0 0.0
    %6502 = vmatprep.subr.mxu0 0.0
    %6503 = vmatpush1.msra.mxu0 0.0
    %6504 = vmatprep.subr.mxu0 0.0
    %6505 = vmatpush1.msra.mxu0 0.0
    %6506 = vmatprep.subr.mxu0 0.0
    %6507 = vmatpush1.msra.mxu0 0.0
    %6508 = vmatprep.subr.mxu0 0.0
    %6509 = vmatpush1.msra.mxu0 0.0
    %6510 = vmatprep.subr.mxu0 0.0
    %6511 = vmatpush1.msra.mxu0 0.0
    %6512 = vmatprep.subr.mxu0 0.0
    %6513 = vmatpush1.msra.mxu0 0.0
    %6514 = vmatprep.subr.mxu0 0.0
    %6515 = vmatpush1.msra.mxu0 0.0
    %6516 = vmatprep.mubr.f32.mxu0 0.0
    %6517 = vmatmul.mubr.f32.gmra.mrb[0].mxu0 %v6451
    %v6518 = vpop.f32.mrb[0].mxu0
    %v6519 = vadd.f32 %v4881, %v6518
    %v6520 = vpop.f32.mrb[0].mxu0
    %6521 = vdwg.mxu0
    %v6522 = vtanh.pop %v6519
    %6523 = vmatprep.subr.mxu0 0.0
    %6524 = vmatpush1.msra.mxu0 %v4473
    %6525 = vmatprep.subr.mxu0 0.0
    %6526 = vmatpush1.msra.mxu0 %v4474
    %6527 = vmatprep.subr.mxu0 0.0
    %6528 = vmatpush1.msra.mxu0 %v4475
    %6529 = vmatprep.subr.mxu0 0.0
    %6530 = vmatpush1.msra.mxu0 %v4476
    %6531 = vmatprep.subr.mxu0 0.0
    %6532 = vmatpush1.msra.mxu0 %v4477
    %6533 = vmatprep.subr.mxu0 0.0
    %6534 = vmatpush1.msra.mxu0 %v4478
    %6535 = vmatprep.subr.mxu0 0.0
    %6536 = vmatpush1.msra.mxu0 %v4479
    %6537 = vmatprep.subr.mxu0 0.0
    %6538 = vmatpush1.msra.mxu0 %v4480
    %6539 = vmatprep.subr.mxu0 0.0
    %6540 = vmatpush1.msra.mxu0 %v4481
    %6541 = vmatprep.subr.mxu0 0.0
    %6542 = vmatpush1.msra.mxu0 %v4482
    %6543 = vmatprep.subr.mxu0 0.0
    %6544 = vmatpush1.msra.mxu0 %v4483
    %6545 = vmatprep.subr.mxu0 0.0
    %6546 = vmatpush1.msra.mxu0 %v4484
    %6547 = vmatprep.subr.mxu0 0.0
    %6548 = vmatpush1.msra.mxu0 %v4485
    %6549 = vmatprep.subr.mxu0 0.0
    %6550 = vmatpush1.msra.mxu0 %v4486
    %6551 = vmatprep.subr.mxu0 0.0
    %6552 = vmatpush1.msra.mxu0 %v4487
    %6553 = vmatprep.subr.mxu0 0.0
    %6554 = vmatpush1.msra.mxu0 %v4488
    %6555 = vmatprep.subr.mxu0 0.0
    %6556 = vmatpush1.msra.mxu0 0.0
    %6557 = vmatprep.subr.mxu0 0.0
    %6558 = vmatpush1.msra.mxu0 0.0
    %6559 = vmatprep.subr.mxu0 0.0
    %6560 = vmatpush1.msra.mxu0 0.0
    %6561 = vmatprep.subr.mxu0 0.0
    %6562 = vmatpush1.msra.mxu0 0.0
    %6563 = vmatprep.subr.mxu0 0.0
    %6564 = vmatpush1.msra.mxu0 0.0
    %6565 = vmatprep.subr.mxu0 0.0
    %6566 = vmatpush1.msra.mxu0 0.0
    %6567 = vmatprep.subr.mxu0 0.0
    %6568 = vmatpush1.msra.mxu0 0.0
    %6569 = vmatprep.subr.mxu0 0.0
    %6570 = vmatpush1.msra.mxu0 0.0
    %6571 = vmatprep.subr.mxu0 0.0
    %6572 = vmatpush1.msra.mxu0 0.0
    %6573 = vmatprep.subr.mxu0 0.0
    %6574 = vmatpush1.msra.mxu0 0.0
    %6575 = vmatprep.subr.mxu0 0.0
    %6576 = vmatpush1.msra.mxu0 0.0
    %6577 = vmatprep.subr.mxu0 0.0
    %6578 = vmatpush1.msra.mxu0 0.0
    %6579 = vmatprep.subr.mxu0 0.0
    %6580 = vmatpush1.msra.mxu0 0.0
    %6581 = vmatprep.subr.mxu0 0.0
    %6582 = vmatpush1.msra.mxu0 0.0
    %6583 = vmatprep.subr.mxu0 0.0
    %6584 = vmatpush1.msra.mxu0 0.0
    %6585 = vmatprep.subr.mxu0 0.0
    %6586 = vmatpush1.msra.mxu0 0.0
    %6587 = vmatprep.mubr.f32.mxu0 0.0
    %6588 = vmatmul.mubr.f32.gmra.mrb[0].mxu0 %v6522
    %v6589 = vpop.f32.mrb[0].mxu0
    %v6590 = vadd.f32 %v4958, %v6589
    %v6591 = vpop.f32.mrb[0].mxu0
    %6592 = vdwg.mxu0
    %v6594 = vsel %vm395, %v6590, 0
    %6596 = vmatprep.subr.mxu0 %v4369
    %6597 = vmatpush1.msra.mxu0 %v4368
    %6598 = vmatprep.subr.mxu0 %v4372
    %6599 = vmatpush1.msra.mxu0 %v4371
    %6600 = vmatprep.subr.mxu0 0.0
    %6601 = vmatpush1.msra.mxu0 0.0
    %6602 = vmatprep.subr.mxu0 0.0
    %6603 = vmatpush1.msra.mxu0 0.0
    %6604 = vmatprep.subr.mxu0 0.0
    %6605 = vmatpush1.msra.mxu0 0.0
    %6606 = vmatprep.subr.mxu0 0.0
    %6607 = vmatpush1.msra.mxu0 0.0
    %6608 = vmatprep.subr.mxu0 0.0
    %6609 = vmatpush1.msra.mxu0 0.0
    %6610 = vmatprep.subr.mxu0 0.0
    %6611 = vmatpush1.msra.mxu0 0.0
    %6612 = vmatprep.subr.mxu0 0.0
    %6613 = vmatpush1.msra.mxu0 0.0
    %6614 = vmatprep.subr.mxu0 0.0
    %6615 = vmatpush1.msra.mxu0 0.0
    %6616 = vmatprep.subr.mxu0 0.0
    %6617 = vmatpush1.msra.mxu0 0.0
    %6618 = vmatprep.subr.mxu0 0.0
    %6619 = vmatpush1.msra.mxu0 0.0
    %6620 = vmatprep.subr.mxu0 0.0
    %6621 = vmatpush1.msra.mxu0 0.0
    %6622 = vmatprep.subr.mxu0 0.0
    %6623 = vmatpush1.msra.mxu0 0.0
    %6624 = vmatprep.subr.mxu0 0.0
    %6625 = vmatpush1.msra.mxu0 0.0
    %6626 = vmatprep.subr.mxu0 0.0
    %6627 = vmatpush1.msra.mxu0 0.0
    %6628 = vmatprep.subr.mxu0 0.0
    %6629 = vmatpush1.msra.mxu0 0.0
    %6630 = vmatprep.subr.mxu0 0.0
    %6631 = vmatpush1.msra.mxu0 0.0
    %6632 = vmatprep.subr.mxu0 0.0
    %6633 = vmatpush1.msra.mxu0 0.0
    %6634 = vmatprep.subr.mxu0 0.0
    %6635 = vmatpush1.msra.mxu0 0.0
    %6636 = vmatprep.subr.mxu0 0.0
    %6637 = vmatpush1.msra.mxu0 0.0
    %6638 = vmatprep.subr.mxu0 0.0
    %6639 = vmatpush1.msra.mxu0 0.0
    %6640 = vmatprep.subr.mxu0 0.0
    %6641 = vmatpush1.msra.mxu0 0.0
    %6642 = vmatprep.subr.mxu0 0.0
    %6643 = vmatpush1.msra.mxu0 0.0
    %6644 = vmatprep.subr.mxu0 0.0
    %6645 = vmatpush1.msra.mxu0 0.0
    %6646 = vmatprep.subr.mxu0 0.0
    %6647 = vmatpush1.msra.mxu0 0.0
    %6648 = vmatprep.subr.mxu0 0.0
    %6649 = vmatpush1.msra.mxu0 0.0
    %6650 = vmatprep.subr.mxu0 0.0
    %6651 = vmatpush1.msra.mxu0 0.0
    %6652 = vmatprep.subr.mxu0 0.0
    %6653 = vmatpush1.msra.mxu0 0.0
    %6654 = vmatprep.subr.mxu0 0.0
    %6655 = vmatpush1.msra.mxu0 0.0
    %6656 = vmatprep.subr.mxu0 0.0
    %6657 = vmatpush1.msra.mxu0 0.0
    %6658 = vmatprep.subr.mxu0 0.0
    %6659 = vmatpush1.msra.mxu0 0.0
    %6660 = vmatprep.mubr.f32.mxu0 0.0
    %6661 = vmatmul.mubr.f32.gmra.mrb[0].mxu0 %v6594
    %v6662 = vpop.f32.mrb[0].mxu0
    %v6663 = vadd.f32 0.0, %v6662
    %v6664 = vpop.f32.mrb[0].mxu0
    %v6665 = vadd.f32 0.0, %v6664
    %6666 = vdwg.mxu0
    %6667 = vmatprep.subr.mxu0 0.0
    %6668 = vmatpush1.msra.mxu0 %v4370
    %6669 = vmatprep.subr.mxu0 0.0
    %6670 = vmatpush1.msra.mxu0 %v4373
    %6671 = vmatprep.subr.mxu0 0.0
    %6672 = vmatpush1.msra.mxu0 0.0
    %6673 = vmatprep.subr.mxu0 0.0
    %6674 = vmatpush1.msra.mxu0 0.0
    %6675 = vmatprep.subr.mxu0 0.0
    %6676 = vmatpush1.msra.mxu0 0.0
    %6677 = vmatprep.subr.mxu0 0.0
    %6678 = vmatpush1.msra.mxu0 0.0
    %6679 = vmatprep.subr.mxu0 0.0
    %6680 = vmatpush1.msra.mxu0 0.0
    %6681 = vmatprep.subr.mxu0 0.0
    %6682 = vmatpush1.msra.mxu0 0.0
    %6683 = vmatprep.subr.mxu0 0.0
    %6684 = vmatpush1.msra.mxu0 0.0
    %6685 = vmatprep.subr.mxu0 0.0
    %6686 = vmatpush1.msra.mxu0 0.0
    %6687 = vmatprep.subr.mxu0 0.0
    %6688 = vmatpush1.msra.mxu0 0.0
    %6689 = vmatprep.subr.mxu0 0.0
    %6690 = vmatpush1.msra.mxu0 0.0
    %6691 = vmatprep.subr.mxu0 0.0
    %6692 = vmatpush1.msra.mxu0 0.0
    %6693 = vmatprep.subr.mxu0 0.0
    %6694 = vmatpush1.msra.mxu0 0.0
    %6695 = vmatprep.subr.mxu0 0.0
    %6696 = vmatpush1.msra.mxu0 0.0
    %6697 = vmatprep.subr.mxu0 0.0
    %6698 = vmatpush1.msra.mxu0 0.0
    %6699 = vmatprep.subr.mxu0 0.0
    %6700 = vmatpush1.msra.mxu0 0.0
    %6701 = vmatprep.subr.mxu0 0.0
    %6702 = vmatpush1.msra.mxu0 0.0
    %6703 = vmatprep.subr.mxu0 0.0
    %6704 = vmatpush1.msra.mxu0 0.0
    %6705 = vmatprep.subr.mxu0 0.0
    %6706 = vmatpush1.msra.mxu0 0.0
    %6707 = vmatprep.subr.mxu0 0.0
    %6708 = vmatpush1.msra.mxu0 0.0
    %6709 = vmatprep.subr.mxu0 0.0
    %6710 = vmatpush1.msra.mxu0 0.0
    %6711 = vmatprep.subr.mxu0 0.0
    %6712 = vmatpush1.msra.mxu0 0.0
    %6713 = vmatprep.subr.mxu0 0.0
    %6714 = vmatpush1.msra.mxu0 0.0
    %6715 = vmatprep.subr.mxu0 0.0
    %6716 = vmatpush1.msra.mxu0 0.0
    %6717 = vmatprep.subr.mxu0 0.0
    %6718 = vmatpush1.msra.mxu0 0.0
    %6719 = vmatprep.subr.mxu0 0.0
    %6720 = vmatpush1.msra.mxu0 0.0
    %6721 = vmatprep.subr.mxu0 0.0
    %6722 = vmatpush1.msra.mxu0 0.0
    %6723 = vmatprep.subr.mxu0 0.0
    %6724 = vmatpush1.msra.mxu0 0.0
    %6725 = vmatprep.subr.mxu0 0.0
    %6726 = vmatpush1.msra.mxu0 0.0
    %6727 = vmatprep.subr.mxu0 0.0
    %6728 = vmatpush1.msra.mxu0 0.0
    %6729 = vmatprep.subr.mxu0 0.0
    %6730 = vmatpush1.msra.mxu0 0.0
    %6731 = vmatprep.mubr.f32.mxu0 0.0
    %6732 = vmatmul.mubr.f32.gmra.mrb[0].mxu0 %v6594
    %v6733 = vpop.f32.mrb[0].mxu0
    %v6734 = vadd.f32 0.0, %v6733
    %v6735 = vpop.f32.mrb[0].mxu0
    %6736 = vdwg.mxu0
    %v6737 = vadd.f32 %v4365, %v6663
    %v6738 = vadd.f32 %v4366, %v6665
    %v6739 = vadd.f32 %v4367, %v6734
    %6740 = vmatprep.subr.mxu0 %v4375
    %6741 = vmatpush1.msra.mxu0 %v4374
    %6742 = vmatprep.subr.mxu0 %v4378
    %6743 = vmatpush1.msra.mxu0 %v4377
    %6744 = vmatprep.subr.mxu0 %v4381
    %6745 = vmatpush1.msra.mxu0 %v4380
    %6746 = vmatprep.subr.mxu0 %v4384
    %6747 = vmatpush1.msra.mxu0 %v4383
    %6748 = vmatprep.subr.mxu0 %v4387
    %6749 = vmatpush1.msra.mxu0 %v4386
    %6750 = vmatprep.subr.mxu0 %v4390
    %6751 = vmatpush1.msra.mxu0 %v4389
    %6752 = vmatprep.subr.mxu0 %v4393
    %6753 = vmatpush1.msra.mxu0 %v4392
    %6754 = vmatprep.subr.mxu0 %v4396
    %6755 = vmatpush1.msra.mxu0 %v4395
    %6756 = vmatprep.subr.mxu0 %v4399
    %6757 = vmatpush1.msra.mxu0 %v4398
    %6758 = vmatprep.subr.mxu0 %v4402
    %6759 = vmatpush1.msra.mxu0 %v4401
    %6760 = vmatprep.subr.mxu0 %v4405
    %6761 = vmatpush1.msra.mxu0 %v4404
    %6762 = vmatprep.subr.mxu0 %v4408
    %6763 = vmatpush1.msra.mxu0 %v4407
    %6764 = vmatprep.subr.mxu0 %v4411
    %6765 = vmatpush1.msra.mxu0 %v4410
    %6766 = vmatprep.subr.mxu0 %v4414
    %6767 = vmatpush1.msra.mxu0 %v4413
    %6768 = vmatprep.subr.mxu0 %v4417
    %6769 = vmatpush1.msra.mxu0 %v4416
    %6770 = vmatprep.subr.mxu0 %v4420
    %6771 = vmatpush1.msra.mxu0 %v4419
    %6772 = vmatprep.subr.mxu0 0.0
    %6773 = vmatpush1.msra.mxu0 0.0
    %6774 = vmatprep.subr.mxu0 0.0
    %6775 = vmatpush1.msra.mxu0 0.0
    %6776 = vmatprep.subr.mxu0 0.0
    %6777 = vmatpush1.msra.mxu0 0.0
    %6778 = vmatprep.subr.mxu0 0.0
    %6779 = vmatpush1.msra.mxu0 0.0
    %6780 = vmatprep.subr.mxu0 0.0
    %6781 = vmatpush1.msra.mxu0 0.0
    %6782 = vmatprep.subr.mxu0 0.0
    %6783 = vmatpush1.msra.mxu0 0.0
    %6784 = vmatprep.subr.mxu0 0.0
    %6785 = vmatpush1.msra.mxu0 0.0
    %6786 = vmatprep.subr.mxu0 0.0
    %6787 = vmatpush1.msra.mxu0 0.0
    %6788 = vmatprep.subr.mxu0 0.0
    %6789 = vmatpush1.msra.mxu0 0.0
    %6790 = vmatprep.subr.mxu0 0.0
    %6791 = vmatpush1.msra.mxu0 0.0
    %6792 = vmatprep.subr.mxu0 0.0
    %6793 = vmatpush1.msra.mxu0 0.0
    %6794 = vmatprep.subr.mxu0 0.0
    %6795 = vmatpush1.msra.mxu0 0.0
    %6796 = vmatprep.subr.mxu0 0.0
    %6797 = vmatpush1.msra.mxu0 0.0
    %6798 = vmatprep.subr.mxu0 0.0
    %6799 = vmatpush1.msra.mxu0 0.0
    %6800 = vmatprep.subr.mxu0 0.0
    %6801 = vmatpush1.msra.mxu0 0.0
    %6802 = vmatprep.subr.mxu0 0.0
    %6803 = vmatpush1.msra.mxu0 0.0
    %6804 = vmatprep.mubr.f32.mxu0 0.0
    %6805 = vmatmul.mubr.f32.gmra.mrb[0].mxu0 %v6380
    %v6806 = vpop.f32.mrb[0].mxu0
    %v6807 = vadd.f32 %v4427, %v6806
    %v6808 = vpop.f32.mrb[0].mxu0
    %v6809 = vadd.f32 %v4431, %v6808
    %6810 = vdwg.mxu0
    %6811 = vmatprep.subr.mxu0 0.0
    %6812 = vmatpush1.msra.mxu0 %v4376
    %6813 = vmatprep.subr.mxu0 0.0
    %6814 = vmatpush1.msra.mxu0 %v4379
    %6815 = vmatprep.subr.mxu0 0.0
    %6816 = vmatpush1.msra.mxu0 %v4382
    %6817 = vmatprep.subr.mxu0 0.0
    %6818 = vmatpush1.msra.mxu0 %v4385
    %6819 = vmatprep.subr.mxu0 0.0
    %6820 = vmatpush1.msra.mxu0 %v4388
    %6821 = vmatprep.subr.mxu0 0.0
    %6822 = vmatpush1.msra.mxu0 %v4391
    %6823 = vmatprep.subr.mxu0 0.0
    %6824 = vmatpush1.msra.mxu0 %v4394
    %6825 = vmatprep.subr.mxu0 0.0
    %6826 = vmatpush1.msra.mxu0 %v4397
    %6827 = vmatprep.subr.mxu0 0.0
    %6828 = vmatpush1.msra.mxu0 %v4400
    %6829 = vmatprep.subr.mxu0 0.0
    %6830 = vmatpush1.msra.mxu0 %v4403
    %6831 = vmatprep.subr.mxu0 0.0
    %6832 = vmatpush1.msra.mxu0 %v4406
    %6833 = vmatprep.subr.mxu0 0.0
    %6834 = vmatpush1.msra.mxu0 %v4409
    %6835 = vmatprep.subr.mxu0 0.0
    %6836 = vmatpush1.msra.mxu0 %v4412
    %6837 = vmatprep.subr.mxu0 0.0
    %6838 = vmatpush1.msra.mxu0 %v4415
    %6839 = vmatprep.subr.mxu0 0.0
    %6840 = vmatpush1.msra.mxu0 %v4418
    %6841 = vmatprep.subr.mxu0 0.0
    %6842 = vmatpush1.msra.mxu0 %v4421
    %6843 = vmatprep.subr.mxu0 0.0
    %6844 = vmatpush1.msra.mxu0 0.0
    %6845 = vmatprep.subr.mxu0 0.0
    %6846 = vmatpush1.msra.mxu0 0.0
    %6847 = vmatprep.subr.mxu0 0.0
    %6848 = vmatpush1.msra.mxu0 0.0
    %6849 = vmatprep.subr.mxu0 0.0
    %6850 = vmatpush1.msra.mxu0 0.0
    %6851 = vmatprep.subr.mxu0 0.0
    %6852 = vmatpush1.msra.mxu0 0.0
    %6853 = vmatprep.subr.mxu0 0.0
    %6854 = vmatpush1.msra.mxu0 0.0
    %6855 = vmatprep.subr.mxu0 0.0
    %6856 = vmatpush1.msra.mxu0 0.0
    %6857 = vmatprep.subr.mxu0 0.0
    %6858 = vmatpush1.msra.mxu0 0.0
    %6859 = vmatprep.subr.mxu0 0.0
    %6860 = vmatpush1.msra.mxu0 0.0
    %6861 = vmatprep.subr.mxu0 0.0
    %6862 = vmatpush1.msra.mxu0 0.0
    %6863 = vmatprep.subr.mxu0 0.0
    %6864 = vmatpush1.msra.mxu0 0.0
    %6865 = vmatprep.subr.mxu0 0.0
    %6866 = vmatpush1.msra.mxu0 0.0
    %6867 = vmatprep.subr.mxu0 0.0
    %6868 = vmatpush1.msra.mxu0 0.0
    %6869 = vmatprep.subr.mxu0 0.0
    %6870 = vmatpush1.msra.mxu0 0.0
    %6871 = vmatprep.subr.mxu0 0.0
    %6872 = vmatpush1.msra.mxu0 0.0
    %6873 = vmatprep.subr.mxu0 0.0
    %6874 = vmatpush1.msra.mxu0 0.0
    %6875 = vmatprep.mubr.f32.mxu0 0.0
    %6876 = vmatmul.mubr.f32.gmra.mrb[0].mxu0 %v6380
    %v6877 = vpop.f32.mrb[0].mxu0
    %v6878 = vadd.f32 %v4435, %v6877
    %v6879 = vpop.f32.mrb[0].mxu0
    %6880 = vdwg.mxu0
    %v6881 = vadd.f32 %v6737, %v6807
    %v6882 = vxor.u32 %v6881, 2147483648
    %v6883 = vmul.f32 %v6882, 1.442695
    %v6884 = vpow.pop %v6883
    %v6885 = vadd.f32 %v6884, 1.0
    %v6886 = vrcp.pop %v6885
    %v6887 = vmul.f32 1.0, %v6886
    %v6888 = vadd.f32 %v6738, %v6809
    %v6889 = vxor.u32 %v6888, 2147483648
    %v6890 = vmul.f32 %v6889, 1.442695
    %v6891 = vpow.pop %v6890
    %v6892 = vadd.f32 %v6891, 1.0
    %v6893 = vrcp.pop %v6892
    %v6894 = vmul.f32 1.0, %v6893
    %v6895 = vmul.f32 %v6887, %v6878
    %v6896 = vadd.f32 %v6739, %v6895
    %v6897 = vtanh.pop %v6896
    %v6898 = vsub.f32 1.0, %v6894
    %v6899 = vmul.f32 %v6898, %v6897
    %v6900 = vmul.f32 %v6894, %v6380
    %v6901 = vadd.f32 %v6899, %v6900
    %6902 = vmatprep.subr.mxu0 0.0
    %6903 = vmatpush1.msra.mxu0 %v4439
    %6904 = vmatprep.subr.mxu0 0.0
    %6905 = vmatpush1.msra.mxu0 %v4440
    %6906 = vmatprep.subr.mxu0 0.0
    %6907 = vmatpush1.msra.mxu0 %v4441
    %6908 = vmatprep.subr.mxu0 0.0
    %6909 = vmatpush1.msra.mxu0 %v4442
    %6910 = vmatprep.subr.mxu0 0.0
    %6911 = vmatpush1.msra.mxu0 %v4443
    %6912 = vmatprep.subr.mxu0 0.0
    %6913 = vmatpush1.msra.mxu0 %v4444
    %6914 = vmatprep.subr.mxu0 0.0
    %6915 = vmatpush1.msra.mxu0 %v4445
    %6916 = vmatprep.subr.mxu0 0.0
    %6917 = vmatpush1.msra.mxu0 %v4446
    %6918 = vmatprep.subr.mxu0 0.0
    %6919 = vmatpush1.msra.mxu0 %v4447
    %6920 = vmatprep.subr.mxu0 0.0
    %6921 = vmatpush1.msra.mxu0 %v4448
    %6922 = vmatprep.subr.mxu0 0.0
    %6923 = vmatpush1.msra.mxu0 %v4449
    %6924 = vmatprep.subr.mxu0 0.0
    %6925 = vmatpush1.msra.mxu0 %v4450
    %6926 = vmatprep.subr.mxu0 0.0
    %6927 = vmatpush1.msra.mxu0 %v4451
    %6928 = vmatprep.subr.mxu0 0.0
    %6929 = vmatpush1.msra.mxu0 %v4452
    %6930 = vmatprep.subr.mxu0 0.0
    %6931 = vmatpush1.msra.mxu0 %v4453
    %6932 = vmatprep.subr.mxu0 0.0
    %6933 = vmatpush1.msra.mxu0 %v4454
    %6934 = vmatprep.subr.mxu0 0.0
    %6935 = vmatpush1.msra.mxu0 0.0
    %6936 = vmatprep.subr.mxu0 0.0
    %6937 = vmatpush1.msra.mxu0 0.0
    %6938 = vmatprep.subr.mxu0 0.0
    %6939 = vmatpush1.msra.mxu0 0.0
    %6940 = vmatprep.subr.mxu0 0.0
    %6941 = vmatpush1.msra.mxu0 0.0
    %6942 = vmatprep.subr.mxu0 0.0
    %6943 = vmatpush1.msra.mxu0 0.0
    %6944 = vmatprep.subr.mxu0 0.0
    %6945 = vmatpush1.msra.mxu0 0.0
    %6946 = vmatprep.subr.mxu0 0.0
    %6947 = vmatpush1.msra.mxu0 0.0
    %6948 = vmatprep.subr.mxu0 0.0
    %6949 = vmatpush1.msra.mxu0 0.0
    %6950 = vmatprep.subr.mxu0 0.0
    %6951 = vmatpush1.msra.mxu0 0.0
    %6952 = vmatprep.subr.mxu0 0.0
    %6953 = vmatpush1.msra.mxu0 0.0
    %6954 = vmatprep.subr.mxu0 0.0
    %6955 = vmatpush1.msra.mxu0 0.0
    %6956 = vmatprep.subr.mxu0 0.0
    %6957 = vmatpush1.msra.mxu0 0.0
    %6958 = vmatprep.subr.mxu0 0.0
    %6959 = vmatpush1.msra.mxu0 0.0
    %6960 = vmatprep.subr.mxu0 0.0
    %6961 = vmatpush1.msra.mxu0 0.0
    %6962 = vmatprep.subr.mxu0 0.0
    %6963 = vmatpush1.msra.mxu0 0.0
    %6964 = vmatprep.subr.mxu0 0.0
    %6965 = vmatpush1.msra.mxu0 0.0
    %6966 = vmatprep.mubr.f32.mxu0 0.0
    %6967 = vmatmul.mubr.f32.gmra.mrb[0].mxu0 %v6901
    %v6968 = vpop.f32.mrb[0].mxu0
    %v6969 = vadd.f32 %v4804, %v6968
    %v6970 = vpop.f32.mrb[0].mxu0
    %6971 = vdwg.mxu0
    %v6972 = vtanh.pop %v6969
    %6973 = vmatprep.subr.mxu0 0.0
    %6974 = vmatpush1.msra.mxu0 %v4456
    %6975 = vmatprep.subr.mxu0 0.0
    %6976 = vmatpush1.msra.mxu0 %v4457
    %6977 = vmatprep.subr.mxu0 0.0
    %6978 = vmatpush1.msra.mxu0 %v4458
    %6979 = vmatprep.subr.mxu0 0.0
    %6980 = vmatpush1.msra.mxu0 %v4459
    %6981 = vmatprep.subr.mxu0 0.0
    %6982 = vmatpush1.msra.mxu0 %v4460
    %6983 = vmatprep.subr.mxu0 0.0
    %6984 = vmatpush1.msra.mxu0 %v4461
    %6985 = vmatprep.subr.mxu0 0.0
    %6986 = vmatpush1.msra.mxu0 %v4462
    %6987 = vmatprep.subr.mxu0 0.0
    %6988 = vmatpush1.msra.mxu0 %v4463
    %6989 = vmatprep.subr.mxu0 0.0
    %6990 = vmatpush1.msra.mxu0 %v4464
    %6991 = vmatprep.subr.mxu0 0.0
    %6992 = vmatpush1.msra.mxu0 %v4465
    %6993 = vmatprep.subr.mxu0 0.0
    %6994 = vmatpush1.msra.mxu0 %v4466
    %6995 = vmatprep.subr.mxu0 0.0
    %6996 = vmatpush1.msra.mxu0 %v4467
    %6997 = vmatprep.subr.mxu0 0.0
    %6998 = vmatpush1.msra.mxu0 %v4468
    %6999 = vmatprep.subr.mxu0 0.0
    %7000 = vmatpush1.msra.mxu0 %v4469
    %7001 = vmatprep.subr.mxu0 0.0
    %7002 = vmatpush1.msra.mxu0 %v4470
    %7003 = vmatprep.subr.mxu0 0.0
    %7004 = vmatpush1.msra.mxu0 %v4471
    %7005 = vmatprep.subr.mxu0 0.0
    %7006 = vmatpush1.msra.mxu0 0.0
    %7007 = vmatprep.subr.mxu0 0.0
    %7008 = vmatpush1.msra.mxu0 0.0
    %7009 = vmatprep.subr.mxu0 0.0
    %7010 = vmatpush1.msra.mxu0 0.0
    %7011 = vmatprep.subr.mxu0 0.0
    %7012 = vmatpush1.msra.mxu0 0.0
    %7013 = vmatprep.subr.mxu0 0.0
    %7014 = vmatpush1.msra.mxu0 0.0
    %7015 = vmatprep.subr.mxu0 0.0
    %7016 = vmatpush1.msra.mxu0 0.0
    %7017 = vmatprep.subr.mxu0 0.0
    %7018 = vmatpush1.msra.mxu0 0.0
    %7019 = vmatprep.subr.mxu0 0.0
    %7020 = vmatpush1.msra.mxu0 0.0
    %7021 = vmatprep.subr.mxu0 0.0
    %7022 = vmatpush1.msra.mxu0 0.0
    %7023 = vmatprep.subr.mxu0 0.0
    %7024 = vmatpush1.msra.mxu0 0.0
    %7025 = vmatprep.subr.mxu0 0.0
    %7026 = vmatpush1.msra.mxu0 0.0
    %7027 = vmatprep.subr.mxu0 0.0
    %7028 = vmatpush1.msra.mxu0 0.0
    %7029 = vmatprep.subr.mxu0 0.0
    %7030 = vmatpush1.msra.mxu0 0.0
    %7031 = vmatprep.subr.mxu0 0.0
    %7032 = vmatpush1.msra.mxu0 0.0
    %7033 = vmatprep.subr.mxu0 0.0
    %7034 = vmatpush1.msra.mxu0 0.0
    %7035 = vmatprep.subr.mxu0 0.0
    %7036 = vmatpush1.msra.mxu0 0.0
    %7037 = vmatprep.mubr.f32.mxu0 0.0
    %7038 = vmatmul.mubr.f32.gmra.mrb[0].mxu0 %v6972
    %v7039 = vpop.f32.mrb[0].mxu0
    %v7040 = vadd.f32 %v4881, %v7039
    %v7041 = vpop.f32.mrb[0].mxu0
    %7042 = vdwg.mxu0
    %v7043 = vtanh.pop %v7040
    %7044 = vmatprep.subr.mxu0 0.0
    %7045 = vmatpush1.msra.mxu0 %v4473
    %7046 = vmatprep.subr.mxu0 0.0
    %7047 = vmatpush1.msra.mxu0 %v4474
    %7048 = vmatprep.subr.mxu0 0.0
    %7049 = vmatpush1.msra.mxu0 %v4475
    %7050 = vmatprep.subr.mxu0 0.0
    %7051 = vmatpush1.msra.mxu0 %v4476
    %7052 = vmatprep.subr.mxu0 0.0
    %7053 = vmatpush1.msra.mxu0 %v4477
    %7054 = vmatprep.subr.mxu0 0.0
    %7055 = vmatpush1.msra.mxu0 %v4478
    %7056 = vmatprep.subr.mxu0 0.0
    %7057 = vmatpush1.msra.mxu0 %v4479
    %7058 = vmatprep.subr.mxu0 0.0
    %7059 = vmatpush1.msra.mxu0 %v4480
    %7060 = vmatprep.subr.mxu0 0.0
    %7061 = vmatpush1.msra.mxu0 %v4481
    %7062 = vmatprep.subr.mxu0 0.0
    %7063 = vmatpush1.msra.mxu0 %v4482
    %7064 = vmatprep.subr.mxu0 0.0
    %7065 = vmatpush1.msra.mxu0 %v4483
    %7066 = vmatprep.subr.mxu0 0.0
    %7067 = vmatpush1.msra.mxu0 %v4484
    %7068 = vmatprep.subr.mxu0 0.0
    %7069 = vmatpush1.msra.mxu0 %v4485
    %7070 = vmatprep.subr.mxu0 0.0
    %7071 = vmatpush1.msra.mxu0 %v4486
    %7072 = vmatprep.subr.mxu0 0.0
    %7073 = vmatpush1.msra.mxu0 %v4487
    %7074 = vmatprep.subr.mxu0 0.0
    %7075 = vmatpush1.msra.mxu0 %v4488
    %7076 = vmatprep.subr.mxu0 0.0
    %7077 = vmatpush1.msra.mxu0 0.0
    %7078 = vmatprep.subr.mxu0 0.0
    %7079 = vmatpush1.msra.mxu0 0.0
    %7080 = vmatprep.subr.mxu0 0.0
    %7081 = vmatpush1.msra.mxu0 0.0
    %7082 = vmatprep.subr.mxu0 0.0
    %7083 = vmatpush1.msra.mxu0 0.0
    %7084 = vmatprep.subr.mxu0 0.0
    %7085 = vmatpush1.msra.mxu0 0.0
    %7086 = vmatprep.subr.mxu0 0.0
    %7087 = vmatpush1.msra.mxu0 0.0
    %7088 = vmatprep.subr.mxu0 0.0
    %7089 = vmatpush1.msra.mxu0 0.0
    %7090 = vmatprep.subr.mxu0 0.0
    %7091 = vmatpush1.msra.mxu0 0.0
    %7092 = vmatprep.subr.mxu0 0.0
    %7093 = vmatpush1.msra.mxu0 0.0
    %7094 = vmatprep.subr.mxu0 0.0
    %7095 = vmatpush1.msra.mxu0 0.0
    %7096 = vmatprep.subr.mxu0 0.0
    %7097 = vmatpush1.msra.mxu0 0.0
    %7098 = vmatprep.subr.mxu0 0.0
    %7099 = vmatpush1.msra.mxu0 0.0
    %7100 = vmatprep.subr.mxu0 0.0
    %7101 = vmatpush1.msra.mxu0 0.0
    %7102 = vmatprep.subr.mxu0 0.0
    %7103 = vmatpush1.msra.mxu0 0.0
    %7104 = vmatprep.subr.mxu0 0.0
    %7105 = vmatpush1.msra.mxu0 0.0
    %7106 = vmatprep.subr.mxu0 0.0
    %7107 = vmatpush1.msra.mxu0 0.0
    %7108 = vmatprep.mubr.f32.mxu0 0.0
    %7109 = vmatmul.mubr.f32.gmra.mrb[0].mxu0 %v7043
    %v7110 = vpop.f32.mrb[0].mxu0
    %v7111 = vadd.f32 %v4958, %v7110
    %v7112 = vpop.f32.mrb[0].mxu0
    %7113 = vdwg.mxu0
    %v7115 = vsel %vm395, %v7111, 0
    %7117 = vmatprep.subr.mxu0 %v4369
    %7118 = vmatpush1.msra.mxu0 %v4368
    %7119 = vmatprep.subr.mxu0 %v4372
    %7120 = vmatpush1.msra.mxu0 %v4371
    %7121 = vmatprep.subr.mxu0 0.0
    %7122 = vmatpush1.msra.mxu0 0.0
    %7123 = vmatprep.subr.mxu0 0.0
    %7124 = vmatpush1.msra.mxu0 0.0
    %7125 = vmatprep.subr.mxu0 0.0
    %7126 = vmatpush1.msra.mxu0 0.0
    %7127 = vmatprep.subr.mxu0 0.0
    %7128 = vmatpush1.msra.mxu0 0.0
    %7129 = vmatprep.subr.mxu0 0.0
    %7130 = vmatpush1.msra.mxu0 0.0
    %7131 = vmatprep.subr.mxu0 0.0
    %7132 = vmatpush1.msra.mxu0 0.0
    %7133 = vmatprep.subr.mxu0 0.0
    %7134 = vmatpush1.msra.mxu0 0.0
    %7135 = vmatprep.subr.mxu0 0.0
    %7136 = vmatpush1.msra.mxu0 0.0
    %7137 = vmatprep.subr.mxu0 0.0
    %7138 = vmatpush1.msra.mxu0 0.0
    %7139 = vmatprep.subr.mxu0 0.0
    %7140 = vmatpush1.msra.mxu0 0.0
    %7141 = vmatprep.subr.mxu0 0.0
    %7142 = vmatpush1.msra.mxu0 0.0
    %7143 = vmatprep.subr.mxu0 0.0
    %7144 = vmatpush1.msra.mxu0 0.0
    %7145 = vmatprep.subr.mxu0 0.0
    %7146 = vmatpush1.msra.mxu0 0.0
    %7147 = vmatprep.subr.mxu0 0.0
    %7148 = vmatpush1.msra.mxu0 0.0
    %7149 = vmatprep.subr.mxu0 0.0
    %7150 = vmatpush1.msra.mxu0 0.0
    %7151 = vmatprep.subr.mxu0 0.0
    %7152 = vmatpush1.msra.mxu0 0.0
    %7153 = vmatprep.subr.mxu0 0.0
    %7154 = vmatpush1.msra.mxu0 0.0
    %7155 = vmatprep.subr.mxu0 0.0
    %7156 = vmatpush1.msra.mxu0 0.0
    %7157 = vmatprep.subr.mxu0 0.0
    %7158 = vmatpush1.msra.mxu0 0.0
    %7159 = vmatprep.subr.mxu0 0.0
    %7160 = vmatpush1.msra.mxu0 0.0
    %7161 = vmatprep.subr.mxu0 0.0
    %7162 = vmatpush1.msra.mxu0 0.0
    %7163 = vmatprep.subr.mxu0 0.0
    %7164 = vmatpush1.msra.mxu0 0.0
    %7165 = vmatprep.subr.mxu0 0.0
    %7166 = vmatpush1.msra.mxu0 0.0
    %7167 = vmatprep.subr.mxu0 0.0
    %7168 = vmatpush1.msra.mxu0 0.0
    %7169 = vmatprep.subr.mxu0 0.0
    %7170 = vmatpush1.msra.mxu0 0.0
    %7171 = vmatprep.subr.mxu0 0.0
    %7172 = vmatpush1.msra.mxu0 0.0
    %7173 = vmatprep.subr.mxu0 0.0
    %7174 = vmatpush1.msra.mxu0 0.0
    %7175 = vmatprep.subr.mxu0 0.0
    %7176 = vmatpush1.msra.mxu0 0.0
    %7177 = vmatprep.subr.mxu0 0.0
    %7178 = vmatpush1.msra.mxu0 0.0
    %7179 = vmatprep.subr.mxu0 0.0
    %7180 = vmatpush1.msra.mxu0 0.0
    %7181 = vmatprep.mubr.f32.mxu0 0.0
    %7182 = vmatmul.mubr.f32.gmra.mrb[0].mxu0 %v7115
    %v7183 = vpop.f32.mrb[0].mxu0
    %v7184 = vadd.f32 0.0, %v7183
    %v7185 = vpop.f32.mrb[0].mxu0
    %v7186 = vadd.f32 0.0, %v7185
    %7187 = vdwg.mxu0
    %7188 = vmatprep.subr.mxu0 0.0
    %7189 = vmatpush1.msra.mxu0 %v4370
    %7190 = vmatprep.subr.mxu0 0.0
    %7191 = vmatpush1.msra.mxu0 %v4373
    %7192 = vmatprep.subr.mxu0 0.0
    %7193 = vmatpush1.msra.mxu0 0.0
    %7194 = vmatprep.subr.mxu0 0.0
    %7195 = vmatpush1.msra.mxu0 0.0
    %7196 = vmatprep.subr.mxu0 0.0
    %7197 = vmatpush1.msra.mxu0 0.0
    %7198 = vmatprep.subr.mxu0 0.0
    %7199 = vmatpush1.msra.mxu0 0.0
    %7200 = vmatprep.subr.mxu0 0.0
    %7201 = vmatpush1.msra.mxu0 0.0
    %7202 = vmatprep.subr.mxu0 0.0
    %7203 = vmatpush1.msra.mxu0 0.0
    %7204 = vmatprep.subr.mxu0 0.0
    %7205 = vmatpush1.msra.mxu0 0.0
    %7206 = vmatprep.subr.mxu0 0.0
    %7207 = vmatpush1.msra.mxu0 0.0
    %7208 = vmatprep.subr.mxu0 0.0
    %7209 = vmatpush1.msra.mxu0 0.0
    %7210 = vmatprep.subr.mxu0 0.0
    %7211 = vmatpush1.msra.mxu0 0.0
    %7212 = vmatprep.subr.mxu0 0.0
    %7213 = vmatpush1.msra.mxu0 0.0
    %7214 = vmatprep.subr.mxu0 0.0
    %7215 = vmatpush1.msra.mxu0 0.0
    %7216 = vmatprep.subr.mxu0 0.0
    %7217 = vmatpush1.msra.mxu0 0.0
    %7218 = vmatprep.subr.mxu0 0.0
    %7219 = vmatpush1.msra.mxu0 0.0
    %7220 = vmatprep.subr.mxu0 0.0
    %7221 = vmatpush1.msra.mxu0 0.0
    %7222 = vmatprep.subr.mxu0 0.0
    %7223 = vmatpush1.msra.mxu0 0.0
    %7224 = vmatprep.subr.mxu0 0.0
    %7225 = vmatpush1.msra.mxu0 0.0
    %7226 = vmatprep.subr.mxu0 0.0
    %7227 = vmatpush1.msra.mxu0 0.0
    %7228 = vmatprep.subr.mxu0 0.0
    %7229 = vmatpush1.msra.mxu0 0.0
    %7230 = vmatprep.subr.mxu0 0.0
    %7231 = vmatpush1.msra.mxu0 0.0
    %7232 = vmatprep.subr.mxu0 0.0
    %7233 = vmatpush1.msra.mxu0 0.0
    %7234 = vmatprep.subr.mxu0 0.0
    %7235 = vmatpush1.msra.mxu0 0.0
    %7236 = vmatprep.subr.mxu0 0.0
    %7237 = vmatpush1.msra.mxu0 0.0
    %7238 = vmatprep.subr.mxu0 0.0
    %7239 = vmatpush1.msra.mxu0 0.0
    %7240 = vmatprep.subr.mxu0 0.0
    %7241 = vmatpush1.msra.mxu0 0.0
    %7242 = vmatprep.subr.mxu0 0.0
    %7243 = vmatpush1.msra.mxu0 0.0
    %7244 = vmatprep.subr.mxu0 0.0
    %7245 = vmatpush1.msra.mxu0 0.0
    %7246 = vmatprep.subr.mxu0 0.0
    %7247 = vmatpush1.msra.mxu0 0.0
    %7248 = vmatprep.subr.mxu0 0.0
    %7249 = vmatpush1.msra.mxu0 0.0
    %7250 = vmatprep.subr.mxu0 0.0
    %7251 = vmatpush1.msra.mxu0 0.0
    %7252 = vmatprep.mubr.f32.mxu0 0.0
    %7253 = vmatmul.mubr.f32.gmra.mrb[0].mxu0 %v7115
    %v7254 = vpop.f32.mrb[0].mxu0
    %v7255 = vadd.f32 0.0, %v7254
    %v7256 = vpop.f32.mrb[0].mxu0
    %7257 = vdwg.mxu0
    %v7258 = vadd.f32 %v4365, %v7184
    %v7259 = vadd.f32 %v4366, %v7186
    %v7260 = vadd.f32 %v4367, %v7255
    %7261 = vmatprep.subr.mxu0 %v4375
    %7262 = vmatpush1.msra.mxu0 %v4374
    %7263 = vmatprep.subr.mxu0 %v4378
    %7264 = vmatpush1.msra.mxu0 %v4377
    %7265 = vmatprep.subr.mxu0 %v4381
    %7266 = vmatpush1.msra.mxu0 %v4380
    %7267 = vmatprep.subr.mxu0 %v4384
    %7268 = vmatpush1.msra.mxu0 %v4383
    %7269 = vmatprep.subr.mxu0 %v4387
    %7270 = vmatpush1.msra.mxu0 %v4386
    %7271 = vmatprep.subr.mxu0 %v4390
    %7272 = vmatpush1.msra.mxu0 %v4389
    %7273 = vmatprep.subr.mxu0 %v4393
    %7274 = vmatpush1.msra.mxu0 %v4392
    %7275 = vmatprep.subr.mxu0 %v4396
    %7276 = vmatpush1.msra.mxu0 %v4395
    %7277 = vmatprep.subr.mxu0 %v4399
    %7278 = vmatpush1.msra.mxu0 %v4398
    %7279 = vmatprep.subr.mxu0 %v4402
    %7280 = vmatpush1.msra.mxu0 %v4401
    %7281 = vmatprep.subr.mxu0 %v4405
    %7282 = vmatpush1.msra.mxu0 %v4404
    %7283 = vmatprep.subr.mxu0 %v4408
    %7284 = vmatpush1.msra.mxu0 %v4407
    %7285 = vmatprep.subr.mxu0 %v4411
    %7286 = vmatpush1.msra.mxu0 %v4410
    %7287 = vmatprep.subr.mxu0 %v4414
    %7288 = vmatpush1.msra.mxu0 %v4413
    %7289 = vmatprep.subr.mxu0 %v4417
    %7290 = vmatpush1.msra.mxu0 %v4416
    %7291 = vmatprep.subr.mxu0 %v4420
    %7292 = vmatpush1.msra.mxu0 %v4419
    %7293 = vmatprep.subr.mxu0 0.0
    %7294 = vmatpush1.msra.mxu0 0.0
    %7295 = vmatprep.subr.mxu0 0.0
    %7296 = vmatpush1.msra.mxu0 0.0
    %7297 = vmatprep.subr.mxu0 0.0
    %7298 = vmatpush1.msra.mxu0 0.0
    %7299 = vmatprep.subr.mxu0 0.0
    %7300 = vmatpush1.msra.mxu0 0.0
    %7301 = vmatprep.subr.mxu0 0.0
    %7302 = vmatpush1.msra.mxu0 0.0
    %7303 = vmatprep.subr.mxu0 0.0
    %7304 = vmatpush1.msra.mxu0 0.0
    %7305 = vmatprep.subr.mxu0 0.0
    %7306 = vmatpush1.msra.mxu0 0.0
    %7307 = vmatprep.subr.mxu0 0.0
    %7308 = vmatpush1.msra.mxu0 0.0
    %7309 = vmatprep.subr.mxu0 0.0
    %7310 = vmatpush1.msra.mxu0 0.0
    %7311 = vmatprep.subr.mxu0 0.0
    %7312 = vmatpush1.msra.mxu0 0.0
    %7313 = vmatprep.subr.mxu0 0.0
    %7314 = vmatpush1.msra.mxu0 0.0
    %7315 = vmatprep.subr.mxu0 0.0
    %7316 = vmatpush1.msra.mxu0 0.0
    %7317 = vmatprep.subr.mxu0 0.0
    %7318 = vmatpush1.msra.mxu0 0.0
    %7319 = vmatprep.subr.mxu0 0.0
    %7320 = vmatpush1.msra.mxu0 0.0
    %7321 = vmatprep.subr.mxu0 0.0
    %7322 = vmatpush1.msra.mxu0 0.0
    %7323 = vmatprep.subr.mxu0 0.0
    %7324 = vmatpush1.msra.mxu0 0.0
    %7325 = vmatprep.mubr.f32.mxu0 0.0
    %7326 = vmatmul.mubr.f32.gmra.mrb[0].mxu0 %v6901
    %v7327 = vpop.f32.mrb[0].mxu0
    %v7328 = vadd.f32 %v4427, %v7327
    %v7329 = vpop.f32.mrb[0].mxu0
    %v7330 = vadd.f32 %v4431, %v7329
    %7331 = vdwg.mxu0
    %7332 = vmatprep.subr.mxu0 0.0
    %7333 = vmatpush1.msra.mxu0 %v4376
    %7334 = vmatprep.subr.mxu0 0.0
    %7335 = vmatpush1.msra.mxu0 %v4379
    %7336 = vmatprep.subr.mxu0 0.0
    %7337 = vmatpush1.msra.mxu0 %v4382
    %7338 = vmatprep.subr.mxu0 0.0
    %7339 = vmatpush1.msra.mxu0 %v4385
    %7340 = vmatprep.subr.mxu0 0.0
    %7341 = vmatpush1.msra.mxu0 %v4388
    %7342 = vmatprep.subr.mxu0 0.0
    %7343 = vmatpush1.msra.mxu0 %v4391
    %7344 = vmatprep.subr.mxu0 0.0
    %7345 = vmatpush1.msra.mxu0 %v4394
    %7346 = vmatprep.subr.mxu0 0.0
    %7347 = vmatpush1.msra.mxu0 %v4397
    %7348 = vmatprep.subr.mxu0 0.0
    %7349 = vmatpush1.msra.mxu0 %v4400
    %7350 = vmatprep.subr.mxu0 0.0
    %7351 = vmatpush1.msra.mxu0 %v4403
    %7352 = vmatprep.subr.mxu0 0.0
    %7353 = vmatpush1.msra.mxu0 %v4406
    %7354 = vmatprep.subr.mxu0 0.0
    %7355 = vmatpush1.msra.mxu0 %v4409
    %7356 = vmatprep.subr.mxu0 0.0
    %7357 = vmatpush1.msra.mxu0 %v4412
    %7358 = vmatprep.subr.mxu0 0.0
    %7359 = vmatpush1.msra.mxu0 %v4415
    %7360 = vmatprep.subr.mxu0 0.0
    %7361 = vmatpush1.msra.mxu0 %v4418
    %7362 = vmatprep.subr.mxu0 0.0
    %7363 = vmatpush1.msra.mxu0 %v4421
    %7364 = vmatprep.subr.mxu0 0.0
    %7365 = vmatpush1.msra.mxu0 0.0
    %7366 = vmatprep.subr.mxu0 0.0
    %7367 = vmatpush1.msra.mxu0 0.0
    %7368 = vmatprep.subr.mxu0 0.0
    %7369 = vmatpush1.msra.mxu0 0.0
    %7370 = vmatprep.subr.mxu0 0.0
    %7371 = vmatpush1.msra.mxu0 0.0
    %7372 = vmatprep.subr.mxu0 0.0
    %7373 = vmatpush1.msra.mxu0 0.0
    %7374 = vmatprep.subr.mxu0 0.0
    %7375 = vmatpush1.msra.mxu0 0.0
    %7376 = vmatprep.subr.mxu0 0.0
    %7377 = vmatpush1.msra.mxu0 0.0
    %7378 = vmatprep.subr.mxu0 0.0
    %7379 = vmatpush1.msra.mxu0 0.0
    %7380 = vmatprep.subr.mxu0 0.0
    %7381 = vmatpush1.msra.mxu0 0.0
    %7382 = vmatprep.subr.mxu0 0.0
    %7383 = vmatpush1.msra.mxu0 0.0
    %7384 = vmatprep.subr.mxu0 0.0
    %7385 = vmatpush1.msra.mxu0 0.0
    %7386 = vmatprep.subr.mxu0 0.0
    %7387 = vmatpush1.msra.mxu0 0.0
    %7388 = vmatprep.subr.mxu0 0.0
    %7389 = vmatpush1.msra.mxu0 0.0
    %7390 = vmatprep.subr.mxu0 0.0
    %7391 = vmatpush1.msra.mxu0 0.0
    %7392 = vmatprep.subr.mxu0 0.0
    %7393 = vmatpush1.msra.mxu0 0.0
    %7394 = vmatprep.subr.mxu0 0.0
    %7395 = vmatpush1.msra.mxu0 0.0
    %7396 = vmatprep.mubr.f32.mxu0 0.0
    %7397 = vmatmul.mubr.f32.gmra.mrb[0].mxu0 %v6901
    %v7398 = vpop.f32.mrb[0].mxu0
    %v7399 = vadd.f32 %v4435, %v7398
    %v7400 = vpop.f32.mrb[0].mxu0
    %7401 = vdwg.mxu0
    %v7402 = vadd.f32 %v7258, %v7328
    %v7403 = vxor.u32 %v7402, 2147483648
    %v7404 = vmul.f32 %v7403, 1.442695
    %v7405 = vpow.pop %v7404
    %v7406 = vadd.f32 %v7405, 1.0
    %v7407 = vrcp.pop %v7406
    %v7408 = vmul.f32 1.0, %v7407
    %v7409 = vadd.f32 %v7259, %v7330
    %v7410 = vxor.u32 %v7409, 2147483648
    %v7411 = vmul.f32 %v7410, 1.442695
    %v7412 = vpow.pop %v7411
    %v7413 = vadd.f32 %v7412, 1.0
    %v7414 = vrcp.pop %v7413
    %v7415 = vmul.f32 1.0, %v7414
    %v7416 = vmul.f32 %v7408, %v7399
    %v7417 = vadd.f32 %v7260, %v7416
    %v7418 = vtanh.pop %v7417
    %v7419 = vsub.f32 1.0, %v7415
    %v7420 = vmul.f32 %v7419, %v7418
    %v7421 = vmul.f32 %v7415, %v6901
    %v7422 = vadd.f32 %v7420, %v7421
    %7423 = vmatprep.subr.mxu0 0.0
    %7424 = vmatpush1.msra.mxu0 %v4439
    %7425 = vmatprep.subr.mxu0 0.0
    %7426 = vmatpush1.msra.mxu0 %v4440
    %7427 = vmatprep.subr.mxu0 0.0
    %7428 = vmatpush1.msra.mxu0 %v4441
    %7429 = vmatprep.subr.mxu0 0.0
    %7430 = vmatpush1.msra.mxu0 %v4442
    %7431 = vmatprep.subr.mxu0 0.0
    %7432 = vmatpush1.msra.mxu0 %v4443
    %7433 = vmatprep.subr.mxu0 0.0
    %7434 = vmatpush1.msra.mxu0 %v4444
    %7435 = vmatprep.subr.mxu0 0.0
    %7436 = vmatpush1.msra.mxu0 %v4445
    %7437 = vmatprep.subr.mxu0 0.0
    %7438 = vmatpush1.msra.mxu0 %v4446
    %7439 = vmatprep.subr.mxu0 0.0
    %7440 = vmatpush1.msra.mxu0 %v4447
    %7441 = vmatprep.subr.mxu0 0.0
    %7442 = vmatpush1.msra.mxu0 %v4448
    %7443 = vmatprep.subr.mxu0 0.0
    %7444 = vmatpush1.msra.mxu0 %v4449
    %7445 = vmatprep.subr.mxu0 0.0
    %7446 = vmatpush1.msra.mxu0 %v4450
    %7447 = vmatprep.subr.mxu0 0.0
    %7448 = vmatpush1.msra.mxu0 %v4451
    %7449 = vmatprep.subr.mxu0 0.0
    %7450 = vmatpush1.msra.mxu0 %v4452
    %7451 = vmatprep.subr.mxu0 0.0
    %7452 = vmatpush1.msra.mxu0 %v4453
    %7453 = vmatprep.subr.mxu0 0.0
    %7454 = vmatpush1.msra.mxu0 %v4454
    %7455 = vmatprep.subr.mxu0 0.0
    %7456 = vmatpush1.msra.mxu0 0.0
    %7457 = vmatprep.subr.mxu0 0.0
    %7458 = vmatpush1.msra.mxu0 0.0
    %7459 = vmatprep.subr.mxu0 0.0
    %7460 = vmatpush1.msra.mxu0 0.0
    %7461 = vmatprep.subr.mxu0 0.0
    %7462 = vmatpush1.msra.mxu0 0.0
    %7463 = vmatprep.subr.mxu0 0.0
    %7464 = vmatpush1.msra.mxu0 0.0
    %7465 = vmatprep.subr.mxu0 0.0
    %7466 = vmatpush1.msra.mxu0 0.0
    %7467 = vmatprep.subr.mxu0 0.0
    %7468 = vmatpush1.msra.mxu0 0.0
    %7469 = vmatprep.subr.mxu0 0.0
    %7470 = vmatpush1.msra.mxu0 0.0
    %7471 = vmatprep.subr.mxu0 0.0
    %7472 = vmatpush1.msra.mxu0 0.0
    %7473 = vmatprep.subr.mxu0 0.0
    %7474 = vmatpush1.msra.mxu0 0.0
    %7475 = vmatprep.subr.mxu0 0.0
    %7476 = vmatpush1.msra.mxu0 0.0
    %7477 = vmatprep.subr.mxu0 0.0
    %7478 = vmatpush1.msra.mxu0 0.0
    %7479 = vmatprep.subr.mxu0 0.0
    %7480 = vmatpush1.msra.mxu0 0.0
    %7481 = vmatprep.subr.mxu0 0.0
    %7482 = vmatpush1.msra.mxu0 0.0
    %7483 = vmatprep.subr.mxu0 0.0
    %7484 = vmatpush1.msra.mxu0 0.0
    %7485 = vmatprep.subr.mxu0 0.0
    %7486 = vmatpush1.msra.mxu0 0.0
    %7487 = vmatprep.mubr.f32.mxu0 0.0
    %7488 = vmatmul.mubr.f32.gmra.mrb[0].mxu0 %v7422
    %v7489 = vpop.f32.mrb[0].mxu0
    %v7490 = vadd.f32 %v4804, %v7489
    %v7491 = vpop.f32.mrb[0].mxu0
    %7492 = vdwg.mxu0
    %v7493 = vtanh.pop %v7490
    %7494 = vmatprep.subr.mxu0 0.0
    %7495 = vmatpush1.msra.mxu0 %v4456
    %7496 = vmatprep.subr.mxu0 0.0
    %7497 = vmatpush1.msra.mxu0 %v4457
    %7498 = vmatprep.subr.mxu0 0.0
    %7499 = vmatpush1.msra.mxu0 %v4458
    %7500 = vmatprep.subr.mxu0 0.0
    %7501 = vmatpush1.msra.mxu0 %v4459
    %7502 = vmatprep.subr.mxu0 0.0
    %7503 = vmatpush1.msra.mxu0 %v4460
    %7504 = vmatprep.subr.mxu0 0.0
    %7505 = vmatpush1.msra.mxu0 %v4461
    %7506 = vmatprep.subr.mxu0 0.0
    %7507 = vmatpush1.msra.mxu0 %v4462
    %7508 = vmatprep.subr.mxu0 0.0
    %7509 = vmatpush1.msra.mxu0 %v4463
    %7510 = vmatprep.subr.mxu0 0.0
    %7511 = vmatpush1.msra.mxu0 %v4464
    %7512 = vmatprep.subr.mxu0 0.0
    %7513 = vmatpush1.msra.mxu0 %v4465
    %7514 = vmatprep.subr.mxu0 0.0
    %7515 = vmatpush1.msra.mxu0 %v4466
    %7516 = vmatprep.subr.mxu0 0.0
    %7517 = vmatpush1.msra.mxu0 %v4467
    %7518 = vmatprep.subr.mxu0 0.0
    %7519 = vmatpush1.msra.mxu0 %v4468
    %7520 = vmatprep.subr.mxu0 0.0
    %7521 = vmatpush1.msra.mxu0 %v4469
    %7522 = vmatprep.subr.mxu0 0.0
    %7523 = vmatpush1.msra.mxu0 %v4470
    %7524 = vmatprep.subr.mxu0 0.0
    %7525 = vmatpush1.msra.mxu0 %v4471
    %7526 = vmatprep.subr.mxu0 0.0
    %7527 = vmatpush1.msra.mxu0 0.0
    %7528 = vmatprep.subr.mxu0 0.0
    %7529 = vmatpush1.msra.mxu0 0.0
    %7530 = vmatprep.subr.mxu0 0.0
    %7531 = vmatpush1.msra.mxu0 0.0
    %7532 = vmatprep.subr.mxu0 0.0
    %7533 = vmatpush1.msra.mxu0 0.0
    %7534 = vmatprep.subr.mxu0 0.0
    %7535 = vmatpush1.msra.mxu0 0.0
    %7536 = vmatprep.subr.mxu0 0.0
    %7537 = vmatpush1.msra.mxu0 0.0
    %7538 = vmatprep.subr.mxu0 0.0
    %7539 = vmatpush1.msra.mxu0 0.0
    %7540 = vmatprep.subr.mxu0 0.0
    %7541 = vmatpush1.msra.mxu0 0.0
    %7542 = vmatprep.subr.mxu0 0.0
    %7543 = vmatpush1.msra.mxu0 0.0
    %7544 = vmatprep.subr.mxu0 0.0
    %7545 = vmatpush1.msra.mxu0 0.0
    %7546 = vmatprep.subr.mxu0 0.0
    %7547 = vmatpush1.msra.mxu0 0.0
    %7548 = vmatprep.subr.mxu0 0.0
    %7549 = vmatpush1.msra.mxu0 0.0
    %7550 = vmatprep.subr.mxu0 0.0
    %7551 = vmatpush1.msra.mxu0 0.0
    %7552 = vmatprep.subr.mxu0 0.0
    %7553 = vmatpush1.msra.mxu0 0.0
    %7554 = vmatprep.subr.mxu0 0.0
    %7555 = vmatpush1.msra.mxu0 0.0
    %7556 = vmatprep.subr.mxu0 0.0
    %7557 = vmatpush1.msra.mxu0 0.0
    %7558 = vmatprep.mubr.f32.mxu0 0.0
    %7559 = vmatmul.mubr.f32.gmra.mrb[0].mxu0 %v7493
    %v7560 = vpop.f32.mrb[0].mxu0
    %v7561 = vadd.f32 %v4881, %v7560
    %v7562 = vpop.f32.mrb[0].mxu0
    %7563 = vdwg.mxu0
    %v7564 = vtanh.pop %v7561
    %7565 = vmatprep.subr.mxu0 0.0
    %7566 = vmatpush1.msra.mxu0 %v4473
    %7567 = vmatprep.subr.mxu0 0.0
    %7568 = vmatpush1.msra.mxu0 %v4474
    %7569 = vmatprep.subr.mxu0 0.0
    %7570 = vmatpush1.msra.mxu0 %v4475
    %7571 = vmatprep.subr.mxu0 0.0
    %7572 = vmatpush1.msra.mxu0 %v4476
    %7573 = vmatprep.subr.mxu0 0.0
    %7574 = vmatpush1.msra.mxu0 %v4477
    %7575 = vmatprep.subr.mxu0 0.0
    %7576 = vmatpush1.msra.mxu0 %v4478
    %7577 = vmatprep.subr.mxu0 0.0
    %7578 = vmatpush1.msra.mxu0 %v4479
    %7579 = vmatprep.subr.mxu0 0.0
    %7580 = vmatpush1.msra.mxu0 %v4480
    %7581 = vmatprep.subr.mxu0 0.0
    %7582 = vmatpush1.msra.mxu0 %v4481
    %7583 = vmatprep.subr.mxu0 0.0
    %7584 = vmatpush1.msra.mxu0 %v4482
    %7585 = vmatprep.subr.mxu0 0.0
    %7586 = vmatpush1.msra.mxu0 %v4483
    %7587 = vmatprep.subr.mxu0 0.0
    %7588 = vmatpush1.msra.mxu0 %v4484
    %7589 = vmatprep.subr.mxu0 0.0
    %7590 = vmatpush1.msra.mxu0 %v4485
    %7591 = vmatprep.subr.mxu0 0.0
    %7592 = vmatpush1.msra.mxu0 %v4486
    %7593 = vmatprep.subr.mxu0 0.0
    %7594 = vmatpush1.msra.mxu0 %v4487
    %7595 = vmatprep.subr.mxu0 0.0
    %7596 = vmatpush1.msra.mxu0 %v4488
    %7597 = vmatprep.subr.mxu0 0.0
    %7598 = vmatpush1.msra.mxu0 0.0
    %7599 = vmatprep.subr.mxu0 0.0
    %7600 = vmatpush1.msra.mxu0 0.0
    %7601 = vmatprep.subr.mxu0 0.0
    %7602 = vmatpush1.msra.mxu0 0.0
    %7603 = vmatprep.subr.mxu0 0.0
    %7604 = vmatpush1.msra.mxu0 0.0
    %7605 = vmatprep.subr.mxu0 0.0
    %7606 = vmatpush1.msra.mxu0 0.0
    %7607 = vmatprep.subr.mxu0 0.0
    %7608 = vmatpush1.msra.mxu0 0.0
    %7609 = vmatprep.subr.mxu0 0.0
    %7610 = vmatpush1.msra.mxu0 0.0
    %7611 = vmatprep.subr.mxu0 0.0
    %7612 = vmatpush1.msra.mxu0 0.0
    %7613 = vmatprep.subr.mxu0 0.0
    %7614 = vmatpush1.msra.mxu0 0.0
    %7615 = vmatprep.subr.mxu0 0.0
    %7616 = vmatpush1.msra.mxu0 0.0
    %7617 = vmatprep.subr.mxu0 0.0
    %7618 = vmatpush1.msra.mxu0 0.0
    %7619 = vmatprep.subr.mxu0 0.0
    %7620 = vmatpush1.msra.mxu0 0.0
    %7621 = vmatprep.subr.mxu0 0.0
    %7622 = vmatpush1.msra.mxu0 0.0
    %7623 = vmatprep.subr.mxu0 0.0
    %7624 = vmatpush1.msra.mxu0 0.0
    %7625 = vmatprep.subr.mxu0 0.0
    %7626 = vmatpush1.msra.mxu0 0.0
    %7627 = vmatprep.subr.mxu0 0.0
    %7628 = vmatpush1.msra.mxu0 0.0
    %7629 = vmatprep.mubr.f32.mxu0 0.0
    %7630 = vmatmul.mubr.f32.gmra.mrb[0].mxu0 %v7564
    %v7631 = vpop.f32.mrb[0].mxu0
    %v7632 = vadd.f32 %v4958, %v7631
    %v7633 = vpop.f32.mrb[0].mxu0
    %7634 = vdwg.mxu0
    %v7636 = vsel %vm395, %v7632, 0
    %7638 = vmatprep.subr.mxu0 %v4369
    %7639 = vmatpush1.msra.mxu0 %v4368
    %7640 = vmatprep.subr.mxu0 %v4372
    %7641 = vmatpush1.msra.mxu0 %v4371
    %7642 = vmatprep.subr.mxu0 0.0
    %7643 = vmatpush1.msra.mxu0 0.0
    %7644 = vmatprep.subr.mxu0 0.0
    %7645 = vmatpush1.msra.mxu0 0.0
    %7646 = vmatprep.subr.mxu0 0.0
    %7647 = vmatpush1.msra.mxu0 0.0
    %7648 = vmatprep.subr.mxu0 0.0
    %7649 = vmatpush1.msra.mxu0 0.0
    %7650 = vmatprep.subr.mxu0 0.0
    %7651 = vmatpush1.msra.mxu0 0.0
    %7652 = vmatprep.subr.mxu0 0.0
    %7653 = vmatpush1.msra.mxu0 0.0
    %7654 = vmatprep.subr.mxu0 0.0
    %7655 = vmatpush1.msra.mxu0 0.0
    %7656 = vmatprep.subr.mxu0 0.0
    %7657 = vmatpush1.msra.mxu0 0.0
    %7658 = vmatprep.subr.mxu0 0.0
    %7659 = vmatpush1.msra.mxu0 0.0
    %7660 = vmatprep.subr.mxu0 0.0
    %7661 = vmatpush1.msra.mxu0 0.0
    %7662 = vmatprep.subr.mxu0 0.0
    %7663 = vmatpush1.msra.mxu0 0.0
    %7664 = vmatprep.subr.mxu0 0.0
    %7665 = vmatpush1.msra.mxu0 0.0
    %7666 = vmatprep.subr.mxu0 0.0
    %7667 = vmatpush1.msra.mxu0 0.0
    %7668 = vmatprep.subr.mxu0 0.0
    %7669 = vmatpush1.msra.mxu0 0.0
    %7670 = vmatprep.subr.mxu0 0.0
    %7671 = vmatpush1.msra.mxu0 0.0
    %7672 = vmatprep.subr.mxu0 0.0
    %7673 = vmatpush1.msra.mxu0 0.0
    %7674 = vmatprep.subr.mxu0 0.0
    %7675 = vmatpush1.msra.mxu0 0.0
    %7676 = vmatprep.subr.mxu0 0.0
    %7677 = vmatpush1.msra.mxu0 0.0
    %7678 = vmatprep.subr.mxu0 0.0
    %7679 = vmatpush1.msra.mxu0 0.0
    %7680 = vmatprep.subr.mxu0 0.0
    %7681 = vmatpush1.msra.mxu0 0.0
    %7682 = vmatprep.subr.mxu0 0.0
    %7683 = vmatpush1.msra.mxu0 0.0
    %7684 = vmatprep.subr.mxu0 0.0
    %7685 = vmatpush1.msra.mxu0 0.0
    %7686 = vmatprep.subr.mxu0 0.0
    %7687 = vmatpush1.msra.mxu0 0.0
    %7688 = vmatprep.subr.mxu0 0.0
    %7689 = vmatpush1.msra.mxu0 0.0
    %7690 = vmatprep.subr.mxu0 0.0
    %7691 = vmatpush1.msra.mxu0 0.0
    %7692 = vmatprep.subr.mxu0 0.0
    %7693 = vmatpush1.msra.mxu0 0.0
    %7694 = vmatprep.subr.mxu0 0.0
    %7695 = vmatpush1.msra.mxu0 0.0
    %7696 = vmatprep.subr.mxu0 0.0
    %7697 = vmatpush1.msra.mxu0 0.0
    %7698 = vmatprep.subr.mxu0 0.0
    %7699 = vmatpush1.msra.mxu0 0.0
    %7700 = vmatprep.subr.mxu0 0.0
    %7701 = vmatpush1.msra.mxu0 0.0
    %7702 = vmatprep.mubr.f32.mxu0 0.0
    %7703 = vmatmul.mubr.f32.gmra.mrb[0].mxu0 %v7636
    %v7704 = vpop.f32.mrb[0].mxu0
    %v7705 = vadd.f32 0.0, %v7704
    %v7706 = vpop.f32.mrb[0].mxu0
    %v7707 = vadd.f32 0.0, %v7706
    %7708 = vdwg.mxu0
    %7709 = vmatprep.subr.mxu0 0.0
    %7710 = vmatpush1.msra.mxu0 %v4370
    %7711 = vmatprep.subr.mxu0 0.0
    %7712 = vmatpush1.msra.mxu0 %v4373
    %7713 = vmatprep.subr.mxu0 0.0
    %7714 = vmatpush1.msra.mxu0 0.0
    %7715 = vmatprep.subr.mxu0 0.0
    %7716 = vmatpush1.msra.mxu0 0.0
    %7717 = vmatprep.subr.mxu0 0.0
    %7718 = vmatpush1.msra.mxu0 0.0
    %7719 = vmatprep.subr.mxu0 0.0
    %7720 = vmatpush1.msra.mxu0 0.0
    %7721 = vmatprep.subr.mxu0 0.0
    %7722 = vmatpush1.msra.mxu0 0.0
    %7723 = vmatprep.subr.mxu0 0.0
    %7724 = vmatpush1.msra.mxu0 0.0
    %7725 = vmatprep.subr.mxu0 0.0
    %7726 = vmatpush1.msra.mxu0 0.0
    %7727 = vmatprep.subr.mxu0 0.0
    %7728 = vmatpush1.msra.mxu0 0.0
    %7729 = vmatprep.subr.mxu0 0.0
    %7730 = vmatpush1.msra.mxu0 0.0
    %7731 = vmatprep.subr.mxu0 0.0
    %7732 = vmatpush1.msra.mxu0 0.0
    %7733 = vmatprep.subr.mxu0 0.0
    %7734 = vmatpush1.msra.mxu0 0.0
    %7735 = vmatprep.subr.mxu0 0.0
    %7736 = vmatpush1.msra.mxu0 0.0
    %7737 = vmatprep.subr.mxu0 0.0
    %7738 = vmatpush1.msra.mxu0 0.0
    %7739 = vmatprep.subr.mxu0 0.0
    %7740 = vmatpush1.msra.mxu0 0.0
    %7741 = vmatprep.subr.mxu0 0.0
    %7742 = vmatpush1.msra.mxu0 0.0
    %7743 = vmatprep.subr.mxu0 0.0
    %7744 = vmatpush1.msra.mxu0 0.0
    %7745 = vmatprep.subr.mxu0 0.0
    %7746 = vmatpush1.msra.mxu0 0.0
    %7747 = vmatprep.subr.mxu0 0.0
    %7748 = vmatpush1.msra.mxu0 0.0
    %7749 = vmatprep.subr.mxu0 0.0
    %7750 = vmatpush1.msra.mxu0 0.0
    %7751 = vmatprep.subr.mxu0 0.0
    %7752 = vmatpush1.msra.mxu0 0.0
    %7753 = vmatprep.subr.mxu0 0.0
    %7754 = vmatpush1.msra.mxu0 0.0
    %7755 = vmatprep.subr.mxu0 0.0
    %7756 = vmatpush1.msra.mxu0 0.0
    %7757 = vmatprep.subr.mxu0 0.0
    %7758 = vmatpush1.msra.mxu0 0.0
    %7759 = vmatprep.subr.mxu0 0.0
    %7760 = vmatpush1.msra.mxu0 0.0
    %7761 = vmatprep.subr.mxu0 0.0
    %7762 = vmatpush1.msra.mxu0 0.0
    %7763 = vmatprep.subr.mxu0 0.0
    %7764 = vmatpush1.msra.mxu0 0.0
    %7765 = vmatprep.subr.mxu0 0.0
    %7766 = vmatpush1.msra.mxu0 0.0
    %7767 = vmatprep.subr.mxu0 0.0
    %7768 = vmatpush1.msra.mxu0 0.0
    %7769 = vmatprep.subr.mxu0 0.0
    %7770 = vmatpush1.msra.mxu0 0.0
    %7771 = vmatprep.subr.mxu0 0.0
    %7772 = vmatpush1.msra.mxu0 0.0
    %7773 = vmatprep.mubr.f32.mxu0 0.0
    %7774 = vmatmul.mubr.f32.gmra.mrb[0].mxu0 %v7636
    %v7775 = vpop.f32.mrb[0].mxu0
    %v7776 = vadd.f32 0.0, %v7775
    %v7777 = vpop.f32.mrb[0].mxu0
    %7778 = vdwg.mxu0
    %v7779 = vadd.f32 %v4365, %v7705
    %v7780 = vadd.f32 %v4366, %v7707
    %v7781 = vadd.f32 %v4367, %v7776
    %7782 = vmatprep.subr.mxu0 %v4375
    %7783 = vmatpush1.msra.mxu0 %v4374
    %7784 = vmatprep.subr.mxu0 %v4378
    %7785 = vmatpush1.msra.mxu0 %v4377
    %7786 = vmatprep.subr.mxu0 %v4381
    %7787 = vmatpush1.msra.mxu0 %v4380
    %7788 = vmatprep.subr.mxu0 %v4384
    %7789 = vmatpush1.msra.mxu0 %v4383
    %7790 = vmatprep.subr.mxu0 %v4387
    %7791 = vmatpush1.msra.mxu0 %v4386
    %7792 = vmatprep.subr.mxu0 %v4390
    %7793 = vmatpush1.msra.mxu0 %v4389
    %7794 = vmatprep.subr.mxu0 %v4393
    %7795 = vmatpush1.msra.mxu0 %v4392
    %7796 = vmatprep.subr.mxu0 %v4396
    %7797 = vmatpush1.msra.mxu0 %v4395
    %7798 = vmatprep.subr.mxu0 %v4399
    %7799 = vmatpush1.msra.mxu0 %v4398
    %7800 = vmatprep.subr.mxu0 %v4402
    %7801 = vmatpush1.msra.mxu0 %v4401
    %7802 = vmatprep.subr.mxu0 %v4405
    %7803 = vmatpush1.msra.mxu0 %v4404
    %7804 = vmatprep.subr.mxu0 %v4408
    %7805 = vmatpush1.msra.mxu0 %v4407
    %7806 = vmatprep.subr.mxu0 %v4411
    %7807 = vmatpush1.msra.mxu0 %v4410
    %7808 = vmatprep.subr.mxu0 %v4414
    %7809 = vmatpush1.msra.mxu0 %v4413
    %7810 = vmatprep.subr.mxu0 %v4417
    %7811 = vmatpush1.msra.mxu0 %v4416
    %7812 = vmatprep.subr.mxu0 %v4420
    %7813 = vmatpush1.msra.mxu0 %v4419
    %7814 = vmatprep.subr.mxu0 0.0
    %7815 = vmatpush1.msra.mxu0 0.0
    %7816 = vmatprep.subr.mxu0 0.0
    %7817 = vmatpush1.msra.mxu0 0.0
    %7818 = vmatprep.subr.mxu0 0.0
    %7819 = vmatpush1.msra.mxu0 0.0
    %7820 = vmatprep.subr.mxu0 0.0
    %7821 = vmatpush1.msra.mxu0 0.0
    %7822 = vmatprep.subr.mxu0 0.0
    %7823 = vmatpush1.msra.mxu0 0.0
    %7824 = vmatprep.subr.mxu0 0.0
    %7825 = vmatpush1.msra.mxu0 0.0
    %7826 = vmatprep.subr.mxu0 0.0
    %7827 = vmatpush1.msra.mxu0 0.0
    %7828 = vmatprep.subr.mxu0 0.0
    %7829 = vmatpush1.msra.mxu0 0.0
    %7830 = vmatprep.subr.mxu0 0.0
    %7831 = vmatpush1.msra.mxu0 0.0
    %7832 = vmatprep.subr.mxu0 0.0
    %7833 = vmatpush1.msra.mxu0 0.0
    %7834 = vmatprep.subr.mxu0 0.0
    %7835 = vmatpush1.msra.mxu0 0.0
    %7836 = vmatprep.subr.mxu0 0.0
    %7837 = vmatpush1.msra.mxu0 0.0
    %7838 = vmatprep.subr.mxu0 0.0
    %7839 = vmatpush1.msra.mxu0 0.0
    %7840 = vmatprep.subr.mxu0 0.0
    %7841 = vmatpush1.msra.mxu0 0.0
    %7842 = vmatprep.subr.mxu0 0.0
    %7843 = vmatpush1.msra.mxu0 0.0
    %7844 = vmatprep.subr.mxu0 0.0
    %7845 = vmatpush1.msra.mxu0 0.0
    %7846 = vmatprep.mubr.f32.mxu0 0.0
    %7847 = vmatmul.mubr.f32.gmra.mrb[0].mxu0 %v7422
    %v7848 = vpop.f32.mrb[0].mxu0
    %v7849 = vadd.f32 %v4427, %v7848
    %v7850 = vpop.f32.mrb[0].mxu0
    %v7851 = vadd.f32 %v4431, %v7850
    %7852 = vdwg.mxu0
    %7853 = vmatprep.subr.mxu0 0.0
    %7854 = vmatpush1.msra.mxu0 %v4376
    %7855 = vmatprep.subr.mxu0 0.0
    %7856 = vmatpush1.msra.mxu0 %v4379
    %7857 = vmatprep.subr.mxu0 0.0
    %7858 = vmatpush1.msra.mxu0 %v4382
    %7859 = vmatprep.subr.mxu0 0.0
    %7860 = vmatpush1.msra.mxu0 %v4385
    %7861 = vmatprep.subr.mxu0 0.0
    %7862 = vmatpush1.msra.mxu0 %v4388
    %7863 = vmatprep.subr.mxu0 0.0
    %7864 = vmatpush1.msra.mxu0 %v4391
    %7865 = vmatprep.subr.mxu0 0.0
    %7866 = vmatpush1.msra.mxu0 %v4394
    %7867 = vmatprep.subr.mxu0 0.0
    %7868 = vmatpush1.msra.mxu0 %v4397
    %7869 = vmatprep.subr.mxu0 0.0
    %7870 = vmatpush1.msra.mxu0 %v4400
    %7871 = vmatprep.subr.mxu0 0.0
    %7872 = vmatpush1.msra.mxu0 %v4403
    %7873 = vmatprep.subr.mxu0 0.0
    %7874 = vmatpush1.msra.mxu0 %v4406
    %7875 = vmatprep.subr.mxu0 0.0
    %7876 = vmatpush1.msra.mxu0 %v4409
    %7877 = vmatprep.subr.mxu0 0.0
    %7878 = vmatpush1.msra.mxu0 %v4412
    %7879 = vmatprep.subr.mxu0 0.0
    %7880 = vmatpush1.msra.mxu0 %v4415
    %7881 = vmatprep.subr.mxu0 0.0
    %7882 = vmatpush1.msra.mxu0 %v4418
    %7883 = vmatprep.subr.mxu0 0.0
    %7884 = vmatpush1.msra.mxu0 %v4421
    %7885 = vmatprep.subr.mxu0 0.0
    %7886 = vmatpush1.msra.mxu0 0.0
    %7887 = vmatprep.subr.mxu0 0.0
    %7888 = vmatpush1.msra.mxu0 0.0
    %7889 = vmatprep.subr.mxu0 0.0
    %7890 = vmatpush1.msra.mxu0 0.0
    %7891 = vmatprep.subr.mxu0 0.0
    %7892 = vmatpush1.msra.mxu0 0.0
    %7893 = vmatprep.subr.mxu0 0.0
    %7894 = vmatpush1.msra.mxu0 0.0
    %7895 = vmatprep.subr.mxu0 0.0
    %7896 = vmatpush1.msra.mxu0 0.0
    %7897 = vmatprep.subr.mxu0 0.0
    %7898 = vmatpush1.msra.mxu0 0.0
    %7899 = vmatprep.subr.mxu0 0.0
    %7900 = vmatpush1.msra.mxu0 0.0
    %7901 = vmatprep.subr.mxu0 0.0
    %7902 = vmatpush1.msra.mxu0 0.0
    %7903 = vmatprep.subr.mxu0 0.0
    %7904 = vmatpush1.msra.mxu0 0.0
    %7905 = vmatprep.subr.mxu0 0.0
    %7906 = vmatpush1.msra.mxu0 0.0
    %7907 = vmatprep.subr.mxu0 0.0
    %7908 = vmatpush1.msra.mxu0 0.0
    %7909 = vmatprep.subr.mxu0 0.0
    %7910 = vmatpush1.msra.mxu0 0.0
    %7911 = vmatprep.subr.mxu0 0.0
    %7912 = vmatpush1.msra.mxu0 0.0
    %7913 = vmatprep.subr.mxu0 0.0
    %7914 = vmatpush1.msra.mxu0 0.0
    %7915 = vmatprep.subr.mxu0 0.0
    %7916 = vmatpush1.msra.mxu0 0.0
    %7917 = vmatprep.mubr.f32.mxu0 0.0
    %7918 = vmatmul.mubr.f32.gmra.mrb[0].mxu0 %v7422
    %v7919 = vpop.f32.mrb[0].mxu0
    %v7920 = vadd.f32 %v4435, %v7919
    %v7921 = vpop.f32.mrb[0].mxu0
    %7922 = vdwg.mxu0
    %v7923 = vadd.f32 %v7779, %v7849
    %v7924 = vxor.u32 %v7923, 2147483648
    %v7925 = vmul.f32 %v7924, 1.442695
    %v7926 = vpow.pop %v7925
    %v7927 = vadd.f32 %v7926, 1.0
    %v7928 = vrcp.pop %v7927
    %v7929 = vmul.f32 1.0, %v7928
    %v7930 = vadd.f32 %v7780, %v7851
    %v7931 = vxor.u32 %v7930, 2147483648
    %v7932 = vmul.f32 %v7931, 1.442695
    %v7933 = vpow.pop %v7932
    %v7934 = vadd.f32 %v7933, 1.0
    %v7935 = vrcp.pop %v7934
    %v7936 = vmul.f32 1.0, %v7935
    %v7937 = vmul.f32 %v7929, %v7920
    %v7938 = vadd.f32 %v7781, %v7937
    %v7939 = vtanh.pop %v7938
    %v7940 = vsub.f32 1.0, %v7936
    %v7941 = vmul.f32 %v7940, %v7939
    %v7942 = vmul.f32 %v7936, %v7422
    %v7943 = vadd.f32 %v7941, %v7942
    %7944 = vmatprep.subr.mxu0 0.0
    %7945 = vmatpush1.msra.mxu0 %v4439
    %7946 = vmatprep.subr.mxu0 0.0
    %7947 = vmatpush1.msra.mxu0 %v4440
    %7948 = vmatprep.subr.mxu0 0.0
    %7949 = vmatpush1.msra.mxu0 %v4441
    %7950 = vmatprep.subr.mxu0 0.0
    %7951 = vmatpush1.msra.mxu0 %v4442
    %7952 = vmatprep.subr.mxu0 0.0
    %7953 = vmatpush1.msra.mxu0 %v4443
    %7954 = vmatprep.subr.mxu0 0.0
    %7955 = vmatpush1.msra.mxu0 %v4444
    %7956 = vmatprep.subr.mxu0 0.0
    %7957 = vmatpush1.msra.mxu0 %v4445
    %7958 = vmatprep.subr.mxu0 0.0
    %7959 = vmatpush1.msra.mxu0 %v4446
    %7960 = vmatprep.subr.mxu0 0.0
    %7961 = vmatpush1.msra.mxu0 %v4447
    %7962 = vmatprep.subr.mxu0 0.0
    %7963 = vmatpush1.msra.mxu0 %v4448
    %7964 = vmatprep.subr.mxu0 0.0
    %7965 = vmatpush1.msra.mxu0 %v4449
    %7966 = vmatprep.subr.mxu0 0.0
    %7967 = vmatpush1.msra.mxu0 %v4450
    %7968 = vmatprep.subr.mxu0 0.0
    %7969 = vmatpush1.msra.mxu0 %v4451
    %7970 = vmatprep.subr.mxu0 0.0
    %7971 = vmatpush1.msra.mxu0 %v4452
    %7972 = vmatprep.subr.mxu0 0.0
    %7973 = vmatpush1.msra.mxu0 %v4453
    %7974 = vmatprep.subr.mxu0 0.0
    %7975 = vmatpush1.msra.mxu0 %v4454
    %7976 = vmatprep.subr.mxu0 0.0
    %7977 = vmatpush1.msra.mxu0 0.0
    %7978 = vmatprep.subr.mxu0 0.0
    %7979 = vmatpush1.msra.mxu0 0.0
    %7980 = vmatprep.subr.mxu0 0.0
    %7981 = vmatpush1.msra.mxu0 0.0
    %7982 = vmatprep.subr.mxu0 0.0
    %7983 = vmatpush1.msra.mxu0 0.0
    %7984 = vmatprep.subr.mxu0 0.0
    %7985 = vmatpush1.msra.mxu0 0.0
    %7986 = vmatprep.subr.mxu0 0.0
    %7987 = vmatpush1.msra.mxu0 0.0
    %7988 = vmatprep.subr.mxu0 0.0
    %7989 = vmatpush1.msra.mxu0 0.0
    %7990 = vmatprep.subr.mxu0 0.0
    %7991 = vmatpush1.msra.mxu0 0.0
    %7992 = vmatprep.subr.mxu0 0.0
    %7993 = vmatpush1.msra.mxu0 0.0
    %7994 = vmatprep.subr.mxu0 0.0
    %7995 = vmatpush1.msra.mxu0 0.0
    %7996 = vmatprep.subr.mxu0 0.0
    %7997 = vmatpush1.msra.mxu0 0.0
    %7998 = vmatprep.subr.mxu0 0.0
    %7999 = vmatpush1.msra.mxu0 0.0
    %8000 = vmatprep.subr.mxu0 0.0
    %8001 = vmatpush1.msra.mxu0 0.0
    %8002 = vmatprep.subr.mxu0 0.0
    %8003 = vmatpush1.msra.mxu0 0.0
    %8004 = vmatprep.subr.mxu0 0.0
    %8005 = vmatpush1.msra.mxu0 0.0
    %8006 = vmatprep.subr.mxu0 0.0
    %8007 = vmatpush1.msra.mxu0 0.0
    %8008 = vmatprep.mubr.f32.mxu0 0.0
    %8009 = vmatmul.mubr.f32.gmra.mrb[0].mxu0 %v7943
    %v8010 = vpop.f32.mrb[0].mxu0
    %v8011 = vadd.f32 %v4804, %v8010
    %v8012 = vpop.f32.mrb[0].mxu0
    %8013 = vdwg.mxu0
    %v8014 = vtanh.pop %v8011
    %8015 = vmatprep.subr.mxu0 0.0
    %8016 = vmatpush1.msra.mxu0 %v4456
    %8017 = vmatprep.subr.mxu0 0.0
    %8018 = vmatpush1.msra.mxu0 %v4457
    %8019 = vmatprep.subr.mxu0 0.0
    %8020 = vmatpush1.msra.mxu0 %v4458
    %8021 = vmatprep.subr.mxu0 0.0
    %8022 = vmatpush1.msra.mxu0 %v4459
    %8023 = vmatprep.subr.mxu0 0.0
    %8024 = vmatpush1.msra.mxu0 %v4460
    %8025 = vmatprep.subr.mxu0 0.0
    %8026 = vmatpush1.msra.mxu0 %v4461
    %8027 = vmatprep.subr.mxu0 0.0
    %8028 = vmatpush1.msra.mxu0 %v4462
    %8029 = vmatprep.subr.mxu0 0.0
    %8030 = vmatpush1.msra.mxu0 %v4463
    %8031 = vmatprep.subr.mxu0 0.0
    %8032 = vmatpush1.msra.mxu0 %v4464
    %8033 = vmatprep.subr.mxu0 0.0
    %8034 = vmatpush1.msra.mxu0 %v4465
    %8035 = vmatprep.subr.mxu0 0.0
    %8036 = vmatpush1.msra.mxu0 %v4466
    %8037 = vmatprep.subr.mxu0 0.0
    %8038 = vmatpush1.msra.mxu0 %v4467
    %8039 = vmatprep.subr.mxu0 0.0
    %8040 = vmatpush1.msra.mxu0 %v4468
    %8041 = vmatprep.subr.mxu0 0.0
    %8042 = vmatpush1.msra.mxu0 %v4469
    %8043 = vmatprep.subr.mxu0 0.0
    %8044 = vmatpush1.msra.mxu0 %v4470
    %8045 = vmatprep.subr.mxu0 0.0
    %8046 = vmatpush1.msra.mxu0 %v4471
    %8047 = vmatprep.subr.mxu0 0.0
    %8048 = vmatpush1.msra.mxu0 0.0
    %8049 = vmatprep.subr.mxu0 0.0
    %8050 = vmatpush1.msra.mxu0 0.0
    %8051 = vmatprep.subr.mxu0 0.0
    %8052 = vmatpush1.msra.mxu0 0.0
    %8053 = vmatprep.subr.mxu0 0.0
    %8054 = vmatpush1.msra.mxu0 0.0
    %8055 = vmatprep.subr.mxu0 0.0
    %8056 = vmatpush1.msra.mxu0 0.0
    %8057 = vmatprep.subr.mxu0 0.0
    %8058 = vmatpush1.msra.mxu0 0.0
    %8059 = vmatprep.subr.mxu0 0.0
    %8060 = vmatpush1.msra.mxu0 0.0
    %8061 = vmatprep.subr.mxu0 0.0
    %8062 = vmatpush1.msra.mxu0 0.0
    %8063 = vmatprep.subr.mxu0 0.0
    %8064 = vmatpush1.msra.mxu0 0.0
    %8065 = vmatprep.subr.mxu0 0.0
    %8066 = vmatpush1.msra.mxu0 0.0
    %8067 = vmatprep.subr.mxu0 0.0
    %8068 = vmatpush1.msra.mxu0 0.0
    %8069 = vmatprep.subr.mxu0 0.0
    %8070 = vmatpush1.msra.mxu0 0.0
    %8071 = vmatprep.subr.mxu0 0.0
    %8072 = vmatpush1.msra.mxu0 0.0
    %8073 = vmatprep.subr.mxu0 0.0
    %8074 = vmatpush1.msra.mxu0 0.0
    %8075 = vmatprep.subr.mxu0 0.0
    %8076 = vmatpush1.msra.mxu0 0.0
    %8077 = vmatprep.subr.mxu0 0.0
    %8078 = vmatpush1.msra.mxu0 0.0
    %8079 = vmatprep.mubr.f32.mxu0 0.0
    %8080 = vmatmul.mubr.f32.gmra.mrb[0].mxu0 %v8014
    %v8081 = vpop.f32.mrb[0].mxu0
    %v8082 = vadd.f32 %v4881, %v8081
    %v8083 = vpop.f32.mrb[0].mxu0
    %8084 = vdwg.mxu0
    %v8085 = vtanh.pop %v8082
    %8086 = vmatprep.subr.mxu0 0.0
    %8087 = vmatpush1.msra.mxu0 %v4473
    %8088 = vmatprep.subr.mxu0 0.0
    %8089 = vmatpush1.msra.mxu0 %v4474
    %8090 = vmatprep.subr.mxu0 0.0
    %8091 = vmatpush1.msra.mxu0 %v4475
    %8092 = vmatprep.subr.mxu0 0.0
    %8093 = vmatpush1.msra.mxu0 %v4476
    %8094 = vmatprep.subr.mxu0 0.0
    %8095 = vmatpush1.msra.mxu0 %v4477
    %8096 = vmatprep.subr.mxu0 0.0
    %8097 = vmatpush1.msra.mxu0 %v4478
    %8098 = vmatprep.subr.mxu0 0.0
    %8099 = vmatpush1.msra.mxu0 %v4479
    %8100 = vmatprep.subr.mxu0 0.0
    %8101 = vmatpush1.msra.mxu0 %v4480
    %8102 = vmatprep.subr.mxu0 0.0
    %8103 = vmatpush1.msra.mxu0 %v4481
    %8104 = vmatprep.subr.mxu0 0.0
    %8105 = vmatpush1.msra.mxu0 %v4482
    %8106 = vmatprep.subr.mxu0 0.0
    %8107 = vmatpush1.msra.mxu0 %v4483
    %8108 = vmatprep.subr.mxu0 0.0
    %8109 = vmatpush1.msra.mxu0 %v4484
    %8110 = vmatprep.subr.mxu0 0.0
    %8111 = vmatpush1.msra.mxu0 %v4485
    %8112 = vmatprep.subr.mxu0 0.0
    %8113 = vmatpush1.msra.mxu0 %v4486
    %8114 = vmatprep.subr.mxu0 0.0
    %8115 = vmatpush1.msra.mxu0 %v4487
    %8116 = vmatprep.subr.mxu0 0.0
    %8117 = vmatpush1.msra.mxu0 %v4488
    %8118 = vmatprep.subr.mxu0 0.0
    %8119 = vmatpush1.msra.mxu0 0.0
    %8120 = vmatprep.subr.mxu0 0.0
    %8121 = vmatpush1.msra.mxu0 0.0
    %8122 = vmatprep.subr.mxu0 0.0
    %8123 = vmatpush1.msra.mxu0 0.0
    %8124 = vmatprep.subr.mxu0 0.0
    %8125 = vmatpush1.msra.mxu0 0.0
    %8126 = vmatprep.subr.mxu0 0.0
    %8127 = vmatpush1.msra.mxu0 0.0
    %8128 = vmatprep.subr.mxu0 0.0
    %8129 = vmatpush1.msra.mxu0 0.0
    %8130 = vmatprep.subr.mxu0 0.0
    %8131 = vmatpush1.msra.mxu0 0.0
    %8132 = vmatprep.subr.mxu0 0.0
    %8133 = vmatpush1.msra.mxu0 0.0
    %8134 = vmatprep.subr.mxu0 0.0
    %8135 = vmatpush1.msra.mxu0 0.0
    %8136 = vmatprep.subr.mxu0 0.0
    %8137 = vmatpush1.msra.mxu0 0.0
    %8138 = vmatprep.subr.mxu0 0.0
    %8139 = vmatpush1.msra.mxu0 0.0
    %8140 = vmatprep.subr.mxu0 0.0
    %8141 = vmatpush1.msra.mxu0 0.0
    %8142 = vmatprep.subr.mxu0 0.0
    %8143 = vmatpush1.msra.mxu0 0.0
    %8144 = vmatprep.subr.mxu0 0.0
    %8145 = vmatpush1.msra.mxu0 0.0
    %8146 = vmatprep.subr.mxu0 0.0
    %8147 = vmatpush1.msra.mxu0 0.0
    %8148 = vmatprep.subr.mxu0 0.0
    %8149 = vmatpush1.msra.mxu0 0.0
    %8150 = vmatprep.mubr.f32.mxu0 0.0
    %8151 = vmatmul.mubr.f32.gmra.mrb[0].mxu0 %v8085
    %v8152 = vpop.f32.mrb[0].mxu0
    %v8153 = vadd.f32 %v4958, %v8152
    %v8154 = vpop.f32.mrb[0].mxu0
    %8155 = vdwg.mxu0
    %v8157 = vsel %vm395, %v8153, 0
    %8159 = vmatprep.subr.mxu0 %v4369
    %8160 = vmatpush1.msra.mxu0 %v4368
    %8161 = vmatprep.subr.mxu0 %v4372
    %8162 = vmatpush1.msra.mxu0 %v4371
    %8163 = vmatprep.subr.mxu0 0.0
    %8164 = vmatpush1.msra.mxu0 0.0
    %8165 = vmatprep.subr.mxu0 0.0
    %8166 = vmatpush1.msra.mxu0 0.0
    %8167 = vmatprep.subr.mxu0 0.0
    %8168 = vmatpush1.msra.mxu0 0.0
    %8169 = vmatprep.subr.mxu0 0.0
    %8170 = vmatpush1.msra.mxu0 0.0
    %8171 = vmatprep.subr.mxu0 0.0
    %8172 = vmatpush1.msra.mxu0 0.0
    %8173 = vmatprep.subr.mxu0 0.0
    %8174 = vmatpush1.msra.mxu0 0.0
    %8175 = vmatprep.subr.mxu0 0.0
    %8176 = vmatpush1.msra.mxu0 0.0
    %8177 = vmatprep.subr.mxu0 0.0
    %8178 = vmatpush1.msra.mxu0 0.0
    %8179 = vmatprep.subr.mxu0 0.0
    %8180 = vmatpush1.msra.mxu0 0.0
    %8181 = vmatprep.subr.mxu0 0.0
    %8182 = vmatpush1.msra.mxu0 0.0
    %8183 = vmatprep.subr.mxu0 0.0
    %8184 = vmatpush1.msra.mxu0 0.0
    %8185 = vmatprep.subr.mxu0 0.0
    %8186 = vmatpush1.msra.mxu0 0.0
    %8187 = vmatprep.subr.mxu0 0.0
    %8188 = vmatpush1.msra.mxu0 0.0
    %8189 = vmatprep.subr.mxu0 0.0
    %8190 = vmatpush1.msra.mxu0 0.0
    %8191 = vmatprep.subr.mxu0 0.0
    %8192 = vmatpush1.msra.mxu0 0.0
    %8193 = vmatprep.subr.mxu0 0.0
    %8194 = vmatpush1.msra.mxu0 0.0
    %8195 = vmatprep.subr.mxu0 0.0
    %8196 = vmatpush1.msra.mxu0 0.0
    %8197 = vmatprep.subr.mxu0 0.0
    %8198 = vmatpush1.msra.mxu0 0.0
    %8199 = vmatprep.subr.mxu0 0.0
    %8200 = vmatpush1.msra.mxu0 0.0
    %8201 = vmatprep.subr.mxu0 0.0
    %8202 = vmatpush1.msra.mxu0 0.0
    %8203 = vmatprep.subr.mxu0 0.0
    %8204 = vmatpush1.msra.mxu0 0.0
    %8205 = vmatprep.subr.mxu0 0.0
    %8206 = vmatpush1.msra.mxu0 0.0
    %8207 = vmatprep.subr.mxu0 0.0
    %8208 = vmatpush1.msra.mxu0 0.0
    %8209 = vmatprep.subr.mxu0 0.0
    %8210 = vmatpush1.msra.mxu0 0.0
    %8211 = vmatprep.subr.mxu0 0.0
    %8212 = vmatpush1.msra.mxu0 0.0
    %8213 = vmatprep.subr.mxu0 0.0
    %8214 = vmatpush1.msra.mxu0 0.0
    %8215 = vmatprep.subr.mxu0 0.0
    %8216 = vmatpush1.msra.mxu0 0.0
    %8217 = vmatprep.subr.mxu0 0.0
    %8218 = vmatpush1.msra.mxu0 0.0
    %8219 = vmatprep.subr.mxu0 0.0
    %8220 = vmatpush1.msra.mxu0 0.0
    %8221 = vmatprep.subr.mxu0 0.0
    %8222 = vmatpush1.msra.mxu0 0.0
    %8223 = vmatprep.mubr.f32.mxu0 0.0
    %8224 = vmatmul.mubr.f32.gmra.mrb[0].mxu0 %v8157
    %v8225 = vpop.f32.mrb[0].mxu0
    %v8226 = vadd.f32 0.0, %v8225
    %v8227 = vpop.f32.mrb[0].mxu0
    %v8228 = vadd.f32 0.0, %v8227
    %8229 = vdwg.mxu0
    %8230 = vmatprep.subr.mxu0 0.0
    %8231 = vmatpush1.msra.mxu0 %v4370
    %8232 = vmatprep.subr.mxu0 0.0
    %8233 = vmatpush1.msra.mxu0 %v4373
    %8234 = vmatprep.subr.mxu0 0.0
    %8235 = vmatpush1.msra.mxu0 0.0
    %8236 = vmatprep.subr.mxu0 0.0
    %8237 = vmatpush1.msra.mxu0 0.0
    %8238 = vmatprep.subr.mxu0 0.0
    %8239 = vmatpush1.msra.mxu0 0.0
    %8240 = vmatprep.subr.mxu0 0.0
    %8241 = vmatpush1.msra.mxu0 0.0
    %8242 = vmatprep.subr.mxu0 0.0
    %8243 = vmatpush1.msra.mxu0 0.0
    %8244 = vmatprep.subr.mxu0 0.0
    %8245 = vmatpush1.msra.mxu0 0.0
    %8246 = vmatprep.subr.mxu0 0.0
    %8247 = vmatpush1.msra.mxu0 0.0
    %8248 = vmatprep.subr.mxu0 0.0
    %8249 = vmatpush1.msra.mxu0 0.0
    %8250 = vmatprep.subr.mxu0 0.0
    %8251 = vmatpush1.msra.mxu0 0.0
    %8252 = vmatprep.subr.mxu0 0.0
    %8253 = vmatpush1.msra.mxu0 0.0
    %8254 = vmatprep.subr.mxu0 0.0
    %8255 = vmatpush1.msra.mxu0 0.0
    %8256 = vmatprep.subr.mxu0 0.0
    %8257 = vmatpush1.msra.mxu0 0.0
    %8258 = vmatprep.subr.mxu0 0.0
    %8259 = vmatpush1.msra.mxu0 0.0
    %8260 = vmatprep.subr.mxu0 0.0
    %8261 = vmatpush1.msra.mxu0 0.0
    %8262 = vmatprep.subr.mxu0 0.0
    %8263 = vmatpush1.msra.mxu0 0.0
    %8264 = vmatprep.subr.mxu0 0.0
    %8265 = vmatpush1.msra.mxu0 0.0
    %8266 = vmatprep.subr.mxu0 0.0
    %8267 = vmatpush1.msra.mxu0 0.0
    %8268 = vmatprep.subr.mxu0 0.0
    %8269 = vmatpush1.msra.mxu0 0.0
    %8270 = vmatprep.subr.mxu0 0.0
    %8271 = vmatpush1.msra.mxu0 0.0
    %8272 = vmatprep.subr.mxu0 0.0
    %8273 = vmatpush1.msra.mxu0 0.0
    %8274 = vmatprep.subr.mxu0 0.0
    %8275 = vmatpush1.msra.mxu0 0.0
    %8276 = vmatprep.subr.mxu0 0.0
    %8277 = vmatpush1.msra.mxu0 0.0
    %8278 = vmatprep.subr.mxu0 0.0
    %8279 = vmatpush1.msra.mxu0 0.0
    %8280 = vmatprep.subr.mxu0 0.0
    %8281 = vmatpush1.msra.mxu0 0.0
    %8282 = vmatprep.subr.mxu0 0.0
    %8283 = vmatpush1.msra.mxu0 0.0
    %8284 = vmatprep.subr.mxu0 0.0
    %8285 = vmatpush1.msra.mxu0 0.0
    %8286 = vmatprep.subr.mxu0 0.0
    %8287 = vmatpush1.msra.mxu0 0.0
    %8288 = vmatprep.subr.mxu0 0.0
    %8289 = vmatpush1.msra.mxu0 0.0
    %8290 = vmatprep.subr.mxu0 0.0
    %8291 = vmatpush1.msra.mxu0 0.0
    %8292 = vmatprep.subr.mxu0 0.0
    %8293 = vmatpush1.msra.mxu0 0.0
    %8294 = vmatprep.mubr.f32.mxu0 0.0
    %8295 = vmatmul.mubr.f32.gmra.mrb[0].mxu0 %v8157
    %v8296 = vpop.f32.mrb[0].mxu0
    %v8297 = vadd.f32 0.0, %v8296
    %v8298 = vpop.f32.mrb[0].mxu0
    %8299 = vdwg.mxu0
    %v8300 = vadd.f32 %v4365, %v8226
    %v8301 = vadd.f32 %v4366, %v8228
    %v8302 = vadd.f32 %v4367, %v8297
    %8303 = vmatprep.subr.mxu0 %v4375
    %8304 = vmatpush1.msra.mxu0 %v4374
    %8305 = vmatprep.subr.mxu0 %v4378
    %8306 = vmatpush1.msra.mxu0 %v4377
    %8307 = vmatprep.subr.mxu0 %v4381
    %8308 = vmatpush1.msra.mxu0 %v4380
    %8309 = vmatprep.subr.mxu0 %v4384
    %8310 = vmatpush1.msra.mxu0 %v4383
    %8311 = vmatprep.subr.mxu0 %v4387
    %8312 = vmatpush1.msra.mxu0 %v4386
    %8313 = vmatprep.subr.mxu0 %v4390
    %8314 = vmatpush1.msra.mxu0 %v4389
    %8315 = vmatprep.subr.mxu0 %v4393
    %8316 = vmatpush1.msra.mxu0 %v4392
    %8317 = vmatprep.subr.mxu0 %v4396
    %8318 = vmatpush1.msra.mxu0 %v4395
    %8319 = vmatprep.subr.mxu0 %v4399
    %8320 = vmatpush1.msra.mxu0 %v4398
    %8321 = vmatprep.subr.mxu0 %v4402
    %8322 = vmatpush1.msra.mxu0 %v4401
    %8323 = vmatprep.subr.mxu0 %v4405
    %8324 = vmatpush1.msra.mxu0 %v4404
    %8325 = vmatprep.subr.mxu0 %v4408
    %8326 = vmatpush1.msra.mxu0 %v4407
    %8327 = vmatprep.subr.mxu0 %v4411
    %8328 = vmatpush1.msra.mxu0 %v4410
    %8329 = vmatprep.subr.mxu0 %v4414
    %8330 = vmatpush1.msra.mxu0 %v4413
    %8331 = vmatprep.subr.mxu0 %v4417
    %8332 = vmatpush1.msra.mxu0 %v4416
    %8333 = vmatprep.subr.mxu0 %v4420
    %8334 = vmatpush1.msra.mxu0 %v4419
    %8335 = vmatprep.subr.mxu0 0.0
    %8336 = vmatpush1.msra.mxu0 0.0
    %8337 = vmatprep.subr.mxu0 0.0
    %8338 = vmatpush1.msra.mxu0 0.0
    %8339 = vmatprep.subr.mxu0 0.0
    %8340 = vmatpush1.msra.mxu0 0.0
    %8341 = vmatprep.subr.mxu0 0.0
    %8342 = vmatpush1.msra.mxu0 0.0
    %8343 = vmatprep.subr.mxu0 0.0
    %8344 = vmatpush1.msra.mxu0 0.0
    %8345 = vmatprep.subr.mxu0 0.0
    %8346 = vmatpush1.msra.mxu0 0.0
    %8347 = vmatprep.subr.mxu0 0.0
    %8348 = vmatpush1.msra.mxu0 0.0
    %8349 = vmatprep.subr.mxu0 0.0
    %8350 = vmatpush1.msra.mxu0 0.0
    %8351 = vmatprep.subr.mxu0 0.0
    %8352 = vmatpush1.msra.mxu0 0.0
    %8353 = vmatprep.subr.mxu0 0.0
    %8354 = vmatpush1.msra.mxu0 0.0
    %8355 = vmatprep.subr.mxu0 0.0
    %8356 = vmatpush1.msra.mxu0 0.0
    %8357 = vmatprep.subr.mxu0 0.0
    %8358 = vmatpush1.msra.mxu0 0.0
    %8359 = vmatprep.subr.mxu0 0.0
    %8360 = vmatpush1.msra.mxu0 0.0
    %8361 = vmatprep.subr.mxu0 0.0
    %8362 = vmatpush1.msra.mxu0 0.0
    %8363 = vmatprep.subr.mxu0 0.0
    %8364 = vmatpush1.msra.mxu0 0.0
    %8365 = vmatprep.subr.mxu0 0.0
    %8366 = vmatpush1.msra.mxu0 0.0
    %8367 = vmatprep.mubr.f32.mxu0 0.0
    %8368 = vmatmul.mubr.f32.gmra.mrb[0].mxu0 %v7943
    %v8369 = vpop.f32.mrb[0].mxu0
    %v8370 = vadd.f32 %v4427, %v8369
    %v8371 = vpop.f32.mrb[0].mxu0
    %v8372 = vadd.f32 %v4431, %v8371
    %8373 = vdwg.mxu0
    %8374 = vmatprep.subr.mxu0 0.0
    %8375 = vmatpush1.msra.mxu0 %v4376
    %8376 = vmatprep.subr.mxu0 0.0
    %8377 = vmatpush1.msra.mxu0 %v4379
    %8378 = vmatprep.subr.mxu0 0.0
    %8379 = vmatpush1.msra.mxu0 %v4382
    %8380 = vmatprep.subr.mxu0 0.0
    %8381 = vmatpush1.msra.mxu0 %v4385
    %8382 = vmatprep.subr.mxu0 0.0
    %8383 = vmatpush1.msra.mxu0 %v4388
    %8384 = vmatprep.subr.mxu0 0.0
    %8385 = vmatpush1.msra.mxu0 %v4391
    %8386 = vmatprep.subr.mxu0 0.0
    %8387 = vmatpush1.msra.mxu0 %v4394
    %8388 = vmatprep.subr.mxu0 0.0
    %8389 = vmatpush1.msra.mxu0 %v4397
    %8390 = vmatprep.subr.mxu0 0.0
    %8391 = vmatpush1.msra.mxu0 %v4400
    %8392 = vmatprep.subr.mxu0 0.0
    %8393 = vmatpush1.msra.mxu0 %v4403
    %8394 = vmatprep.subr.mxu0 0.0
    %8395 = vmatpush1.msra.mxu0 %v4406
    %8396 = vmatprep.subr.mxu0 0.0
    %8397 = vmatpush1.msra.mxu0 %v4409
    %8398 = vmatprep.subr.mxu0 0.0
    %8399 = vmatpush1.msra.mxu0 %v4412
    %8400 = vmatprep.subr.mxu0 0.0
    %8401 = vmatpush1.msra.mxu0 %v4415
    %8402 = vmatprep.subr.mxu0 0.0
    %8403 = vmatpush1.msra.mxu0 %v4418
    %8404 = vmatprep.subr.mxu0 0.0
    %8405 = vmatpush1.msra.mxu0 %v4421
    %8406 = vmatprep.subr.mxu0 0.0
    %8407 = vmatpush1.msra.mxu0 0.0
    %8408 = vmatprep.subr.mxu0 0.0
    %8409 = vmatpush1.msra.mxu0 0.0
    %8410 = vmatprep.subr.mxu0 0.0
    %8411 = vmatpush1.msra.mxu0 0.0
    %8412 = vmatprep.subr.mxu0 0.0
    %8413 = vmatpush1.msra.mxu0 0.0
    %8414 = vmatprep.subr.mxu0 0.0
    %8415 = vmatpush1.msra.mxu0 0.0
    %8416 = vmatprep.subr.mxu0 0.0
    %8417 = vmatpush1.msra.mxu0 0.0
    %8418 = vmatprep.subr.mxu0 0.0
    %8419 = vmatpush1.msra.mxu0 0.0
    %8420 = vmatprep.subr.mxu0 0.0
    %8421 = vmatpush1.msra.mxu0 0.0
    %8422 = vmatprep.subr.mxu0 0.0
    %8423 = vmatpush1.msra.mxu0 0.0
    %8424 = vmatprep.subr.mxu0 0.0
    %8425 = vmatpush1.msra.mxu0 0.0
    %8426 = vmatprep.subr.mxu0 0.0
    %8427 = vmatpush1.msra.mxu0 0.0
    %8428 = vmatprep.subr.mxu0 0.0
    %8429 = vmatpush1.msra.mxu0 0.0
    %8430 = vmatprep.subr.mxu0 0.0
    %8431 = vmatpush1.msra.mxu0 0.0
    %8432 = vmatprep.subr.mxu0 0.0
    %8433 = vmatpush1.msra.mxu0 0.0
    %8434 = vmatprep.subr.mxu0 0.0
    %8435 = vmatpush1.msra.mxu0 0.0
    %8436 = vmatprep.subr.mxu0 0.0
    %8437 = vmatpush1.msra.mxu0 0.0
    %8438 = vmatprep.mubr.f32.mxu0 0.0
    %8439 = vmatmul.mubr.f32.gmra.mrb[0].mxu0 %v7943
    %v8440 = vpop.f32.mrb[0].mxu0
    %v8441 = vadd.f32 %v4435, %v8440
    %v8442 = vpop.f32.mrb[0].mxu0
    %8443 = vdwg.mxu0
    %v8444 = vadd.f32 %v8300, %v8370
    %v8445 = vxor.u32 %v8444, 2147483648
    %v8446 = vmul.f32 %v8445, 1.442695
    %v8447 = vpow.pop %v8446
    %v8448 = vadd.f32 %v8447, 1.0
    %v8449 = vrcp.pop %v8448
    %v8450 = vmul.f32 1.0, %v8449
    %v8451 = vadd.f32 %v8301, %v8372
    %v8452 = vxor.u32 %v8451, 2147483648
    %v8453 = vmul.f32 %v8452, 1.442695
    %v8454 = vpow.pop %v8453
    %v8455 = vadd.f32 %v8454, 1.0
    %v8456 = vrcp.pop %v8455
    %v8457 = vmul.f32 1.0, %v8456
    %v8458 = vmul.f32 %v8450, %v8441
    %v8459 = vadd.f32 %v8302, %v8458
    %v8460 = vtanh.pop %v8459
    %v8461 = vsub.f32 1.0, %v8457
    %v8462 = vmul.f32 %v8461, %v8460
    %v8463 = vmul.f32 %v8457, %v7943
    %v8464 = vadd.f32 %v8462, %v8463
    %8465 = vmatprep.subr.mxu0 0.0
    %8466 = vmatpush1.msra.mxu0 %v4439
    %8467 = vmatprep.subr.mxu0 0.0
    %8468 = vmatpush1.msra.mxu0 %v4440
    %8469 = vmatprep.subr.mxu0 0.0
    %8470 = vmatpush1.msra.mxu0 %v4441
    %8471 = vmatprep.subr.mxu0 0.0
    %8472 = vmatpush1.msra.mxu0 %v4442
    %8473 = vmatprep.subr.mxu0 0.0
    %8474 = vmatpush1.msra.mxu0 %v4443
    %8475 = vmatprep.subr.mxu0 0.0
    %8476 = vmatpush1.msra.mxu0 %v4444
    %8477 = vmatprep.subr.mxu0 0.0
    %8478 = vmatpush1.msra.mxu0 %v4445
    %8479 = vmatprep.subr.mxu0 0.0
    %8480 = vmatpush1.msra.mxu0 %v4446
    %8481 = vmatprep.subr.mxu0 0.0
    %8482 = vmatpush1.msra.mxu0 %v4447
    %8483 = vmatprep.subr.mxu0 0.0
    %8484 = vmatpush1.msra.mxu0 %v4448
    %8485 = vmatprep.subr.mxu0 0.0
    %8486 = vmatpush1.msra.mxu0 %v4449
    %8487 = vmatprep.subr.mxu0 0.0
    %8488 = vmatpush1.msra.mxu0 %v4450
    %8489 = vmatprep.subr.mxu0 0.0
    %8490 = vmatpush1.msra.mxu0 %v4451
    %8491 = vmatprep.subr.mxu0 0.0
    %8492 = vmatpush1.msra.mxu0 %v4452
    %8493 = vmatprep.subr.mxu0 0.0
    %8494 = vmatpush1.msra.mxu0 %v4453
    %8495 = vmatprep.subr.mxu0 0.0
    %8496 = vmatpush1.msra.mxu0 %v4454
    %8497 = vmatprep.subr.mxu0 0.0
    %8498 = vmatpush1.msra.mxu0 0.0
    %8499 = vmatprep.subr.mxu0 0.0
    %8500 = vmatpush1.msra.mxu0 0.0
    %8501 = vmatprep.subr.mxu0 0.0
    %8502 = vmatpush1.msra.mxu0 0.0
    %8503 = vmatprep.subr.mxu0 0.0
    %8504 = vmatpush1.msra.mxu0 0.0
    %8505 = vmatprep.subr.mxu0 0.0
    %8506 = vmatpush1.msra.mxu0 0.0
    %8507 = vmatprep.subr.mxu0 0.0
    %8508 = vmatpush1.msra.mxu0 0.0
    %8509 = vmatprep.subr.mxu0 0.0
    %8510 = vmatpush1.msra.mxu0 0.0
    %8511 = vmatprep.subr.mxu0 0.0
    %8512 = vmatpush1.msra.mxu0 0.0
    %8513 = vmatprep.subr.mxu0 0.0
    %8514 = vmatpush1.msra.mxu0 0.0
    %8515 = vmatprep.subr.mxu0 0.0
    %8516 = vmatpush1.msra.mxu0 0.0
    %8517 = vmatprep.subr.mxu0 0.0
    %8518 = vmatpush1.msra.mxu0 0.0
    %8519 = vmatprep.subr.mxu0 0.0
    %8520 = vmatpush1.msra.mxu0 0.0
    %8521 = vmatprep.subr.mxu0 0.0
    %8522 = vmatpush1.msra.mxu0 0.0
    %8523 = vmatprep.subr.mxu0 0.0
    %8524 = vmatpush1.msra.mxu0 0.0
    %8525 = vmatprep.subr.mxu0 0.0
    %8526 = vmatpush1.msra.mxu0 0.0
    %8527 = vmatprep.subr.mxu0 0.0
    %8528 = vmatpush1.msra.mxu0 0.0
    %8529 = vmatprep.mubr.f32.mxu0 0.0
    %8530 = vmatmul.mubr.f32.gmra.mrb[0].mxu0 %v8464
    %v8531 = vpop.f32.mrb[0].mxu0
    %v8532 = vadd.f32 %v4804, %v8531
    %v8533 = vpop.f32.mrb[0].mxu0
    %8534 = vdwg.mxu0
    %v8535 = vtanh.pop %v8532
    %8536 = vmatprep.subr.mxu0 0.0
    %8537 = vmatpush1.msra.mxu0 %v4456
    %8538 = vmatprep.subr.mxu0 0.0
    %8539 = vmatpush1.msra.mxu0 %v4457
    %8540 = vmatprep.subr.mxu0 0.0
    %8541 = vmatpush1.msra.mxu0 %v4458
    %8542 = vmatprep.subr.mxu0 0.0
    %8543 = vmatpush1.msra.mxu0 %v4459
    %8544 = vmatprep.subr.mxu0 0.0
    %8545 = vmatpush1.msra.mxu0 %v4460
    %8546 = vmatprep.subr.mxu0 0.0
    %8547 = vmatpush1.msra.mxu0 %v4461
    %8548 = vmatprep.subr.mxu0 0.0
    %8549 = vmatpush1.msra.mxu0 %v4462
    %8550 = vmatprep.subr.mxu0 0.0
    %8551 = vmatpush1.msra.mxu0 %v4463
    %8552 = vmatprep.subr.mxu0 0.0
    %8553 = vmatpush1.msra.mxu0 %v4464
    %8554 = vmatprep.subr.mxu0 0.0
    %8555 = vmatpush1.msra.mxu0 %v4465
    %8556 = vmatprep.subr.mxu0 0.0
    %8557 = vmatpush1.msra.mxu0 %v4466
    %8558 = vmatprep.subr.mxu0 0.0
    %8559 = vmatpush1.msra.mxu0 %v4467
    %8560 = vmatprep.subr.mxu0 0.0
    %8561 = vmatpush1.msra.mxu0 %v4468
    %8562 = vmatprep.subr.mxu0 0.0
    %8563 = vmatpush1.msra.mxu0 %v4469
    %8564 = vmatprep.subr.mxu0 0.0
    %8565 = vmatpush1.msra.mxu0 %v4470
    %8566 = vmatprep.subr.mxu0 0.0
    %8567 = vmatpush1.msra.mxu0 %v4471
    %8568 = vmatprep.subr.mxu0 0.0
    %8569 = vmatpush1.msra.mxu0 0.0
    %8570 = vmatprep.subr.mxu0 0.0
    %8571 = vmatpush1.msra.mxu0 0.0
    %8572 = vmatprep.subr.mxu0 0.0
    %8573 = vmatpush1.msra.mxu0 0.0
    %8574 = vmatprep.subr.mxu0 0.0
    %8575 = vmatpush1.msra.mxu0 0.0
    %8576 = vmatprep.subr.mxu0 0.0
    %8577 = vmatpush1.msra.mxu0 0.0
    %8578 = vmatprep.subr.mxu0 0.0
    %8579 = vmatpush1.msra.mxu0 0.0
    %8580 = vmatprep.subr.mxu0 0.0
    %8581 = vmatpush1.msra.mxu0 0.0
    %8582 = vmatprep.subr.mxu0 0.0
    %8583 = vmatpush1.msra.mxu0 0.0
    %8584 = vmatprep.subr.mxu0 0.0
    %8585 = vmatpush1.msra.mxu0 0.0
    %8586 = vmatprep.subr.mxu0 0.0
    %8587 = vmatpush1.msra.mxu0 0.0
    %8588 = vmatprep.subr.mxu0 0.0
    %8589 = vmatpush1.msra.mxu0 0.0
    %8590 = vmatprep.subr.mxu0 0.0
    %8591 = vmatpush1.msra.mxu0 0.0
    %8592 = vmatprep.subr.mxu0 0.0
    %8593 = vmatpush1.msra.mxu0 0.0
    %8594 = vmatprep.subr.mxu0 0.0
    %8595 = vmatpush1.msra.mxu0 0.0
    %8596 = vmatprep.subr.mxu0 0.0
    %8597 = vmatpush1.msra.mxu0 0.0
    %8598 = vmatprep.subr.mxu0 0.0
    %8599 = vmatpush1.msra.mxu0 0.0
    %8600 = vmatprep.mubr.f32.mxu0 0.0
    %8601 = vmatmul.mubr.f32.gmra.mrb[0].mxu0 %v8535
    %v8602 = vpop.f32.mrb[0].mxu0
    %v8603 = vadd.f32 %v4881, %v8602
    %v8604 = vpop.f32.mrb[0].mxu0
    %8605 = vdwg.mxu0
    %v8606 = vtanh.pop %v8603
    %8607 = vmatprep.subr.mxu0 0.0
    %8608 = vmatpush1.msra.mxu0 %v4473
    %8609 = vmatprep.subr.mxu0 0.0
    %8610 = vmatpush1.msra.mxu0 %v4474
    %8611 = vmatprep.subr.mxu0 0.0
    %8612 = vmatpush1.msra.mxu0 %v4475
    %8613 = vmatprep.subr.mxu0 0.0
    %8614 = vmatpush1.msra.mxu0 %v4476
    %8615 = vmatprep.subr.mxu0 0.0
    %8616 = vmatpush1.msra.mxu0 %v4477
    %8617 = vmatprep.subr.mxu0 0.0
    %8618 = vmatpush1.msra.mxu0 %v4478
    %8619 = vmatprep.subr.mxu0 0.0
    %8620 = vmatpush1.msra.mxu0 %v4479
    %8621 = vmatprep.subr.mxu0 0.0
    %8622 = vmatpush1.msra.mxu0 %v4480
    %8623 = vmatprep.subr.mxu0 0.0
    %8624 = vmatpush1.msra.mxu0 %v4481
    %8625 = vmatprep.subr.mxu0 0.0
    %8626 = vmatpush1.msra.mxu0 %v4482
    %8627 = vmatprep.subr.mxu0 0.0
    %8628 = vmatpush1.msra.mxu0 %v4483
    %8629 = vmatprep.subr.mxu0 0.0
    %8630 = vmatpush1.msra.mxu0 %v4484
    %8631 = vmatprep.subr.mxu0 0.0
    %8632 = vmatpush1.msra.mxu0 %v4485
    %8633 = vmatprep.subr.mxu0 0.0
    %8634 = vmatpush1.msra.mxu0 %v4486
    %8635 = vmatprep.subr.mxu0 0.0
    %8636 = vmatpush1.msra.mxu0 %v4487
    %8637 = vmatprep.subr.mxu0 0.0
    %8638 = vmatpush1.msra.mxu0 %v4488
    %8639 = vmatprep.subr.mxu0 0.0
    %8640 = vmatpush1.msra.mxu0 0.0
    %8641 = vmatprep.subr.mxu0 0.0
    %8642 = vmatpush1.msra.mxu0 0.0
    %8643 = vmatprep.subr.mxu0 0.0
    %8644 = vmatpush1.msra.mxu0 0.0
    %8645 = vmatprep.subr.mxu0 0.0
    %8646 = vmatpush1.msra.mxu0 0.0
    %8647 = vmatprep.subr.mxu0 0.0
    %8648 = vmatpush1.msra.mxu0 0.0
    %8649 = vmatprep.subr.mxu0 0.0
    %8650 = vmatpush1.msra.mxu0 0.0
    %8651 = vmatprep.subr.mxu0 0.0
    %8652 = vmatpush1.msra.mxu0 0.0
    %8653 = vmatprep.subr.mxu0 0.0
    %8654 = vmatpush1.msra.mxu0 0.0
    %8655 = vmatprep.subr.mxu0 0.0
    %8656 = vmatpush1.msra.mxu0 0.0
    %8657 = vmatprep.subr.mxu0 0.0
    %8658 = vmatpush1.msra.mxu0 0.0
    %8659 = vmatprep.subr.mxu0 0.0
    %8660 = vmatpush1.msra.mxu0 0.0
    %8661 = vmatprep.subr.mxu0 0.0
    %8662 = vmatpush1.msra.mxu0 0.0
    %8663 = vmatprep.subr.mxu0 0.0
    %8664 = vmatpush1.msra.mxu0 0.0
    %8665 = vmatprep.subr.mxu0 0.0
    %8666 = vmatpush1.msra.mxu0 0.0
    %8667 = vmatprep.subr.mxu0 0.0
    %8668 = vmatpush1.msra.mxu0 0.0
    %8669 = vmatprep.subr.mxu0 0.0
    %8670 = vmatpush1.msra.mxu0 0.0
    %8671 = vmatprep.mubr.f32.mxu0 0.0
    %8672 = vmatmul.mubr.f32.gmra.mrb[0].mxu0 %v8606
    %v8673 = vpop.f32.mrb[0].mxu0
    %v8674 = vadd.f32 %v4958, %v8673
    %v8675 = vpop.f32.mrb[0].mxu0
    %8676 = vdwg.mxu0
    %v8677 = vrot.slane %v5548, 6
    %v8679 = vrot.slane %v6069, 4
    %v8681 = vrot.slane %v6590, 2
    %v8683 = vrot.slane %v7632, 6
    %v8685 = vrot.slane %v8153, 4
    %v8688 = vrot.slane %v8674, 2
    %vm8690 = vcmask 1041408
    %v8691 = vsel %vm8690, %v5027, %v8677
    %vm8692 = vcmask 1043456
    %v8693 = vsel %vm8692, %v8691, %v8679
    %vm8694 = vcmask 1045504
    %v8695 = vsel %vm8694, %v8693, %v8681
    %v8696 = vsel %vm8690, %v7111, %v8683
    %v8697 = vsel %vm8692, %v8696, %v8685
    %v8698 = vsel %vm8694, %v8697, %v8688
    %8699 = vst.msk [vmem:[#allocation32] sm:$0xff] %vm395, %v8695
    %8700 = vst.msk [vmem:[#allocation32 + $0x8] sm:$0xff] %vm395, %v8698
    // Predicated region
    $region198: #{tpu_custom_call.1} parent=1 // pred_check
      _
    $region199: #{tpu_custom_call.1} parent=1 // pred_check_branch
      %8702 = sbr.rel (0) target = $region201
    $region200: #{tpu_custom_call.1} parent=1 // pred_region
      %s8704 = ssub.s32 256, 256
      %8705 = vsyncadd [#allocation4], %s8704
      %s8706 = sshll.u32 [#allocation32], 4
      %s8707 = int_to_ptr.vmem [resolvable:$true] %s8706
      %8712 = dma.vmem_to_hbm [thread:$0]  %s8707, 256, %s61, [#allocation4], 128, 128, 8
    $region201: #{tpu_custom_call.1} parent=1 // pred_fallthru
      _
    // Predicated region
    $region202: #{tpu_custom_call.1} parent=1 // pred_check
      _
    $region203: #{tpu_custom_call.1} parent=1 // pred_check_branch
      %8714 = sbr.rel (0) target = $region205
    $region204: #{tpu_custom_call.1} parent=1 // pred_region
      %s8716 = ssub.s32 32, 32
      %8717 = vsyncadd [#allocation34], %s8716
      %s8719 = sshll.u32 [#allocation33], 4
      %s8720 = int_to_ptr.vmem [resolvable:$true] %s8719
      %8722 = dma.vmem_to_hbm [thread:$0]  %s8720, 32, %s63, [#allocation34]
    $region205: #{tpu_custom_call.1} parent=1 // pred_fallthru
      _
    // Predicated region
    $region206: #{tpu_custom_call.1} parent=1 // pred_check
      _
    $region207: #{tpu_custom_call.1} parent=1 // pred_check_branch
      %8724 = sbr.rel (0) target = $region209
    $region208: #{tpu_custom_call.1} parent=1 // pred_region
      %8725 = dma.done [#allocation4], 256
    $region209: #{tpu_custom_call.1} parent=1 // pred_fallthru
      _
    // Predicated region
    $region210: #{tpu_custom_call.1} parent=1 // pred_check
      _
    $region211: #{tpu_custom_call.1} parent=1 // pred_check_branch
      %8727 = sbr.rel (0) target = $region213
    $region212: #{tpu_custom_call.1} parent=1 // pred_region
      %8728 = dma.done [#allocation34], 32
    $region213: #{tpu_custom_call.1} parent=1 // pred_fallthru
      _
    %8729 = vsyncpa [#allocation3], 1
    %8730 = vsyncpa [#allocation6], 1
    %8731 = vsyncpa [#allocation9], 1
    %8732 = vsyncpa [#allocation12], 1
    %8733 = vsyncpa [#allocation15], 1
    %8734 = vsyncpa [#allocation18], 1
    %8735 = vsyncpa [#allocation21], 1
    %8736 = vsyncpa [#allocation24], 1
    %8737 = vsyncpa [#allocation27], 1
    %8738 = vsyncpa [#allocation30], 1
    %8739 = vsyncpa [#allocation4], 1
    %8740 = vsyncpa [#allocation34], 1

</llo_original>
